<compile_context>
chip_gen: v7x
topology: tpu7x:2x2x1
jax: 0.10.0
libtpu: 0.0.40
codegen_flags: <defaults>
</compile_context>

<pallas_src>
import math
import numpy as np

import jax
import jax.numpy as jnp
from jax.experimental import pallas as pl
from jax.experimental.pallas import tpu as pltpu

# ---------------- config (small, consistent with the module) ----------------
SEQ_LEN = 16          # T  (configs.seq_len)
PRED_LEN = 8          # configs.pred_len (unused in forward)
TOP_K = 2             # configs.top_k
D_MODEL = 32          # N  (configs.d_model)
D_FF = 32             # configs.d_ff
N_HEADS = 4           # configs.n_heads
C_OUT = 8             # V  graph nodes (configs.c_out)
CONV_CH = 8           # C  (configs.conv_channel)
SKIP_CH = 8           # S  (configs.skip_channel)
GCN_DEPTH = 2         # configs.gcn_depth
PROP_ALPHA = 0.05     # configs.propalpha
NODE_DIM = 10         # configs.node_dim
LN_EPS = 1e-5
DH = D_MODEL // N_HEADS
NEG_INF = -1e9

GC_ORDER = ("wg", "bg", "wend_s", "wlinT", "ybias", "g", "b")
ATT_ORDER = ("wqkv", "bqkv", "wo", "bo", "g1", "be1", "wc1", "bc1",
             "wc2", "bc2", "g2", "be2", "go", "beo")


# ------------------------------ small helpers --------------------------------
def _gelu(x):
    # TODO(synk): PyTorch nn.GELU/F.gelu default to exact erf; tanh approximation used here.
    c = math.sqrt(2.0 / math.pi)
    return 0.5 * x * (1.0 + jnp.tanh(c * (x + 0.044715 * x * x * x)))


def _layernorm(z, g, b):
    mu = jnp.mean(z, axis=-1, keepdims=True)
    var = jnp.mean((z - mu) ** 2, axis=-1, keepdims=True)
    return (z - mu) * jax.lax.rsqrt(var + LN_EPS) * g + b


# --------------------------- fused forward kernel ----------------------------
def _make_fused_kernel(scales):
    T, N, V, S = SEQ_LEN, D_MODEL, C_OUT, SKIP_CH
    k = len(scales)
    lengths = [((T + s - 1) // s) * s for s in scales]
    max_len = max(lengths)
    n_gc, n_att = len(GC_ORDER), len(ATT_ORDER)

    def kernel(*refs):
        w_ref = refs[0]                                   # (B, k)  SMEM
        x_ref = refs[1]                                   # (1, T, N)
        pos = 2
        gc_refs = [refs[pos + i * n_gc: pos + (i + 1) * n_gc] for i in range(k)]
        pos += k * n_gc
        (wqkv, bqkv, wo, bo, g1, be1, wc1, bc1, wc2, bc2,
         g2, be2, go, beo) = refs[pos: pos + n_att]
        pos += n_att
        mask_refs = refs[pos: pos + k]
        pos += k
        o_ref = refs[pos]                                 # (1, T, N) output
        pad_ref = refs[pos + 1]                           # (max_len, N) scratch

        bidx = pl.program_id(0)
        x = x_ref[0]                                      # (T, N)

        def graph_block(xin, wg, bg, wend_s, wlinT, ybias, gg, bb):
            # start_conv + mixprop(propagation + 1x1 mlp) folded host-side into a
            # single (N, S*V) matmul; lane index is s*V + v.
            gmid = _gelu(jnp.dot(xin, wg[...],
                                 preferred_element_type=jnp.float32) + bg[...])
            wend_all = wend_s[...]                        # (S, T, T)
            acc = jnp.zeros((T, V), jnp.float32)
            for s in range(S):                            # end_conv: contract (s, tau)
                acc = acc + jnp.dot(wend_all[s], gmid[:, s * V:(s + 1) * V],
                                    preferred_element_type=jnp.float32)
            # linear(V->N); end_conv bias + linear bias folded into ybias (T, N)
            y = jnp.dot(acc, wlinT[...],
                        preferred_element_type=jnp.float32) + ybias[...]
            return _layernorm(xin + y, gg[...], bb[...])

        def attention(xp, mask):
            # Block-diagonal masked MHA over the padded sequence == independent
            # full attention per length-`scale` segment (matches torch reshape).
            L = xp.shape[0]
            qkv = jnp.dot(xp, wqkv[...],
                          preferred_element_type=jnp.float32) + bqkv[...]
            wo_a = wo[...]
            sc = 1.0 / math.sqrt(DH)
            attn = jnp.zeros((L, N), jnp.float32)
            for h in range(N_HEADS):                      # static unroll
                qh = qkv[:, h * DH:(h + 1) * DH]
                kh = qkv[:, N + h * DH:N + (h + 1) * DH]
                vh = qkv[:, 2 * N + h * DH:2 * N + (h + 1) * DH]
                s = jnp.dot(qh, kh.T,
                            preferred_element_type=jnp.float32) * sc + mask
                s = s - jnp.max(s, axis=-1, keepdims=True)
                e = jnp.exp(s)
                p = e / jnp.sum(e, axis=-1, keepdims=True)
                oh = jnp.dot(p, vh, preferred_element_type=jnp.float32)
                # accumulate head output straight through Wo (no concatenate)
                attn = attn + jnp.dot(oh, wo_a[h * DH:(h + 1) * DH, :],
                                      preferred_element_type=jnp.float32)
            attn = attn + bo[...]
            x1 = _layernorm(xp + attn, g1[...], be1[...])          # norm1
            y = _gelu(jnp.dot(x1, wc1[...],
                              preferred_element_type=jnp.float32) + bc1[...])
            y = jnp.dot(y, wc2[...],
                        preferred_element_type=jnp.float32) + bc2[...]
            x2 = _layernorm(x1 + y, g2[...], be2[...])             # norm2
            # ScaleGraphBlock: out = gelu(norm(att0(out)))
            return _gelu(_layernorm(x2, go[...], beo[...]))

        # zero the padding rows of the scratch once (only if any scale pads)
        if max_len > T:
            pad_ref[T:max_len, :] = jnp.zeros((max_len - T, N), jnp.float32)

        res_acc = jnp.zeros((T, N), jnp.float32)
        for i in range(k):
            x = graph_block(x, *gc_refs[i])               # x reassigned, as in torch
            L = lengths[i]
            if L > T:
                pad_ref[:T, :] = x
                xp = pad_ref[:L, :]
            else:
                xp = x
            out = attention(xp, mask_refs[i][...])
            res_acc = res_acc + out[:T, :] * w_ref[bidx, i]
        o_ref[0] = res_acc + x                            # residual with last gconv out

    return kernel


# ------------------------------- FFT_for_Period -------------------------------
def fft_for_period(x, k=2):
    # FFT / top-k have no Pallas equivalent; done host-side, exactly like the
    # PyTorch code that moves top_list to .cpu().numpy().
    xf = jnp.fft.rfft(x, axis=1)
    amp = jnp.abs(xf)                               # (B, F, N)
    freq = amp.mean(axis=0).mean(axis=-1)           # (F,)
    freq = freq.at[0].set(0.0)
    top = np.argsort(np.asarray(freq))[::-1][:k].copy()   # descending == torch.topk
    period = x.shape[1] // top
    return period, amp.mean(axis=-1)[:, top]        # (k,), (B, k)


# ----------------------------- ScaleGraphBlock fwd ----------------------------
def scale_graph_block(x, params):
    B, T, N = x.shape
    scale_list, scale_weight = fft_for_period(x, TOP_K)
    scales = [int(s) for s in scale_list]
    lengths = [((T + s - 1) // s) * s for s in scales]
    max_len = max(lengths)
    w_soft = jax.nn.softmax(scale_weight, axis=1)          # (B, k)

    # per-scale block-diagonal additive attention masks (host-side constants)
    masks = []
    for s, L in zip(scales, lengths):
        seg = np.arange(L) // s
        masks.append(jnp.asarray(
            np.where(seg[:, None] == seg[None, :], 0.0, NEG_INF).astype(np.float32)))

    ops = []
    for i in range(TOP_K):
        ops += [params["gconv"][i][n] for n in GC_ORDER]
    ops += [params["att"][n] for n in ATT_ORDER]
    ops += masks

    def bcast(a):
        z = (0,) * a.ndim
        return pl.BlockSpec(a.shape, lambda b, _z=z: _z)

    in_specs = ([pl.BlockSpec(memory_space=pltpu.MemorySpace.SMEM),
                 pl.BlockSpec((1, T, N), lambda b: (b, 0, 0))]
                + [bcast(a) for a in ops])

    return pl.pallas_call(
        _make_fused_kernel(scales),
        grid=(B,),
        in_specs=in_specs,
        out_specs=pl.BlockSpec((1, T, N), lambda b: (b, 0, 0)),
        out_shape=jax.ShapeDtypeStruct((B, T, N), x.dtype),
        scratch_shapes=[pltpu.VMEM((max_len, N), jnp.float32)],
        compiler_params=pltpu.CompilerParams(dimension_semantics=("parallel",)),
    )(w_soft, x, *ops)


# ------------------------------ parameter init --------------------------------
def init_params(key):
    V, C, S, T, N = C_OUT, CONV_CH, SKIP_CH, SEQ_LEN, D_MODEL
    K = N - V + 1
    keys = iter(jax.random.split(key, 64))

    def nrm(shape, scale=0.1):
        return np.asarray(scale * jax.random.normal(next(keys), shape),
                          dtype=np.float32)

    # ---- Attention_Block params (QKV fused host-side) ----
    att = {}
    wq, bq = nrm((N, N)), nrm((1, N), 0.01)
    wk, bk = nrm((N, N)), nrm((1, N), 0.01)
    wv, bv = nrm((N, N)), nrm((1, N), 0.01)
    att["wqkv"] = jnp.asarray(np.concatenate([wq, wk, wv], axis=1))     # (N, 3N)
    att["bqkv"] = jnp.asarray(np.concatenate([bq, bk, bv], axis=1))     # (1, 3N)
    att["wo"] = jnp.asarray(nrm((N, N)))
    att["bo"] = jnp.asarray(nrm((1, N), 0.01))
    att["wc1"] = jnp.asarray(nrm((N, D_FF)))
    att["bc1"] = jnp.asarray(nrm((1, D_FF), 0.01))
    att["wc2"] = jnp.asarray(nrm((D_FF, N)))
    att["bc2"] = jnp.asarray(nrm((1, N), 0.01))
    for g, b in [("g1", "be1"), ("g2", "be2"), ("go", "beo")]:
        att[g] = jnp.ones((1, N), jnp.float32)
        att[b] = jnp.zeros((1, N), jnp.float32)

    # ---- GraphBlock params, folded host-side into dense matmul operands ----
    gconv = []
    for _ in range(TOP_K):
        nv1 = nrm((V, NODE_DIM), 1.0)
        nv2 = nrm((NODE_DIM, V), 1.0)
        wstart = nrm((C, K));  bstart = nrm((C,), 0.01)
        wmlp = nrm((S, (GCN_DEPTH + 1) * C));  bmlp = nrm((S,), 0.01)
        wend = nrm((T, S, T));  bend = nrm((T,), 0.01)
        wlin = nrm((N, V));  blin = nrm((N,), 0.01)

        # adjacency (parameter-derived constant): softmax(relu(nv1@nv2)) + I, row-norm
        rel = np.maximum(nv1 @ nv2, 0.0)
        e = np.exp(rel - rel.max(axis=1, keepdims=True))
        adp = e / e.sum(axis=1, keepdims=True)
        adj = adp + np.eye(V, dtype=np.float32)
        a = adj / adj.sum(axis=1, keepdims=True)                       # (V, V)

        # mixprop propagation matrices: h_d = P_d @ h_0 (along node axis)
        P = [np.eye(V, dtype=np.float32)]
        for _d in range(GCN_DEPTH):
            P.append(PROP_ALPHA * np.eye(V, dtype=np.float32)
                     + (1.0 - PROP_ALPHA) * a @ P[-1])

        # banded start_conv: h0[c, w, t] = sum_n band[c, n, w] * x[t, n]
        band = np.zeros((C, N, V), np.float32)
        for w_node in range(V):
            band[:, w_node:w_node + K, w_node] = wstart

        # fold start_conv + propagation + 1x1 mlp into one (N, S*V) matmul
        prop = np.concatenate(
            [np.einsum("cnw,vw->cnv", band, Pd) for Pd in P], axis=0)  # (3C, N, V)
        wg = np.einsum("sc,cnv->nsv", wmlp, prop).reshape(N, S * V)    # (N, S*V)
        rs = np.stack([Pd.sum(axis=1) for Pd in P], axis=0)            # (gdep+1, V)
        bcat = (np.repeat(bstart[None, :], GCN_DEPTH + 1, axis=0)[:, :, None]
                * rs[:, None, :]).reshape((GCN_DEPTH + 1) * C, V)      # (3C, V)
        bg = (wmlp @ bcat + bmlp[:, None]).reshape(1, S * V)           # (1, S*V)

        wend_s = np.ascontiguousarray(np.transpose(wend, (1, 0, 2)))   # (S, T, T)
        wlinT = np.ascontiguousarray(wlin.T)                           # (V, N)
        # end_conv bias + linear bias folded into a dense (T, N) bias
        ybias = (bend[:, None] * wlin.sum(axis=1)[None, :]
                 + blin[None, :]).astype(np.float32)                   # (T, N)

        gconv.append({
            "wg": jnp.asarray(wg), "bg": jnp.asarray(bg),
            "wend_s": jnp.asarray(wend_s), "wlinT": jnp.asarray(wlinT),
            "ybias": jnp.asarray(ybias),
            "g": jnp.ones((1, N), jnp.float32),
            "b": jnp.zeros((1, N), jnp.float32),
        })
    return {"att": att, "gconv": gconv}


# ----------------------------------- main -------------------------------------
if __name__ == "__main__":
    key = jax.random.PRNGKey(0)
    pkey, xkey = jax.random.split(key)
    params = init_params(pkey)
    x = jax.random.normal(xkey, (2, SEQ_LEN, D_MODEL), dtype=jnp.float32)

    out = scale_graph_block(x, params)
    out = jax.block_until_ready(out)

    assert out.shape == (2, SEQ_LEN, D_MODEL)
    assert bool(jnp.all(jnp.isfinite(out)))
    print("KERNEL_OK")
</pallas_src>

<mosaic_0001>
module attributes {stable_mosaic.version = 11 : i64} {
  func.func @kernel(%arg0: i32, %arg1: memref<2x2xf32, #tpu.memory_space<smem>>, %arg2: memref<1x16x32xf32, #tpu.memory_space<vmem>>, %arg3: memref<32x64xf32, #tpu.memory_space<vmem>>, %arg4: memref<1x64xf32, #tpu.memory_space<vmem>>, %arg5: memref<8x16x16xf32, #tpu.memory_space<vmem>>, %arg6: memref<8x32xf32, #tpu.memory_space<vmem>>, %arg7: memref<16x32xf32, #tpu.memory_space<vmem>>, %arg8: memref<1x32xf32, #tpu.memory_space<vmem>>, %arg9: memref<1x32xf32, #tpu.memory_space<vmem>>, %arg10: memref<32x64xf32, #tpu.memory_space<vmem>>, %arg11: memref<1x64xf32, #tpu.memory_space<vmem>>, %arg12: memref<8x16x16xf32, #tpu.memory_space<vmem>>, %arg13: memref<8x32xf32, #tpu.memory_space<vmem>>, %arg14: memref<16x32xf32, #tpu.memory_space<vmem>>, %arg15: memref<1x32xf32, #tpu.memory_space<vmem>>, %arg16: memref<1x32xf32, #tpu.memory_space<vmem>>, %arg17: memref<32x96xf32, #tpu.memory_space<vmem>>, %arg18: memref<1x96xf32, #tpu.memory_space<vmem>>, %arg19: memref<32x32xf32, #tpu.memory_space<vmem>>, %arg20: memref<1x32xf32, #tpu.memory_space<vmem>>, %arg21: memref<1x32xf32, #tpu.memory_space<vmem>>, %arg22: memref<1x32xf32, #tpu.memory_space<vmem>>, %arg23: memref<32x32xf32, #tpu.memory_space<vmem>>, %arg24: memref<1x32xf32, #tpu.memory_space<vmem>>, %arg25: memref<32x32xf32, #tpu.memory_space<vmem>>, %arg26: memref<1x32xf32, #tpu.memory_space<vmem>>, %arg27: memref<1x32xf32, #tpu.memory_space<vmem>>, %arg28: memref<1x32xf32, #tpu.memory_space<vmem>>, %arg29: memref<1x32xf32, #tpu.memory_space<vmem>>, %arg30: memref<1x32xf32, #tpu.memory_space<vmem>>, %arg31: memref<16x16xf32, #tpu.memory_space<vmem>>, %arg32: memref<16x16xf32, #tpu.memory_space<vmem>>, %arg33: memref<1x16x32xf32, #tpu.memory_space<vmem>>, %arg34: memref<16x32xf32, #tpu.memory_space<vmem>>) attributes {dimension_semantics = [#tpu.dimension_semantics<parallel>], iteration_bounds = array<i64: 2>, scalar_prefetch = 0 : i64, scratch_operands = 1 : i64, tpu.core_type = #tpu.core_type<tc>, window_params = [{transform_indices = @transform_0, window_bounds = array<i64: 2, 2>}, {transform_indices = @transform_1, window_bounds = array<i64: 1, 16, 32>}, {pipeline_mode = #tpu.pipeline_mode<synchronous>, transform_indices = @transform_2, window_bounds = array<i64: 32, 64>}, {pipeline_mode = #tpu.pipeline_mode<synchronous>, transform_indices = @transform_3, window_bounds = array<i64: 1, 64>}, {pipeline_mode = #tpu.pipeline_mode<synchronous>, transform_indices = @transform_4, window_bounds = array<i64: 8, 16, 16>}, {pipeline_mode = #tpu.pipeline_mode<synchronous>, transform_indices = @transform_5, window_bounds = array<i64: 8, 32>}, {pipeline_mode = #tpu.pipeline_mode<synchronous>, transform_indices = @transform_6, window_bounds = array<i64: 16, 32>}, {pipeline_mode = #tpu.pipeline_mode<synchronous>, transform_indices = @transform_7, window_bounds = array<i64: 1, 32>}, {pipeline_mode = #tpu.pipeline_mode<synchronous>, transform_indices = @transform_8, window_bounds = array<i64: 1, 32>}, {pipeline_mode = #tpu.pipeline_mode<synchronous>, transform_indices = @transform_9, window_bounds = array<i64: 32, 64>}, {pipeline_mode = #tpu.pipeline_mode<synchronous>, transform_indices = @transform_10, window_bounds = array<i64: 1, 64>}, {pipeline_mode = #tpu.pipeline_mode<synchronous>, transform_indices = @transform_11, window_bounds = array<i64: 8, 16, 16>}, {pipeline_mode = #tpu.pipeline_mode<synchronous>, transform_indices = @transform_12, window_bounds = array<i64: 8, 32>}, {pipeline_mode = #tpu.pipeline_mode<synchronous>, transform_indices = @transform_13, window_bounds = array<i64: 16, 32>}, {pipeline_mode = #tpu.pipeline_mode<synchronous>, transform_indices = @transform_14, window_bounds = array<i64: 1, 32>}, {pipeline_mode = #tpu.pipeline_mode<synchronous>, transform_indices = @transform_15, window_bounds = array<i64: 1, 32>}, {pipeline_mode = #tpu.pipeline_mode<synchronous>, transform_indices = @transform_16, window_bounds = array<i64: 32, 96>}, {pipeline_mode = #tpu.pipeline_mode<synchronous>, transform_indices = @transform_17, window_bounds = array<i64: 1, 96>}, {pipeline_mode = #tpu.pipeline_mode<synchronous>, transform_indices = @transform_18, window_bounds = array<i64: 32, 32>}, {pipeline_mode = #tpu.pipeline_mode<synchronous>, transform_indices = @transform_19, window_bounds = array<i64: 1, 32>}, {pipeline_mode = #tpu.pipeline_mode<synchronous>, transform_indices = @transform_20, window_bounds = array<i64: 1, 32>}, {pipeline_mode = #tpu.pipeline_mode<synchronous>, transform_indices = @transform_21, window_bounds = array<i64: 1, 32>}, {pipeline_mode = #tpu.pipeline_mode<synchronous>, transform_indices = @transform_22, window_bounds = array<i64: 32, 32>}, {pipeline_mode = #tpu.pipeline_mode<synchronous>, transform_indices = @transform_23, window_bounds = array<i64: 1, 32>}, {pipeline_mode = #tpu.pipeline_mode<synchronous>, transform_indices = @transform_24, window_bounds = array<i64: 32, 32>}, {pipeline_mode = #tpu.pipeline_mode<synchronous>, transform_indices = @transform_25, window_bounds = array<i64: 1, 32>}, {pipeline_mode = #tpu.pipeline_mode<synchronous>, transform_indices = @transform_26, window_bounds = array<i64: 1, 32>}, {pipeline_mode = #tpu.pipeline_mode<synchronous>, transform_indices = @transform_27, window_bounds = array<i64: 1, 32>}, {pipeline_mode = #tpu.pipeline_mode<synchronous>, transform_indices = @transform_28, window_bounds = array<i64: 1, 32>}, {pipeline_mode = #tpu.pipeline_mode<synchronous>, transform_indices = @transform_29, window_bounds = array<i64: 1, 32>}, {pipeline_mode = #tpu.pipeline_mode<synchronous>, transform_indices = @transform_30, window_bounds = array<i64: 16, 16>}, {pipeline_mode = #tpu.pipeline_mode<synchronous>, transform_indices = @transform_31, window_bounds = array<i64: 16, 16>}, {transform_indices = @transform_32, window_bounds = array<i64: 1, 16, 32>}]} {
    %c0 = arith.constant 0 : index
    %c0_0 = arith.constant 0 : index
    %c0_1 = arith.constant 0 : index
    %0 = vector.load %arg2[%c0, %c0_0, %c0_1] : memref<1x16x32xf32, #tpu.memory_space<vmem>>, vector<1x16x32xf32>
    %1 = vector.shape_cast %0 : vector<1x16x32xf32> to vector<16x32xf32>
    %cst = arith.constant 0.000000e+00 : f32
    %2 = vector.broadcast %cst : f32 to vector<16x32xf32>
    %c0_2 = arith.constant 0 : index
    %c0_3 = arith.constant 0 : index
    %3 = vector.load %arg3[%c0_2, %c0_3] : memref<32x64xf32, #tpu.memory_space<vmem>>, vector<32x64xf32>
    %cst_4 = arith.constant dense<0.000000e+00> : vector<16x64xf32>
    %4 = tpu.matmul %1, %3, %cst_4 {dimension_numbers = #tpu.dot_dimension_numbers<[1], [0], [0], [1], [0, 0, 1, 1], [], []>} : vector<16x32xf32>, vector<32x64xf32>, vector<16x64xf32> -> vector<16x64xf32>
    %c0_5 = arith.constant 0 : index
    %c0_6 = arith.constant 0 : index
    %5 = vector.load %arg4[%c0_5, %c0_6] : memref<1x64xf32, #tpu.memory_space<vmem>>, vector<1x64xf32>
    %6 = vector.broadcast %5 : vector<1x64xf32> to vector<16x64xf32>
    %7 = arith.addf %4, %6 : vector<16x64xf32>
    %cst_7 = arith.constant 5.000000e-01 : f32
    %8 = vector.broadcast %cst_7 : f32 to vector<16x64xf32>
    %9 = arith.mulf %8, %7 : vector<16x64xf32>
    %cst_8 = arith.constant 4.471500e-02 : f32
    %10 = vector.broadcast %cst_8 : f32 to vector<16x64xf32>
    %11 = arith.mulf %10, %7 : vector<16x64xf32>
    %12 = arith.mulf %11, %7 : vector<16x64xf32>
    %13 = arith.mulf %12, %7 : vector<16x64xf32>
    %14 = arith.addf %7, %13 : vector<16x64xf32>
    %cst_9 = arith.constant 0.797884583 : f32
    %15 = vector.broadcast %cst_9 : f32 to vector<16x64xf32>
    %16 = arith.mulf %15, %14 : vector<16x64xf32>
    %17 = math.tanh %16 : vector<16x64xf32>
    %cst_10 = arith.constant 1.000000e+00 : f32
    %18 = vector.broadcast %cst_10 : f32 to vector<16x64xf32>
    %19 = arith.addf %18, %17 : vector<16x64xf32>
    %20 = arith.mulf %9, %19 : vector<16x64xf32>
    %c0_11 = arith.constant 0 : index
    %c0_12 = arith.constant 0 : index
    %c0_13 = arith.constant 0 : index
    %21 = vector.load %arg5[%c0_11, %c0_12, %c0_13] : memref<8x16x16xf32, #tpu.memory_space<vmem>>, vector<8x16x16xf32>
    %cst_14 = arith.constant 0.000000e+00 : f32
    %22 = vector.broadcast %cst_14 : f32 to vector<16x8xf32>
    %23 = vector.extract_strided_slice %21 {offsets = [0, 0, 0], sizes = [1, 16, 16], strides = [1, 1, 1]} : vector<8x16x16xf32> to vector<1x16x16xf32>
    %24 = vector.shape_cast %23 : vector<1x16x16xf32> to vector<16x16xf32>
    %25 = vector.extract_strided_slice %20 {offsets = [0, 0], sizes = [16, 8], strides = [1, 1]} : vector<16x64xf32> to vector<16x8xf32>
    %cst_15 = arith.constant dense<0.000000e+00> : vector<16x8xf32>
    %26 = tpu.matmul %24, %25, %cst_15 {dimension_numbers = #tpu.dot_dimension_numbers<[1], [0], [0], [1], [0, 0, 1, 1], [], []>} : vector<16x16xf32>, vector<16x8xf32>, vector<16x8xf32> -> vector<16x8xf32>
    %27 = arith.addf %22, %26 : vector<16x8xf32>
    %28 = vector.extract_strided_slice %21 {offsets = [1, 0, 0], sizes = [1, 16, 16], strides = [1, 1, 1]} : vector<8x16x16xf32> to vector<1x16x16xf32>
    %29 = vector.shape_cast %28 : vector<1x16x16xf32> to vector<16x16xf32>
    %30 = vector.extract_strided_slice %20 {offsets = [0, 8], sizes = [16, 8], strides = [1, 1]} : vector<16x64xf32> to vector<16x8xf32>
    %cst_16 = arith.constant dense<0.000000e+00> : vector<16x8xf32>
    %31 = tpu.matmul %29, %30, %cst_16 {dimension_numbers = #tpu.dot_dimension_numbers<[1], [0], [0], [1], [0, 0, 1, 1], [], []>} : vector<16x16xf32>, vector<16x8xf32>, vector<16x8xf32> -> vector<16x8xf32>
    %32 = arith.addf %27, %31 : vector<16x8xf32>
    %33 = vector.extract_strided_slice %21 {offsets = [2, 0, 0], sizes = [1, 16, 16], strides = [1, 1, 1]} : vector<8x16x16xf32> to vector<1x16x16xf32>
    %34 = vector.shape_cast %33 : vector<1x16x16xf32> to vector<16x16xf32>
    %35 = vector.extract_strided_slice %20 {offsets = [0, 16], sizes = [16, 8], strides = [1, 1]} : vector<16x64xf32> to vector<16x8xf32>
    %cst_17 = arith.constant dense<0.000000e+00> : vector<16x8xf32>
    %36 = tpu.matmul %34, %35, %cst_17 {dimension_numbers = #tpu.dot_dimension_numbers<[1], [0], [0], [1], [0, 0, 1, 1], [], []>} : vector<16x16xf32>, vector<16x8xf32>, vector<16x8xf32> -> vector<16x8xf32>
    %37 = arith.addf %32, %36 : vector<16x8xf32>
    %38 = vector.extract_strided_slice %21 {offsets = [3, 0, 0], sizes = [1, 16, 16], strides = [1, 1, 1]} : vector<8x16x16xf32> to vector<1x16x16xf32>
    %39 = vector.shape_cast %38 : vector<1x16x16xf32> to vector<16x16xf32>
    %40 = vector.extract_strided_slice %20 {offsets = [0, 24], sizes = [16, 8], strides = [1, 1]} : vector<16x64xf32> to vector<16x8xf32>
    %cst_18 = arith.constant dense<0.000000e+00> : vector<16x8xf32>
    %41 = tpu.matmul %39, %40, %cst_18 {dimension_numbers = #tpu.dot_dimension_numbers<[1], [0], [0], [1], [0, 0, 1, 1], [], []>} : vector<16x16xf32>, vector<16x8xf32>, vector<16x8xf32> -> vector<16x8xf32>
    %42 = arith.addf %37, %41 : vector<16x8xf32>
    %43 = vector.extract_strided_slice %21 {offsets = [4, 0, 0], sizes = [1, 16, 16], strides = [1, 1, 1]} : vector<8x16x16xf32> to vector<1x16x16xf32>
    %44 = vector.shape_cast %43 : vector<1x16x16xf32> to vector<16x16xf32>
    %45 = vector.extract_strided_slice %20 {offsets = [0, 32], sizes = [16, 8], strides = [1, 1]} : vector<16x64xf32> to vector<16x8xf32>
    %cst_19 = arith.constant dense<0.000000e+00> : vector<16x8xf32>
    %46 = tpu.matmul %44, %45, %cst_19 {dimension_numbers = #tpu.dot_dimension_numbers<[1], [0], [0], [1], [0, 0, 1, 1], [], []>} : vector<16x16xf32>, vector<16x8xf32>, vector<16x8xf32> -> vector<16x8xf32>
    %47 = arith.addf %42, %46 : vector<16x8xf32>
    %48 = vector.extract_strided_slice %21 {offsets = [5, 0, 0], sizes = [1, 16, 16], strides = [1, 1, 1]} : vector<8x16x16xf32> to vector<1x16x16xf32>
    %49 = vector.shape_cast %48 : vector<1x16x16xf32> to vector<16x16xf32>
    %50 = vector.extract_strided_slice %20 {offsets = [0, 40], sizes = [16, 8], strides = [1, 1]} : vector<16x64xf32> to vector<16x8xf32>
    %cst_20 = arith.constant dense<0.000000e+00> : vector<16x8xf32>
    %51 = tpu.matmul %49, %50, %cst_20 {dimension_numbers = #tpu.dot_dimension_numbers<[1], [0], [0], [1], [0, 0, 1, 1], [], []>} : vector<16x16xf32>, vector<16x8xf32>, vector<16x8xf32> -> vector<16x8xf32>
    %52 = arith.addf %47, %51 : vector<16x8xf32>
    %53 = vector.extract_strided_slice %21 {offsets = [6, 0, 0], sizes = [1, 16, 16], strides = [1, 1, 1]} : vector<8x16x16xf32> to vector<1x16x16xf32>
    %54 = vector.shape_cast %53 : vector<1x16x16xf32> to vector<16x16xf32>
    %55 = vector.extract_strided_slice %20 {offsets = [0, 48], sizes = [16, 8], strides = [1, 1]} : vector<16x64xf32> to vector<16x8xf32>
    %cst_21 = arith.constant dense<0.000000e+00> : vector<16x8xf32>
    %56 = tpu.matmul %54, %55, %cst_21 {dimension_numbers = #tpu.dot_dimension_numbers<[1], [0], [0], [1], [0, 0, 1, 1], [], []>} : vector<16x16xf32>, vector<16x8xf32>, vector<16x8xf32> -> vector<16x8xf32>
    %57 = arith.addf %52, %56 : vector<16x8xf32>
    %58 = vector.extract_strided_slice %21 {offsets = [7, 0, 0], sizes = [1, 16, 16], strides = [1, 1, 1]} : vector<8x16x16xf32> to vector<1x16x16xf32>
    %59 = vector.shape_cast %58 : vector<1x16x16xf32> to vector<16x16xf32>
    %60 = vector.extract_strided_slice %20 {offsets = [0, 56], sizes = [16, 8], strides = [1, 1]} : vector<16x64xf32> to vector<16x8xf32>
    %cst_22 = arith.constant dense<0.000000e+00> : vector<16x8xf32>
    %61 = tpu.matmul %59, %60, %cst_22 {dimension_numbers = #tpu.dot_dimension_numbers<[1], [0], [0], [1], [0, 0, 1, 1], [], []>} : vector<16x16xf32>, vector<16x8xf32>, vector<16x8xf32> -> vector<16x8xf32>
    %62 = arith.addf %57, %61 : vector<16x8xf32>
    %c0_23 = arith.constant 0 : index
    %c0_24 = arith.constant 0 : index
    %63 = vector.load %arg6[%c0_23, %c0_24] : memref<8x32xf32, #tpu.memory_space<vmem>>, vector<8x32xf32>
    %cst_25 = arith.constant dense<0.000000e+00> : vector<16x32xf32>
    %64 = tpu.matmul %62, %63, %cst_25 {dimension_numbers = #tpu.dot_dimension_numbers<[1], [0], [0], [1], [0, 0, 1, 1], [], []>} : vector<16x8xf32>, vector<8x32xf32>, vector<16x32xf32> -> vector<16x32xf32>
    %c0_26 = arith.constant 0 : index
    %c0_27 = arith.constant 0 : index
    %65 = vector.load %arg7[%c0_26, %c0_27] : memref<16x32xf32, #tpu.memory_space<vmem>>, vector<16x32xf32>
    %66 = arith.addf %64, %65 : vector<16x32xf32>
    %67 = arith.addf %1, %66 : vector<16x32xf32>
    %c0_28 = arith.constant 0 : index
    %c0_29 = arith.constant 0 : index
    %68 = vector.load %arg8[%c0_28, %c0_29] : memref<1x32xf32, #tpu.memory_space<vmem>>, vector<1x32xf32>
    %c0_30 = arith.constant 0 : index
    %c0_31 = arith.constant 0 : index
    %69 = vector.load %arg9[%c0_30, %c0_31] : memref<1x32xf32, #tpu.memory_space<vmem>>, vector<1x32xf32>
    %cst_32 = arith.constant dense<0.000000e+00> : vector<16xf32>
    %70 = vector.multi_reduction <add>, %67, %cst_32 [1] : vector<16x32xf32> to vector<16xf32>
    %71 = vector.shape_cast %70 : vector<16xf32> to vector<16x1xf32>
    %cst_33 = arith.constant 3.200000e+01 : f32
    %72 = vector.broadcast %cst_33 : f32 to vector<16x1xf32>
    %73 = arith.divf %71, %72 : vector<16x1xf32>
    %74 = vector.broadcast %73 : vector<16x1xf32> to vector<16x32xf32>
    %75 = arith.subf %67, %74 : vector<16x32xf32>
    %76 = arith.mulf %75, %75 : vector<16x32xf32>
    %cst_34 = arith.constant dense<0.000000e+00> : vector<16xf32>
    %77 = vector.multi_reduction <add>, %76, %cst_34 [1] : vector<16x32xf32> to vector<16xf32>
    %78 = vector.shape_cast %77 : vector<16xf32> to vector<16x1xf32>
    %cst_35 = arith.constant 3.200000e+01 : f32
    %79 = vector.broadcast %cst_35 : f32 to vector<16x1xf32>
    %80 = arith.divf %78, %79 : vector<16x1xf32>
    %81 = vector.broadcast %73 : vector<16x1xf32> to vector<16x32xf32>
    %82 = arith.subf %67, %81 : vector<16x32xf32>
    %cst_36 = arith.constant 9.99999974E-6 : f32
    %83 = vector.broadcast %cst_36 : f32 to vector<16x1xf32>
    %84 = arith.addf %80, %83 : vector<16x1xf32>
    %85 = math.rsqrt %84 : vector<16x1xf32>
    %86 = vector.broadcast %85 : vector<16x1xf32> to vector<16x32xf32>
    %87 = arith.mulf %82, %86 : vector<16x32xf32>
    %88 = vector.broadcast %68 : vector<1x32xf32> to vector<16x32xf32>
    %89 = arith.mulf %87, %88 : vector<16x32xf32>
    %90 = vector.broadcast %69 : vector<1x32xf32> to vector<16x32xf32>
    %91 = arith.addf %89, %90 : vector<16x32xf32>
    %c0_37 = arith.constant 0 : index
    %c0_38 = arith.constant 0 : index
    %92 = vector.load %arg31[%c0_37, %c0_38] : memref<16x16xf32, #tpu.memory_space<vmem>>, vector<16x16xf32>
    %c0_39 = arith.constant 0 : index
    %c0_40 = arith.constant 0 : index
    %93 = vector.load %arg17[%c0_39, %c0_40] : memref<32x96xf32, #tpu.memory_space<vmem>>, vector<32x96xf32>
    %cst_41 = arith.constant dense<0.000000e+00> : vector<16x96xf32>
    %94 = tpu.matmul %91, %93, %cst_41 {dimension_numbers = #tpu.dot_dimension_numbers<[1], [0], [0], [1], [0, 0, 1, 1], [], []>} : vector<16x32xf32>, vector<32x96xf32>, vector<16x96xf32> -> vector<16x96xf32>
    %c0_42 = arith.constant 0 : index
    %c0_43 = arith.constant 0 : index
    %95 = vector.load %arg18[%c0_42, %c0_43] : memref<1x96xf32, #tpu.memory_space<vmem>>, vector<1x96xf32>
    %96 = vector.broadcast %95 : vector<1x96xf32> to vector<16x96xf32>
    %97 = arith.addf %94, %96 : vector<16x96xf32>
    %c0_44 = arith.constant 0 : index
    %c0_45 = arith.constant 0 : index
    %98 = vector.load %arg19[%c0_44, %c0_45] : memref<32x32xf32, #tpu.memory_space<vmem>>, vector<32x32xf32>
    %cst_46 = arith.constant 0.000000e+00 : f32
    %99 = vector.broadcast %cst_46 : f32 to vector<16x32xf32>
    %100 = vector.extract_strided_slice %97 {offsets = [0, 0], sizes = [16, 8], strides = [1, 1]} : vector<16x96xf32> to vector<16x8xf32>
    %101 = vector.extract_strided_slice %97 {offsets = [0, 32], sizes = [16, 8], strides = [1, 1]} : vector<16x96xf32> to vector<16x8xf32>
    %102 = vector.extract_strided_slice %97 {offsets = [0, 64], sizes = [16, 8], strides = [1, 1]} : vector<16x96xf32> to vector<16x8xf32>
    %103 = tpu.transpose %101, [1, 0] : vector<16x8xf32> -> vector<8x16xf32>
    %cst_47 = arith.constant dense<0.000000e+00> : vector<16x16xf32>
    %104 = tpu.matmul %100, %103, %cst_47 {dimension_numbers = #tpu.dot_dimension_numbers<[1], [0], [0], [1], [0, 0, 1, 1], [], []>} : vector<16x8xf32>, vector<8x16xf32>, vector<16x16xf32> -> vector<16x16xf32>
    %cst_48 = arith.constant 0.353553385 : f32
    %105 = vector.broadcast %cst_48 : f32 to vector<16x16xf32>
    %106 = arith.mulf %104, %105 : vector<16x16xf32>
    %107 = arith.addf %106, %92 : vector<16x16xf32>
    %cst_49 = arith.constant dense<0xFF800000> : vector<16xf32>
    %108 = vector.multi_reduction <maximumf>, %107, %cst_49 [1] : vector<16x16xf32> to vector<16xf32>
    %109 = vector.shape_cast %108 : vector<16xf32> to vector<16x1xf32>
    %110 = vector.broadcast %109 : vector<16x1xf32> to vector<16x16xf32>
    %111 = arith.subf %107, %110 : vector<16x16xf32>
    %112 = math.exp %111 : vector<16x16xf32>
    %cst_50 = arith.constant dense<0.000000e+00> : vector<16xf32>
    %113 = vector.multi_reduction <add>, %112, %cst_50 [1] : vector<16x16xf32> to vector<16xf32>
    %114 = vector.shape_cast %113 : vector<16xf32> to vector<16x1xf32>
    %115 = vector.broadcast %114 : vector<16x1xf32> to vector<16x16xf32>
    %116 = arith.divf %112, %115 : vector<16x16xf32>
    %cst_51 = arith.constant dense<0.000000e+00> : vector<16x8xf32>
    %117 = tpu.matmul %116, %102, %cst_51 {dimension_numbers = #tpu.dot_dimension_numbers<[1], [0], [0], [1], [0, 0, 1, 1], [], []>} : vector<16x16xf32>, vector<16x8xf32>, vector<16x8xf32> -> vector<16x8xf32>
    %118 = vector.extract_strided_slice %98 {offsets = [0, 0], sizes = [8, 32], strides = [1, 1]} : vector<32x32xf32> to vector<8x32xf32>
    %cst_52 = arith.constant dense<0.000000e+00> : vector<16x32xf32>
    %119 = tpu.matmul %117, %118, %cst_52 {dimension_numbers = #tpu.dot_dimension_numbers<[1], [0], [0], [1], [0, 0, 1, 1], [], []>} : vector<16x8xf32>, vector<8x32xf32>, vector<16x32xf32> -> vector<16x32xf32>
    %120 = arith.addf %99, %119 : vector<16x32xf32>
    %121 = vector.extract_strided_slice %97 {offsets = [0, 8], sizes = [16, 8], strides = [1, 1]} : vector<16x96xf32> to vector<16x8xf32>
    %122 = vector.extract_strided_slice %97 {offsets = [0, 40], sizes = [16, 8], strides = [1, 1]} : vector<16x96xf32> to vector<16x8xf32>
    %123 = vector.extract_strided_slice %97 {offsets = [0, 72], sizes = [16, 8], strides = [1, 1]} : vector<16x96xf32> to vector<16x8xf32>
    %124 = tpu.transpose %122, [1, 0] : vector<16x8xf32> -> vector<8x16xf32>
    %cst_53 = arith.constant dense<0.000000e+00> : vector<16x16xf32>
    %125 = tpu.matmul %121, %124, %cst_53 {dimension_numbers = #tpu.dot_dimension_numbers<[1], [0], [0], [1], [0, 0, 1, 1], [], []>} : vector<16x8xf32>, vector<8x16xf32>, vector<16x16xf32> -> vector<16x16xf32>
    %cst_54 = arith.constant 0.353553385 : f32
    %126 = vector.broadcast %cst_54 : f32 to vector<16x16xf32>
    %127 = arith.mulf %125, %126 : vector<16x16xf32>
    %128 = arith.addf %127, %92 : vector<16x16xf32>
    %cst_55 = arith.constant dense<0xFF800000> : vector<16xf32>
    %129 = vector.multi_reduction <maximumf>, %128, %cst_55 [1] : vector<16x16xf32> to vector<16xf32>
    %130 = vector.shape_cast %129 : vector<16xf32> to vector<16x1xf32>
    %131 = vector.broadcast %130 : vector<16x1xf32> to vector<16x16xf32>
    %132 = arith.subf %128, %131 : vector<16x16xf32>
    %133 = math.exp %132 : vector<16x16xf32>
    %cst_56 = arith.constant dense<0.000000e+00> : vector<16xf32>
    %134 = vector.multi_reduction <add>, %133, %cst_56 [1] : vector<16x16xf32> to vector<16xf32>
    %135 = vector.shape_cast %134 : vector<16xf32> to vector<16x1xf32>
    %136 = vector.broadcast %135 : vector<16x1xf32> to vector<16x16xf32>
    %137 = arith.divf %133, %136 : vector<16x16xf32>
    %cst_57 = arith.constant dense<0.000000e+00> : vector<16x8xf32>
    %138 = tpu.matmul %137, %123, %cst_57 {dimension_numbers = #tpu.dot_dimension_numbers<[1], [0], [0], [1], [0, 0, 1, 1], [], []>} : vector<16x16xf32>, vector<16x8xf32>, vector<16x8xf32> -> vector<16x8xf32>
    %139 = vector.extract_strided_slice %98 {offsets = [8, 0], sizes = [8, 32], strides = [1, 1]} : vector<32x32xf32> to vector<8x32xf32>
    %cst_58 = arith.constant dense<0.000000e+00> : vector<16x32xf32>
    %140 = tpu.matmul %138, %139, %cst_58 {dimension_numbers = #tpu.dot_dimension_numbers<[1], [0], [0], [1], [0, 0, 1, 1], [], []>} : vector<16x8xf32>, vector<8x32xf32>, vector<16x32xf32> -> vector<16x32xf32>
    %141 = arith.addf %120, %140 : vector<16x32xf32>
    %142 = vector.extract_strided_slice %97 {offsets = [0, 16], sizes = [16, 8], strides = [1, 1]} : vector<16x96xf32> to vector<16x8xf32>
    %143 = vector.extract_strided_slice %97 {offsets = [0, 48], sizes = [16, 8], strides = [1, 1]} : vector<16x96xf32> to vector<16x8xf32>
    %144 = vector.extract_strided_slice %97 {offsets = [0, 80], sizes = [16, 8], strides = [1, 1]} : vector<16x96xf32> to vector<16x8xf32>
    %145 = tpu.transpose %143, [1, 0] : vector<16x8xf32> -> vector<8x16xf32>
    %cst_59 = arith.constant dense<0.000000e+00> : vector<16x16xf32>
    %146 = tpu.matmul %142, %145, %cst_59 {dimension_numbers = #tpu.dot_dimension_numbers<[1], [0], [0], [1], [0, 0, 1, 1], [], []>} : vector<16x8xf32>, vector<8x16xf32>, vector<16x16xf32> -> vector<16x16xf32>
    %cst_60 = arith.constant 0.353553385 : f32
    %147 = vector.broadcast %cst_60 : f32 to vector<16x16xf32>
    %148 = arith.mulf %146, %147 : vector<16x16xf32>
    %149 = arith.addf %148, %92 : vector<16x16xf32>
    %cst_61 = arith.constant dense<0xFF800000> : vector<16xf32>
    %150 = vector.multi_reduction <maximumf>, %149, %cst_61 [1] : vector<16x16xf32> to vector<16xf32>
    %151 = vector.shape_cast %150 : vector<16xf32> to vector<16x1xf32>
    %152 = vector.broadcast %151 : vector<16x1xf32> to vector<16x16xf32>
    %153 = arith.subf %149, %152 : vector<16x16xf32>
    %154 = math.exp %153 : vector<16x16xf32>
    %cst_62 = arith.constant dense<0.000000e+00> : vector<16xf32>
    %155 = vector.multi_reduction <add>, %154, %cst_62 [1] : vector<16x16xf32> to vector<16xf32>
    %156 = vector.shape_cast %155 : vector<16xf32> to vector<16x1xf32>
    %157 = vector.broadcast %156 : vector<16x1xf32> to vector<16x16xf32>
    %158 = arith.divf %154, %157 : vector<16x16xf32>
    %cst_63 = arith.constant dense<0.000000e+00> : vector<16x8xf32>
    %159 = tpu.matmul %158, %144, %cst_63 {dimension_numbers = #tpu.dot_dimension_numbers<[1], [0], [0], [1], [0, 0, 1, 1], [], []>} : vector<16x16xf32>, vector<16x8xf32>, vector<16x8xf32> -> vector<16x8xf32>
    %160 = vector.extract_strided_slice %98 {offsets = [16, 0], sizes = [8, 32], strides = [1, 1]} : vector<32x32xf32> to vector<8x32xf32>
    %cst_64 = arith.constant dense<0.000000e+00> : vector<16x32xf32>
    %161 = tpu.matmul %159, %160, %cst_64 {dimension_numbers = #tpu.dot_dimension_numbers<[1], [0], [0], [1], [0, 0, 1, 1], [], []>} : vector<16x8xf32>, vector<8x32xf32>, vector<16x32xf32> -> vector<16x32xf32>
    %162 = arith.addf %141, %161 : vector<16x32xf32>
    %163 = vector.extract_strided_slice %97 {offsets = [0, 24], sizes = [16, 8], strides = [1, 1]} : vector<16x96xf32> to vector<16x8xf32>
    %164 = vector.extract_strided_slice %97 {offsets = [0, 56], sizes = [16, 8], strides = [1, 1]} : vector<16x96xf32> to vector<16x8xf32>
    %165 = vector.extract_strided_slice %97 {offsets = [0, 88], sizes = [16, 8], strides = [1, 1]} : vector<16x96xf32> to vector<16x8xf32>
    %166 = tpu.transpose %164, [1, 0] : vector<16x8xf32> -> vector<8x16xf32>
    %cst_65 = arith.constant dense<0.000000e+00> : vector<16x16xf32>
    %167 = tpu.matmul %163, %166, %cst_65 {dimension_numbers = #tpu.dot_dimension_numbers<[1], [0], [0], [1], [0, 0, 1, 1], [], []>} : vector<16x8xf32>, vector<8x16xf32>, vector<16x16xf32> -> vector<16x16xf32>
    %cst_66 = arith.constant 0.353553385 : f32
    %168 = vector.broadcast %cst_66 : f32 to vector<16x16xf32>
    %169 = arith.mulf %167, %168 : vector<16x16xf32>
    %170 = arith.addf %169, %92 : vector<16x16xf32>
    %cst_67 = arith.constant dense<0xFF800000> : vector<16xf32>
    %171 = vector.multi_reduction <maximumf>, %170, %cst_67 [1] : vector<16x16xf32> to vector<16xf32>
    %172 = vector.shape_cast %171 : vector<16xf32> to vector<16x1xf32>
    %173 = vector.broadcast %172 : vector<16x1xf32> to vector<16x16xf32>
    %174 = arith.subf %170, %173 : vector<16x16xf32>
    %175 = math.exp %174 : vector<16x16xf32>
    %cst_68 = arith.constant dense<0.000000e+00> : vector<16xf32>
    %176 = vector.multi_reduction <add>, %175, %cst_68 [1] : vector<16x16xf32> to vector<16xf32>
    %177 = vector.shape_cast %176 : vector<16xf32> to vector<16x1xf32>
    %178 = vector.broadcast %177 : vector<16x1xf32> to vector<16x16xf32>
    %179 = arith.divf %175, %178 : vector<16x16xf32>
    %cst_69 = arith.constant dense<0.000000e+00> : vector<16x8xf32>
    %180 = tpu.matmul %179, %165, %cst_69 {dimension_numbers = #tpu.dot_dimension_numbers<[1], [0], [0], [1], [0, 0, 1, 1], [], []>} : vector<16x16xf32>, vector<16x8xf32>, vector<16x8xf32> -> vector<16x8xf32>
    %181 = vector.extract_strided_slice %98 {offsets = [24, 0], sizes = [8, 32], strides = [1, 1]} : vector<32x32xf32> to vector<8x32xf32>
    %cst_70 = arith.constant dense<0.000000e+00> : vector<16x32xf32>
    %182 = tpu.matmul %180, %181, %cst_70 {dimension_numbers = #tpu.dot_dimension_numbers<[1], [0], [0], [1], [0, 0, 1, 1], [], []>} : vector<16x8xf32>, vector<8x32xf32>, vector<16x32xf32> -> vector<16x32xf32>
    %183 = arith.addf %162, %182 : vector<16x32xf32>
    %c0_71 = arith.constant 0 : index
    %c0_72 = arith.constant 0 : index
    %184 = vector.load %arg20[%c0_71, %c0_72] : memref<1x32xf32, #tpu.memory_space<vmem>>, vector<1x32xf32>
    %185 = vector.broadcast %184 : vector<1x32xf32> to vector<16x32xf32>
    %186 = arith.addf %183, %185 : vector<16x32xf32>
    %187 = arith.addf %91, %186 : vector<16x32xf32>
    %c0_73 = arith.constant 0 : index
    %c0_74 = arith.constant 0 : index
    %188 = vector.load %arg21[%c0_73, %c0_74] : memref<1x32xf32, #tpu.memory_space<vmem>>, vector<1x32xf32>
    %c0_75 = arith.constant 0 : index
    %c0_76 = arith.constant 0 : index
    %189 = vector.load %arg22[%c0_75, %c0_76] : memref<1x32xf32, #tpu.memory_space<vmem>>, vector<1x32xf32>
    %cst_77 = arith.constant dense<0.000000e+00> : vector<16xf32>
    %190 = vector.multi_reduction <add>, %187, %cst_77 [1] : vector<16x32xf32> to vector<16xf32>
    %191 = vector.shape_cast %190 : vector<16xf32> to vector<16x1xf32>
    %cst_78 = arith.constant 3.200000e+01 : f32
    %192 = vector.broadcast %cst_78 : f32 to vector<16x1xf32>
    %193 = arith.divf %191, %192 : vector<16x1xf32>
    %194 = vector.broadcast %193 : vector<16x1xf32> to vector<16x32xf32>
    %195 = arith.subf %187, %194 : vector<16x32xf32>
    %196 = arith.mulf %195, %195 : vector<16x32xf32>
    %cst_79 = arith.constant dense<0.000000e+00> : vector<16xf32>
    %197 = vector.multi_reduction <add>, %196, %cst_79 [1] : vector<16x32xf32> to vector<16xf32>
    %198 = vector.shape_cast %197 : vector<16xf32> to vector<16x1xf32>
    %cst_80 = arith.constant 3.200000e+01 : f32
    %199 = vector.broadcast %cst_80 : f32 to vector<16x1xf32>
    %200 = arith.divf %198, %199 : vector<16x1xf32>
    %201 = vector.broadcast %193 : vector<16x1xf32> to vector<16x32xf32>
    %202 = arith.subf %187, %201 : vector<16x32xf32>
    %cst_81 = arith.constant 9.99999974E-6 : f32
    %203 = vector.broadcast %cst_81 : f32 to vector<16x1xf32>
    %204 = arith.addf %200, %203 : vector<16x1xf32>
    %205 = math.rsqrt %204 : vector<16x1xf32>
    %206 = vector.broadcast %205 : vector<16x1xf32> to vector<16x32xf32>
    %207 = arith.mulf %202, %206 : vector<16x32xf32>
    %208 = vector.broadcast %188 : vector<1x32xf32> to vector<16x32xf32>
    %209 = arith.mulf %207, %208 : vector<16x32xf32>
    %210 = vector.broadcast %189 : vector<1x32xf32> to vector<16x32xf32>
    %211 = arith.addf %209, %210 : vector<16x32xf32>
    %c0_82 = arith.constant 0 : index
    %c0_83 = arith.constant 0 : index
    %212 = vector.load %arg23[%c0_82, %c0_83] : memref<32x32xf32, #tpu.memory_space<vmem>>, vector<32x32xf32>
    %cst_84 = arith.constant dense<0.000000e+00> : vector<16x32xf32>
    %213 = tpu.matmul %211, %212, %cst_84 {dimension_numbers = #tpu.dot_dimension_numbers<[1], [0], [0], [1], [0, 0, 1, 1], [], []>} : vector<16x32xf32>, vector<32x32xf32>, vector<16x32xf32> -> vector<16x32xf32>
    %c0_85 = arith.constant 0 : index
    %c0_86 = arith.constant 0 : index
    %214 = vector.load %arg24[%c0_85, %c0_86] : memref<1x32xf32, #tpu.memory_space<vmem>>, vector<1x32xf32>
    %215 = vector.broadcast %214 : vector<1x32xf32> to vector<16x32xf32>
    %216 = arith.addf %213, %215 : vector<16x32xf32>
    %cst_87 = arith.constant 5.000000e-01 : f32
    %217 = vector.broadcast %cst_87 : f32 to vector<16x32xf32>
    %218 = arith.mulf %217, %216 : vector<16x32xf32>
    %cst_88 = arith.constant 4.471500e-02 : f32
    %219 = vector.broadcast %cst_88 : f32 to vector<16x32xf32>
    %220 = arith.mulf %219, %216 : vector<16x32xf32>
    %221 = arith.mulf %220, %216 : vector<16x32xf32>
    %222 = arith.mulf %221, %216 : vector<16x32xf32>
    %223 = arith.addf %216, %222 : vector<16x32xf32>
    %cst_89 = arith.constant 0.797884583 : f32
    %224 = vector.broadcast %cst_89 : f32 to vector<16x32xf32>
    %225 = arith.mulf %224, %223 : vector<16x32xf32>
    %226 = math.tanh %225 : vector<16x32xf32>
    %cst_90 = arith.constant 1.000000e+00 : f32
    %227 = vector.broadcast %cst_90 : f32 to vector<16x32xf32>
    %228 = arith.addf %227, %226 : vector<16x32xf32>
    %229 = arith.mulf %218, %228 : vector<16x32xf32>
    %c0_91 = arith.constant 0 : index
    %c0_92 = arith.constant 0 : index
    %230 = vector.load %arg25[%c0_91, %c0_92] : memref<32x32xf32, #tpu.memory_space<vmem>>, vector<32x32xf32>
    %cst_93 = arith.constant dense<0.000000e+00> : vector<16x32xf32>
    %231 = tpu.matmul %229, %230, %cst_93 {dimension_numbers = #tpu.dot_dimension_numbers<[1], [0], [0], [1], [0, 0, 1, 1], [], []>} : vector<16x32xf32>, vector<32x32xf32>, vector<16x32xf32> -> vector<16x32xf32>
    %c0_94 = arith.constant 0 : index
    %c0_95 = arith.constant 0 : index
    %232 = vector.load %arg26[%c0_94, %c0_95] : memref<1x32xf32, #tpu.memory_space<vmem>>, vector<1x32xf32>
    %233 = vector.broadcast %232 : vector<1x32xf32> to vector<16x32xf32>
    %234 = arith.addf %231, %233 : vector<16x32xf32>
    %235 = arith.addf %211, %234 : vector<16x32xf32>
    %c0_96 = arith.constant 0 : index
    %c0_97 = arith.constant 0 : index
    %236 = vector.load %arg27[%c0_96, %c0_97] : memref<1x32xf32, #tpu.memory_space<vmem>>, vector<1x32xf32>
    %c0_98 = arith.constant 0 : index
    %c0_99 = arith.constant 0 : index
    %237 = vector.load %arg28[%c0_98, %c0_99] : memref<1x32xf32, #tpu.memory_space<vmem>>, vector<1x32xf32>
    %cst_100 = arith.constant dense<0.000000e+00> : vector<16xf32>
    %238 = vector.multi_reduction <add>, %235, %cst_100 [1] : vector<16x32xf32> to vector<16xf32>
    %239 = vector.shape_cast %238 : vector<16xf32> to vector<16x1xf32>
    %cst_101 = arith.constant 3.200000e+01 : f32
    %240 = vector.broadcast %cst_101 : f32 to vector<16x1xf32>
    %241 = arith.divf %239, %240 : vector<16x1xf32>
    %242 = vector.broadcast %241 : vector<16x1xf32> to vector<16x32xf32>
    %243 = arith.subf %235, %242 : vector<16x32xf32>
    %244 = arith.mulf %243, %243 : vector<16x32xf32>
    %cst_102 = arith.constant dense<0.000000e+00> : vector<16xf32>
    %245 = vector.multi_reduction <add>, %244, %cst_102 [1] : vector<16x32xf32> to vector<16xf32>
    %246 = vector.shape_cast %245 : vector<16xf32> to vector<16x1xf32>
    %cst_103 = arith.constant 3.200000e+01 : f32
    %247 = vector.broadcast %cst_103 : f32 to vector<16x1xf32>
    %248 = arith.divf %246, %247 : vector<16x1xf32>
    %249 = vector.broadcast %241 : vector<16x1xf32> to vector<16x32xf32>
    %250 = arith.subf %235, %249 : vector<16x32xf32>
    %cst_104 = arith.constant 9.99999974E-6 : f32
    %251 = vector.broadcast %cst_104 : f32 to vector<16x1xf32>
    %252 = arith.addf %248, %251 : vector<16x1xf32>
    %253 = math.rsqrt %252 : vector<16x1xf32>
    %254 = vector.broadcast %253 : vector<16x1xf32> to vector<16x32xf32>
    %255 = arith.mulf %250, %254 : vector<16x32xf32>
    %256 = vector.broadcast %236 : vector<1x32xf32> to vector<16x32xf32>
    %257 = arith.mulf %255, %256 : vector<16x32xf32>
    %258 = vector.broadcast %237 : vector<1x32xf32> to vector<16x32xf32>
    %259 = arith.addf %257, %258 : vector<16x32xf32>
    %c0_105 = arith.constant 0 : index
    %c0_106 = arith.constant 0 : index
    %260 = vector.load %arg29[%c0_105, %c0_106] : memref<1x32xf32, #tpu.memory_space<vmem>>, vector<1x32xf32>
    %c0_107 = arith.constant 0 : index
    %c0_108 = arith.constant 0 : index
    %261 = vector.load %arg30[%c0_107, %c0_108] : memref<1x32xf32, #tpu.memory_space<vmem>>, vector<1x32xf32>
    %cst_109 = arith.constant dense<0.000000e+00> : vector<16xf32>
    %262 = vector.multi_reduction <add>, %259, %cst_109 [1] : vector<16x32xf32> to vector<16xf32>
    %263 = vector.shape_cast %262 : vector<16xf32> to vector<16x1xf32>
    %cst_110 = arith.constant 3.200000e+01 : f32
    %264 = vector.broadcast %cst_110 : f32 to vector<16x1xf32>
    %265 = arith.divf %263, %264 : vector<16x1xf32>
    %266 = vector.broadcast %265 : vector<16x1xf32> to vector<16x32xf32>
    %267 = arith.subf %259, %266 : vector<16x32xf32>
    %268 = arith.mulf %267, %267 : vector<16x32xf32>
    %cst_111 = arith.constant dense<0.000000e+00> : vector<16xf32>
    %269 = vector.multi_reduction <add>, %268, %cst_111 [1] : vector<16x32xf32> to vector<16xf32>
    %270 = vector.shape_cast %269 : vector<16xf32> to vector<16x1xf32>
    %cst_112 = arith.constant 3.200000e+01 : f32
    %271 = vector.broadcast %cst_112 : f32 to vector<16x1xf32>
    %272 = arith.divf %270, %271 : vector<16x1xf32>
    %273 = vector.broadcast %265 : vector<16x1xf32> to vector<16x32xf32>
    %274 = arith.subf %259, %273 : vector<16x32xf32>
    %cst_113 = arith.constant 9.99999974E-6 : f32
    %275 = vector.broadcast %cst_113 : f32 to vector<16x1xf32>
    %276 = arith.addf %272, %275 : vector<16x1xf32>
    %277 = math.rsqrt %276 : vector<16x1xf32>
    %278 = vector.broadcast %277 : vector<16x1xf32> to vector<16x32xf32>
    %279 = arith.mulf %274, %278 : vector<16x32xf32>
    %280 = vector.broadcast %260 : vector<1x32xf32> to vector<16x32xf32>
    %281 = arith.mulf %279, %280 : vector<16x32xf32>
    %282 = vector.broadcast %261 : vector<1x32xf32> to vector<16x32xf32>
    %283 = arith.addf %281, %282 : vector<16x32xf32>
    %cst_114 = arith.constant 5.000000e-01 : f32
    %284 = vector.broadcast %cst_114 : f32 to vector<16x32xf32>
    %285 = arith.mulf %284, %283 : vector<16x32xf32>
    %cst_115 = arith.constant 4.471500e-02 : f32
    %286 = vector.broadcast %cst_115 : f32 to vector<16x32xf32>
    %287 = arith.mulf %286, %283 : vector<16x32xf32>
    %288 = arith.mulf %287, %283 : vector<16x32xf32>
    %289 = arith.mulf %288, %283 : vector<16x32xf32>
    %290 = arith.addf %283, %289 : vector<16x32xf32>
    %cst_116 = arith.constant 0.797884583 : f32
    %291 = vector.broadcast %cst_116 : f32 to vector<16x32xf32>
    %292 = arith.mulf %291, %290 : vector<16x32xf32>
    %293 = math.tanh %292 : vector<16x32xf32>
    %cst_117 = arith.constant 1.000000e+00 : f32
    %294 = vector.broadcast %cst_117 : f32 to vector<16x32xf32>
    %295 = arith.addf %294, %293 : vector<16x32xf32>
    %296 = arith.mulf %285, %295 : vector<16x32xf32>
    %297 = arith.index_cast %arg0 : i32 to index
    %c0_118 = arith.constant 0 : index
    %298 = memref.load %arg1[%297, %c0_118] : memref<2x2xf32, #tpu.memory_space<smem>>
    %299 = vector.broadcast %298 : f32 to vector<16x32xf32>
    %300 = arith.mulf %296, %299 : vector<16x32xf32>
    %301 = arith.addf %2, %300 : vector<16x32xf32>
    %c0_119 = arith.constant 0 : index
    %c0_120 = arith.constant 0 : index
    %302 = vector.load %arg10[%c0_119, %c0_120] : memref<32x64xf32, #tpu.memory_space<vmem>>, vector<32x64xf32>
    %cst_121 = arith.constant dense<0.000000e+00> : vector<16x64xf32>
    %303 = tpu.matmul %91, %302, %cst_121 {dimension_numbers = #tpu.dot_dimension_numbers<[1], [0], [0], [1], [0, 0, 1, 1], [], []>} : vector<16x32xf32>, vector<32x64xf32>, vector<16x64xf32> -> vector<16x64xf32>
    %c0_122 = arith.constant 0 : index
    %c0_123 = arith.constant 0 : index
    %304 = vector.load %arg11[%c0_122, %c0_123] : memref<1x64xf32, #tpu.memory_space<vmem>>, vector<1x64xf32>
    %305 = vector.broadcast %304 : vector<1x64xf32> to vector<16x64xf32>
    %306 = arith.addf %303, %305 : vector<16x64xf32>
    %cst_124 = arith.constant 5.000000e-01 : f32
    %307 = vector.broadcast %cst_124 : f32 to vector<16x64xf32>
    %308 = arith.mulf %307, %306 : vector<16x64xf32>
    %cst_125 = arith.constant 4.471500e-02 : f32
    %309 = vector.broadcast %cst_125 : f32 to vector<16x64xf32>
    %310 = arith.mulf %309, %306 : vector<16x64xf32>
    %311 = arith.mulf %310, %306 : vector<16x64xf32>
    %312 = arith.mulf %311, %306 : vector<16x64xf32>
    %313 = arith.addf %306, %312 : vector<16x64xf32>
    %cst_126 = arith.constant 0.797884583 : f32
    %314 = vector.broadcast %cst_126 : f32 to vector<16x64xf32>
    %315 = arith.mulf %314, %313 : vector<16x64xf32>
    %316 = math.tanh %315 : vector<16x64xf32>
    %cst_127 = arith.constant 1.000000e+00 : f32
    %317 = vector.broadcast %cst_127 : f32 to vector<16x64xf32>
    %318 = arith.addf %317, %316 : vector<16x64xf32>
    %319 = arith.mulf %308, %318 : vector<16x64xf32>
    %c0_128 = arith.constant 0 : index
    %c0_129 = arith.constant 0 : index
    %c0_130 = arith.constant 0 : index
    %320 = vector.load %arg12[%c0_128, %c0_129, %c0_130] : memref<8x16x16xf32, #tpu.memory_space<vmem>>, vector<8x16x16xf32>
    %cst_131 = arith.constant 0.000000e+00 : f32
    %321 = vector.broadcast %cst_131 : f32 to vector<16x8xf32>
    %322 = vector.extract_strided_slice %320 {offsets = [0, 0, 0], sizes = [1, 16, 16], strides = [1, 1, 1]} : vector<8x16x16xf32> to vector<1x16x16xf32>
    %323 = vector.shape_cast %322 : vector<1x16x16xf32> to vector<16x16xf32>
    %324 = vector.extract_strided_slice %319 {offsets = [0, 0], sizes = [16, 8], strides = [1, 1]} : vector<16x64xf32> to vector<16x8xf32>
    %cst_132 = arith.constant dense<0.000000e+00> : vector<16x8xf32>
    %325 = tpu.matmul %323, %324, %cst_132 {dimension_numbers = #tpu.dot_dimension_numbers<[1], [0], [0], [1], [0, 0, 1, 1], [], []>} : vector<16x16xf32>, vector<16x8xf32>, vector<16x8xf32> -> vector<16x8xf32>
    %326 = arith.addf %321, %325 : vector<16x8xf32>
    %327 = vector.extract_strided_slice %320 {offsets = [1, 0, 0], sizes = [1, 16, 16], strides = [1, 1, 1]} : vector<8x16x16xf32> to vector<1x16x16xf32>
    %328 = vector.shape_cast %327 : vector<1x16x16xf32> to vector<16x16xf32>
    %329 = vector.extract_strided_slice %319 {offsets = [0, 8], sizes = [16, 8], strides = [1, 1]} : vector<16x64xf32> to vector<16x8xf32>
    %cst_133 = arith.constant dense<0.000000e+00> : vector<16x8xf32>
    %330 = tpu.matmul %328, %329, %cst_133 {dimension_numbers = #tpu.dot_dimension_numbers<[1], [0], [0], [1], [0, 0, 1, 1], [], []>} : vector<16x16xf32>, vector<16x8xf32>, vector<16x8xf32> -> vector<16x8xf32>
    %331 = arith.addf %326, %330 : vector<16x8xf32>
    %332 = vector.extract_strided_slice %320 {offsets = [2, 0, 0], sizes = [1, 16, 16], strides = [1, 1, 1]} : vector<8x16x16xf32> to vector<1x16x16xf32>
    %333 = vector.shape_cast %332 : vector<1x16x16xf32> to vector<16x16xf32>
    %334 = vector.extract_strided_slice %319 {offsets = [0, 16], sizes = [16, 8], strides = [1, 1]} : vector<16x64xf32> to vector<16x8xf32>
    %cst_134 = arith.constant dense<0.000000e+00> : vector<16x8xf32>
    %335 = tpu.matmul %333, %334, %cst_134 {dimension_numbers = #tpu.dot_dimension_numbers<[1], [0], [0], [1], [0, 0, 1, 1], [], []>} : vector<16x16xf32>, vector<16x8xf32>, vector<16x8xf32> -> vector<16x8xf32>
    %336 = arith.addf %331, %335 : vector<16x8xf32>
    %337 = vector.extract_strided_slice %320 {offsets = [3, 0, 0], sizes = [1, 16, 16], strides = [1, 1, 1]} : vector<8x16x16xf32> to vector<1x16x16xf32>
    %338 = vector.shape_cast %337 : vector<1x16x16xf32> to vector<16x16xf32>
    %339 = vector.extract_strided_slice %319 {offsets = [0, 24], sizes = [16, 8], strides = [1, 1]} : vector<16x64xf32> to vector<16x8xf32>
    %cst_135 = arith.constant dense<0.000000e+00> : vector<16x8xf32>
    %340 = tpu.matmul %338, %339, %cst_135 {dimension_numbers = #tpu.dot_dimension_numbers<[1], [0], [0], [1], [0, 0, 1, 1], [], []>} : vector<16x16xf32>, vector<16x8xf32>, vector<16x8xf32> -> vector<16x8xf32>
    %341 = arith.addf %336, %340 : vector<16x8xf32>
    %342 = vector.extract_strided_slice %320 {offsets = [4, 0, 0], sizes = [1, 16, 16], strides = [1, 1, 1]} : vector<8x16x16xf32> to vector<1x16x16xf32>
    %343 = vector.shape_cast %342 : vector<1x16x16xf32> to vector<16x16xf32>
    %344 = vector.extract_strided_slice %319 {offsets = [0, 32], sizes = [16, 8], strides = [1, 1]} : vector<16x64xf32> to vector<16x8xf32>
    %cst_136 = arith.constant dense<0.000000e+00> : vector<16x8xf32>
    %345 = tpu.matmul %343, %344, %cst_136 {dimension_numbers = #tpu.dot_dimension_numbers<[1], [0], [0], [1], [0, 0, 1, 1], [], []>} : vector<16x16xf32>, vector<16x8xf32>, vector<16x8xf32> -> vector<16x8xf32>
    %346 = arith.addf %341, %345 : vector<16x8xf32>
    %347 = vector.extract_strided_slice %320 {offsets = [5, 0, 0], sizes = [1, 16, 16], strides = [1, 1, 1]} : vector<8x16x16xf32> to vector<1x16x16xf32>
    %348 = vector.shape_cast %347 : vector<1x16x16xf32> to vector<16x16xf32>
    %349 = vector.extract_strided_slice %319 {offsets = [0, 40], sizes = [16, 8], strides = [1, 1]} : vector<16x64xf32> to vector<16x8xf32>
    %cst_137 = arith.constant dense<0.000000e+00> : vector<16x8xf32>
    %350 = tpu.matmul %348, %349, %cst_137 {dimension_numbers = #tpu.dot_dimension_numbers<[1], [0], [0], [1], [0, 0, 1, 1], [], []>} : vector<16x16xf32>, vector<16x8xf32>, vector<16x8xf32> -> vector<16x8xf32>
    %351 = arith.addf %346, %350 : vector<16x8xf32>
    %352 = vector.extract_strided_slice %320 {offsets = [6, 0, 0], sizes = [1, 16, 16], strides = [1, 1, 1]} : vector<8x16x16xf32> to vector<1x16x16xf32>
    %353 = vector.shape_cast %352 : vector<1x16x16xf32> to vector<16x16xf32>
    %354 = vector.extract_strided_slice %319 {offsets = [0, 48], sizes = [16, 8], strides = [1, 1]} : vector<16x64xf32> to vector<16x8xf32>
    %cst_138 = arith.constant dense<0.000000e+00> : vector<16x8xf32>
    %355 = tpu.matmul %353, %354, %cst_138 {dimension_numbers = #tpu.dot_dimension_numbers<[1], [0], [0], [1], [0, 0, 1, 1], [], []>} : vector<16x16xf32>, vector<16x8xf32>, vector<16x8xf32> -> vector<16x8xf32>
    %356 = arith.addf %351, %355 : vector<16x8xf32>
    %357 = vector.extract_strided_slice %320 {offsets = [7, 0, 0], sizes = [1, 16, 16], strides = [1, 1, 1]} : vector<8x16x16xf32> to vector<1x16x16xf32>
    %358 = vector.shape_cast %357 : vector<1x16x16xf32> to vector<16x16xf32>
    %359 = vector.extract_strided_slice %319 {offsets = [0, 56], sizes = [16, 8], strides = [1, 1]} : vector<16x64xf32> to vector<16x8xf32>
    %cst_139 = arith.constant dense<0.000000e+00> : vector<16x8xf32>
    %360 = tpu.matmul %358, %359, %cst_139 {dimension_numbers = #tpu.dot_dimension_numbers<[1], [0], [0], [1], [0, 0, 1, 1], [], []>} : vector<16x16xf32>, vector<16x8xf32>, vector<16x8xf32> -> vector<16x8xf32>
    %361 = arith.addf %356, %360 : vector<16x8xf32>
    %c0_140 = arith.constant 0 : index
    %c0_141 = arith.constant 0 : index
    %362 = vector.load %arg13[%c0_140, %c0_141] : memref<8x32xf32, #tpu.memory_space<vmem>>, vector<8x32xf32>
    %cst_142 = arith.constant dense<0.000000e+00> : vector<16x32xf32>
    %363 = tpu.matmul %361, %362, %cst_142 {dimension_numbers = #tpu.dot_dimension_numbers<[1], [0], [0], [1], [0, 0, 1, 1], [], []>} : vector<16x8xf32>, vector<8x32xf32>, vector<16x32xf32> -> vector<16x32xf32>
    %c0_143 = arith.constant 0 : index
    %c0_144 = arith.constant 0 : index
    %364 = vector.load %arg14[%c0_143, %c0_144] : memref<16x32xf32, #tpu.memory_space<vmem>>, vector<16x32xf32>
    %365 = arith.addf %363, %364 : vector<16x32xf32>
    %366 = arith.addf %91, %365 : vector<16x32xf32>
    %c0_145 = arith.constant 0 : index
    %c0_146 = arith.constant 0 : index
    %367 = vector.load %arg15[%c0_145, %c0_146] : memref<1x32xf32, #tpu.memory_space<vmem>>, vector<1x32xf32>
    %c0_147 = arith.constant 0 : index
    %c0_148 = arith.constant 0 : index
    %368 = vector.load %arg16[%c0_147, %c0_148] : memref<1x32xf32, #tpu.memory_space<vmem>>, vector<1x32xf32>
    %cst_149 = arith.constant dense<0.000000e+00> : vector<16xf32>
    %369 = vector.multi_reduction <add>, %366, %cst_149 [1] : vector<16x32xf32> to vector<16xf32>
    %370 = vector.shape_cast %369 : vector<16xf32> to vector<16x1xf32>
    %cst_150 = arith.constant 3.200000e+01 : f32
    %371 = vector.broadcast %cst_150 : f32 to vector<16x1xf32>
    %372 = arith.divf %370, %371 : vector<16x1xf32>
    %373 = vector.broadcast %372 : vector<16x1xf32> to vector<16x32xf32>
    %374 = arith.subf %366, %373 : vector<16x32xf32>
    %375 = arith.mulf %374, %374 : vector<16x32xf32>
    %cst_151 = arith.constant dense<0.000000e+00> : vector<16xf32>
    %376 = vector.multi_reduction <add>, %375, %cst_151 [1] : vector<16x32xf32> to vector<16xf32>
    %377 = vector.shape_cast %376 : vector<16xf32> to vector<16x1xf32>
    %cst_152 = arith.constant 3.200000e+01 : f32
    %378 = vector.broadcast %cst_152 : f32 to vector<16x1xf32>
    %379 = arith.divf %377, %378 : vector<16x1xf32>
    %380 = vector.broadcast %372 : vector<16x1xf32> to vector<16x32xf32>
    %381 = arith.subf %366, %380 : vector<16x32xf32>
    %cst_153 = arith.constant 9.99999974E-6 : f32
    %382 = vector.broadcast %cst_153 : f32 to vector<16x1xf32>
    %383 = arith.addf %379, %382 : vector<16x1xf32>
    %384 = math.rsqrt %383 : vector<16x1xf32>
    %385 = vector.broadcast %384 : vector<16x1xf32> to vector<16x32xf32>
    %386 = arith.mulf %381, %385 : vector<16x32xf32>
    %387 = vector.broadcast %367 : vector<1x32xf32> to vector<16x32xf32>
    %388 = arith.mulf %386, %387 : vector<16x32xf32>
    %389 = vector.broadcast %368 : vector<1x32xf32> to vector<16x32xf32>
    %390 = arith.addf %388, %389 : vector<16x32xf32>
    %c0_154 = arith.constant 0 : index
    %c0_155 = arith.constant 0 : index
    %391 = vector.load %arg32[%c0_154, %c0_155] : memref<16x16xf32, #tpu.memory_space<vmem>>, vector<16x16xf32>
    %c0_156 = arith.constant 0 : index
    %c0_157 = arith.constant 0 : index
    %392 = vector.load %arg17[%c0_156, %c0_157] : memref<32x96xf32, #tpu.memory_space<vmem>>, vector<32x96xf32>
    %cst_158 = arith.constant dense<0.000000e+00> : vector<16x96xf32>
    %393 = tpu.matmul %390, %392, %cst_158 {dimension_numbers = #tpu.dot_dimension_numbers<[1], [0], [0], [1], [0, 0, 1, 1], [], []>} : vector<16x32xf32>, vector<32x96xf32>, vector<16x96xf32> -> vector<16x96xf32>
    %c0_159 = arith.constant 0 : index
    %c0_160 = arith.constant 0 : index
    %394 = vector.load %arg18[%c0_159, %c0_160] : memref<1x96xf32, #tpu.memory_space<vmem>>, vector<1x96xf32>
    %395 = vector.broadcast %394 : vector<1x96xf32> to vector<16x96xf32>
    %396 = arith.addf %393, %395 : vector<16x96xf32>
    %c0_161 = arith.constant 0 : index
    %c0_162 = arith.constant 0 : index
    %397 = vector.load %arg19[%c0_161, %c0_162] : memref<32x32xf32, #tpu.memory_space<vmem>>, vector<32x32xf32>
    %cst_163 = arith.constant 0.000000e+00 : f32
    %398 = vector.broadcast %cst_163 : f32 to vector<16x32xf32>
    %399 = vector.extract_strided_slice %396 {offsets = [0, 0], sizes = [16, 8], strides = [1, 1]} : vector<16x96xf32> to vector<16x8xf32>
    %400 = vector.extract_strided_slice %396 {offsets = [0, 32], sizes = [16, 8], strides = [1, 1]} : vector<16x96xf32> to vector<16x8xf32>
    %401 = vector.extract_strided_slice %396 {offsets = [0, 64], sizes = [16, 8], strides = [1, 1]} : vector<16x96xf32> to vector<16x8xf32>
    %402 = tpu.transpose %400, [1, 0] : vector<16x8xf32> -> vector<8x16xf32>
    %cst_164 = arith.constant dense<0.000000e+00> : vector<16x16xf32>
    %403 = tpu.matmul %399, %402, %cst_164 {dimension_numbers = #tpu.dot_dimension_numbers<[1], [0], [0], [1], [0, 0, 1, 1], [], []>} : vector<16x8xf32>, vector<8x16xf32>, vector<16x16xf32> -> vector<16x16xf32>
    %cst_165 = arith.constant 0.353553385 : f32
    %404 = vector.broadcast %cst_165 : f32 to vector<16x16xf32>
    %405 = arith.mulf %403, %404 : vector<16x16xf32>
    %406 = arith.addf %405, %391 : vector<16x16xf32>
    %cst_166 = arith.constant dense<0xFF800000> : vector<16xf32>
    %407 = vector.multi_reduction <maximumf>, %406, %cst_166 [1] : vector<16x16xf32> to vector<16xf32>
    %408 = vector.shape_cast %407 : vector<16xf32> to vector<16x1xf32>
    %409 = vector.broadcast %408 : vector<16x1xf32> to vector<16x16xf32>
    %410 = arith.subf %406, %409 : vector<16x16xf32>
    %411 = math.exp %410 : vector<16x16xf32>
    %cst_167 = arith.constant dense<0.000000e+00> : vector<16xf32>
    %412 = vector.multi_reduction <add>, %411, %cst_167 [1] : vector<16x16xf32> to vector<16xf32>
    %413 = vector.shape_cast %412 : vector<16xf32> to vector<16x1xf32>
    %414 = vector.broadcast %413 : vector<16x1xf32> to vector<16x16xf32>
    %415 = arith.divf %411, %414 : vector<16x16xf32>
    %cst_168 = arith.constant dense<0.000000e+00> : vector<16x8xf32>
    %416 = tpu.matmul %415, %401, %cst_168 {dimension_numbers = #tpu.dot_dimension_numbers<[1], [0], [0], [1], [0, 0, 1, 1], [], []>} : vector<16x16xf32>, vector<16x8xf32>, vector<16x8xf32> -> vector<16x8xf32>
    %417 = vector.extract_strided_slice %397 {offsets = [0, 0], sizes = [8, 32], strides = [1, 1]} : vector<32x32xf32> to vector<8x32xf32>
    %cst_169 = arith.constant dense<0.000000e+00> : vector<16x32xf32>
    %418 = tpu.matmul %416, %417, %cst_169 {dimension_numbers = #tpu.dot_dimension_numbers<[1], [0], [0], [1], [0, 0, 1, 1], [], []>} : vector<16x8xf32>, vector<8x32xf32>, vector<16x32xf32> -> vector<16x32xf32>
    %419 = arith.addf %398, %418 : vector<16x32xf32>
    %420 = vector.extract_strided_slice %396 {offsets = [0, 8], sizes = [16, 8], strides = [1, 1]} : vector<16x96xf32> to vector<16x8xf32>
    %421 = vector.extract_strided_slice %396 {offsets = [0, 40], sizes = [16, 8], strides = [1, 1]} : vector<16x96xf32> to vector<16x8xf32>
    %422 = vector.extract_strided_slice %396 {offsets = [0, 72], sizes = [16, 8], strides = [1, 1]} : vector<16x96xf32> to vector<16x8xf32>
    %423 = tpu.transpose %421, [1, 0] : vector<16x8xf32> -> vector<8x16xf32>
    %cst_170 = arith.constant dense<0.000000e+00> : vector<16x16xf32>
    %424 = tpu.matmul %420, %423, %cst_170 {dimension_numbers = #tpu.dot_dimension_numbers<[1], [0], [0], [1], [0, 0, 1, 1], [], []>} : vector<16x8xf32>, vector<8x16xf32>, vector<16x16xf32> -> vector<16x16xf32>
    %cst_171 = arith.constant 0.353553385 : f32
    %425 = vector.broadcast %cst_171 : f32 to vector<16x16xf32>
    %426 = arith.mulf %424, %425 : vector<16x16xf32>
    %427 = arith.addf %426, %391 : vector<16x16xf32>
    %cst_172 = arith.constant dense<0xFF800000> : vector<16xf32>
    %428 = vector.multi_reduction <maximumf>, %427, %cst_172 [1] : vector<16x16xf32> to vector<16xf32>
    %429 = vector.shape_cast %428 : vector<16xf32> to vector<16x1xf32>
    %430 = vector.broadcast %429 : vector<16x1xf32> to vector<16x16xf32>
    %431 = arith.subf %427, %430 : vector<16x16xf32>
    %432 = math.exp %431 : vector<16x16xf32>
    %cst_173 = arith.constant dense<0.000000e+00> : vector<16xf32>
    %433 = vector.multi_reduction <add>, %432, %cst_173 [1] : vector<16x16xf32> to vector<16xf32>
    %434 = vector.shape_cast %433 : vector<16xf32> to vector<16x1xf32>
    %435 = vector.broadcast %434 : vector<16x1xf32> to vector<16x16xf32>
    %436 = arith.divf %432, %435 : vector<16x16xf32>
    %cst_174 = arith.constant dense<0.000000e+00> : vector<16x8xf32>
    %437 = tpu.matmul %436, %422, %cst_174 {dimension_numbers = #tpu.dot_dimension_numbers<[1], [0], [0], [1], [0, 0, 1, 1], [], []>} : vector<16x16xf32>, vector<16x8xf32>, vector<16x8xf32> -> vector<16x8xf32>
    %438 = vector.extract_strided_slice %397 {offsets = [8, 0], sizes = [8, 32], strides = [1, 1]} : vector<32x32xf32> to vector<8x32xf32>
    %cst_175 = arith.constant dense<0.000000e+00> : vector<16x32xf32>
    %439 = tpu.matmul %437, %438, %cst_175 {dimension_numbers = #tpu.dot_dimension_numbers<[1], [0], [0], [1], [0, 0, 1, 1], [], []>} : vector<16x8xf32>, vector<8x32xf32>, vector<16x32xf32> -> vector<16x32xf32>
    %440 = arith.addf %419, %439 : vector<16x32xf32>
    %441 = vector.extract_strided_slice %396 {offsets = [0, 16], sizes = [16, 8], strides = [1, 1]} : vector<16x96xf32> to vector<16x8xf32>
    %442 = vector.extract_strided_slice %396 {offsets = [0, 48], sizes = [16, 8], strides = [1, 1]} : vector<16x96xf32> to vector<16x8xf32>
    %443 = vector.extract_strided_slice %396 {offsets = [0, 80], sizes = [16, 8], strides = [1, 1]} : vector<16x96xf32> to vector<16x8xf32>
    %444 = tpu.transpose %442, [1, 0] : vector<16x8xf32> -> vector<8x16xf32>
    %cst_176 = arith.constant dense<0.000000e+00> : vector<16x16xf32>
    %445 = tpu.matmul %441, %444, %cst_176 {dimension_numbers = #tpu.dot_dimension_numbers<[1], [0], [0], [1], [0, 0, 1, 1], [], []>} : vector<16x8xf32>, vector<8x16xf32>, vector<16x16xf32> -> vector<16x16xf32>
    %cst_177 = arith.constant 0.353553385 : f32
    %446 = vector.broadcast %cst_177 : f32 to vector<16x16xf32>
    %447 = arith.mulf %445, %446 : vector<16x16xf32>
    %448 = arith.addf %447, %391 : vector<16x16xf32>
    %cst_178 = arith.constant dense<0xFF800000> : vector<16xf32>
    %449 = vector.multi_reduction <maximumf>, %448, %cst_178 [1] : vector<16x16xf32> to vector<16xf32>
    %450 = vector.shape_cast %449 : vector<16xf32> to vector<16x1xf32>
    %451 = vector.broadcast %450 : vector<16x1xf32> to vector<16x16xf32>
    %452 = arith.subf %448, %451 : vector<16x16xf32>
    %453 = math.exp %452 : vector<16x16xf32>
    %cst_179 = arith.constant dense<0.000000e+00> : vector<16xf32>
    %454 = vector.multi_reduction <add>, %453, %cst_179 [1] : vector<16x16xf32> to vector<16xf32>
    %455 = vector.shape_cast %454 : vector<16xf32> to vector<16x1xf32>
    %456 = vector.broadcast %455 : vector<16x1xf32> to vector<16x16xf32>
    %457 = arith.divf %453, %456 : vector<16x16xf32>
    %cst_180 = arith.constant dense<0.000000e+00> : vector<16x8xf32>
    %458 = tpu.matmul %457, %443, %cst_180 {dimension_numbers = #tpu.dot_dimension_numbers<[1], [0], [0], [1], [0, 0, 1, 1], [], []>} : vector<16x16xf32>, vector<16x8xf32>, vector<16x8xf32> -> vector<16x8xf32>
    %459 = vector.extract_strided_slice %397 {offsets = [16, 0], sizes = [8, 32], strides = [1, 1]} : vector<32x32xf32> to vector<8x32xf32>
    %cst_181 = arith.constant dense<0.000000e+00> : vector<16x32xf32>
    %460 = tpu.matmul %458, %459, %cst_181 {dimension_numbers = #tpu.dot_dimension_numbers<[1], [0], [0], [1], [0, 0, 1, 1], [], []>} : vector<16x8xf32>, vector<8x32xf32>, vector<16x32xf32> -> vector<16x32xf32>
    %461 = arith.addf %440, %460 : vector<16x32xf32>
    %462 = vector.extract_strided_slice %396 {offsets = [0, 24], sizes = [16, 8], strides = [1, 1]} : vector<16x96xf32> to vector<16x8xf32>
    %463 = vector.extract_strided_slice %396 {offsets = [0, 56], sizes = [16, 8], strides = [1, 1]} : vector<16x96xf32> to vector<16x8xf32>
    %464 = vector.extract_strided_slice %396 {offsets = [0, 88], sizes = [16, 8], strides = [1, 1]} : vector<16x96xf32> to vector<16x8xf32>
    %465 = tpu.transpose %463, [1, 0] : vector<16x8xf32> -> vector<8x16xf32>
    %cst_182 = arith.constant dense<0.000000e+00> : vector<16x16xf32>
    %466 = tpu.matmul %462, %465, %cst_182 {dimension_numbers = #tpu.dot_dimension_numbers<[1], [0], [0], [1], [0, 0, 1, 1], [], []>} : vector<16x8xf32>, vector<8x16xf32>, vector<16x16xf32> -> vector<16x16xf32>
    %cst_183 = arith.constant 0.353553385 : f32
    %467 = vector.broadcast %cst_183 : f32 to vector<16x16xf32>
    %468 = arith.mulf %466, %467 : vector<16x16xf32>
    %469 = arith.addf %468, %391 : vector<16x16xf32>
    %cst_184 = arith.constant dense<0xFF800000> : vector<16xf32>
    %470 = vector.multi_reduction <maximumf>, %469, %cst_184 [1] : vector<16x16xf32> to vector<16xf32>
    %471 = vector.shape_cast %470 : vector<16xf32> to vector<16x1xf32>
    %472 = vector.broadcast %471 : vector<16x1xf32> to vector<16x16xf32>
    %473 = arith.subf %469, %472 : vector<16x16xf32>
    %474 = math.exp %473 : vector<16x16xf32>
    %cst_185 = arith.constant dense<0.000000e+00> : vector<16xf32>
    %475 = vector.multi_reduction <add>, %474, %cst_185 [1] : vector<16x16xf32> to vector<16xf32>
    %476 = vector.shape_cast %475 : vector<16xf32> to vector<16x1xf32>
    %477 = vector.broadcast %476 : vector<16x1xf32> to vector<16x16xf32>
    %478 = arith.divf %474, %477 : vector<16x16xf32>
    %cst_186 = arith.constant dense<0.000000e+00> : vector<16x8xf32>
    %479 = tpu.matmul %478, %464, %cst_186 {dimension_numbers = #tpu.dot_dimension_numbers<[1], [0], [0], [1], [0, 0, 1, 1], [], []>} : vector<16x16xf32>, vector<16x8xf32>, vector<16x8xf32> -> vector<16x8xf32>
    %480 = vector.extract_strided_slice %397 {offsets = [24, 0], sizes = [8, 32], strides = [1, 1]} : vector<32x32xf32> to vector<8x32xf32>
    %cst_187 = arith.constant dense<0.000000e+00> : vector<16x32xf32>
    %481 = tpu.matmul %479, %480, %cst_187 {dimension_numbers = #tpu.dot_dimension_numbers<[1], [0], [0], [1], [0, 0, 1, 1], [], []>} : vector<16x8xf32>, vector<8x32xf32>, vector<16x32xf32> -> vector<16x32xf32>
    %482 = arith.addf %461, %481 : vector<16x32xf32>
    %c0_188 = arith.constant 0 : index
    %c0_189 = arith.constant 0 : index
    %483 = vector.load %arg20[%c0_188, %c0_189] : memref<1x32xf32, #tpu.memory_space<vmem>>, vector<1x32xf32>
    %484 = vector.broadcast %483 : vector<1x32xf32> to vector<16x32xf32>
    %485 = arith.addf %482, %484 : vector<16x32xf32>
    %486 = arith.addf %390, %485 : vector<16x32xf32>
    %c0_190 = arith.constant 0 : index
    %c0_191 = arith.constant 0 : index
    %487 = vector.load %arg21[%c0_190, %c0_191] : memref<1x32xf32, #tpu.memory_space<vmem>>, vector<1x32xf32>
    %c0_192 = arith.constant 0 : index
    %c0_193 = arith.constant 0 : index
    %488 = vector.load %arg22[%c0_192, %c0_193] : memref<1x32xf32, #tpu.memory_space<vmem>>, vector<1x32xf32>
    %cst_194 = arith.constant dense<0.000000e+00> : vector<16xf32>
    %489 = vector.multi_reduction <add>, %486, %cst_194 [1] : vector<16x32xf32> to vector<16xf32>
    %490 = vector.shape_cast %489 : vector<16xf32> to vector<16x1xf32>
    %cst_195 = arith.constant 3.200000e+01 : f32
    %491 = vector.broadcast %cst_195 : f32 to vector<16x1xf32>
    %492 = arith.divf %490, %491 : vector<16x1xf32>
    %493 = vector.broadcast %492 : vector<16x1xf32> to vector<16x32xf32>
    %494 = arith.subf %486, %493 : vector<16x32xf32>
    %495 = arith.mulf %494, %494 : vector<16x32xf32>
    %cst_196 = arith.constant dense<0.000000e+00> : vector<16xf32>
    %496 = vector.multi_reduction <add>, %495, %cst_196 [1] : vector<16x32xf32> to vector<16xf32>
    %497 = vector.shape_cast %496 : vector<16xf32> to vector<16x1xf32>
    %cst_197 = arith.constant 3.200000e+01 : f32
    %498 = vector.broadcast %cst_197 : f32 to vector<16x1xf32>
    %499 = arith.divf %497, %498 : vector<16x1xf32>
    %500 = vector.broadcast %492 : vector<16x1xf32> to vector<16x32xf32>
    %501 = arith.subf %486, %500 : vector<16x32xf32>
    %cst_198 = arith.constant 9.99999974E-6 : f32
    %502 = vector.broadcast %cst_198 : f32 to vector<16x1xf32>
    %503 = arith.addf %499, %502 : vector<16x1xf32>
    %504 = math.rsqrt %503 : vector<16x1xf32>
    %505 = vector.broadcast %504 : vector<16x1xf32> to vector<16x32xf32>
    %506 = arith.mulf %501, %505 : vector<16x32xf32>
    %507 = vector.broadcast %487 : vector<1x32xf32> to vector<16x32xf32>
    %508 = arith.mulf %506, %507 : vector<16x32xf32>
    %509 = vector.broadcast %488 : vector<1x32xf32> to vector<16x32xf32>
    %510 = arith.addf %508, %509 : vector<16x32xf32>
    %c0_199 = arith.constant 0 : index
    %c0_200 = arith.constant 0 : index
    %511 = vector.load %arg23[%c0_199, %c0_200] : memref<32x32xf32, #tpu.memory_space<vmem>>, vector<32x32xf32>
    %cst_201 = arith.constant dense<0.000000e+00> : vector<16x32xf32>
    %512 = tpu.matmul %510, %511, %cst_201 {dimension_numbers = #tpu.dot_dimension_numbers<[1], [0], [0], [1], [0, 0, 1, 1], [], []>} : vector<16x32xf32>, vector<32x32xf32>, vector<16x32xf32> -> vector<16x32xf32>
    %c0_202 = arith.constant 0 : index
    %c0_203 = arith.constant 0 : index
    %513 = vector.load %arg24[%c0_202, %c0_203] : memref<1x32xf32, #tpu.memory_space<vmem>>, vector<1x32xf32>
    %514 = vector.broadcast %513 : vector<1x32xf32> to vector<16x32xf32>
    %515 = arith.addf %512, %514 : vector<16x32xf32>
    %cst_204 = arith.constant 5.000000e-01 : f32
    %516 = vector.broadcast %cst_204 : f32 to vector<16x32xf32>
    %517 = arith.mulf %516, %515 : vector<16x32xf32>
    %cst_205 = arith.constant 4.471500e-02 : f32
    %518 = vector.broadcast %cst_205 : f32 to vector<16x32xf32>
    %519 = arith.mulf %518, %515 : vector<16x32xf32>
    %520 = arith.mulf %519, %515 : vector<16x32xf32>
    %521 = arith.mulf %520, %515 : vector<16x32xf32>
    %522 = arith.addf %515, %521 : vector<16x32xf32>
    %cst_206 = arith.constant 0.797884583 : f32
    %523 = vector.broadcast %cst_206 : f32 to vector<16x32xf32>
    %524 = arith.mulf %523, %522 : vector<16x32xf32>
    %525 = math.tanh %524 : vector<16x32xf32>
    %cst_207 = arith.constant 1.000000e+00 : f32
    %526 = vector.broadcast %cst_207 : f32 to vector<16x32xf32>
    %527 = arith.addf %526, %525 : vector<16x32xf32>
    %528 = arith.mulf %517, %527 : vector<16x32xf32>
    %c0_208 = arith.constant 0 : index
    %c0_209 = arith.constant 0 : index
    %529 = vector.load %arg25[%c0_208, %c0_209] : memref<32x32xf32, #tpu.memory_space<vmem>>, vector<32x32xf32>
    %cst_210 = arith.constant dense<0.000000e+00> : vector<16x32xf32>
    %530 = tpu.matmul %528, %529, %cst_210 {dimension_numbers = #tpu.dot_dimension_numbers<[1], [0], [0], [1], [0, 0, 1, 1], [], []>} : vector<16x32xf32>, vector<32x32xf32>, vector<16x32xf32> -> vector<16x32xf32>
    %c0_211 = arith.constant 0 : index
    %c0_212 = arith.constant 0 : index
    %531 = vector.load %arg26[%c0_211, %c0_212] : memref<1x32xf32, #tpu.memory_space<vmem>>, vector<1x32xf32>
    %532 = vector.broadcast %531 : vector<1x32xf32> to vector<16x32xf32>
    %533 = arith.addf %530, %532 : vector<16x32xf32>
    %534 = arith.addf %510, %533 : vector<16x32xf32>
    %c0_213 = arith.constant 0 : index
    %c0_214 = arith.constant 0 : index
    %535 = vector.load %arg27[%c0_213, %c0_214] : memref<1x32xf32, #tpu.memory_space<vmem>>, vector<1x32xf32>
    %c0_215 = arith.constant 0 : index
    %c0_216 = arith.constant 0 : index
    %536 = vector.load %arg28[%c0_215, %c0_216] : memref<1x32xf32, #tpu.memory_space<vmem>>, vector<1x32xf32>
    %cst_217 = arith.constant dense<0.000000e+00> : vector<16xf32>
    %537 = vector.multi_reduction <add>, %534, %cst_217 [1] : vector<16x32xf32> to vector<16xf32>
    %538 = vector.shape_cast %537 : vector<16xf32> to vector<16x1xf32>
    %cst_218 = arith.constant 3.200000e+01 : f32
    %539 = vector.broadcast %cst_218 : f32 to vector<16x1xf32>
    %540 = arith.divf %538, %539 : vector<16x1xf32>
    %541 = vector.broadcast %540 : vector<16x1xf32> to vector<16x32xf32>
    %542 = arith.subf %534, %541 : vector<16x32xf32>
    %543 = arith.mulf %542, %542 : vector<16x32xf32>
    %cst_219 = arith.constant dense<0.000000e+00> : vector<16xf32>
    %544 = vector.multi_reduction <add>, %543, %cst_219 [1] : vector<16x32xf32> to vector<16xf32>
    %545 = vector.shape_cast %544 : vector<16xf32> to vector<16x1xf32>
    %cst_220 = arith.constant 3.200000e+01 : f32
    %546 = vector.broadcast %cst_220 : f32 to vector<16x1xf32>
    %547 = arith.divf %545, %546 : vector<16x1xf32>
    %548 = vector.broadcast %540 : vector<16x1xf32> to vector<16x32xf32>
    %549 = arith.subf %534, %548 : vector<16x32xf32>
    %cst_221 = arith.constant 9.99999974E-6 : f32
    %550 = vector.broadcast %cst_221 : f32 to vector<16x1xf32>
    %551 = arith.addf %547, %550 : vector<16x1xf32>
    %552 = math.rsqrt %551 : vector<16x1xf32>
    %553 = vector.broadcast %552 : vector<16x1xf32> to vector<16x32xf32>
    %554 = arith.mulf %549, %553 : vector<16x32xf32>
    %555 = vector.broadcast %535 : vector<1x32xf32> to vector<16x32xf32>
    %556 = arith.mulf %554, %555 : vector<16x32xf32>
    %557 = vector.broadcast %536 : vector<1x32xf32> to vector<16x32xf32>
    %558 = arith.addf %556, %557 : vector<16x32xf32>
    %c0_222 = arith.constant 0 : index
    %c0_223 = arith.constant 0 : index
    %559 = vector.load %arg29[%c0_222, %c0_223] : memref<1x32xf32, #tpu.memory_space<vmem>>, vector<1x32xf32>
    %c0_224 = arith.constant 0 : index
    %c0_225 = arith.constant 0 : index
    %560 = vector.load %arg30[%c0_224, %c0_225] : memref<1x32xf32, #tpu.memory_space<vmem>>, vector<1x32xf32>
    %cst_226 = arith.constant dense<0.000000e+00> : vector<16xf32>
    %561 = vector.multi_reduction <add>, %558, %cst_226 [1] : vector<16x32xf32> to vector<16xf32>
    %562 = vector.shape_cast %561 : vector<16xf32> to vector<16x1xf32>
    %cst_227 = arith.constant 3.200000e+01 : f32
    %563 = vector.broadcast %cst_227 : f32 to vector<16x1xf32>
    %564 = arith.divf %562, %563 : vector<16x1xf32>
    %565 = vector.broadcast %564 : vector<16x1xf32> to vector<16x32xf32>
    %566 = arith.subf %558, %565 : vector<16x32xf32>
    %567 = arith.mulf %566, %566 : vector<16x32xf32>
    %cst_228 = arith.constant dense<0.000000e+00> : vector<16xf32>
    %568 = vector.multi_reduction <add>, %567, %cst_228 [1] : vector<16x32xf32> to vector<16xf32>
    %569 = vector.shape_cast %568 : vector<16xf32> to vector<16x1xf32>
    %cst_229 = arith.constant 3.200000e+01 : f32
    %570 = vector.broadcast %cst_229 : f32 to vector<16x1xf32>
    %571 = arith.divf %569, %570 : vector<16x1xf32>
    %572 = vector.broadcast %564 : vector<16x1xf32> to vector<16x32xf32>
    %573 = arith.subf %558, %572 : vector<16x32xf32>
    %cst_230 = arith.constant 9.99999974E-6 : f32
    %574 = vector.broadcast %cst_230 : f32 to vector<16x1xf32>
    %575 = arith.addf %571, %574 : vector<16x1xf32>
    %576 = math.rsqrt %575 : vector<16x1xf32>
    %577 = vector.broadcast %576 : vector<16x1xf32> to vector<16x32xf32>
    %578 = arith.mulf %573, %577 : vector<16x32xf32>
    %579 = vector.broadcast %559 : vector<1x32xf32> to vector<16x32xf32>
    %580 = arith.mulf %578, %579 : vector<16x32xf32>
    %581 = vector.broadcast %560 : vector<1x32xf32> to vector<16x32xf32>
    %582 = arith.addf %580, %581 : vector<16x32xf32>
    %cst_231 = arith.constant 5.000000e-01 : f32
    %583 = vector.broadcast %cst_231 : f32 to vector<16x32xf32>
    %584 = arith.mulf %583, %582 : vector<16x32xf32>
    %cst_232 = arith.constant 4.471500e-02 : f32
    %585 = vector.broadcast %cst_232 : f32 to vector<16x32xf32>
    %586 = arith.mulf %585, %582 : vector<16x32xf32>
    %587 = arith.mulf %586, %582 : vector<16x32xf32>
    %588 = arith.mulf %587, %582 : vector<16x32xf32>
    %589 = arith.addf %582, %588 : vector<16x32xf32>
    %cst_233 = arith.constant 0.797884583 : f32
    %590 = vector.broadcast %cst_233 : f32 to vector<16x32xf32>
    %591 = arith.mulf %590, %589 : vector<16x32xf32>
    %592 = math.tanh %591 : vector<16x32xf32>
    %cst_234 = arith.constant 1.000000e+00 : f32
    %593 = vector.broadcast %cst_234 : f32 to vector<16x32xf32>
    %594 = arith.addf %593, %592 : vector<16x32xf32>
    %595 = arith.mulf %584, %594 : vector<16x32xf32>
    %596 = arith.index_cast %arg0 : i32 to index
    %c1 = arith.constant 1 : index
    %597 = memref.load %arg1[%596, %c1] : memref<2x2xf32, #tpu.memory_space<smem>>
    %598 = vector.broadcast %597 : f32 to vector<16x32xf32>
    %599 = arith.mulf %595, %598 : vector<16x32xf32>
    %600 = arith.addf %301, %599 : vector<16x32xf32>
    %601 = arith.addf %600, %390 : vector<16x32xf32>
    %c0_235 = arith.constant 0 : index
    %c0_236 = arith.constant 0 : index
    %c0_237 = arith.constant 0 : index
    %602 = vector.load %arg33[%c0_235, %c0_236, %c0_237] : memref<1x16x32xf32, #tpu.memory_space<vmem>>, vector<1x16x32xf32>
    %603 = vector.shape_cast %602 : vector<1x16x32xf32> to vector<16x32xf32>
    %604 = vector.shape_cast %601 : vector<16x32xf32> to vector<1x16x32xf32>
    tpu.vector_store %arg33[%c0_235, %c0_236, %c0_237], %604 {strides = array<i32>} : memref<1x16x32xf32, #tpu.memory_space<vmem>>, vector<1x16x32xf32>,
    return
  }
  func.func @transform_0(%arg0: i32) -> (i32, i32) {
    %c0_i32 = arith.constant 0 : i32
    %c0_i32_0 = arith.constant 0 : i32
    %c0_i32_1 = arith.constant 0 : i32
    return %c0_i32, %c0_i32_0 : i32, i32
  }
  func.func @transform_1(%arg0: i32) -> (i32, i32, i32) {
    %c0_i32 = arith.constant 0 : i32
    %c0_i32_0 = arith.constant 0 : i32
    %c0_i32_1 = arith.constant 0 : i32
    return %arg0, %c0_i32, %c0_i32_0 : i32, i32, i32
  }
  func.func @transform_2(%arg0: i32) -> (i32, i32) {
    %c0_i32 = arith.constant 0 : i32
    %c0_i32_0 = arith.constant 0 : i32
    %c0_i32_1 = arith.constant 0 : i32
    return %c0_i32, %c0_i32_0 : i32, i32
  }
  func.func @transform_3(%arg0: i32) -> (i32, i32) {
    %c0_i32 = arith.constant 0 : i32
    %c0_i32_0 = arith.constant 0 : i32
    %c0_i32_1 = arith.constant 0 : i32
    return %c0_i32, %c0_i32_0 : i32, i32
  }
  func.func @transform_4(%arg0: i32) -> (i32, i32, i32) {
    %c0_i32 = arith.constant 0 : i32
    %c0_i32_0 = arith.constant 0 : i32
    %c0_i32_1 = arith.constant 0 : i32
    %c0_i32_2 = arith.constant 0 : i32
    return %c0_i32, %c0_i32_0, %c0_i32_1 : i32, i32, i32
  }
  func.func @transform_5(%arg0: i32) -> (i32, i32) {
    %c0_i32 = arith.constant 0 : i32
    %c0_i32_0 = arith.constant 0 : i32
    %c0_i32_1 = arith.constant 0 : i32
    return %c0_i32, %c0_i32_0 : i32, i32
  }
  func.func @transform_6(%arg0: i32) -> (i32, i32) {
    %c0_i32 = arith.constant 0 : i32
    %c0_i32_0 = arith.constant 0 : i32
    %c0_i32_1 = arith.constant 0 : i32
    return %c0_i32, %c0_i32_0 : i32, i32
  }
  func.func @transform_7(%arg0: i32) -> (i32, i32) {
    %c0_i32 = arith.constant 0 : i32
    %c0_i32_0 = arith.constant 0 : i32
    %c0_i32_1 = arith.constant 0 : i32
    return %c0_i32, %c0_i32_0 : i32, i32
  }
  func.func @transform_8(%arg0: i32) -> (i32, i32) {
    %c0_i32 = arith.constant 0 : i32
    %c0_i32_0 = arith.constant 0 : i32
    %c0_i32_1 = arith.constant 0 : i32
    return %c0_i32, %c0_i32_0 : i32, i32
  }
  func.func @transform_9(%arg0: i32) -> (i32, i32) {
    %c0_i32 = arith.constant 0 : i32
    %c0_i32_0 = arith.constant 0 : i32
    %c0_i32_1 = arith.constant 0 : i32
    return %c0_i32, %c0_i32_0 : i32, i32
  }
  func.func @transform_10(%arg0: i32) -> (i32, i32) {
    %c0_i32 = arith.constant 0 : i32
    %c0_i32_0 = arith.constant 0 : i32
    %c0_i32_1 = arith.constant 0 : i32
    return %c0_i32, %c0_i32_0 : i32, i32
  }
  func.func @transform_11(%arg0: i32) -> (i32, i32, i32) {
    %c0_i32 = arith.constant 0 : i32
    %c0_i32_0 = arith.constant 0 : i32
    %c0_i32_1 = arith.constant 0 : i32
    %c0_i32_2 = arith.constant 0 : i32
    return %c0_i32, %c0_i32_0, %c0_i32_1 : i32, i32, i32
  }
  func.func @transform_12(%arg0: i32) -> (i32, i32) {
    %c0_i32 = arith.constant 0 : i32
    %c0_i32_0 = arith.constant 0 : i32
    %c0_i32_1 = arith.constant 0 : i32
    return %c0_i32, %c0_i32_0 : i32, i32
  }
  func.func @transform_13(%arg0: i32) -> (i32, i32) {
    %c0_i32 = arith.constant 0 : i32
    %c0_i32_0 = arith.constant 0 : i32
    %c0_i32_1 = arith.constant 0 : i32
    return %c0_i32, %c0_i32_0 : i32, i32
  }
  func.func @transform_14(%arg0: i32) -> (i32, i32) {
    %c0_i32 = arith.constant 0 : i32
    %c0_i32_0 = arith.constant 0 : i32
    %c0_i32_1 = arith.constant 0 : i32
    return %c0_i32, %c0_i32_0 : i32, i32
  }
  func.func @transform_15(%arg0: i32) -> (i32, i32) {
    %c0_i32 = arith.constant 0 : i32
    %c0_i32_0 = arith.constant 0 : i32
    %c0_i32_1 = arith.constant 0 : i32
    return %c0_i32, %c0_i32_0 : i32, i32
  }
  func.func @transform_16(%arg0: i32) -> (i32, i32) {
    %c0_i32 = arith.constant 0 : i32
    %c0_i32_0 = arith.constant 0 : i32
    %c0_i32_1 = arith.constant 0 : i32
    return %c0_i32, %c0_i32_0 : i32, i32
  }
  func.func @transform_17(%arg0: i32) -> (i32, i32) {
    %c0_i32 = arith.constant 0 : i32
    %c0_i32_0 = arith.constant 0 : i32
    %c0_i32_1 = arith.constant 0 : i32
    return %c0_i32, %c0_i32_0 : i32, i32
  }
  func.func @transform_18(%arg0: i32) -> (i32, i32) {
    %c0_i32 = arith.constant 0 : i32
    %c0_i32_0 = arith.constant 0 : i32
    %c0_i32_1 = arith.constant 0 : i32
    return %c0_i32, %c0_i32_0 : i32, i32
  }
  func.func @transform_19(%arg0: i32) -> (i32, i32) {
    %c0_i32 = arith.constant 0 : i32
    %c0_i32_0 = arith.constant 0 : i32
    %c0_i32_1 = arith.constant 0 : i32
    return %c0_i32, %c0_i32_0 : i32, i32
  }
  func.func @transform_20(%arg0: i32) -> (i32, i32) {
    %c0_i32 = arith.constant 0 : i32
    %c0_i32_0 = arith.constant 0 : i32
    %c0_i32_1 = arith.constant 0 : i32
    return %c0_i32, %c0_i32_0 : i32, i32
  }
  func.func @transform_21(%arg0: i32) -> (i32, i32) {
    %c0_i32 = arith.constant 0 : i32
    %c0_i32_0 = arith.constant 0 : i32
    %c0_i32_1 = arith.constant 0 : i32
    return %c0_i32, %c0_i32_0 : i32, i32
  }
  func.func @transform_22(%arg0: i32) -> (i32, i32) {
    %c0_i32 = arith.constant 0 : i32
    %c0_i32_0 = arith.constant 0 : i32
    %c0_i32_1 = arith.constant 0 : i32
    return %c0_i32, %c0_i32_0 : i32, i32
  }
  func.func @transform_23(%arg0: i32) -> (i32, i32) {
    %c0_i32 = arith.constant 0 : i32
    %c0_i32_0 = arith.constant 0 : i32
    %c0_i32_1 = arith.constant 0 : i32
    return %c0_i32, %c0_i32_0 : i32, i32
  }
  func.func @transform_24(%arg0: i32) -> (i32, i32) {
    %c0_i32 = arith.constant 0 : i32
    %c0_i32_0 = arith.constant 0 : i32
    %c0_i32_1 = arith.constant 0 : i32
    return %c0_i32, %c0_i32_0 : i32, i32
  }
  func.func @transform_25(%arg0: i32) -> (i32, i32) {
    %c0_i32 = arith.constant 0 : i32
    %c0_i32_0 = arith.constant 0 : i32
    %c0_i32_1 = arith.constant 0 : i32
    return %c0_i32, %c0_i32_0 : i32, i32
  }
  func.func @transform_26(%arg0: i32) -> (i32, i32) {
    %c0_i32 = arith.constant 0 : i32
    %c0_i32_0 = arith.constant 0 : i32
    %c0_i32_1 = arith.constant 0 : i32
    return %c0_i32, %c0_i32_0 : i32, i32
  }
  func.func @transform_27(%arg0: i32) -> (i32, i32) {
    %c0_i32 = arith.constant 0 : i32
    %c0_i32_0 = arith.constant 0 : i32
    %c0_i32_1 = arith.constant 0 : i32
    return %c0_i32, %c0_i32_0 : i32, i32
  }
  func.func @transform_28(%arg0: i32) -> (i32, i32) {
    %c0_i32 = arith.constant 0 : i32
    %c0_i32_0 = arith.constant 0 : i32
    %c0_i32_1 = arith.constant 0 : i32
    return %c0_i32, %c0_i32_0 : i32, i32
  }
  func.func @transform_29(%arg0: i32) -> (i32, i32) {
    %c0_i32 = arith.constant 0 : i32
    %c0_i32_0 = arith.constant 0 : i32
    %c0_i32_1 = arith.constant 0 : i32
    return %c0_i32, %c0_i32_0 : i32, i32
  }
  func.func @transform_30(%arg0: i32) -> (i32, i32) {
    %c0_i32 = arith.constant 0 : i32
    %c0_i32_0 = arith.constant 0 : i32
    %c0_i32_1 = arith.constant 0 : i32
    return %c0_i32, %c0_i32_0 : i32, i32
  }
  func.func @transform_31(%arg0: i32) -> (i32, i32) {
    %c0_i32 = arith.constant 0 : i32
    %c0_i32_0 = arith.constant 0 : i32
    %c0_i32_1 = arith.constant 0 : i32
    return %c0_i32, %c0_i32_0 : i32, i32
  }
  func.func @transform_32(%arg0: i32) -> (i32, i32, i32) {
    %c0_i32 = arith.constant 0 : i32
    %c0_i32_0 = arith.constant 0 : i32
    %c0_i32_1 = arith.constant 0 : i32
    return %arg0, %c0_i32, %c0_i32_0 : i32, i32, i32
  }
}

</mosaic_0001>

<llo_original>
// kernel: tpu_custom_call.1
$region0: #{tpu_custom_call.1}
  #allocation0 [shape = 'u32[]', space=smem, size = 0x4, offset = 0x4, fixed_abs, tag = 'smem constant byte address 0x4 - core index']
  #allocation1 [shape = 'u32[144,128]{1,0:T(1,128)}', space=vmem, size = 0x12000, scoped, tag = 'internal scratch']
  #allocation2 [shape = 'f32[16,32]{1,0:T(8,128)}', space=vmem, size = 0x2000, scoped, tag = 'scratch operand']
  %s0 = inlined_call_operand.smem [shape: u32[33], index: -1, kind: input, shape index: {}]
  %s1 = sld [smem:[%s0]]
  %s2 = scalar_lea.smem %s0, 1
  %s3 = sld [smem:[%s2]]
  %s4 = scalar_lea.smem %s0, 2
  %s5 = sld [smem:[%s4]]
  %s6 = scalar_lea.smem %s0, 3
  %s7 = sld [smem:[%s6]]
  %s8 = scalar_lea.smem %s0, 4
  %s9 = sld [smem:[%s8]]
  %s10 = scalar_lea.smem %s0, 5
  %s11 = sld [smem:[%s10]]
  %s12 = scalar_lea.smem %s0, 6
  %s13 = sld [smem:[%s12]]
  %s14 = scalar_lea.smem %s0, 7
  %s15 = sld [smem:[%s14]]
  %s16 = scalar_lea.smem %s0, 8
  %s17 = sld [smem:[%s16]]
  %s18 = scalar_lea.smem %s0, 9
  %s19 = sld [smem:[%s18]]
  %s20 = scalar_lea.smem %s0, 10
  %s21 = sld [smem:[%s20]]
  %s22 = scalar_lea.smem %s0, 11
  %s23 = sld [smem:[%s22]]
  %s24 = scalar_lea.smem %s0, 12
  %s25 = sld [smem:[%s24]]
  %s26 = scalar_lea.smem %s0, 13
  %s27 = sld [smem:[%s26]]
  %s28 = scalar_lea.smem %s0, 14
  %s29 = sld [smem:[%s28]]
  %s30 = scalar_lea.smem %s0, 15
  %s31 = sld [smem:[%s30]]
  %s32 = scalar_lea.smem %s0, 16
  %s33 = sld [smem:[%s32]]
  %s34 = scalar_lea.smem %s0, 17
  %s35 = sld [smem:[%s34]]
  %s36 = scalar_lea.smem %s0, 18
  %s37 = sld [smem:[%s36]]
  %s38 = scalar_lea.smem %s0, 19
  %s39 = sld [smem:[%s38]]
  %s40 = scalar_lea.smem %s0, 20
  %s41 = sld [smem:[%s40]]
  %s42 = scalar_lea.smem %s0, 21
  %s43 = sld [smem:[%s42]]
  %s44 = scalar_lea.smem %s0, 22
  %s45 = sld [smem:[%s44]]
  %s46 = scalar_lea.smem %s0, 23
  %s47 = sld [smem:[%s46]]
  %s48 = scalar_lea.smem %s0, 24
  %s49 = sld [smem:[%s48]]
  %s50 = scalar_lea.smem %s0, 25
  %s51 = sld [smem:[%s50]]
  %s52 = scalar_lea.smem %s0, 26
  %s53 = sld [smem:[%s52]]
  %s54 = scalar_lea.smem %s0, 27
  %s55 = sld [smem:[%s54]]
  %s56 = scalar_lea.smem %s0, 28
  %s57 = sld [smem:[%s56]]
  %s58 = scalar_lea.smem %s0, 29
  %s59 = sld [smem:[%s58]]
  %s60 = scalar_lea.smem %s0, 30
  %s61 = sld [smem:[%s60]]
  %s62 = scalar_lea.smem %s0, 31
  %s63 = sld [smem:[%s62]]
  %s64 = scalar_lea.smem %s0, 32
  %s65 = sld [smem:[%s64]]
  %s66 = sld [smem:[#allocation0]]
  $region253: #{tpu_custom_call.1} parent=0
    _
  %s68 = ssub.s32 1, %s66
  %s69 = scalar_select 0, %s68, %s66
  $region1: #{tpu_custom_call.1} parent=0
    #allocation3 [shape = 'u8[1024]{0}', space=smem, size = 0x400, scoped, tag = 'input window, operand 0, single buffered']
    #allocation4 [shape = 's32[2]{0}', space=sflag, size = 0x8, scoped, tag = 'scoped memory for tpu_custom_call.1']
    #allocation5 [shape = 's32[2]{0}', space=sflag, size = 0x8, scoped, tag = 'scoped memory for tpu_custom_call.1']
    #allocation6 [shape = 's32[2]{0}', space=sflag, size = 0x8, scoped, tag = 'scoped memory for tpu_custom_call.1']
    #allocation7 [shape = 'u8[16384]{0}', space=vmem, size = 0x4000, scoped, tag = 'input window, operand 1']
    #allocation8 [shape = 'u8[16384]{0}', space=vmem, size = 0x4000, scoped, tag = 'input window, operand 2, single buffered']
    #allocation9 [shape = 's32[1]{0}', space=sflag, size = 0x4, scoped, tag = 'scoped memory for tpu_custom_call.1']
    #allocation10 [shape = 'u8[512]{0}', space=vmem, size = 0x400, scoped, tag = 'input window, operand 3, single buffered']
    #allocation11 [shape = 'u8[65536]{0}', space=vmem, size = 0x10000, scoped, tag = 'input window, operand 4, single buffered']
    #allocation12 [shape = 's32[1]{0}', space=sflag, size = 0x4, scoped, tag = 'scoped memory for tpu_custom_call.1']
    #allocation13 [shape = 'u8[4096]{0}', space=vmem, size = 0x1000, scoped, tag = 'input window, operand 5, single buffered']
    #allocation14 [shape = 'u8[8192]{0}', space=vmem, size = 0x2000, scoped, tag = 'input window, operand 6, single buffered']
    #allocation15 [shape = 's32[1]{0}', space=sflag, size = 0x4, scoped, tag = 'scoped memory for tpu_custom_call.1']
    #allocation16 [shape = 'u8[512]{0}', space=vmem, size = 0x400, scoped, tag = 'input window, operand 7, single buffered']
    #allocation17 [shape = 'u8[512]{0}', space=vmem, size = 0x400, scoped, tag = 'input window, operand 8, single buffered']
    #allocation18 [shape = 's32[1]{0}', space=sflag, size = 0x4, scoped, tag = 'scoped memory for tpu_custom_call.1']
    #allocation19 [shape = 'u8[512]{0}', space=vmem, size = 0x400, scoped, tag = 'input window, operand 10, single buffered']
    #allocation20 [shape = 'u8[65536]{0}', space=vmem, size = 0x10000, scoped, tag = 'input window, operand 11, single buffered']
    #allocation21 [shape = 's32[1]{0}', space=sflag, size = 0x4, scoped, tag = 'scoped memory for tpu_custom_call.1']
    #allocation22 [shape = 'u8[4096]{0}', space=vmem, size = 0x1000, scoped, tag = 'input window, operand 12, single buffered']
    #allocation23 [shape = 'u8[8192]{0}', space=vmem, size = 0x2000, scoped, tag = 'input window, operand 13, single buffered']
    #allocation24 [shape = 's32[1]{0}', space=sflag, size = 0x4, scoped, tag = 'scoped memory for tpu_custom_call.1']
    #allocation25 [shape = 'u8[512]{0}', space=vmem, size = 0x400, scoped, tag = 'input window, operand 14, single buffered']
    #allocation26 [shape = 'u8[512]{0}', space=vmem, size = 0x400, scoped, tag = 'input window, operand 15, single buffered']
    #allocation27 [shape = 's32[1]{0}', space=sflag, size = 0x4, scoped, tag = 'scoped memory for tpu_custom_call.1']
    #allocation28 [shape = 'u8[16384]{0}', space=vmem, size = 0x4000, scoped, tag = 'input window, operand 16, single buffered']
    #allocation29 [shape = 'u8[512]{0}', space=vmem, size = 0x400, scoped, tag = 'input window, operand 17, single buffered']
    #allocation30 [shape = 's32[1]{0}', space=sflag, size = 0x4, scoped, tag = 'scoped memory for tpu_custom_call.1']
    #allocation31 [shape = 'u8[512]{0}', space=vmem, size = 0x400, scoped, tag = 'input window, operand 21, single buffered']
    #allocation32 [shape = 'u8[16384]{0}', space=vmem, size = 0x4000, scoped, tag = 'input window, operand 22, single buffered']
    #allocation33 [shape = 's32[1]{0}', space=sflag, size = 0x4, scoped, tag = 'scoped memory for tpu_custom_call.1']
    #allocation34 [shape = 'u8[512]{0}', space=vmem, size = 0x400, scoped, tag = 'input window, operand 23, single buffered']
    #allocation35 [shape = 'u8[16384]{0}', space=vmem, size = 0x4000, scoped, tag = 'input window, operand 24, single buffered']
    #allocation36 [shape = 's32[1]{0}', space=sflag, size = 0x4, scoped, tag = 'scoped memory for tpu_custom_call.1']
    #allocation37 [shape = 'u8[512]{0}', space=vmem, size = 0x400, scoped, tag = 'input window, operand 25, single buffered']
    #allocation38 [shape = 'u8[512]{0}', space=vmem, size = 0x400, scoped, tag = 'input window, operand 26, single buffered']
    #allocation39 [shape = 's32[1]{0}', space=sflag, size = 0x4, scoped, tag = 'scoped memory for tpu_custom_call.1']
    #allocation40 [shape = 'u8[16384]{0}', space=vmem, size = 0x4000, scoped, tag = 'output window, operand 0']
    %70 = vsyncpa [#allocation6], 0
    %71 = vsyncpa [#allocation4], 0
    %s72 = scalar_lea.sflag [#allocation4], 1
    %73 = vsyncpa %s72, 0
    %74 = vsyncpa [#allocation9], 0
    %75 = vsyncpa [#allocation12], 0
    %76 = vsyncpa [#allocation15], 0
    %77 = vsyncpa [#allocation18], 0
    %78 = vsyncpa [#allocation21], 0
    %79 = vsyncpa [#allocation24], 0
    %80 = vsyncpa [#allocation27], 0
    %81 = vsyncpa [#allocation30], 0
    %82 = vsyncpa [#allocation33], 0
    %83 = vsyncpa [#allocation36], 0
    %84 = vsyncpa [#allocation39], 0
    %85 = vsyncpa [#allocation5], 0
    %s86 = scalar_lea.sflag [#allocation5], 1
    %87 = vsyncpa %s86, 0
    loop: start=0, step=1, limit=4
    $region2: #{tpu_custom_call.1} parent=1 // loop_pre_header
      _
    $region3: #{tpu_custom_call.1} parent=1 // loop_header
      %s89 = sphi 0, %s93
      %p90 = scmp.ge.s32.totalorder %s89, 4
      %s97 = sphi 0, %s97
      %s99 = sphi 0, %s97
      %s100 = sphi 0, %s99
      %s114 = sphi 0, %s100
      %s120 = sphi 0, %s122
      %s123 = sphi 0, %s120
      %s124 = sphi 0, %s123
      %s140 = sphi 0, %s124
      %s144 = sphi 0, %s144
      %s146 = sphi 0, %s144
      %s147 = sphi 0, %s146
      %s161 = sphi 0, %s147
      %s165 = sphi 0, %s165
      %s167 = sphi 0, %s165
      %s168 = sphi 0, %s167
      %s182 = sphi 0, %s168
      %s186 = sphi 0, %s186
      %s188 = sphi 0, %s186
      %s189 = sphi 0, %s188
      %s203 = sphi 0, %s189
      %s207 = sphi 0, %s207
      %s209 = sphi 0, %s207
      %s210 = sphi 0, %s209
      %s224 = sphi 0, %s210
      %s228 = sphi 0, %s228
      %s230 = sphi 0, %s228
      %s231 = sphi 0, %s230
      %s245 = sphi 0, %s231
      %s249 = sphi 0, %s249
      %s251 = sphi 0, %s249
      %s252 = sphi 0, %s251
      %s266 = sphi 0, %s252
      %s270 = sphi 0, %s270
      %s272 = sphi 0, %s270
      %s273 = sphi 0, %s272
      %s287 = sphi 0, %s273
      %s291 = sphi 0, %s291
      %s293 = sphi 0, %s291
      %s294 = sphi 0, %s293
      %s308 = sphi 0, %s294
      %s312 = sphi 0, %s312
      %s314 = sphi 0, %s312
      %s315 = sphi 0, %s314
      %s329 = sphi 0, %s315
      %s333 = sphi 0, %s333
      %s335 = sphi 0, %s333
      %s336 = sphi 0, %s335
      %s350 = sphi 0, %s336
      %s354 = sphi 0, %s354
      %s356 = sphi 0, %s354
      %s357 = sphi 0, %s356
      %s371 = sphi 0, %s357
      %s375 = sphi 0, %s375
      %s377 = sphi 0, %s375
      %s378 = sphi 0, %s377
      %s392 = sphi 0, %s378
      %s396 = sphi 0, %s396
      %s398 = sphi 0, %s396
      %s399 = sphi 0, %s398
      %s413 = sphi 0, %s399
      %s417 = sphi 0, %s417
      %s419 = sphi 0, %s417
      %s420 = sphi 0, %s419
      %s434 = sphi 0, %s420
      %s438 = sphi 0, %s438
      %s440 = sphi 0, %s438
      %s441 = sphi 0, %s440
      %s455 = sphi 0, %s441
      %s459 = sphi 0, %s459
      %s461 = sphi 0, %s459
      %s462 = sphi 0, %s461
      %s476 = sphi 0, %s462
      %s480 = sphi 0, %s480
      %s482 = sphi 0, %s480
      %s483 = sphi 0, %s482
      %s497 = sphi 0, %s483
      %s501 = sphi 0, %s501
      %s503 = sphi 0, %s501
      %s504 = sphi 0, %s503
      %s518 = sphi 0, %s504
      %s522 = sphi 0, %s522
      %s524 = sphi 0, %s522
      %s525 = sphi 0, %s524
      %s539 = sphi 0, %s525
      %s543 = sphi 0, %s543
      %s545 = sphi 0, %s543
      %s546 = sphi 0, %s545
      %s560 = sphi 0, %s546
      %s564 = sphi 0, %s564
      %s566 = sphi 0, %s564
      %s567 = sphi 0, %s566
      %s581 = sphi 0, %s567
      %s585 = sphi 0, %s585
      %s587 = sphi 0, %s585
      %s588 = sphi 0, %s587
      %s602 = sphi 0, %s588
      %s606 = sphi 0, %s606
      %s608 = sphi 0, %s606
      %s609 = sphi 0, %s608
      %s623 = sphi 0, %s609
      %s627 = sphi 0, %s627
      %s629 = sphi 0, %s627
      %s630 = sphi 0, %s629
      %s644 = sphi 0, %s630
      %s648 = sphi 0, %s648
      %s650 = sphi 0, %s648
      %s651 = sphi 0, %s650
      %s665 = sphi 0, %s651
      %s669 = sphi 0, %s669
      %s671 = sphi 0, %s669
      %s672 = sphi 0, %s671
      %s686 = sphi 0, %s672
      %s690 = sphi 0, %s690
      %s692 = sphi 0, %s690
      %s693 = sphi 0, %s692
      %s707 = sphi 0, %s693
      %s711 = sphi 0, %s711
      %s713 = sphi 0, %s711
      %s714 = sphi 0, %s713
      %s728 = sphi 0, %s714
      %s732 = sphi 0, %s732
      %s734 = sphi 0, %s732
      %s735 = sphi 0, %s734
      %s749 = sphi 0, %s735
      %s753 = sphi 0, %s753
      %s755 = sphi 0, %s753
      %s756 = sphi 0, %s755
      %s770 = sphi 0, %s756
      %s776 = sphi 0, %s778
      %s779 = sphi 0, %s776
      %s780 = sphi 0, %s779
      %s796 = sphi 0, %s780
    $region4: #{tpu_custom_call.1} parent=1 // loop_header_branch
      %92 = sbr.rel (%p90) target = $region8
    $region5: #{tpu_custom_call.1} parent=1 // loop_body
      %s94 = ssub.s32 %s89, 1
      %s95 = ssub.s32 %s89, 2
      %s96 = sadd.s32 %s89, 1
      %s98 = sadd.s32 %s97, 1
      %p101 = scmp.eq.s32.totalorder %s89, 1
      %p102 = scmp.ne.s32.totalorder %s97, %s99
      %p103 = scmp.eq.s32.totalorder %s89, 0
      %p104 = por %p102, %p103
      %p105 = scmp.ne.s32.totalorder %s97, %s99
      %p106 = scmp.eq.s32.totalorder %s94, 1
      %p107 = por %p105, %p106
      %p108 = scmp.ne.s32.totalorder %s99, %s100
      %p109 = scmp.eq.s32.totalorder %s94, 0
      %p110 = por %p108, %p109
      %p111 = scmp.ne.s32.totalorder %s99, %s100
      %p112 = scmp.eq.s32.totalorder %s95, 1
      %p113 = por %p111, %p112
      %p115 = scmp.ne.s32.totalorder %s100, %s114
      %p116 = scmp.eq.s32.totalorder %s95, 0
      %p117 = por %p115, %p116
      %s118 = ssub.s32 %s89, %s96
      %p119 = scmp.eq.s32.totalorder %s118, 0
      %s121 = sadd.s32 %s120, 1
      %s122 = scalar_select %p119, %s120, %s121
      %p125 = pneg %p119
      %p126 = scmp.eq.s32.totalorder %s89, 1
      %p127 = por %p125, %p126
      %p128 = scmp.ne.s32.totalorder %s120, %s123
      %p129 = scmp.eq.s32.totalorder %s89, 0
      %p130 = por %p128, %p129
      %p131 = scmp.ne.s32.totalorder %s120, %s123
      %p132 = scmp.eq.s32.totalorder %s94, 1
      %p133 = por %p131, %p132
      %p134 = scmp.ne.s32.totalorder %s123, %s124
      %p135 = scmp.eq.s32.totalorder %s94, 0
      %p136 = por %p134, %p135
      %p137 = scmp.ne.s32.totalorder %s123, %s124
      %p138 = scmp.eq.s32.totalorder %s95, 1
      %p139 = por %p137, %p138
      %p141 = scmp.ne.s32.totalorder %s124, %s140
      %p142 = scmp.eq.s32.totalorder %s95, 0
      %p143 = por %p141, %p142
      %s145 = sadd.s32 %s144, 1
      %p148 = scmp.eq.s32.totalorder %s89, 1
      %p149 = scmp.ne.s32.totalorder %s144, %s146
      %p150 = scmp.eq.s32.totalorder %s89, 0
      %p151 = por %p149, %p150
      %p152 = scmp.ne.s32.totalorder %s144, %s146
      %p153 = scmp.eq.s32.totalorder %s94, 1
      %p154 = por %p152, %p153
      %p155 = scmp.ne.s32.totalorder %s146, %s147
      %p156 = scmp.eq.s32.totalorder %s94, 0
      %p157 = por %p155, %p156
      %p158 = scmp.ne.s32.totalorder %s146, %s147
      %p159 = scmp.eq.s32.totalorder %s95, 1
      %p160 = por %p158, %p159
      %p162 = scmp.ne.s32.totalorder %s147, %s161
      %p163 = scmp.eq.s32.totalorder %s95, 0
      %p164 = por %p162, %p163
      %s166 = sadd.s32 %s165, 1
      %p169 = scmp.eq.s32.totalorder %s89, 1
      %p170 = scmp.ne.s32.totalorder %s165, %s167
      %p171 = scmp.eq.s32.totalorder %s89, 0
      %p172 = por %p170, %p171
      %p173 = scmp.ne.s32.totalorder %s165, %s167
      %p174 = scmp.eq.s32.totalorder %s94, 1
      %p175 = por %p173, %p174
      %p176 = scmp.ne.s32.totalorder %s167, %s168
      %p177 = scmp.eq.s32.totalorder %s94, 0
      %p178 = por %p176, %p177
      %p179 = scmp.ne.s32.totalorder %s167, %s168
      %p180 = scmp.eq.s32.totalorder %s95, 1
      %p181 = por %p179, %p180
      %p183 = scmp.ne.s32.totalorder %s168, %s182
      %p184 = scmp.eq.s32.totalorder %s95, 0
      %p185 = por %p183, %p184
      %s187 = sadd.s32 %s186, 1
      %p190 = scmp.eq.s32.totalorder %s89, 1
      %p191 = scmp.ne.s32.totalorder %s186, %s188
      %p192 = scmp.eq.s32.totalorder %s89, 0
      %p193 = por %p191, %p192
      %p194 = scmp.ne.s32.totalorder %s186, %s188
      %p195 = scmp.eq.s32.totalorder %s94, 1
      %p196 = por %p194, %p195
      %p197 = scmp.ne.s32.totalorder %s188, %s189
      %p198 = scmp.eq.s32.totalorder %s94, 0
      %p199 = por %p197, %p198
      %p200 = scmp.ne.s32.totalorder %s188, %s189
      %p201 = scmp.eq.s32.totalorder %s95, 1
      %p202 = por %p200, %p201
      %p204 = scmp.ne.s32.totalorder %s189, %s203
      %p205 = scmp.eq.s32.totalorder %s95, 0
      %p206 = por %p204, %p205
      %s208 = sadd.s32 %s207, 1
      %p211 = scmp.eq.s32.totalorder %s89, 1
      %p212 = scmp.ne.s32.totalorder %s207, %s209
      %p213 = scmp.eq.s32.totalorder %s89, 0
      %p214 = por %p212, %p213
      %p215 = scmp.ne.s32.totalorder %s207, %s209
      %p216 = scmp.eq.s32.totalorder %s94, 1
      %p217 = por %p215, %p216
      %p218 = scmp.ne.s32.totalorder %s209, %s210
      %p219 = scmp.eq.s32.totalorder %s94, 0
      %p220 = por %p218, %p219
      %p221 = scmp.ne.s32.totalorder %s209, %s210
      %p222 = scmp.eq.s32.totalorder %s95, 1
      %p223 = por %p221, %p222
      %p225 = scmp.ne.s32.totalorder %s210, %s224
      %p226 = scmp.eq.s32.totalorder %s95, 0
      %p227 = por %p225, %p226
      %s229 = sadd.s32 %s228, 1
      %p232 = scmp.eq.s32.totalorder %s89, 1
      %p233 = scmp.ne.s32.totalorder %s228, %s230
      %p234 = scmp.eq.s32.totalorder %s89, 0
      %p235 = por %p233, %p234
      %p236 = scmp.ne.s32.totalorder %s228, %s230
      %p237 = scmp.eq.s32.totalorder %s94, 1
      %p238 = por %p236, %p237
      %p239 = scmp.ne.s32.totalorder %s230, %s231
      %p240 = scmp.eq.s32.totalorder %s94, 0
      %p241 = por %p239, %p240
      %p242 = scmp.ne.s32.totalorder %s230, %s231
      %p243 = scmp.eq.s32.totalorder %s95, 1
      %p244 = por %p242, %p243
      %p246 = scmp.ne.s32.totalorder %s231, %s245
      %p247 = scmp.eq.s32.totalorder %s95, 0
      %p248 = por %p246, %p247
      %s250 = sadd.s32 %s249, 1
      %p253 = scmp.eq.s32.totalorder %s89, 1
      %p254 = scmp.ne.s32.totalorder %s249, %s251
      %p255 = scmp.eq.s32.totalorder %s89, 0
      %p256 = por %p254, %p255
      %p257 = scmp.ne.s32.totalorder %s249, %s251
      %p258 = scmp.eq.s32.totalorder %s94, 1
      %p259 = por %p257, %p258
      %p260 = scmp.ne.s32.totalorder %s251, %s252
      %p261 = scmp.eq.s32.totalorder %s94, 0
      %p262 = por %p260, %p261
      %p263 = scmp.ne.s32.totalorder %s251, %s252
      %p264 = scmp.eq.s32.totalorder %s95, 1
      %p265 = por %p263, %p264
      %p267 = scmp.ne.s32.totalorder %s252, %s266
      %p268 = scmp.eq.s32.totalorder %s95, 0
      %p269 = por %p267, %p268
      %s271 = sadd.s32 %s270, 1
      %p274 = scmp.eq.s32.totalorder %s89, 1
      %p275 = scmp.ne.s32.totalorder %s270, %s272
      %p276 = scmp.eq.s32.totalorder %s89, 0
      %p277 = por %p275, %p276
      %p278 = scmp.ne.s32.totalorder %s270, %s272
      %p279 = scmp.eq.s32.totalorder %s94, 1
      %p280 = por %p278, %p279
      %p281 = scmp.ne.s32.totalorder %s272, %s273
      %p282 = scmp.eq.s32.totalorder %s94, 0
      %p283 = por %p281, %p282
      %p284 = scmp.ne.s32.totalorder %s272, %s273
      %p285 = scmp.eq.s32.totalorder %s95, 1
      %p286 = por %p284, %p285
      %p288 = scmp.ne.s32.totalorder %s273, %s287
      %p289 = scmp.eq.s32.totalorder %s95, 0
      %p290 = por %p288, %p289
      %s292 = sadd.s32 %s291, 1
      %p295 = scmp.eq.s32.totalorder %s89, 1
      %p296 = scmp.ne.s32.totalorder %s291, %s293
      %p297 = scmp.eq.s32.totalorder %s89, 0
      %p298 = por %p296, %p297
      %p299 = scmp.ne.s32.totalorder %s291, %s293
      %p300 = scmp.eq.s32.totalorder %s94, 1
      %p301 = por %p299, %p300
      %p302 = scmp.ne.s32.totalorder %s293, %s294
      %p303 = scmp.eq.s32.totalorder %s94, 0
      %p304 = por %p302, %p303
      %p305 = scmp.ne.s32.totalorder %s293, %s294
      %p306 = scmp.eq.s32.totalorder %s95, 1
      %p307 = por %p305, %p306
      %p309 = scmp.ne.s32.totalorder %s294, %s308
      %p310 = scmp.eq.s32.totalorder %s95, 0
      %p311 = por %p309, %p310
      %s313 = sadd.s32 %s312, 1
      %p316 = scmp.eq.s32.totalorder %s89, 1
      %p317 = scmp.ne.s32.totalorder %s312, %s314
      %p318 = scmp.eq.s32.totalorder %s89, 0
      %p319 = por %p317, %p318
      %p320 = scmp.ne.s32.totalorder %s312, %s314
      %p321 = scmp.eq.s32.totalorder %s94, 1
      %p322 = por %p320, %p321
      %p323 = scmp.ne.s32.totalorder %s314, %s315
      %p324 = scmp.eq.s32.totalorder %s94, 0
      %p325 = por %p323, %p324
      %p326 = scmp.ne.s32.totalorder %s314, %s315
      %p327 = scmp.eq.s32.totalorder %s95, 1
      %p328 = por %p326, %p327
      %p330 = scmp.ne.s32.totalorder %s315, %s329
      %p331 = scmp.eq.s32.totalorder %s95, 0
      %p332 = por %p330, %p331
      %s334 = sadd.s32 %s333, 1
      %p337 = scmp.eq.s32.totalorder %s89, 1
      %p338 = scmp.ne.s32.totalorder %s333, %s335
      %p339 = scmp.eq.s32.totalorder %s89, 0
      %p340 = por %p338, %p339
      %p341 = scmp.ne.s32.totalorder %s333, %s335
      %p342 = scmp.eq.s32.totalorder %s94, 1
      %p343 = por %p341, %p342
      %p344 = scmp.ne.s32.totalorder %s335, %s336
      %p345 = scmp.eq.s32.totalorder %s94, 0
      %p346 = por %p344, %p345
      %p347 = scmp.ne.s32.totalorder %s335, %s336
      %p348 = scmp.eq.s32.totalorder %s95, 1
      %p349 = por %p347, %p348
      %p351 = scmp.ne.s32.totalorder %s336, %s350
      %p352 = scmp.eq.s32.totalorder %s95, 0
      %p353 = por %p351, %p352
      %s355 = sadd.s32 %s354, 1
      %p358 = scmp.eq.s32.totalorder %s89, 1
      %p359 = scmp.ne.s32.totalorder %s354, %s356
      %p360 = scmp.eq.s32.totalorder %s89, 0
      %p361 = por %p359, %p360
      %p362 = scmp.ne.s32.totalorder %s354, %s356
      %p363 = scmp.eq.s32.totalorder %s94, 1
      %p364 = por %p362, %p363
      %p365 = scmp.ne.s32.totalorder %s356, %s357
      %p366 = scmp.eq.s32.totalorder %s94, 0
      %p367 = por %p365, %p366
      %p368 = scmp.ne.s32.totalorder %s356, %s357
      %p369 = scmp.eq.s32.totalorder %s95, 1
      %p370 = por %p368, %p369
      %p372 = scmp.ne.s32.totalorder %s357, %s371
      %p373 = scmp.eq.s32.totalorder %s95, 0
      %p374 = por %p372, %p373
      %s376 = sadd.s32 %s375, 1
      %p379 = scmp.eq.s32.totalorder %s89, 1
      %p380 = scmp.ne.s32.totalorder %s375, %s377
      %p381 = scmp.eq.s32.totalorder %s89, 0
      %p382 = por %p380, %p381
      %p383 = scmp.ne.s32.totalorder %s375, %s377
      %p384 = scmp.eq.s32.totalorder %s94, 1
      %p385 = por %p383, %p384
      %p386 = scmp.ne.s32.totalorder %s377, %s378
      %p387 = scmp.eq.s32.totalorder %s94, 0
      %p388 = por %p386, %p387
      %p389 = scmp.ne.s32.totalorder %s377, %s378
      %p390 = scmp.eq.s32.totalorder %s95, 1
      %p391 = por %p389, %p390
      %p393 = scmp.ne.s32.totalorder %s378, %s392
      %p394 = scmp.eq.s32.totalorder %s95, 0
      %p395 = por %p393, %p394
      %s397 = sadd.s32 %s396, 1
      %p400 = scmp.eq.s32.totalorder %s89, 1
      %p401 = scmp.ne.s32.totalorder %s396, %s398
      %p402 = scmp.eq.s32.totalorder %s89, 0
      %p403 = por %p401, %p402
      %p404 = scmp.ne.s32.totalorder %s396, %s398
      %p405 = scmp.eq.s32.totalorder %s94, 1
      %p406 = por %p404, %p405
      %p407 = scmp.ne.s32.totalorder %s398, %s399
      %p408 = scmp.eq.s32.totalorder %s94, 0
      %p409 = por %p407, %p408
      %p410 = scmp.ne.s32.totalorder %s398, %s399
      %p411 = scmp.eq.s32.totalorder %s95, 1
      %p412 = por %p410, %p411
      %p414 = scmp.ne.s32.totalorder %s399, %s413
      %p415 = scmp.eq.s32.totalorder %s95, 0
      %p416 = por %p414, %p415
      %s418 = sadd.s32 %s417, 1
      %p421 = scmp.eq.s32.totalorder %s89, 1
      %p422 = scmp.ne.s32.totalorder %s417, %s419
      %p423 = scmp.eq.s32.totalorder %s89, 0
      %p424 = por %p422, %p423
      %p425 = scmp.ne.s32.totalorder %s417, %s419
      %p426 = scmp.eq.s32.totalorder %s94, 1
      %p427 = por %p425, %p426
      %p428 = scmp.ne.s32.totalorder %s419, %s420
      %p429 = scmp.eq.s32.totalorder %s94, 0
      %p430 = por %p428, %p429
      %p431 = scmp.ne.s32.totalorder %s419, %s420
      %p432 = scmp.eq.s32.totalorder %s95, 1
      %p433 = por %p431, %p432
      %p435 = scmp.ne.s32.totalorder %s420, %s434
      %p436 = scmp.eq.s32.totalorder %s95, 0
      %p437 = por %p435, %p436
      %s439 = sadd.s32 %s438, 1
      %p442 = scmp.eq.s32.totalorder %s89, 1
      %p443 = scmp.ne.s32.totalorder %s438, %s440
      %p444 = scmp.eq.s32.totalorder %s89, 0
      %p445 = por %p443, %p444
      %p446 = scmp.ne.s32.totalorder %s438, %s440
      %p447 = scmp.eq.s32.totalorder %s94, 1
      %p448 = por %p446, %p447
      %p449 = scmp.ne.s32.totalorder %s440, %s441
      %p450 = scmp.eq.s32.totalorder %s94, 0
      %p451 = por %p449, %p450
      %p452 = scmp.ne.s32.totalorder %s440, %s441
      %p453 = scmp.eq.s32.totalorder %s95, 1
      %p454 = por %p452, %p453
      %p456 = scmp.ne.s32.totalorder %s441, %s455
      %p457 = scmp.eq.s32.totalorder %s95, 0
      %p458 = por %p456, %p457
      %s460 = sadd.s32 %s459, 1
      %p463 = scmp.eq.s32.totalorder %s89, 1
      %p464 = scmp.ne.s32.totalorder %s459, %s461
      %p465 = scmp.eq.s32.totalorder %s89, 0
      %p466 = por %p464, %p465
      %p467 = scmp.ne.s32.totalorder %s459, %s461
      %p468 = scmp.eq.s32.totalorder %s94, 1
      %p469 = por %p467, %p468
      %p470 = scmp.ne.s32.totalorder %s461, %s462
      %p471 = scmp.eq.s32.totalorder %s94, 0
      %p472 = por %p470, %p471
      %p473 = scmp.ne.s32.totalorder %s461, %s462
      %p474 = scmp.eq.s32.totalorder %s95, 1
      %p475 = por %p473, %p474
      %p477 = scmp.ne.s32.totalorder %s462, %s476
      %p478 = scmp.eq.s32.totalorder %s95, 0
      %p479 = por %p477, %p478
      %s481 = sadd.s32 %s480, 1
      %p484 = scmp.eq.s32.totalorder %s89, 1
      %p485 = scmp.ne.s32.totalorder %s480, %s482
      %p486 = scmp.eq.s32.totalorder %s89, 0
      %p487 = por %p485, %p486
      %p488 = scmp.ne.s32.totalorder %s480, %s482
      %p489 = scmp.eq.s32.totalorder %s94, 1
      %p490 = por %p488, %p489
      %p491 = scmp.ne.s32.totalorder %s482, %s483
      %p492 = scmp.eq.s32.totalorder %s94, 0
      %p493 = por %p491, %p492
      %p494 = scmp.ne.s32.totalorder %s482, %s483
      %p495 = scmp.eq.s32.totalorder %s95, 1
      %p496 = por %p494, %p495
      %p498 = scmp.ne.s32.totalorder %s483, %s497
      %p499 = scmp.eq.s32.totalorder %s95, 0
      %p500 = por %p498, %p499
      %s502 = sadd.s32 %s501, 1
      %p505 = scmp.eq.s32.totalorder %s89, 1
      %p506 = scmp.ne.s32.totalorder %s501, %s503
      %p507 = scmp.eq.s32.totalorder %s89, 0
      %p508 = por %p506, %p507
      %p509 = scmp.ne.s32.totalorder %s501, %s503
      %p510 = scmp.eq.s32.totalorder %s94, 1
      %p511 = por %p509, %p510
      %p512 = scmp.ne.s32.totalorder %s503, %s504
      %p513 = scmp.eq.s32.totalorder %s94, 0
      %p514 = por %p512, %p513
      %p515 = scmp.ne.s32.totalorder %s503, %s504
      %p516 = scmp.eq.s32.totalorder %s95, 1
      %p517 = por %p515, %p516
      %p519 = scmp.ne.s32.totalorder %s504, %s518
      %p520 = scmp.eq.s32.totalorder %s95, 0
      %p521 = por %p519, %p520
      %s523 = sadd.s32 %s522, 1
      %p526 = scmp.eq.s32.totalorder %s89, 1
      %p527 = scmp.ne.s32.totalorder %s522, %s524
      %p528 = scmp.eq.s32.totalorder %s89, 0
      %p529 = por %p527, %p528
      %p530 = scmp.ne.s32.totalorder %s522, %s524
      %p531 = scmp.eq.s32.totalorder %s94, 1
      %p532 = por %p530, %p531
      %p533 = scmp.ne.s32.totalorder %s524, %s525
      %p534 = scmp.eq.s32.totalorder %s94, 0
      %p535 = por %p533, %p534
      %p536 = scmp.ne.s32.totalorder %s524, %s525
      %p537 = scmp.eq.s32.totalorder %s95, 1
      %p538 = por %p536, %p537
      %p540 = scmp.ne.s32.totalorder %s525, %s539
      %p541 = scmp.eq.s32.totalorder %s95, 0
      %p542 = por %p540, %p541
      %s544 = sadd.s32 %s543, 1
      %p547 = scmp.eq.s32.totalorder %s89, 1
      %p548 = scmp.ne.s32.totalorder %s543, %s545
      %p549 = scmp.eq.s32.totalorder %s89, 0
      %p550 = por %p548, %p549
      %p551 = scmp.ne.s32.totalorder %s543, %s545
      %p552 = scmp.eq.s32.totalorder %s94, 1
      %p553 = por %p551, %p552
      %p554 = scmp.ne.s32.totalorder %s545, %s546
      %p555 = scmp.eq.s32.totalorder %s94, 0
      %p556 = por %p554, %p555
      %p557 = scmp.ne.s32.totalorder %s545, %s546
      %p558 = scmp.eq.s32.totalorder %s95, 1
      %p559 = por %p557, %p558
      %p561 = scmp.ne.s32.totalorder %s546, %s560
      %p562 = scmp.eq.s32.totalorder %s95, 0
      %p563 = por %p561, %p562
      %s565 = sadd.s32 %s564, 1
      %p568 = scmp.eq.s32.totalorder %s89, 1
      %p569 = scmp.ne.s32.totalorder %s564, %s566
      %p570 = scmp.eq.s32.totalorder %s89, 0
      %p571 = por %p569, %p570
      %p572 = scmp.ne.s32.totalorder %s564, %s566
      %p573 = scmp.eq.s32.totalorder %s94, 1
      %p574 = por %p572, %p573
      %p575 = scmp.ne.s32.totalorder %s566, %s567
      %p576 = scmp.eq.s32.totalorder %s94, 0
      %p577 = por %p575, %p576
      %p578 = scmp.ne.s32.totalorder %s566, %s567
      %p579 = scmp.eq.s32.totalorder %s95, 1
      %p580 = por %p578, %p579
      %p582 = scmp.ne.s32.totalorder %s567, %s581
      %p583 = scmp.eq.s32.totalorder %s95, 0
      %p584 = por %p582, %p583
      %s586 = sadd.s32 %s585, 1
      %p589 = scmp.eq.s32.totalorder %s89, 1
      %p590 = scmp.ne.s32.totalorder %s585, %s587
      %p591 = scmp.eq.s32.totalorder %s89, 0
      %p592 = por %p590, %p591
      %p593 = scmp.ne.s32.totalorder %s585, %s587
      %p594 = scmp.eq.s32.totalorder %s94, 1
      %p595 = por %p593, %p594
      %p596 = scmp.ne.s32.totalorder %s587, %s588
      %p597 = scmp.eq.s32.totalorder %s94, 0
      %p598 = por %p596, %p597
      %p599 = scmp.ne.s32.totalorder %s587, %s588
      %p600 = scmp.eq.s32.totalorder %s95, 1
      %p601 = por %p599, %p600
      %p603 = scmp.ne.s32.totalorder %s588, %s602
      %p604 = scmp.eq.s32.totalorder %s95, 0
      %p605 = por %p603, %p604
      %s607 = sadd.s32 %s606, 1
      %p610 = scmp.eq.s32.totalorder %s89, 1
      %p611 = scmp.ne.s32.totalorder %s606, %s608
      %p612 = scmp.eq.s32.totalorder %s89, 0
      %p613 = por %p611, %p612
      %p614 = scmp.ne.s32.totalorder %s606, %s608
      %p615 = scmp.eq.s32.totalorder %s94, 1
      %p616 = por %p614, %p615
      %p617 = scmp.ne.s32.totalorder %s608, %s609
      %p618 = scmp.eq.s32.totalorder %s94, 0
      %p619 = por %p617, %p618
      %p620 = scmp.ne.s32.totalorder %s608, %s609
      %p621 = scmp.eq.s32.totalorder %s95, 1
      %p622 = por %p620, %p621
      %p624 = scmp.ne.s32.totalorder %s609, %s623
      %p625 = scmp.eq.s32.totalorder %s95, 0
      %p626 = por %p624, %p625
      %s628 = sadd.s32 %s627, 1
      %p631 = scmp.eq.s32.totalorder %s89, 1
      %p632 = scmp.ne.s32.totalorder %s627, %s629
      %p633 = scmp.eq.s32.totalorder %s89, 0
      %p634 = por %p632, %p633
      %p635 = scmp.ne.s32.totalorder %s627, %s629
      %p636 = scmp.eq.s32.totalorder %s94, 1
      %p637 = por %p635, %p636
      %p638 = scmp.ne.s32.totalorder %s629, %s630
      %p639 = scmp.eq.s32.totalorder %s94, 0
      %p640 = por %p638, %p639
      %p641 = scmp.ne.s32.totalorder %s629, %s630
      %p642 = scmp.eq.s32.totalorder %s95, 1
      %p643 = por %p641, %p642
      %p645 = scmp.ne.s32.totalorder %s630, %s644
      %p646 = scmp.eq.s32.totalorder %s95, 0
      %p647 = por %p645, %p646
      %s649 = sadd.s32 %s648, 1
      %p652 = scmp.eq.s32.totalorder %s89, 1
      %p653 = scmp.ne.s32.totalorder %s648, %s650
      %p654 = scmp.eq.s32.totalorder %s89, 0
      %p655 = por %p653, %p654
      %p656 = scmp.ne.s32.totalorder %s648, %s650
      %p657 = scmp.eq.s32.totalorder %s94, 1
      %p658 = por %p656, %p657
      %p659 = scmp.ne.s32.totalorder %s650, %s651
      %p660 = scmp.eq.s32.totalorder %s94, 0
      %p661 = por %p659, %p660
      %p662 = scmp.ne.s32.totalorder %s650, %s651
      %p663 = scmp.eq.s32.totalorder %s95, 1
      %p664 = por %p662, %p663
      %p666 = scmp.ne.s32.totalorder %s651, %s665
      %p667 = scmp.eq.s32.totalorder %s95, 0
      %p668 = por %p666, %p667
      %s670 = sadd.s32 %s669, 1
      %p673 = scmp.eq.s32.totalorder %s89, 1
      %p674 = scmp.ne.s32.totalorder %s669, %s671
      %p675 = scmp.eq.s32.totalorder %s89, 0
      %p676 = por %p674, %p675
      %p677 = scmp.ne.s32.totalorder %s669, %s671
      %p678 = scmp.eq.s32.totalorder %s94, 1
      %p679 = por %p677, %p678
      %p680 = scmp.ne.s32.totalorder %s671, %s672
      %p681 = scmp.eq.s32.totalorder %s94, 0
      %p682 = por %p680, %p681
      %p683 = scmp.ne.s32.totalorder %s671, %s672
      %p684 = scmp.eq.s32.totalorder %s95, 1
      %p685 = por %p683, %p684
      %p687 = scmp.ne.s32.totalorder %s672, %s686
      %p688 = scmp.eq.s32.totalorder %s95, 0
      %p689 = por %p687, %p688
      %s691 = sadd.s32 %s690, 1
      %p694 = scmp.eq.s32.totalorder %s89, 1
      %p695 = scmp.ne.s32.totalorder %s690, %s692
      %p696 = scmp.eq.s32.totalorder %s89, 0
      %p697 = por %p695, %p696
      %p698 = scmp.ne.s32.totalorder %s690, %s692
      %p699 = scmp.eq.s32.totalorder %s94, 1
      %p700 = por %p698, %p699
      %p701 = scmp.ne.s32.totalorder %s692, %s693
      %p702 = scmp.eq.s32.totalorder %s94, 0
      %p703 = por %p701, %p702
      %p704 = scmp.ne.s32.totalorder %s692, %s693
      %p705 = scmp.eq.s32.totalorder %s95, 1
      %p706 = por %p704, %p705
      %p708 = scmp.ne.s32.totalorder %s693, %s707
      %p709 = scmp.eq.s32.totalorder %s95, 0
      %p710 = por %p708, %p709
      %s712 = sadd.s32 %s711, 1
      %p715 = scmp.eq.s32.totalorder %s89, 1
      %p716 = scmp.ne.s32.totalorder %s711, %s713
      %p717 = scmp.eq.s32.totalorder %s89, 0
      %p718 = por %p716, %p717
      %p719 = scmp.ne.s32.totalorder %s711, %s713
      %p720 = scmp.eq.s32.totalorder %s94, 1
      %p721 = por %p719, %p720
      %p722 = scmp.ne.s32.totalorder %s713, %s714
      %p723 = scmp.eq.s32.totalorder %s94, 0
      %p724 = por %p722, %p723
      %p725 = scmp.ne.s32.totalorder %s713, %s714
      %p726 = scmp.eq.s32.totalorder %s95, 1
      %p727 = por %p725, %p726
      %p729 = scmp.ne.s32.totalorder %s714, %s728
      %p730 = scmp.eq.s32.totalorder %s95, 0
      %p731 = por %p729, %p730
      %s733 = sadd.s32 %s732, 1
      %p736 = scmp.eq.s32.totalorder %s89, 1
      %p737 = scmp.ne.s32.totalorder %s732, %s734
      %p738 = scmp.eq.s32.totalorder %s89, 0
      %p739 = por %p737, %p738
      %p740 = scmp.ne.s32.totalorder %s732, %s734
      %p741 = scmp.eq.s32.totalorder %s94, 1
      %p742 = por %p740, %p741
      %p743 = scmp.ne.s32.totalorder %s734, %s735
      %p744 = scmp.eq.s32.totalorder %s94, 0
      %p745 = por %p743, %p744
      %p746 = scmp.ne.s32.totalorder %s734, %s735
      %p747 = scmp.eq.s32.totalorder %s95, 1
      %p748 = por %p746, %p747
      %p750 = scmp.ne.s32.totalorder %s735, %s749
      %p751 = scmp.eq.s32.totalorder %s95, 0
      %p752 = por %p750, %p751
      %s754 = sadd.s32 %s753, 1
      %p757 = scmp.eq.s32.totalorder %s89, 1
      %p758 = scmp.ne.s32.totalorder %s753, %s755
      %p759 = scmp.eq.s32.totalorder %s89, 0
      %p760 = por %p758, %p759
      %p761 = scmp.ne.s32.totalorder %s753, %s755
      %p762 = scmp.eq.s32.totalorder %s94, 1
      %p763 = por %p761, %p762
      %p764 = scmp.ne.s32.totalorder %s755, %s756
      %p765 = scmp.eq.s32.totalorder %s94, 0
      %p766 = por %p764, %p765
      %p767 = scmp.ne.s32.totalorder %s755, %s756
      %p768 = scmp.eq.s32.totalorder %s95, 1
      %p769 = por %p767, %p768
      %p771 = scmp.ne.s32.totalorder %s756, %s770
      %p772 = scmp.eq.s32.totalorder %s95, 0
      %p773 = por %p771, %p772
      %s774 = ssub.s32 %s89, %s96
      %p775 = scmp.eq.s32.totalorder %s774, 0
      %s777 = sadd.s32 %s776, 1
      %s778 = scalar_select %p775, %s776, %s777
      %p781 = pneg %p775
      %p782 = scmp.eq.s32.totalorder %s89, 1
      %p783 = por %p781, %p782
      %p784 = scmp.ne.s32.totalorder %s776, %s779
      %p785 = scmp.eq.s32.totalorder %s89, 0
      %p786 = por %p784, %p785
      %p787 = scmp.ne.s32.totalorder %s776, %s779
      %p788 = scmp.eq.s32.totalorder %s94, 1
      %p789 = por %p787, %p788
      %p790 = scmp.ne.s32.totalorder %s779, %s780
      %p791 = scmp.eq.s32.totalorder %s94, 0
      %p792 = por %p790, %p791
      %p793 = scmp.ne.s32.totalorder %s779, %s780
      %p794 = scmp.eq.s32.totalorder %s95, 1
      %p795 = por %p793, %p794
      %p797 = scmp.ne.s32.totalorder %s780, %s796
      %p798 = scmp.eq.s32.totalorder %s95, 0
      %p799 = por %p797, %p798
      %p800 = scmp.le.s32.totalorder 1, %s89
      %p801 = scmp.lt.s32.totalorder %s89, 3
      %p802 = pnand %p800, %p801
      %p803 = pneg %p802
      // Predicated region
      $region9: #{tpu_custom_call.1} parent=5 // pred_check
        _
      $region10: #{tpu_custom_call.1} parent=5 // pred_check_branch
        %805 = sbr.rel (%p802) target = $region12
      $region11: #{tpu_custom_call.1} parent=5 // pred_region
        %s806 = ssub.s32 %s89, 1
        // Predicated region
        $region13: #{tpu_custom_call.1} parent=11 // pred_check
          %p807 = pneg %p110
        $region14: #{tpu_custom_call.1} parent=11 // pred_check_branch
          %809 = sbr.rel (%p807) target = $region16
        $region15: #{tpu_custom_call.1} parent=11 // pred_region
          %s811 = ssub.s32 32, 32
          %812 = vsyncadd [#allocation6], %s811
          %815 = dma.hbm_to_smem %s1, 32, [#allocation3], [#allocation6]
        $region16: #{tpu_custom_call.1} parent=11 // pred_fallthru
          _
        // Predicated region
        $region17: #{tpu_custom_call.1} parent=11 // pred_check
          %p816 = pneg %p157
        $region18: #{tpu_custom_call.1} parent=11 // pred_check_branch
          %818 = sbr.rel (%p816) target = $region20
        $region19: #{tpu_custom_call.1} parent=11 // pred_region
          %s820 = ssub.s32 512, 512
          %821 = vsyncadd [#allocation9], %s820
          %s822 = sshll.u32 [#allocation8], 4
          %s823 = int_to_ptr.vmem [resolvable:$true] %s822
          %828 = dma.hbm_to_vmem [thread:$0]  %s5, 512, %s823, [#allocation9], 128, 128, 8
        $region20: #{tpu_custom_call.1} parent=11 // pred_fallthru
          _
        // Predicated region
        $region21: #{tpu_custom_call.1} parent=11 // pred_check
          %p829 = pneg %p178
        $region22: #{tpu_custom_call.1} parent=11 // pred_check_branch
          %831 = sbr.rel (%p829) target = $region24
        $region23: #{tpu_custom_call.1} parent=11 // pred_region
          %s833 = ssub.s32 16, 16
          %834 = vsyncadd [#allocation9], %s833
          %s836 = sshll.u32 [#allocation10], 4
          %s837 = int_to_ptr.vmem [resolvable:$true] %s836
          %839 = dma.hbm_to_vmem [thread:$0]  %s7, 16, %s837, [#allocation9]
        $region24: #{tpu_custom_call.1} parent=11 // pred_fallthru
          _
        // Predicated region
        $region25: #{tpu_custom_call.1} parent=11 // pred_check
          %p840 = pneg %p199
        $region26: #{tpu_custom_call.1} parent=11 // pred_check_branch
          %842 = sbr.rel (%p840) target = $region28
        $region27: #{tpu_custom_call.1} parent=11 // pred_region
          %s844 = ssub.s32 2048, 2048
          %845 = vsyncadd [#allocation12], %s844
          %s846 = sshll.u32 [#allocation11], 4
          %s847 = int_to_ptr.vmem [resolvable:$true] %s846
          %852 = dma.hbm_to_vmem [thread:$0]  %s9, 2048, %s847, [#allocation12], 128, 128, 8
        $region28: #{tpu_custom_call.1} parent=11 // pred_fallthru
          _
        // Predicated region
        $region29: #{tpu_custom_call.1} parent=11 // pred_check
          %p853 = pneg %p220
        $region30: #{tpu_custom_call.1} parent=11 // pred_check_branch
          %855 = sbr.rel (%p853) target = $region32
        $region31: #{tpu_custom_call.1} parent=11 // pred_region
          %s857 = ssub.s32 128, 128
          %858 = vsyncadd [#allocation12], %s857
          %s860 = sshll.u32 [#allocation13], 4
          %s861 = int_to_ptr.vmem [resolvable:$true] %s860
          %863 = dma.hbm_to_vmem [thread:$0]  %s11, 128, %s861, [#allocation12]
        $region32: #{tpu_custom_call.1} parent=11 // pred_fallthru
          _
        // Predicated region
        $region33: #{tpu_custom_call.1} parent=11 // pred_check
          %p864 = pneg %p241
        $region34: #{tpu_custom_call.1} parent=11 // pred_check_branch
          %866 = sbr.rel (%p864) target = $region36
        $region35: #{tpu_custom_call.1} parent=11 // pred_region
          %s868 = ssub.s32 256, 256
          %869 = vsyncadd [#allocation15], %s868
          %s870 = sshll.u32 [#allocation14], 4
          %s871 = int_to_ptr.vmem [resolvable:$true] %s870
          %876 = dma.hbm_to_vmem [thread:$0]  %s13, 256, %s871, [#allocation15], 128, 128, 8
        $region36: #{tpu_custom_call.1} parent=11 // pred_fallthru
          _
        // Predicated region
        $region37: #{tpu_custom_call.1} parent=11 // pred_check
          %p877 = pneg %p262
        $region38: #{tpu_custom_call.1} parent=11 // pred_check_branch
          %879 = sbr.rel (%p877) target = $region40
        $region39: #{tpu_custom_call.1} parent=11 // pred_region
          %s881 = ssub.s32 16, 16
          %882 = vsyncadd [#allocation15], %s881
          %s884 = sshll.u32 [#allocation16], 4
          %s885 = int_to_ptr.vmem [resolvable:$true] %s884
          %887 = dma.hbm_to_vmem [thread:$0]  %s15, 16, %s885, [#allocation15]
        $region40: #{tpu_custom_call.1} parent=11 // pred_fallthru
          _
        // Predicated region
        $region41: #{tpu_custom_call.1} parent=11 // pred_check
          %p888 = pneg %p283
        $region42: #{tpu_custom_call.1} parent=11 // pred_check_branch
          %890 = sbr.rel (%p888) target = $region44
        $region43: #{tpu_custom_call.1} parent=11 // pred_region
          %s892 = ssub.s32 16, 16
          %893 = vsyncadd [#allocation18], %s892
          %s895 = sshll.u32 [#allocation17], 4
          %s896 = int_to_ptr.vmem [resolvable:$true] %s895
          %898 = dma.hbm_to_vmem [thread:$0]  %s17, 16, %s896, [#allocation18]
        $region44: #{tpu_custom_call.1} parent=11 // pred_fallthru
          _
        // Predicated region
        $region45: #{tpu_custom_call.1} parent=11 // pred_check
          %p899 = pneg %p304
        $region46: #{tpu_custom_call.1} parent=11 // pred_check_branch
          %901 = sbr.rel (%p899) target = $region48
        $region47: #{tpu_custom_call.1} parent=11 // pred_region
          _
        $region48: #{tpu_custom_call.1} parent=11 // pred_fallthru
          _
        // Predicated region
        $region49: #{tpu_custom_call.1} parent=11 // pred_check
          %p902 = pneg %p325
        $region50: #{tpu_custom_call.1} parent=11 // pred_check_branch
          %904 = sbr.rel (%p902) target = $region52
        $region51: #{tpu_custom_call.1} parent=11 // pred_region
          %s906 = ssub.s32 16, 16
          %907 = vsyncadd [#allocation18], %s906
          %s909 = sshll.u32 [#allocation19], 4
          %s910 = int_to_ptr.vmem [resolvable:$true] %s909
          %912 = dma.hbm_to_vmem [thread:$0]  %s21, 16, %s910, [#allocation18]
        $region52: #{tpu_custom_call.1} parent=11 // pred_fallthru
          _
        // Predicated region
        $region53: #{tpu_custom_call.1} parent=11 // pred_check
          %p913 = pneg %p346
        $region54: #{tpu_custom_call.1} parent=11 // pred_check_branch
          %915 = sbr.rel (%p913) target = $region56
        $region55: #{tpu_custom_call.1} parent=11 // pred_region
          %s917 = ssub.s32 2048, 2048
          %918 = vsyncadd [#allocation21], %s917
          %s919 = sshll.u32 [#allocation20], 4
          %s920 = int_to_ptr.vmem [resolvable:$true] %s919
          %925 = dma.hbm_to_vmem [thread:$0]  %s23, 2048, %s920, [#allocation21], 128, 128, 8
        $region56: #{tpu_custom_call.1} parent=11 // pred_fallthru
          _
        // Predicated region
        $region57: #{tpu_custom_call.1} parent=11 // pred_check
          %p926 = pneg %p367
        $region58: #{tpu_custom_call.1} parent=11 // pred_check_branch
          %928 = sbr.rel (%p926) target = $region60
        $region59: #{tpu_custom_call.1} parent=11 // pred_region
          %s930 = ssub.s32 128, 128
          %931 = vsyncadd [#allocation21], %s930
          %s933 = sshll.u32 [#allocation22], 4
          %s934 = int_to_ptr.vmem [resolvable:$true] %s933
          %936 = dma.hbm_to_vmem [thread:$0]  %s25, 128, %s934, [#allocation21]
        $region60: #{tpu_custom_call.1} parent=11 // pred_fallthru
          _
        // Predicated region
        $region61: #{tpu_custom_call.1} parent=11 // pred_check
          %p937 = pneg %p388
        $region62: #{tpu_custom_call.1} parent=11 // pred_check_branch
          %939 = sbr.rel (%p937) target = $region64
        $region63: #{tpu_custom_call.1} parent=11 // pred_region
          %s941 = ssub.s32 256, 256
          %942 = vsyncadd [#allocation24], %s941
          %s943 = sshll.u32 [#allocation23], 4
          %s944 = int_to_ptr.vmem [resolvable:$true] %s943
          %949 = dma.hbm_to_vmem [thread:$0]  %s27, 256, %s944, [#allocation24], 128, 128, 8
        $region64: #{tpu_custom_call.1} parent=11 // pred_fallthru
          _
        // Predicated region
        $region65: #{tpu_custom_call.1} parent=11 // pred_check
          %p950 = pneg %p409
        $region66: #{tpu_custom_call.1} parent=11 // pred_check_branch
          %952 = sbr.rel (%p950) target = $region68
        $region67: #{tpu_custom_call.1} parent=11 // pred_region
          %s954 = ssub.s32 16, 16
          %955 = vsyncadd [#allocation24], %s954
          %s957 = sshll.u32 [#allocation25], 4
          %s958 = int_to_ptr.vmem [resolvable:$true] %s957
          %960 = dma.hbm_to_vmem [thread:$0]  %s29, 16, %s958, [#allocation24]
        $region68: #{tpu_custom_call.1} parent=11 // pred_fallthru
          _
        // Predicated region
        $region69: #{tpu_custom_call.1} parent=11 // pred_check
          %p961 = pneg %p430
        $region70: #{tpu_custom_call.1} parent=11 // pred_check_branch
          %963 = sbr.rel (%p961) target = $region72
        $region71: #{tpu_custom_call.1} parent=11 // pred_region
          %s965 = ssub.s32 16, 16
          %966 = vsyncadd [#allocation27], %s965
          %s968 = sshll.u32 [#allocation26], 4
          %s969 = int_to_ptr.vmem [resolvable:$true] %s968
          %971 = dma.hbm_to_vmem [thread:$0]  %s31, 16, %s969, [#allocation27]
        $region72: #{tpu_custom_call.1} parent=11 // pred_fallthru
          _
        // Predicated region
        $region73: #{tpu_custom_call.1} parent=11 // pred_check
          %p972 = pneg %p451
        $region74: #{tpu_custom_call.1} parent=11 // pred_check_branch
          %974 = sbr.rel (%p972) target = $region76
        $region75: #{tpu_custom_call.1} parent=11 // pred_region
          %s976 = ssub.s32 512, 512
          %977 = vsyncadd [#allocation27], %s976
          %s978 = sshll.u32 [#allocation28], 4
          %s979 = int_to_ptr.vmem [resolvable:$true] %s978
          %984 = dma.hbm_to_vmem [thread:$0]  %s33, 512, %s979, [#allocation27], 128, 128, 8
        $region76: #{tpu_custom_call.1} parent=11 // pred_fallthru
          _
        // Predicated region
        $region77: #{tpu_custom_call.1} parent=11 // pred_check
          %p985 = pneg %p472
        $region78: #{tpu_custom_call.1} parent=11 // pred_check_branch
          %987 = sbr.rel (%p985) target = $region80
        $region79: #{tpu_custom_call.1} parent=11 // pred_region
          %s989 = ssub.s32 16, 16
          %990 = vsyncadd [#allocation30], %s989
          %s992 = sshll.u32 [#allocation29], 4
          %s993 = int_to_ptr.vmem [resolvable:$true] %s992
          %995 = dma.hbm_to_vmem [thread:$0]  %s35, 16, %s993, [#allocation30]
        $region80: #{tpu_custom_call.1} parent=11 // pred_fallthru
          _
        // Predicated region
        $region81: #{tpu_custom_call.1} parent=11 // pred_check
          %p996 = pneg %p493
        $region82: #{tpu_custom_call.1} parent=11 // pred_check_branch
          %998 = sbr.rel (%p996) target = $region84
        $region83: #{tpu_custom_call.1} parent=11 // pred_region
          _
        $region84: #{tpu_custom_call.1} parent=11 // pred_fallthru
          _
        // Predicated region
        $region85: #{tpu_custom_call.1} parent=11 // pred_check
          %p999 = pneg %p514
        $region86: #{tpu_custom_call.1} parent=11 // pred_check_branch
          %1001 = sbr.rel (%p999) target = $region88
        $region87: #{tpu_custom_call.1} parent=11 // pred_region
          _
        $region88: #{tpu_custom_call.1} parent=11 // pred_fallthru
          _
        // Predicated region
        $region89: #{tpu_custom_call.1} parent=11 // pred_check
          %p1002 = pneg %p535
        $region90: #{tpu_custom_call.1} parent=11 // pred_check_branch
          %1004 = sbr.rel (%p1002) target = $region92
        $region91: #{tpu_custom_call.1} parent=11 // pred_region
          _
        $region92: #{tpu_custom_call.1} parent=11 // pred_fallthru
          _
        // Predicated region
        $region93: #{tpu_custom_call.1} parent=11 // pred_check
          %p1005 = pneg %p556
        $region94: #{tpu_custom_call.1} parent=11 // pred_check_branch
          %1007 = sbr.rel (%p1005) target = $region96
        $region95: #{tpu_custom_call.1} parent=11 // pred_region
          %s1009 = ssub.s32 16, 16
          %1010 = vsyncadd [#allocation30], %s1009
          %s1012 = sshll.u32 [#allocation31], 4
          %s1013 = int_to_ptr.vmem [resolvable:$true] %s1012
          %1015 = dma.hbm_to_vmem [thread:$0]  %s43, 16, %s1013, [#allocation30]
        $region96: #{tpu_custom_call.1} parent=11 // pred_fallthru
          _
        // Predicated region
        $region97: #{tpu_custom_call.1} parent=11 // pred_check
          %p1016 = pneg %p577
        $region98: #{tpu_custom_call.1} parent=11 // pred_check_branch
          %1018 = sbr.rel (%p1016) target = $region100
        $region99: #{tpu_custom_call.1} parent=11 // pred_region
          %s1020 = ssub.s32 512, 512
          %1021 = vsyncadd [#allocation33], %s1020
          %s1022 = sshll.u32 [#allocation32], 4
          %s1023 = int_to_ptr.vmem [resolvable:$true] %s1022
          %1028 = dma.hbm_to_vmem [thread:$0]  %s45, 512, %s1023, [#allocation33], 128, 128, 8
        $region100: #{tpu_custom_call.1} parent=11 // pred_fallthru
          _
        // Predicated region
        $region101: #{tpu_custom_call.1} parent=11 // pred_check
          %p1029 = pneg %p598
        $region102: #{tpu_custom_call.1} parent=11 // pred_check_branch
          %1031 = sbr.rel (%p1029) target = $region104
        $region103: #{tpu_custom_call.1} parent=11 // pred_region
          %s1033 = ssub.s32 16, 16
          %1034 = vsyncadd [#allocation33], %s1033
          %s1036 = sshll.u32 [#allocation34], 4
          %s1037 = int_to_ptr.vmem [resolvable:$true] %s1036
          %1039 = dma.hbm_to_vmem [thread:$0]  %s47, 16, %s1037, [#allocation33]
        $region104: #{tpu_custom_call.1} parent=11 // pred_fallthru
          _
        // Predicated region
        $region105: #{tpu_custom_call.1} parent=11 // pred_check
          %p1040 = pneg %p619
        $region106: #{tpu_custom_call.1} parent=11 // pred_check_branch
          %1042 = sbr.rel (%p1040) target = $region108
        $region107: #{tpu_custom_call.1} parent=11 // pred_region
          %s1044 = ssub.s32 512, 512
          %1045 = vsyncadd [#allocation36], %s1044
          %s1046 = sshll.u32 [#allocation35], 4
          %s1047 = int_to_ptr.vmem [resolvable:$true] %s1046
          %1052 = dma.hbm_to_vmem [thread:$0]  %s49, 512, %s1047, [#allocation36], 128, 128, 8
        $region108: #{tpu_custom_call.1} parent=11 // pred_fallthru
          _
        // Predicated region
        $region109: #{tpu_custom_call.1} parent=11 // pred_check
          %p1053 = pneg %p640
        $region110: #{tpu_custom_call.1} parent=11 // pred_check_branch
          %1055 = sbr.rel (%p1053) target = $region112
        $region111: #{tpu_custom_call.1} parent=11 // pred_region
          %s1057 = ssub.s32 16, 16
          %1058 = vsyncadd [#allocation36], %s1057
          %s1060 = sshll.u32 [#allocation37], 4
          %s1061 = int_to_ptr.vmem [resolvable:$true] %s1060
          %1063 = dma.hbm_to_vmem [thread:$0]  %s51, 16, %s1061, [#allocation36]
        $region112: #{tpu_custom_call.1} parent=11 // pred_fallthru
          _
        // Predicated region
        $region113: #{tpu_custom_call.1} parent=11 // pred_check
          %p1064 = pneg %p661
        $region114: #{tpu_custom_call.1} parent=11 // pred_check_branch
          %1066 = sbr.rel (%p1064) target = $region116
        $region115: #{tpu_custom_call.1} parent=11 // pred_region
          %s1068 = ssub.s32 16, 16
          %1069 = vsyncadd [#allocation39], %s1068
          %s1071 = sshll.u32 [#allocation38], 4
          %s1072 = int_to_ptr.vmem [resolvable:$true] %s1071
          %1074 = dma.hbm_to_vmem [thread:$0]  %s53, 16, %s1072, [#allocation39]
        $region116: #{tpu_custom_call.1} parent=11 // pred_fallthru
          _
        // Predicated region
        $region117: #{tpu_custom_call.1} parent=11 // pred_check
          %p1075 = pneg %p682
        $region118: #{tpu_custom_call.1} parent=11 // pred_check_branch
          %1077 = sbr.rel (%p1075) target = $region120
        $region119: #{tpu_custom_call.1} parent=11 // pred_region
          _
        $region120: #{tpu_custom_call.1} parent=11 // pred_fallthru
          _
        // Predicated region
        $region121: #{tpu_custom_call.1} parent=11 // pred_check
          %p1078 = pneg %p703
        $region122: #{tpu_custom_call.1} parent=11 // pred_check_branch
          %1080 = sbr.rel (%p1078) target = $region124
        $region123: #{tpu_custom_call.1} parent=11 // pred_region
          _
        $region124: #{tpu_custom_call.1} parent=11 // pred_fallthru
          _
        // Predicated region
        $region125: #{tpu_custom_call.1} parent=11 // pred_check
          %p1081 = pneg %p724
        $region126: #{tpu_custom_call.1} parent=11 // pred_check_branch
          %1083 = sbr.rel (%p1081) target = $region128
        $region127: #{tpu_custom_call.1} parent=11 // pred_region
          _
        $region128: #{tpu_custom_call.1} parent=11 // pred_fallthru
          _
        // Predicated region
        $region129: #{tpu_custom_call.1} parent=11 // pred_check
          %p1084 = pneg %p745
        $region130: #{tpu_custom_call.1} parent=11 // pred_check_branch
          %1086 = sbr.rel (%p1084) target = $region132
        $region131: #{tpu_custom_call.1} parent=11 // pred_region
          _
        $region132: #{tpu_custom_call.1} parent=11 // pred_fallthru
          _
        // Predicated region
        $region133: #{tpu_custom_call.1} parent=11 // pred_check
          %p1087 = pneg %p766
        $region134: #{tpu_custom_call.1} parent=11 // pred_check_branch
          %1089 = sbr.rel (%p1087) target = $region136
        $region135: #{tpu_custom_call.1} parent=11 // pred_region
          _
        $region136: #{tpu_custom_call.1} parent=11 // pred_fallthru
          _
      $region12: #{tpu_custom_call.1} parent=5 // pred_fallthru
        _
      %p1090 = scmp.lt.s32.totalorder %s89, 2
      // Predicated region
      $region137: #{tpu_custom_call.1} parent=5 // pred_check
        %p1091 = pneg %p1090
      $region138: #{tpu_custom_call.1} parent=5 // pred_check_branch
        %1093 = sbr.rel (%p1091) target = $region140
      $region139: #{tpu_custom_call.1} parent=5 // pred_region
        // Predicated region
        $region141: #{tpu_custom_call.1} parent=139 // pred_check
          %p1094 = pneg %p130
        $region142: #{tpu_custom_call.1} parent=139 // pred_check_branch
          %1096 = sbr.rel (%p1094) target = $region144
        $region143: #{tpu_custom_call.1} parent=139 // pred_region
          %s1097 = sand.u32 %s120, 1
          %s1098 = scalar_lea.sflag [#allocation4], %s1097
          %s1099 = sand.u32 %s120, 1
          %s1100 = smul.addr %s1099, 16
          %s1101 = scalar_lea.vmem [#allocation7], %s1100
          %s1103 = ssub.s32 256, 256
          %1104 = vsyncadd %s1098, %s1103
          %s1105 = smul.addr %s89, 2
          %s1106 = smul.addr %s1105, 128
          %s1107 = scalar_lea.hbm %s3, %s1106
          %s1108 = sshll.u32 %s1101, 4
          %s1109 = int_to_ptr.vmem [resolvable:$true] %s1108
          %1114 = dma.hbm_to_vmem [thread:$0]  %s1107, 256, %s1109, %s1098, 128, 128, 8
        $region144: #{tpu_custom_call.1} parent=139 // pred_fallthru
          _
      $region140: #{tpu_custom_call.1} parent=5 // pred_fallthru
        _
      %p1115 = scmp.le.s32.totalorder 1, %s89
      %p1116 = scmp.lt.s32.totalorder %s89, 3
      %p1117 = pnand %p1115, %p1116
      %p1118 = pneg %p1117
      // Predicated region
      $region145: #{tpu_custom_call.1} parent=5 // pred_check
        _
      $region146: #{tpu_custom_call.1} parent=5 // pred_check_branch
        %1120 = sbr.rel (%p1117) target = $region148
      $region147: #{tpu_custom_call.1} parent=5 // pred_region
        %s1121 = ssub.s32 %s89, 1
        // Predicated region
        $region149: #{tpu_custom_call.1} parent=147 // pred_check
          %p1122 = pneg %p110
        $region150: #{tpu_custom_call.1} parent=147 // pred_check_branch
          %1124 = sbr.rel (%p1122) target = $region152
        $region151: #{tpu_custom_call.1} parent=147 // pred_region
          %1125 = dma.done [#allocation6], 32
        $region152: #{tpu_custom_call.1} parent=147 // pred_fallthru
          _
        %s1126 = sand.u32 %s123, 1
        %s1127 = scalar_lea.sflag [#allocation4], %s1126
        %s1128 = sand.u32 %s123, 1
        %s1129 = smul.addr %s1128, 16
        %s1130 = scalar_lea.vmem [#allocation7], %s1129
        // Predicated region
        $region153: #{tpu_custom_call.1} parent=147 // pred_check
          %p1131 = pneg %p136
        $region154: #{tpu_custom_call.1} parent=147 // pred_check_branch
          %1133 = sbr.rel (%p1131) target = $region156
        $region155: #{tpu_custom_call.1} parent=147 // pred_region
          %1134 = dma.done %s1127, 256
        $region156: #{tpu_custom_call.1} parent=147 // pred_fallthru
          _
        // Predicated region
        $region157: #{tpu_custom_call.1} parent=147 // pred_check
          %p1135 = pneg %p157
        $region158: #{tpu_custom_call.1} parent=147 // pred_check_branch
          %1137 = sbr.rel (%p1135) target = $region160
        $region159: #{tpu_custom_call.1} parent=147 // pred_region
          %1138 = dma.done [#allocation9], 512
        $region160: #{tpu_custom_call.1} parent=147 // pred_fallthru
          _
        // Predicated region
        $region161: #{tpu_custom_call.1} parent=147 // pred_check
          %p1139 = pneg %p178
        $region162: #{tpu_custom_call.1} parent=147 // pred_check_branch
          %1141 = sbr.rel (%p1139) target = $region164
        $region163: #{tpu_custom_call.1} parent=147 // pred_region
          %1142 = dma.done [#allocation9], 16
        $region164: #{tpu_custom_call.1} parent=147 // pred_fallthru
          _
        // Predicated region
        $region165: #{tpu_custom_call.1} parent=147 // pred_check
          %p1143 = pneg %p199
        $region166: #{tpu_custom_call.1} parent=147 // pred_check_branch
          %1145 = sbr.rel (%p1143) target = $region168
        $region167: #{tpu_custom_call.1} parent=147 // pred_region
          %1146 = dma.done [#allocation12], 2048
        $region168: #{tpu_custom_call.1} parent=147 // pred_fallthru
          _
        // Predicated region
        $region169: #{tpu_custom_call.1} parent=147 // pred_check
          %p1147 = pneg %p220
        $region170: #{tpu_custom_call.1} parent=147 // pred_check_branch
          %1149 = sbr.rel (%p1147) target = $region172
        $region171: #{tpu_custom_call.1} parent=147 // pred_region
          %1150 = dma.done [#allocation12], 128
        $region172: #{tpu_custom_call.1} parent=147 // pred_fallthru
          _
        // Predicated region
        $region173: #{tpu_custom_call.1} parent=147 // pred_check
          %p1151 = pneg %p241
        $region174: #{tpu_custom_call.1} parent=147 // pred_check_branch
          %1153 = sbr.rel (%p1151) target = $region176
        $region175: #{tpu_custom_call.1} parent=147 // pred_region
          %1154 = dma.done [#allocation15], 256
        $region176: #{tpu_custom_call.1} parent=147 // pred_fallthru
          _
        // Predicated region
        $region177: #{tpu_custom_call.1} parent=147 // pred_check
          %p1155 = pneg %p262
        $region178: #{tpu_custom_call.1} parent=147 // pred_check_branch
          %1157 = sbr.rel (%p1155) target = $region180
        $region179: #{tpu_custom_call.1} parent=147 // pred_region
          %1158 = dma.done [#allocation15], 16
        $region180: #{tpu_custom_call.1} parent=147 // pred_fallthru
          _
        // Predicated region
        $region181: #{tpu_custom_call.1} parent=147 // pred_check
          %p1159 = pneg %p283
        $region182: #{tpu_custom_call.1} parent=147 // pred_check_branch
          %1161 = sbr.rel (%p1159) target = $region184
        $region183: #{tpu_custom_call.1} parent=147 // pred_region
          %1162 = dma.done [#allocation18], 16
        $region184: #{tpu_custom_call.1} parent=147 // pred_fallthru
          _
        // Predicated region
        $region185: #{tpu_custom_call.1} parent=147 // pred_check
          %p1163 = pneg %p325
        $region186: #{tpu_custom_call.1} parent=147 // pred_check_branch
          %1165 = sbr.rel (%p1163) target = $region188
        $region187: #{tpu_custom_call.1} parent=147 // pred_region
          %1166 = dma.done [#allocation18], 16
        $region188: #{tpu_custom_call.1} parent=147 // pred_fallthru
          _
        // Predicated region
        $region189: #{tpu_custom_call.1} parent=147 // pred_check
          %p1167 = pneg %p346
        $region190: #{tpu_custom_call.1} parent=147 // pred_check_branch
          %1169 = sbr.rel (%p1167) target = $region192
        $region191: #{tpu_custom_call.1} parent=147 // pred_region
          %1170 = dma.done [#allocation21], 2048
        $region192: #{tpu_custom_call.1} parent=147 // pred_fallthru
          _
        // Predicated region
        $region193: #{tpu_custom_call.1} parent=147 // pred_check
          %p1171 = pneg %p367
        $region194: #{tpu_custom_call.1} parent=147 // pred_check_branch
          %1173 = sbr.rel (%p1171) target = $region196
        $region195: #{tpu_custom_call.1} parent=147 // pred_region
          %1174 = dma.done [#allocation21], 128
        $region196: #{tpu_custom_call.1} parent=147 // pred_fallthru
          _
        // Predicated region
        $region197: #{tpu_custom_call.1} parent=147 // pred_check
          %p1175 = pneg %p388
        $region198: #{tpu_custom_call.1} parent=147 // pred_check_branch
          %1177 = sbr.rel (%p1175) target = $region200
        $region199: #{tpu_custom_call.1} parent=147 // pred_region
          %1178 = dma.done [#allocation24], 256
        $region200: #{tpu_custom_call.1} parent=147 // pred_fallthru
          _
        // Predicated region
        $region201: #{tpu_custom_call.1} parent=147 // pred_check
          %p1179 = pneg %p409
        $region202: #{tpu_custom_call.1} parent=147 // pred_check_branch
          %1181 = sbr.rel (%p1179) target = $region204
        $region203: #{tpu_custom_call.1} parent=147 // pred_region
          %1182 = dma.done [#allocation24], 16
        $region204: #{tpu_custom_call.1} parent=147 // pred_fallthru
          _
        // Predicated region
        $region205: #{tpu_custom_call.1} parent=147 // pred_check
          %p1183 = pneg %p430
        $region206: #{tpu_custom_call.1} parent=147 // pred_check_branch
          %1185 = sbr.rel (%p1183) target = $region208
        $region207: #{tpu_custom_call.1} parent=147 // pred_region
          %1186 = dma.done [#allocation27], 16
        $region208: #{tpu_custom_call.1} parent=147 // pred_fallthru
          _
        // Predicated region
        $region209: #{tpu_custom_call.1} parent=147 // pred_check
          %p1187 = pneg %p451
        $region210: #{tpu_custom_call.1} parent=147 // pred_check_branch
          %1189 = sbr.rel (%p1187) target = $region212
        $region211: #{tpu_custom_call.1} parent=147 // pred_region
          %1190 = dma.done [#allocation27], 512
        $region212: #{tpu_custom_call.1} parent=147 // pred_fallthru
          _
        // Predicated region
        $region213: #{tpu_custom_call.1} parent=147 // pred_check
          %p1191 = pneg %p472
        $region214: #{tpu_custom_call.1} parent=147 // pred_check_branch
          %1193 = sbr.rel (%p1191) target = $region216
        $region215: #{tpu_custom_call.1} parent=147 // pred_region
          %1194 = dma.done [#allocation30], 16
        $region216: #{tpu_custom_call.1} parent=147 // pred_fallthru
          _
        // Predicated region
        $region217: #{tpu_custom_call.1} parent=147 // pred_check
          %p1195 = pneg %p556
        $region218: #{tpu_custom_call.1} parent=147 // pred_check_branch
          %1197 = sbr.rel (%p1195) target = $region220
        $region219: #{tpu_custom_call.1} parent=147 // pred_region
          %1198 = dma.done [#allocation30], 16
        $region220: #{tpu_custom_call.1} parent=147 // pred_fallthru
          _
        // Predicated region
        $region221: #{tpu_custom_call.1} parent=147 // pred_check
          %p1199 = pneg %p577
        $region222: #{tpu_custom_call.1} parent=147 // pred_check_branch
          %1201 = sbr.rel (%p1199) target = $region224
        $region223: #{tpu_custom_call.1} parent=147 // pred_region
          %1202 = dma.done [#allocation33], 512
        $region224: #{tpu_custom_call.1} parent=147 // pred_fallthru
          _
        // Predicated region
        $region225: #{tpu_custom_call.1} parent=147 // pred_check
          %p1203 = pneg %p598
        $region226: #{tpu_custom_call.1} parent=147 // pred_check_branch
          %1205 = sbr.rel (%p1203) target = $region228
        $region227: #{tpu_custom_call.1} parent=147 // pred_region
          %1206 = dma.done [#allocation33], 16
        $region228: #{tpu_custom_call.1} parent=147 // pred_fallthru
          _
        // Predicated region
        $region229: #{tpu_custom_call.1} parent=147 // pred_check
          %p1207 = pneg %p619
        $region230: #{tpu_custom_call.1} parent=147 // pred_check_branch
          %1209 = sbr.rel (%p1207) target = $region232
        $region231: #{tpu_custom_call.1} parent=147 // pred_region
          %1210 = dma.done [#allocation36], 512
        $region232: #{tpu_custom_call.1} parent=147 // pred_fallthru
          _
        // Predicated region
        $region233: #{tpu_custom_call.1} parent=147 // pred_check
          %p1211 = pneg %p640
        $region234: #{tpu_custom_call.1} parent=147 // pred_check_branch
          %1213 = sbr.rel (%p1211) target = $region236
        $region235: #{tpu_custom_call.1} parent=147 // pred_region
          %1214 = dma.done [#allocation36], 16
        $region236: #{tpu_custom_call.1} parent=147 // pred_fallthru
          _
        // Predicated region
        $region237: #{tpu_custom_call.1} parent=147 // pred_check
          %p1215 = pneg %p661
        $region238: #{tpu_custom_call.1} parent=147 // pred_check_branch
          %1217 = sbr.rel (%p1215) target = $region240
        $region239: #{tpu_custom_call.1} parent=147 // pred_region
          %1218 = dma.done [#allocation39], 16
        $region240: #{tpu_custom_call.1} parent=147 // pred_fallthru
          _
        %1219 = sfence
        %p1220 = pneg %p110
        %p1221 = pneg %p107
        %s1222 = sand.u32 %s123, 1
        %s1223 = scalar_lea.sflag [#allocation4], %s1222
        %s1224 = sand.u32 %s123, 1
        %s1225 = smul.addr %s1224, 16
        %s1226 = scalar_lea.vmem [#allocation7], %s1225
        %p1227 = pneg %p136
        %p1228 = pneg %p133
        %p1229 = pneg %p157
        %p1230 = pneg %p154
        %p1231 = pneg %p178
        %p1232 = pneg %p175
        %p1233 = pneg %p199
        %p1234 = pneg %p196
        %p1235 = pneg %p220
        %p1236 = pneg %p217
        %p1237 = pneg %p241
        %p1238 = pneg %p238
        %p1239 = pneg %p262
        %p1240 = pneg %p259
        %p1241 = pneg %p283
        %p1242 = pneg %p280
        %p1243 = pneg %p304
        %p1244 = pneg %p301
        %p1245 = pneg %p325
        %p1246 = pneg %p322
        %p1247 = pneg %p346
        %p1248 = pneg %p343
        %p1249 = pneg %p367
        %p1250 = pneg %p364
        %p1251 = pneg %p388
        %p1252 = pneg %p385
        %p1253 = pneg %p409
        %p1254 = pneg %p406
        %p1255 = pneg %p430
        %p1256 = pneg %p427
        %p1257 = pneg %p451
        %p1258 = pneg %p448
        %p1259 = pneg %p472
        %p1260 = pneg %p469
        %p1261 = pneg %p493
        %p1262 = pneg %p490
        %p1263 = pneg %p514
        %p1264 = pneg %p511
        %p1265 = pneg %p535
        %p1266 = pneg %p532
        %p1267 = pneg %p556
        %p1268 = pneg %p553
        %p1269 = pneg %p577
        %p1270 = pneg %p574
        %p1271 = pneg %p598
        %p1272 = pneg %p595
        %p1273 = pneg %p619
        %p1274 = pneg %p616
        %p1275 = pneg %p640
        %p1276 = pneg %p637
        %p1277 = pneg %p661
        %p1278 = pneg %p658
        %p1279 = pneg %p682
        %p1280 = pneg %p679
        %p1281 = pneg %p703
        %p1282 = pneg %p700
        %p1283 = pneg %p724
        %p1284 = pneg %p721
        %p1285 = pneg %p745
        %p1286 = pneg %p742
        %p1287 = pneg %p766
        %p1288 = pneg %p763
        %p1289 = pneg %p792
        %p1290 = pneg %p789
        %s1291 = sand.u32 %s779, 1
        %s1292 = scalar_lea.sflag [#allocation5], %s1291
        %s1293 = sand.u32 %s779, 1
        %s1294 = smul.addr %s1293, 16
        %s1295 = scalar_lea.vmem [#allocation40], %s1294
        %v1296 = vld [vmem:[%s1130] sm:$0xff]
        %v1297 = vld [vmem:[%s1130 + $0x8] sm:$0xff]
        %v1298 = vld [vmem:[#allocation8] sm:$0xff]
        %v1299 = vld [vmem:[#allocation8 + $0x8] sm:$0xff]
        %v1300 = vld [vmem:[#allocation8 + $0x10] sm:$0xff]
        %v1301 = vld [vmem:[#allocation8 + $0x18] sm:$0xff]
        %v1302 = vld [vmem:[#allocation10] sm:$0x1]
        %v1304 = vlaneseq
        %v1305 = vshrl.u32 %v1304, 7
        %v1306 = vsub.s32 0, %v1305
        %v1307 = vrot.slane %v1302, %v1306
        %vm1309 = vcmask 261120
        %v1311 = vsel %vm1309, %v1296, 0
        %v1314 = vsel %vm1309, %v1297, 0
        %1316 = vmatprep.subr.mxu0 0.0
        %1317 = vmatpush1.msra.mxu0 %v1298
        %1318 = vmatprep.subr.mxu0 0.0
        %1319 = vmatpush1.msra.mxu0 %v1299
        %1320 = vmatprep.subr.mxu0 0.0
        %1321 = vmatpush1.msra.mxu0 %v1300
        %1322 = vmatprep.subr.mxu0 0.0
        %1323 = vmatpush1.msra.mxu0 %v1301
        %1324 = vmatprep.subr.mxu0 0.0
        %1325 = vmatpush1.msra.mxu0 0.0
        %1326 = vmatprep.subr.mxu0 0.0
        %1327 = vmatpush1.msra.mxu0 0.0
        %1328 = vmatprep.subr.mxu0 0.0
        %1329 = vmatpush1.msra.mxu0 0.0
        %1330 = vmatprep.subr.mxu0 0.0
        %1331 = vmatpush1.msra.mxu0 0.0
        %1332 = vmatprep.subr.mxu0 0.0
        %1333 = vmatpush1.msra.mxu0 0.0
        %1334 = vmatprep.subr.mxu0 0.0
        %1335 = vmatpush1.msra.mxu0 0.0
        %1336 = vmatprep.subr.mxu0 0.0
        %1337 = vmatpush1.msra.mxu0 0.0
        %1338 = vmatprep.subr.mxu0 0.0
        %1339 = vmatpush1.msra.mxu0 0.0
        %1340 = vmatprep.subr.mxu0 0.0
        %1341 = vmatpush1.msra.mxu0 0.0
        %1342 = vmatprep.subr.mxu0 0.0
        %1343 = vmatpush1.msra.mxu0 0.0
        %1344 = vmatprep.subr.mxu0 0.0
        %1345 = vmatpush1.msra.mxu0 0.0
        %1346 = vmatprep.subr.mxu0 0.0
        %1347 = vmatpush1.msra.mxu0 0.0
        %1348 = vmatprep.subr.mxu0 0.0
        %1349 = vmatpush1.msra.mxu0 0.0
        %1350 = vmatprep.subr.mxu0 0.0
        %1351 = vmatpush1.msra.mxu0 0.0
        %1352 = vmatprep.subr.mxu0 0.0
        %1353 = vmatpush1.msra.mxu0 0.0
        %1354 = vmatprep.subr.mxu0 0.0
        %1355 = vmatpush1.msra.mxu0 0.0
        %1356 = vmatprep.subr.mxu0 0.0
        %1357 = vmatpush1.msra.mxu0 0.0
        %1358 = vmatprep.subr.mxu0 0.0
        %1359 = vmatpush1.msra.mxu0 0.0
        %1360 = vmatprep.subr.mxu0 0.0
        %1361 = vmatpush1.msra.mxu0 0.0
        %1362 = vmatprep.subr.mxu0 0.0
        %1363 = vmatpush1.msra.mxu0 0.0
        %1364 = vmatprep.subr.mxu0 0.0
        %1365 = vmatpush1.msra.mxu0 0.0
        %1366 = vmatprep.subr.mxu0 0.0
        %1367 = vmatpush1.msra.mxu0 0.0
        %1368 = vmatprep.subr.mxu0 0.0
        %1369 = vmatpush1.msra.mxu0 0.0
        %1370 = vmatprep.subr.mxu0 0.0
        %1371 = vmatpush1.msra.mxu0 0.0
        %1372 = vmatprep.subr.mxu0 0.0
        %1373 = vmatpush1.msra.mxu0 0.0
        %1374 = vmatprep.subr.mxu0 0.0
        %1375 = vmatpush1.msra.mxu0 0.0
        %1376 = vmatprep.subr.mxu0 0.0
        %1377 = vmatpush1.msra.mxu0 0.0
        %1378 = vmatprep.subr.mxu0 0.0
        %1379 = vmatpush1.msra.mxu0 0.0
        %1380 = vmatprep.mubr.f32.mxu0 0.0
        %1381 = vmatmul.mubr.f32.gmra.mrb[0].mxu0 %v1311
        %v1382 = vpop.f32.mrb[0].mxu0
        %v1383 = vadd.f32 %v1307, %v1382
        %v1384 = vpop.f32.mrb[0].mxu0
        %1385 = vmatprep.mubr.f32.mxu0 0.0
        %1386 = vmatmul.mubr.f32.gmra.mrb[0].mxu0 %v1314
        %v1387 = vpop.f32.mrb[0].mxu0
        %v1388 = vadd.f32 %v1307, %v1387
        %v1389 = vpop.f32.mrb[0].mxu0
        %1390 = vdwg.mxu0
        %v1391 = vmul.f32 %v1383, 0.5
        %v1392 = vmul.f32 %v1388, 0.5
        %v1393 = vmul.f32 %v1383, 0.044715
        %v1394 = vmul.f32 %v1388, 0.044715
        %v1395 = vmul.f32 %v1393, %v1383
        %v1396 = vmul.f32 %v1394, %v1388
        %v1397 = vmul.f32 %v1395, %v1383
        %v1398 = vmul.f32 %v1396, %v1388
        %v1399 = vadd.f32 %v1383, %v1397
        %v1400 = vadd.f32 %v1388, %v1398
        %v1401 = vmul.f32 %v1399, 0.7978846
        %v1402 = vmul.f32 %v1400, 0.7978846
        %v1403 = vtanh.pop %v1401
        %v1404 = vtanh.pop %v1402
        %v1405 = vadd.f32 %v1403, 1.0
        %v1406 = vadd.f32 %v1404, 1.0
        %v1407 = vmul.f32 %v1391, %v1405
        %v1408 = vmul.f32 %v1392, %v1406
        %v1409 = vld [vmem:[#allocation11] sm:$0xff]
        %v1410 = vld [vmem:[#allocation11 + $0x8] sm:$0xff]
        %v1411 = vld [vmem:[#allocation11 + $0x10] sm:$0xff]
        %v1412 = vld [vmem:[#allocation11 + $0x18] sm:$0xff]
        %v1413 = vld [vmem:[#allocation11 + $0x20] sm:$0xff]
        %v1414 = vld [vmem:[#allocation11 + $0x28] sm:$0xff]
        %v1415 = vld [vmem:[#allocation11 + $0x30] sm:$0xff]
        %v1416 = vld [vmem:[#allocation11 + $0x38] sm:$0xff]
        %v1417 = vld [vmem:[#allocation11 + $0x40] sm:$0xff]
        %v1418 = vld [vmem:[#allocation11 + $0x48] sm:$0xff]
        %v1419 = vld [vmem:[#allocation11 + $0x50] sm:$0xff]
        %v1420 = vld [vmem:[#allocation11 + $0x58] sm:$0xff]
        %v1421 = vld [vmem:[#allocation11 + $0x60] sm:$0xff]
        %v1422 = vld [vmem:[#allocation11 + $0x68] sm:$0xff]
        %v1423 = vld [vmem:[#allocation11 + $0x70] sm:$0xff]
        %v1424 = vld [vmem:[#allocation11 + $0x78] sm:$0xff]
        %1427 = vrot.lane.b32.xlu0 %v1407, 120
        %v1428 = vpop.permute.xlu0 %1427
        %1429 = vrot.lane.b32.xlu0 %v1408, 120
        %v1430 = vpop.permute.xlu0 %1429
        %vm1433 = vcmask 130048
        %v1435 = vsel %vm1433, %v1411, 0
        %v1438 = vsel %vm1433, %v1412, 0
        %1440 = vmatprep.subr.mxu0 0.0
        %1441 = vmatpush1.msra.mxu0 %v1428
        %1442 = vmatprep.subr.mxu0 0.0
        %1443 = vmatpush1.msra.mxu0 %v1430
        %1444 = vmatprep.subr.mxu0 0.0
        %1445 = vmatpush1.msra.mxu0 0.0
        %1446 = vmatprep.subr.mxu0 0.0
        %1447 = vmatpush1.msra.mxu0 0.0
        %1448 = vmatprep.subr.mxu0 0.0
        %1449 = vmatpush1.msra.mxu0 0.0
        %1450 = vmatprep.subr.mxu0 0.0
        %1451 = vmatpush1.msra.mxu0 0.0
        %1452 = vmatprep.subr.mxu0 0.0
        %1453 = vmatpush1.msra.mxu0 0.0
        %1454 = vmatprep.subr.mxu0 0.0
        %1455 = vmatpush1.msra.mxu0 0.0
        %1456 = vmatprep.subr.mxu0 0.0
        %1457 = vmatpush1.msra.mxu0 0.0
        %1458 = vmatprep.subr.mxu0 0.0
        %1459 = vmatpush1.msra.mxu0 0.0
        %1460 = vmatprep.subr.mxu0 0.0
        %1461 = vmatpush1.msra.mxu0 0.0
        %1462 = vmatprep.subr.mxu0 0.0
        %1463 = vmatpush1.msra.mxu0 0.0
        %1464 = vmatprep.subr.mxu0 0.0
        %1465 = vmatpush1.msra.mxu0 0.0
        %1466 = vmatprep.subr.mxu0 0.0
        %1467 = vmatpush1.msra.mxu0 0.0
        %1468 = vmatprep.subr.mxu0 0.0
        %1469 = vmatpush1.msra.mxu0 0.0
        %1470 = vmatprep.subr.mxu0 0.0
        %1471 = vmatpush1.msra.mxu0 0.0
        %1472 = vmatprep.subr.mxu0 0.0
        %1473 = vmatpush1.msra.mxu0 0.0
        %1474 = vmatprep.subr.mxu0 0.0
        %1475 = vmatpush1.msra.mxu0 0.0
        %1476 = vmatprep.subr.mxu0 0.0
        %1477 = vmatpush1.msra.mxu0 0.0
        %1478 = vmatprep.subr.mxu0 0.0
        %1479 = vmatpush1.msra.mxu0 0.0
        %1480 = vmatprep.subr.mxu0 0.0
        %1481 = vmatpush1.msra.mxu0 0.0
        %1482 = vmatprep.subr.mxu0 0.0
        %1483 = vmatpush1.msra.mxu0 0.0
        %1484 = vmatprep.subr.mxu0 0.0
        %1485 = vmatpush1.msra.mxu0 0.0
        %1486 = vmatprep.subr.mxu0 0.0
        %1487 = vmatpush1.msra.mxu0 0.0
        %1488 = vmatprep.subr.mxu0 0.0
        %1489 = vmatpush1.msra.mxu0 0.0
        %1490 = vmatprep.subr.mxu0 0.0
        %1491 = vmatpush1.msra.mxu0 0.0
        %1492 = vmatprep.subr.mxu0 0.0
        %1493 = vmatpush1.msra.mxu0 0.0
        %1494 = vmatprep.subr.mxu0 0.0
        %1495 = vmatpush1.msra.mxu0 0.0
        %1496 = vmatprep.subr.mxu0 0.0
        %1497 = vmatpush1.msra.mxu0 0.0
        %1498 = vmatprep.subr.mxu0 0.0
        %1499 = vmatpush1.msra.mxu0 0.0
        %1500 = vmatprep.subr.mxu0 0.0
        %1501 = vmatpush1.msra.mxu0 0.0
        %1502 = vmatprep.subr.mxu0 0.0
        %1503 = vmatpush1.msra.mxu0 0.0
        %1504 = vmatprep.mubr.f32.mxu0 0.0
        %1505 = vmatmul.mubr.f32.gmra.mrb[0].mxu0 %v1435
        %v1506 = vpop.f32.mrb[0].mxu0
        %v1507 = vadd.f32 0.0, %v1506
        %v1508 = vpop.f32.mrb[0].mxu0
        %1509 = vmatprep.mubr.f32.mxu0 0.0
        %1510 = vmatmul.mubr.f32.gmra.mrb[0].mxu0 %v1438
        %v1511 = vpop.f32.mrb[0].mxu0
        %v1512 = vadd.f32 0.0, %v1511
        %v1513 = vpop.f32.mrb[0].mxu0
        %1514 = vdwg.mxu0
        %v1516 = vsel %vm1433, %v1409, 0
        %v1519 = vsel %vm1433, %v1410, 0
        %1521 = vmatprep.subr.mxu0 0.0
        %1522 = vmatpush1.msra.mxu0 %v1407
        %1523 = vmatprep.subr.mxu0 0.0
        %1524 = vmatpush1.msra.mxu0 %v1408
        %1525 = vmatprep.subr.mxu0 0.0
        %1526 = vmatpush1.msra.mxu0 0.0
        %1527 = vmatprep.subr.mxu0 0.0
        %1528 = vmatpush1.msra.mxu0 0.0
        %1529 = vmatprep.subr.mxu0 0.0
        %1530 = vmatpush1.msra.mxu0 0.0
        %1531 = vmatprep.subr.mxu0 0.0
        %1532 = vmatpush1.msra.mxu0 0.0
        %1533 = vmatprep.subr.mxu0 0.0
        %1534 = vmatpush1.msra.mxu0 0.0
        %1535 = vmatprep.subr.mxu0 0.0
        %1536 = vmatpush1.msra.mxu0 0.0
        %1537 = vmatprep.subr.mxu0 0.0
        %1538 = vmatpush1.msra.mxu0 0.0
        %1539 = vmatprep.subr.mxu0 0.0
        %1540 = vmatpush1.msra.mxu0 0.0
        %1541 = vmatprep.subr.mxu0 0.0
        %1542 = vmatpush1.msra.mxu0 0.0
        %1543 = vmatprep.subr.mxu0 0.0
        %1544 = vmatpush1.msra.mxu0 0.0
        %1545 = vmatprep.subr.mxu0 0.0
        %1546 = vmatpush1.msra.mxu0 0.0
        %1547 = vmatprep.subr.mxu0 0.0
        %1548 = vmatpush1.msra.mxu0 0.0
        %1549 = vmatprep.subr.mxu0 0.0
        %1550 = vmatpush1.msra.mxu0 0.0
        %1551 = vmatprep.subr.mxu0 0.0
        %1552 = vmatpush1.msra.mxu0 0.0
        %1553 = vmatprep.subr.mxu0 0.0
        %1554 = vmatpush1.msra.mxu0 0.0
        %1555 = vmatprep.subr.mxu0 0.0
        %1556 = vmatpush1.msra.mxu0 0.0
        %1557 = vmatprep.subr.mxu0 0.0
        %1558 = vmatpush1.msra.mxu0 0.0
        %1559 = vmatprep.subr.mxu0 0.0
        %1560 = vmatpush1.msra.mxu0 0.0
        %1561 = vmatprep.subr.mxu0 0.0
        %1562 = vmatpush1.msra.mxu0 0.0
        %1563 = vmatprep.subr.mxu0 0.0
        %1564 = vmatpush1.msra.mxu0 0.0
        %1565 = vmatprep.subr.mxu0 0.0
        %1566 = vmatpush1.msra.mxu0 0.0
        %1567 = vmatprep.subr.mxu0 0.0
        %1568 = vmatpush1.msra.mxu0 0.0
        %1569 = vmatprep.subr.mxu0 0.0
        %1570 = vmatpush1.msra.mxu0 0.0
        %1571 = vmatprep.subr.mxu0 0.0
        %1572 = vmatpush1.msra.mxu0 0.0
        %1573 = vmatprep.subr.mxu0 0.0
        %1574 = vmatpush1.msra.mxu0 0.0
        %1575 = vmatprep.subr.mxu0 0.0
        %1576 = vmatpush1.msra.mxu0 0.0
        %1577 = vmatprep.subr.mxu0 0.0
        %1578 = vmatpush1.msra.mxu0 0.0
        %1579 = vmatprep.subr.mxu0 0.0
        %1580 = vmatpush1.msra.mxu0 0.0
        %1581 = vmatprep.subr.mxu0 0.0
        %1582 = vmatpush1.msra.mxu0 0.0
        %1583 = vmatprep.subr.mxu0 0.0
        %1584 = vmatpush1.msra.mxu0 0.0
        %1585 = vmatprep.mubr.f32.mxu0 0.0
        %1586 = vmatmul.mubr.f32.gmra.mrb[0].mxu0 %v1516
        %v1587 = vpop.f32.mrb[0].mxu0
        %v1588 = vadd.f32 %v1507, %v1587
        %v1589 = vpop.f32.mrb[0].mxu0
        %1590 = vmatprep.mubr.f32.mxu0 0.0
        %1591 = vmatmul.mubr.f32.gmra.mrb[0].mxu0 %v1519
        %v1592 = vpop.f32.mrb[0].mxu0
        %v1593 = vadd.f32 %v1512, %v1592
        %v1594 = vpop.f32.mrb[0].mxu0
        %1595 = vdwg.mxu0
        %1596 = vrot.lane.b32.xlu0 %v1407, 112
        %v1597 = vpop.permute.xlu0 %1596
        %1598 = vrot.lane.b32.xlu0 %v1408, 112
        %v1599 = vpop.permute.xlu0 %1598
        %v1603 = vsel %vm1433, %v1413, 0
        %v1606 = vsel %vm1433, %v1414, 0
        %1608 = vmatprep.subr.mxu0 0.0
        %1609 = vmatpush1.msra.mxu0 %v1597
        %1610 = vmatprep.subr.mxu0 0.0
        %1611 = vmatpush1.msra.mxu0 %v1599
        %1612 = vmatprep.subr.mxu0 0.0
        %1613 = vmatpush1.msra.mxu0 0.0
        %1614 = vmatprep.subr.mxu0 0.0
        %1615 = vmatpush1.msra.mxu0 0.0
        %1616 = vmatprep.subr.mxu0 0.0
        %1617 = vmatpush1.msra.mxu0 0.0
        %1618 = vmatprep.subr.mxu0 0.0
        %1619 = vmatpush1.msra.mxu0 0.0
        %1620 = vmatprep.subr.mxu0 0.0
        %1621 = vmatpush1.msra.mxu0 0.0
        %1622 = vmatprep.subr.mxu0 0.0
        %1623 = vmatpush1.msra.mxu0 0.0
        %1624 = vmatprep.subr.mxu0 0.0
        %1625 = vmatpush1.msra.mxu0 0.0
        %1626 = vmatprep.subr.mxu0 0.0
        %1627 = vmatpush1.msra.mxu0 0.0
        %1628 = vmatprep.subr.mxu0 0.0
        %1629 = vmatpush1.msra.mxu0 0.0
        %1630 = vmatprep.subr.mxu0 0.0
        %1631 = vmatpush1.msra.mxu0 0.0
        %1632 = vmatprep.subr.mxu0 0.0
        %1633 = vmatpush1.msra.mxu0 0.0
        %1634 = vmatprep.subr.mxu0 0.0
        %1635 = vmatpush1.msra.mxu0 0.0
        %1636 = vmatprep.subr.mxu0 0.0
        %1637 = vmatpush1.msra.mxu0 0.0
        %1638 = vmatprep.subr.mxu0 0.0
        %1639 = vmatpush1.msra.mxu0 0.0
        %1640 = vmatprep.subr.mxu0 0.0
        %1641 = vmatpush1.msra.mxu0 0.0
        %1642 = vmatprep.subr.mxu0 0.0
        %1643 = vmatpush1.msra.mxu0 0.0
        %1644 = vmatprep.subr.mxu0 0.0
        %1645 = vmatpush1.msra.mxu0 0.0
        %1646 = vmatprep.subr.mxu0 0.0
        %1647 = vmatpush1.msra.mxu0 0.0
        %1648 = vmatprep.subr.mxu0 0.0
        %1649 = vmatpush1.msra.mxu0 0.0
        %1650 = vmatprep.subr.mxu0 0.0
        %1651 = vmatpush1.msra.mxu0 0.0
        %1652 = vmatprep.subr.mxu0 0.0
        %1653 = vmatpush1.msra.mxu0 0.0
        %1654 = vmatprep.subr.mxu0 0.0
        %1655 = vmatpush1.msra.mxu0 0.0
        %1656 = vmatprep.subr.mxu0 0.0
        %1657 = vmatpush1.msra.mxu0 0.0
        %1658 = vmatprep.subr.mxu0 0.0
        %1659 = vmatpush1.msra.mxu0 0.0
        %1660 = vmatprep.subr.mxu0 0.0
        %1661 = vmatpush1.msra.mxu0 0.0
        %1662 = vmatprep.subr.mxu0 0.0
        %1663 = vmatpush1.msra.mxu0 0.0
        %1664 = vmatprep.subr.mxu0 0.0
        %1665 = vmatpush1.msra.mxu0 0.0
        %1666 = vmatprep.subr.mxu0 0.0
        %1667 = vmatpush1.msra.mxu0 0.0
        %1668 = vmatprep.subr.mxu0 0.0
        %1669 = vmatpush1.msra.mxu0 0.0
        %1670 = vmatprep.subr.mxu0 0.0
        %1671 = vmatpush1.msra.mxu0 0.0
        %1672 = vmatprep.mubr.f32.mxu0 0.0
        %1673 = vmatmul.mubr.f32.gmra.mrb[0].mxu0 %v1603
        %v1674 = vpop.f32.mrb[0].mxu0
        %v1675 = vadd.f32 0.0, %v1674
        %v1676 = vpop.f32.mrb[0].mxu0
        %1677 = vmatprep.mubr.f32.mxu0 0.0
        %1678 = vmatmul.mubr.f32.gmra.mrb[0].mxu0 %v1606
        %v1679 = vpop.f32.mrb[0].mxu0
        %v1680 = vadd.f32 0.0, %v1679
        %v1681 = vpop.f32.mrb[0].mxu0
        %1682 = vdwg.mxu0
        %v1683 = vadd.f32 %v1588, %v1675
        %v1684 = vadd.f32 %v1593, %v1680
        %1685 = vrot.lane.b32.xlu0 %v1407, 104
        %v1686 = vpop.permute.xlu0 %1685
        %1687 = vrot.lane.b32.xlu0 %v1408, 104
        %v1688 = vpop.permute.xlu0 %1687
        %v1692 = vsel %vm1433, %v1415, 0
        %v1695 = vsel %vm1433, %v1416, 0
        %1697 = vmatprep.subr.mxu0 0.0
        %1698 = vmatpush1.msra.mxu0 %v1686
        %1699 = vmatprep.subr.mxu0 0.0
        %1700 = vmatpush1.msra.mxu0 %v1688
        %1701 = vmatprep.subr.mxu0 0.0
        %1702 = vmatpush1.msra.mxu0 0.0
        %1703 = vmatprep.subr.mxu0 0.0
        %1704 = vmatpush1.msra.mxu0 0.0
        %1705 = vmatprep.subr.mxu0 0.0
        %1706 = vmatpush1.msra.mxu0 0.0
        %1707 = vmatprep.subr.mxu0 0.0
        %1708 = vmatpush1.msra.mxu0 0.0
        %1709 = vmatprep.subr.mxu0 0.0
        %1710 = vmatpush1.msra.mxu0 0.0
        %1711 = vmatprep.subr.mxu0 0.0
        %1712 = vmatpush1.msra.mxu0 0.0
        %1713 = vmatprep.subr.mxu0 0.0
        %1714 = vmatpush1.msra.mxu0 0.0
        %1715 = vmatprep.subr.mxu0 0.0
        %1716 = vmatpush1.msra.mxu0 0.0
        %1717 = vmatprep.subr.mxu0 0.0
        %1718 = vmatpush1.msra.mxu0 0.0
        %1719 = vmatprep.subr.mxu0 0.0
        %1720 = vmatpush1.msra.mxu0 0.0
        %1721 = vmatprep.subr.mxu0 0.0
        %1722 = vmatpush1.msra.mxu0 0.0
        %1723 = vmatprep.subr.mxu0 0.0
        %1724 = vmatpush1.msra.mxu0 0.0
        %1725 = vmatprep.subr.mxu0 0.0
        %1726 = vmatpush1.msra.mxu0 0.0
        %1727 = vmatprep.subr.mxu0 0.0
        %1728 = vmatpush1.msra.mxu0 0.0
        %1729 = vmatprep.subr.mxu0 0.0
        %1730 = vmatpush1.msra.mxu0 0.0
        %1731 = vmatprep.subr.mxu0 0.0
        %1732 = vmatpush1.msra.mxu0 0.0
        %1733 = vmatprep.subr.mxu0 0.0
        %1734 = vmatpush1.msra.mxu0 0.0
        %1735 = vmatprep.subr.mxu0 0.0
        %1736 = vmatpush1.msra.mxu0 0.0
        %1737 = vmatprep.subr.mxu0 0.0
        %1738 = vmatpush1.msra.mxu0 0.0
        %1739 = vmatprep.subr.mxu0 0.0
        %1740 = vmatpush1.msra.mxu0 0.0
        %1741 = vmatprep.subr.mxu0 0.0
        %1742 = vmatpush1.msra.mxu0 0.0
        %1743 = vmatprep.subr.mxu0 0.0
        %1744 = vmatpush1.msra.mxu0 0.0
        %1745 = vmatprep.subr.mxu0 0.0
        %1746 = vmatpush1.msra.mxu0 0.0
        %1747 = vmatprep.subr.mxu0 0.0
        %1748 = vmatpush1.msra.mxu0 0.0
        %1749 = vmatprep.subr.mxu0 0.0
        %1750 = vmatpush1.msra.mxu0 0.0
        %1751 = vmatprep.subr.mxu0 0.0
        %1752 = vmatpush1.msra.mxu0 0.0
        %1753 = vmatprep.subr.mxu0 0.0
        %1754 = vmatpush1.msra.mxu0 0.0
        %1755 = vmatprep.subr.mxu0 0.0
        %1756 = vmatpush1.msra.mxu0 0.0
        %1757 = vmatprep.subr.mxu0 0.0
        %1758 = vmatpush1.msra.mxu0 0.0
        %1759 = vmatprep.subr.mxu0 0.0
        %1760 = vmatpush1.msra.mxu0 0.0
        %1761 = vmatprep.mubr.f32.mxu0 0.0
        %1762 = vmatmul.mubr.f32.gmra.mrb[0].mxu0 %v1692
        %v1763 = vpop.f32.mrb[0].mxu0
        %v1764 = vadd.f32 0.0, %v1763
        %v1765 = vpop.f32.mrb[0].mxu0
        %1766 = vmatprep.mubr.f32.mxu0 0.0
        %1767 = vmatmul.mubr.f32.gmra.mrb[0].mxu0 %v1695
        %v1768 = vpop.f32.mrb[0].mxu0
        %v1769 = vadd.f32 0.0, %v1768
        %v1770 = vpop.f32.mrb[0].mxu0
        %1771 = vdwg.mxu0
        %v1772 = vadd.f32 %v1683, %v1764
        %v1773 = vadd.f32 %v1684, %v1769
        %1774 = vrot.lane.b32.xlu0 %v1407, 96
        %v1775 = vpop.permute.xlu0 %1774
        %1776 = vrot.lane.b32.xlu0 %v1408, 96
        %v1777 = vpop.permute.xlu0 %1776
        %v1781 = vsel %vm1433, %v1417, 0
        %v1784 = vsel %vm1433, %v1418, 0
        %1786 = vmatprep.subr.mxu0 0.0
        %1787 = vmatpush1.msra.mxu0 %v1775
        %1788 = vmatprep.subr.mxu0 0.0
        %1789 = vmatpush1.msra.mxu0 %v1777
        %1790 = vmatprep.subr.mxu0 0.0
        %1791 = vmatpush1.msra.mxu0 0.0
        %1792 = vmatprep.subr.mxu0 0.0
        %1793 = vmatpush1.msra.mxu0 0.0
        %1794 = vmatprep.subr.mxu0 0.0
        %1795 = vmatpush1.msra.mxu0 0.0
        %1796 = vmatprep.subr.mxu0 0.0
        %1797 = vmatpush1.msra.mxu0 0.0
        %1798 = vmatprep.subr.mxu0 0.0
        %1799 = vmatpush1.msra.mxu0 0.0
        %1800 = vmatprep.subr.mxu0 0.0
        %1801 = vmatpush1.msra.mxu0 0.0
        %1802 = vmatprep.subr.mxu0 0.0
        %1803 = vmatpush1.msra.mxu0 0.0
        %1804 = vmatprep.subr.mxu0 0.0
        %1805 = vmatpush1.msra.mxu0 0.0
        %1806 = vmatprep.subr.mxu0 0.0
        %1807 = vmatpush1.msra.mxu0 0.0
        %1808 = vmatprep.subr.mxu0 0.0
        %1809 = vmatpush1.msra.mxu0 0.0
        %1810 = vmatprep.subr.mxu0 0.0
        %1811 = vmatpush1.msra.mxu0 0.0
        %1812 = vmatprep.subr.mxu0 0.0
        %1813 = vmatpush1.msra.mxu0 0.0
        %1814 = vmatprep.subr.mxu0 0.0
        %1815 = vmatpush1.msra.mxu0 0.0
        %1816 = vmatprep.subr.mxu0 0.0
        %1817 = vmatpush1.msra.mxu0 0.0
        %1818 = vmatprep.subr.mxu0 0.0
        %1819 = vmatpush1.msra.mxu0 0.0
        %1820 = vmatprep.subr.mxu0 0.0
        %1821 = vmatpush1.msra.mxu0 0.0
        %1822 = vmatprep.subr.mxu0 0.0
        %1823 = vmatpush1.msra.mxu0 0.0
        %1824 = vmatprep.subr.mxu0 0.0
        %1825 = vmatpush1.msra.mxu0 0.0
        %1826 = vmatprep.subr.mxu0 0.0
        %1827 = vmatpush1.msra.mxu0 0.0
        %1828 = vmatprep.subr.mxu0 0.0
        %1829 = vmatpush1.msra.mxu0 0.0
        %1830 = vmatprep.subr.mxu0 0.0
        %1831 = vmatpush1.msra.mxu0 0.0
        %1832 = vmatprep.subr.mxu0 0.0
        %1833 = vmatpush1.msra.mxu0 0.0
        %1834 = vmatprep.subr.mxu0 0.0
        %1835 = vmatpush1.msra.mxu0 0.0
        %1836 = vmatprep.subr.mxu0 0.0
        %1837 = vmatpush1.msra.mxu0 0.0
        %1838 = vmatprep.subr.mxu0 0.0
        %1839 = vmatpush1.msra.mxu0 0.0
        %1840 = vmatprep.subr.mxu0 0.0
        %1841 = vmatpush1.msra.mxu0 0.0
        %1842 = vmatprep.subr.mxu0 0.0
        %1843 = vmatpush1.msra.mxu0 0.0
        %1844 = vmatprep.subr.mxu0 0.0
        %1845 = vmatpush1.msra.mxu0 0.0
        %1846 = vmatprep.subr.mxu0 0.0
        %1847 = vmatpush1.msra.mxu0 0.0
        %1848 = vmatprep.subr.mxu0 0.0
        %1849 = vmatpush1.msra.mxu0 0.0
        %1850 = vmatprep.mubr.f32.mxu0 0.0
        %1851 = vmatmul.mubr.f32.gmra.mrb[0].mxu0 %v1781
        %v1852 = vpop.f32.mrb[0].mxu0
        %v1853 = vadd.f32 0.0, %v1852
        %v1854 = vpop.f32.mrb[0].mxu0
        %1855 = vmatprep.mubr.f32.mxu0 0.0
        %1856 = vmatmul.mubr.f32.gmra.mrb[0].mxu0 %v1784
        %v1857 = vpop.f32.mrb[0].mxu0
        %v1858 = vadd.f32 0.0, %v1857
        %v1859 = vpop.f32.mrb[0].mxu0
        %1860 = vdwg.mxu0
        %v1861 = vadd.f32 %v1772, %v1853
        %v1862 = vadd.f32 %v1773, %v1858
        %1863 = vrot.lane.b32.xlu0 %v1407, 88
        %v1864 = vpop.permute.xlu0 %1863
        %1865 = vrot.lane.b32.xlu0 %v1408, 88
        %v1866 = vpop.permute.xlu0 %1865
        %v1870 = vsel %vm1433, %v1419, 0
        %v1873 = vsel %vm1433, %v1420, 0
        %1875 = vmatprep.subr.mxu0 0.0
        %1876 = vmatpush1.msra.mxu0 %v1864
        %1877 = vmatprep.subr.mxu0 0.0
        %1878 = vmatpush1.msra.mxu0 %v1866
        %1879 = vmatprep.subr.mxu0 0.0
        %1880 = vmatpush1.msra.mxu0 0.0
        %1881 = vmatprep.subr.mxu0 0.0
        %1882 = vmatpush1.msra.mxu0 0.0
        %1883 = vmatprep.subr.mxu0 0.0
        %1884 = vmatpush1.msra.mxu0 0.0
        %1885 = vmatprep.subr.mxu0 0.0
        %1886 = vmatpush1.msra.mxu0 0.0
        %1887 = vmatprep.subr.mxu0 0.0
        %1888 = vmatpush1.msra.mxu0 0.0
        %1889 = vmatprep.subr.mxu0 0.0
        %1890 = vmatpush1.msra.mxu0 0.0
        %1891 = vmatprep.subr.mxu0 0.0
        %1892 = vmatpush1.msra.mxu0 0.0
        %1893 = vmatprep.subr.mxu0 0.0
        %1894 = vmatpush1.msra.mxu0 0.0
        %1895 = vmatprep.subr.mxu0 0.0
        %1896 = vmatpush1.msra.mxu0 0.0
        %1897 = vmatprep.subr.mxu0 0.0
        %1898 = vmatpush1.msra.mxu0 0.0
        %1899 = vmatprep.subr.mxu0 0.0
        %1900 = vmatpush1.msra.mxu0 0.0
        %1901 = vmatprep.subr.mxu0 0.0
        %1902 = vmatpush1.msra.mxu0 0.0
        %1903 = vmatprep.subr.mxu0 0.0
        %1904 = vmatpush1.msra.mxu0 0.0
        %1905 = vmatprep.subr.mxu0 0.0
        %1906 = vmatpush1.msra.mxu0 0.0
        %1907 = vmatprep.subr.mxu0 0.0
        %1908 = vmatpush1.msra.mxu0 0.0
        %1909 = vmatprep.subr.mxu0 0.0
        %1910 = vmatpush1.msra.mxu0 0.0
        %1911 = vmatprep.subr.mxu0 0.0
        %1912 = vmatpush1.msra.mxu0 0.0
        %1913 = vmatprep.subr.mxu0 0.0
        %1914 = vmatpush1.msra.mxu0 0.0
        %1915 = vmatprep.subr.mxu0 0.0
        %1916 = vmatpush1.msra.mxu0 0.0
        %1917 = vmatprep.subr.mxu0 0.0
        %1918 = vmatpush1.msra.mxu0 0.0
        %1919 = vmatprep.subr.mxu0 0.0
        %1920 = vmatpush1.msra.mxu0 0.0
        %1921 = vmatprep.subr.mxu0 0.0
        %1922 = vmatpush1.msra.mxu0 0.0
        %1923 = vmatprep.subr.mxu0 0.0
        %1924 = vmatpush1.msra.mxu0 0.0
        %1925 = vmatprep.subr.mxu0 0.0
        %1926 = vmatpush1.msra.mxu0 0.0
        %1927 = vmatprep.subr.mxu0 0.0
        %1928 = vmatpush1.msra.mxu0 0.0
        %1929 = vmatprep.subr.mxu0 0.0
        %1930 = vmatpush1.msra.mxu0 0.0
        %1931 = vmatprep.subr.mxu0 0.0
        %1932 = vmatpush1.msra.mxu0 0.0
        %1933 = vmatprep.subr.mxu0 0.0
        %1934 = vmatpush1.msra.mxu0 0.0
        %1935 = vmatprep.subr.mxu0 0.0
        %1936 = vmatpush1.msra.mxu0 0.0
        %1937 = vmatprep.subr.mxu0 0.0
        %1938 = vmatpush1.msra.mxu0 0.0
        %1939 = vmatprep.mubr.f32.mxu0 0.0
        %1940 = vmatmul.mubr.f32.gmra.mrb[0].mxu0 %v1870
        %v1941 = vpop.f32.mrb[0].mxu0
        %v1942 = vadd.f32 0.0, %v1941
        %v1943 = vpop.f32.mrb[0].mxu0
        %1944 = vmatprep.mubr.f32.mxu0 0.0
        %1945 = vmatmul.mubr.f32.gmra.mrb[0].mxu0 %v1873
        %v1946 = vpop.f32.mrb[0].mxu0
        %v1947 = vadd.f32 0.0, %v1946
        %v1948 = vpop.f32.mrb[0].mxu0
        %1949 = vdwg.mxu0
        %v1950 = vadd.f32 %v1861, %v1942
        %v1951 = vadd.f32 %v1862, %v1947
        %1952 = vrot.lane.b32.xlu0 %v1407, 80
        %v1953 = vpop.permute.xlu0 %1952
        %1954 = vrot.lane.b32.xlu0 %v1408, 80
        %v1955 = vpop.permute.xlu0 %1954
        %v1959 = vsel %vm1433, %v1421, 0
        %v1962 = vsel %vm1433, %v1422, 0
        %1964 = vmatprep.subr.mxu0 0.0
        %1965 = vmatpush1.msra.mxu0 %v1953
        %1966 = vmatprep.subr.mxu0 0.0
        %1967 = vmatpush1.msra.mxu0 %v1955
        %1968 = vmatprep.subr.mxu0 0.0
        %1969 = vmatpush1.msra.mxu0 0.0
        %1970 = vmatprep.subr.mxu0 0.0
        %1971 = vmatpush1.msra.mxu0 0.0
        %1972 = vmatprep.subr.mxu0 0.0
        %1973 = vmatpush1.msra.mxu0 0.0
        %1974 = vmatprep.subr.mxu0 0.0
        %1975 = vmatpush1.msra.mxu0 0.0
        %1976 = vmatprep.subr.mxu0 0.0
        %1977 = vmatpush1.msra.mxu0 0.0
        %1978 = vmatprep.subr.mxu0 0.0
        %1979 = vmatpush1.msra.mxu0 0.0
        %1980 = vmatprep.subr.mxu0 0.0
        %1981 = vmatpush1.msra.mxu0 0.0
        %1982 = vmatprep.subr.mxu0 0.0
        %1983 = vmatpush1.msra.mxu0 0.0
        %1984 = vmatprep.subr.mxu0 0.0
        %1985 = vmatpush1.msra.mxu0 0.0
        %1986 = vmatprep.subr.mxu0 0.0
        %1987 = vmatpush1.msra.mxu0 0.0
        %1988 = vmatprep.subr.mxu0 0.0
        %1989 = vmatpush1.msra.mxu0 0.0
        %1990 = vmatprep.subr.mxu0 0.0
        %1991 = vmatpush1.msra.mxu0 0.0
        %1992 = vmatprep.subr.mxu0 0.0
        %1993 = vmatpush1.msra.mxu0 0.0
        %1994 = vmatprep.subr.mxu0 0.0
        %1995 = vmatpush1.msra.mxu0 0.0
        %1996 = vmatprep.subr.mxu0 0.0
        %1997 = vmatpush1.msra.mxu0 0.0
        %1998 = vmatprep.subr.mxu0 0.0
        %1999 = vmatpush1.msra.mxu0 0.0
        %2000 = vmatprep.subr.mxu0 0.0
        %2001 = vmatpush1.msra.mxu0 0.0
        %2002 = vmatprep.subr.mxu0 0.0
        %2003 = vmatpush1.msra.mxu0 0.0
        %2004 = vmatprep.subr.mxu0 0.0
        %2005 = vmatpush1.msra.mxu0 0.0
        %2006 = vmatprep.subr.mxu0 0.0
        %2007 = vmatpush1.msra.mxu0 0.0
        %2008 = vmatprep.subr.mxu0 0.0
        %2009 = vmatpush1.msra.mxu0 0.0
        %2010 = vmatprep.subr.mxu0 0.0
        %2011 = vmatpush1.msra.mxu0 0.0
        %2012 = vmatprep.subr.mxu0 0.0
        %2013 = vmatpush1.msra.mxu0 0.0
        %2014 = vmatprep.subr.mxu0 0.0
        %2015 = vmatpush1.msra.mxu0 0.0
        %2016 = vmatprep.subr.mxu0 0.0
        %2017 = vmatpush1.msra.mxu0 0.0
        %2018 = vmatprep.subr.mxu0 0.0
        %2019 = vmatpush1.msra.mxu0 0.0
        %2020 = vmatprep.subr.mxu0 0.0
        %2021 = vmatpush1.msra.mxu0 0.0
        %2022 = vmatprep.subr.mxu0 0.0
        %2023 = vmatpush1.msra.mxu0 0.0
        %2024 = vmatprep.subr.mxu0 0.0
        %2025 = vmatpush1.msra.mxu0 0.0
        %2026 = vmatprep.subr.mxu0 0.0
        %2027 = vmatpush1.msra.mxu0 0.0
        %2028 = vmatprep.mubr.f32.mxu0 0.0
        %2029 = vmatmul.mubr.f32.gmra.mrb[0].mxu0 %v1959
        %v2030 = vpop.f32.mrb[0].mxu0
        %v2031 = vadd.f32 0.0, %v2030
        %v2032 = vpop.f32.mrb[0].mxu0
        %2033 = vmatprep.mubr.f32.mxu0 0.0
        %2034 = vmatmul.mubr.f32.gmra.mrb[0].mxu0 %v1962
        %v2035 = vpop.f32.mrb[0].mxu0
        %v2036 = vadd.f32 0.0, %v2035
        %v2037 = vpop.f32.mrb[0].mxu0
        %2038 = vdwg.mxu0
        %v2039 = vadd.f32 %v1950, %v2031
        %v2040 = vadd.f32 %v1951, %v2036
        %2041 = vrot.lane.b32.xlu0 %v1407, 72
        %v2042 = vpop.permute.xlu0 %2041
        %2043 = vrot.lane.b32.xlu0 %v1408, 72
        %v2044 = vpop.permute.xlu0 %2043
        %v2048 = vsel %vm1433, %v1423, 0
        %v2051 = vsel %vm1433, %v1424, 0
        %2053 = vmatprep.subr.mxu0 0.0
        %2054 = vmatpush1.msra.mxu0 %v2042
        %2055 = vmatprep.subr.mxu0 0.0
        %2056 = vmatpush1.msra.mxu0 %v2044
        %2057 = vmatprep.subr.mxu0 0.0
        %2058 = vmatpush1.msra.mxu0 0.0
        %2059 = vmatprep.subr.mxu0 0.0
        %2060 = vmatpush1.msra.mxu0 0.0
        %2061 = vmatprep.subr.mxu0 0.0
        %2062 = vmatpush1.msra.mxu0 0.0
        %2063 = vmatprep.subr.mxu0 0.0
        %2064 = vmatpush1.msra.mxu0 0.0
        %2065 = vmatprep.subr.mxu0 0.0
        %2066 = vmatpush1.msra.mxu0 0.0
        %2067 = vmatprep.subr.mxu0 0.0
        %2068 = vmatpush1.msra.mxu0 0.0
        %2069 = vmatprep.subr.mxu0 0.0
        %2070 = vmatpush1.msra.mxu0 0.0
        %2071 = vmatprep.subr.mxu0 0.0
        %2072 = vmatpush1.msra.mxu0 0.0
        %2073 = vmatprep.subr.mxu0 0.0
        %2074 = vmatpush1.msra.mxu0 0.0
        %2075 = vmatprep.subr.mxu0 0.0
        %2076 = vmatpush1.msra.mxu0 0.0
        %2077 = vmatprep.subr.mxu0 0.0
        %2078 = vmatpush1.msra.mxu0 0.0
        %2079 = vmatprep.subr.mxu0 0.0
        %2080 = vmatpush1.msra.mxu0 0.0
        %2081 = vmatprep.subr.mxu0 0.0
        %2082 = vmatpush1.msra.mxu0 0.0
        %2083 = vmatprep.subr.mxu0 0.0
        %2084 = vmatpush1.msra.mxu0 0.0
        %2085 = vmatprep.subr.mxu0 0.0
        %2086 = vmatpush1.msra.mxu0 0.0
        %2087 = vmatprep.subr.mxu0 0.0
        %2088 = vmatpush1.msra.mxu0 0.0
        %2089 = vmatprep.subr.mxu0 0.0
        %2090 = vmatpush1.msra.mxu0 0.0
        %2091 = vmatprep.subr.mxu0 0.0
        %2092 = vmatpush1.msra.mxu0 0.0
        %2093 = vmatprep.subr.mxu0 0.0
        %2094 = vmatpush1.msra.mxu0 0.0
        %2095 = vmatprep.subr.mxu0 0.0
        %2096 = vmatpush1.msra.mxu0 0.0
        %2097 = vmatprep.subr.mxu0 0.0
        %2098 = vmatpush1.msra.mxu0 0.0
        %2099 = vmatprep.subr.mxu0 0.0
        %2100 = vmatpush1.msra.mxu0 0.0
        %2101 = vmatprep.subr.mxu0 0.0
        %2102 = vmatpush1.msra.mxu0 0.0
        %2103 = vmatprep.subr.mxu0 0.0
        %2104 = vmatpush1.msra.mxu0 0.0
        %2105 = vmatprep.subr.mxu0 0.0
        %2106 = vmatpush1.msra.mxu0 0.0
        %2107 = vmatprep.subr.mxu0 0.0
        %2108 = vmatpush1.msra.mxu0 0.0
        %2109 = vmatprep.subr.mxu0 0.0
        %2110 = vmatpush1.msra.mxu0 0.0
        %2111 = vmatprep.subr.mxu0 0.0
        %2112 = vmatpush1.msra.mxu0 0.0
        %2113 = vmatprep.subr.mxu0 0.0
        %2114 = vmatpush1.msra.mxu0 0.0
        %2115 = vmatprep.subr.mxu0 0.0
        %2116 = vmatpush1.msra.mxu0 0.0
        %2117 = vmatprep.mubr.f32.mxu0 0.0
        %2118 = vmatmul.mubr.f32.gmra.mrb[0].mxu0 %v2048
        %v2119 = vpop.f32.mrb[0].mxu0
        %v2120 = vadd.f32 0.0, %v2119
        %v2121 = vpop.f32.mrb[0].mxu0
        %2122 = vmatprep.mubr.f32.mxu0 0.0
        %2123 = vmatmul.mubr.f32.gmra.mrb[0].mxu0 %v2051
        %v2124 = vpop.f32.mrb[0].mxu0
        %v2125 = vadd.f32 0.0, %v2124
        %v2126 = vpop.f32.mrb[0].mxu0
        %2127 = vdwg.mxu0
        %v2128 = vadd.f32 %v2039, %v2120
        %v2129 = vadd.f32 %v2040, %v2125
        %v2130 = vld [vmem:[#allocation13] sm:$0xff]
        %v2131 = vld [vmem:[#allocation14] sm:$0xff]
        %v2132 = vld [vmem:[#allocation14 + $0x8] sm:$0xff]
        %vm2133 = vcmask 64512
        %v2135 = vsel %vm2133, %v2128, 0
        %v2138 = vsel %vm2133, %v2129, 0
        %2140 = vmatprep.subr.mxu0 0.0
        %2141 = vmatpush1.msra.mxu0 %v2130
        %2142 = vmatprep.subr.mxu0 0.0
        %2143 = vmatpush1.msra.mxu0 0.0
        %2144 = vmatprep.subr.mxu0 0.0
        %2145 = vmatpush1.msra.mxu0 0.0
        %2146 = vmatprep.subr.mxu0 0.0
        %2147 = vmatpush1.msra.mxu0 0.0
        %2148 = vmatprep.subr.mxu0 0.0
        %2149 = vmatpush1.msra.mxu0 0.0
        %2150 = vmatprep.subr.mxu0 0.0
        %2151 = vmatpush1.msra.mxu0 0.0
        %2152 = vmatprep.subr.mxu0 0.0
        %2153 = vmatpush1.msra.mxu0 0.0
        %2154 = vmatprep.subr.mxu0 0.0
        %2155 = vmatpush1.msra.mxu0 0.0
        %2156 = vmatprep.subr.mxu0 0.0
        %2157 = vmatpush1.msra.mxu0 0.0
        %2158 = vmatprep.subr.mxu0 0.0
        %2159 = vmatpush1.msra.mxu0 0.0
        %2160 = vmatprep.subr.mxu0 0.0
        %2161 = vmatpush1.msra.mxu0 0.0
        %2162 = vmatprep.subr.mxu0 0.0
        %2163 = vmatpush1.msra.mxu0 0.0
        %2164 = vmatprep.subr.mxu0 0.0
        %2165 = vmatpush1.msra.mxu0 0.0
        %2166 = vmatprep.subr.mxu0 0.0
        %2167 = vmatpush1.msra.mxu0 0.0
        %2168 = vmatprep.subr.mxu0 0.0
        %2169 = vmatpush1.msra.mxu0 0.0
        %2170 = vmatprep.subr.mxu0 0.0
        %2171 = vmatpush1.msra.mxu0 0.0
        %2172 = vmatprep.subr.mxu0 0.0
        %2173 = vmatpush1.msra.mxu0 0.0
        %2174 = vmatprep.subr.mxu0 0.0
        %2175 = vmatpush1.msra.mxu0 0.0
        %2176 = vmatprep.subr.mxu0 0.0
        %2177 = vmatpush1.msra.mxu0 0.0
        %2178 = vmatprep.subr.mxu0 0.0
        %2179 = vmatpush1.msra.mxu0 0.0
        %2180 = vmatprep.subr.mxu0 0.0
        %2181 = vmatpush1.msra.mxu0 0.0
        %2182 = vmatprep.subr.mxu0 0.0
        %2183 = vmatpush1.msra.mxu0 0.0
        %2184 = vmatprep.subr.mxu0 0.0
        %2185 = vmatpush1.msra.mxu0 0.0
        %2186 = vmatprep.subr.mxu0 0.0
        %2187 = vmatpush1.msra.mxu0 0.0
        %2188 = vmatprep.subr.mxu0 0.0
        %2189 = vmatpush1.msra.mxu0 0.0
        %2190 = vmatprep.subr.mxu0 0.0
        %2191 = vmatpush1.msra.mxu0 0.0
        %2192 = vmatprep.subr.mxu0 0.0
        %2193 = vmatpush1.msra.mxu0 0.0
        %2194 = vmatprep.subr.mxu0 0.0
        %2195 = vmatpush1.msra.mxu0 0.0
        %2196 = vmatprep.subr.mxu0 0.0
        %2197 = vmatpush1.msra.mxu0 0.0
        %2198 = vmatprep.subr.mxu0 0.0
        %2199 = vmatpush1.msra.mxu0 0.0
        %2200 = vmatprep.subr.mxu0 0.0
        %2201 = vmatpush1.msra.mxu0 0.0
        %2202 = vmatprep.subr.mxu0 0.0
        %2203 = vmatpush1.msra.mxu0 0.0
        %2204 = vmatprep.mubr.f32.mxu0 0.0
        %2205 = vmatmul.mubr.f32.gmra.mrb[0].mxu0 %v2135
        %v2206 = vpop.f32.mrb[0].mxu0
        %v2207 = vadd.f32 %v2131, %v2206
        %v2208 = vpop.f32.mrb[0].mxu0
        %2209 = vmatprep.mubr.f32.mxu0 0.0
        %2210 = vmatmul.mubr.f32.gmra.mrb[0].mxu0 %v2138
        %v2211 = vpop.f32.mrb[0].mxu0
        %v2212 = vadd.f32 %v2132, %v2211
        %v2213 = vpop.f32.mrb[0].mxu0
        %2214 = vdwg.mxu0
        %v2215 = vadd.f32 %v1296, %v2207
        %v2216 = vadd.f32 %v1297, %v2212
        %v2217 = vld [vmem:[#allocation16] sm:$0x1]
        %v2218 = vld [vmem:[#allocation17] sm:$0x1]
        %v2219 = vsel %vm1309, %v2215, 0.0
        %2220 = vadd.xlane.f32.xlu0 %v2219
        %v2221 = vpop.xlane.xlu0 %2220
        %v2222 = vsel %vm1309, %v2216, 0.0
        %2223 = vadd.xlane.f32.xlu0 %v2222
        %v2224 = vpop.xlane.xlu0 %2223
        %v2225 = vrcp.pop 32.0
        %v2226 = vmul.f32 %v2221, %v2225
        %v2227 = vmul.f32 %v2224, %v2225
        %v2228 = vsub.f32 %v2215, %v2226
        %v2229 = vsub.f32 %v2216, %v2227
        %v2230 = vmul.f32 %v2228, %v2228
        %v2231 = vmul.f32 %v2229, %v2229
        %v2232 = vsel %vm1309, %v2230, 0.0
        %2233 = vadd.xlane.f32.xlu0 %v2232
        %v2234 = vpop.xlane.xlu0 %2233
        %v2235 = vsel %vm1309, %v2231, 0.0
        %2236 = vadd.xlane.f32.xlu0 %v2235
        %v2237 = vpop.xlane.xlu0 %2236
        %v2238 = vmul.f32 %v2234, %v2225
        %v2239 = vmul.f32 %v2237, %v2225
        %v2240 = vadd.f32 %v2238, 1e-05
        %v2241 = vadd.f32 %v2239, 1e-05
        %v2242 = vrsqrt.pop %v2240
        %v2243 = vrsqrt.pop %v2241
        %v2244 = vmul.f32 %v2228, %v2242
        %v2245 = vmul.f32 %v2229, %v2243
        %v2247 = vlaneseq
        %v2248 = vshrl.u32 %v2247, 7
        %v2249 = vsub.s32 0, %v2248
        %v2250 = vrot.slane %v2217, %v2249
        %v2252 = vmul.f32 %v2244, %v2250
        %v2253 = vmul.f32 %v2245, %v2250
        %v2255 = vlaneseq
        %v2256 = vshrl.u32 %v2255, 7
        %v2257 = vsub.s32 0, %v2256
        %v2258 = vrot.slane %v2218, %v2257
        %v2260 = vadd.f32 %v2252, %v2258
        %v2261 = vadd.f32 %v2253, %v2258
        %v2262 = vld [vmem:[%s61] sm:$0xff]
        %v2263 = vld [vmem:[%s61 + $0x8] sm:$0xff]
        %v2264 = vld [vmem:[#allocation28] sm:$0xff]
        %v2265 = vld [vmem:[#allocation28 + $0x8] sm:$0xff]
        %v2266 = vld [vmem:[#allocation28 + $0x10] sm:$0xff]
        %v2267 = vld [vmem:[#allocation28 + $0x18] sm:$0xff]
        %v2268 = vld [vmem:[#allocation29] sm:$0x1]
        %v2270 = vlaneseq
        %v2271 = vshrl.u32 %v2270, 7
        %v2272 = vsub.s32 0, %v2271
        %v2273 = vrot.slane %v2268, %v2272
        %v2276 = vsel %vm1309, %v2260, 0
        %v2279 = vsel %vm1309, %v2261, 0
        %2281 = vmatprep.subr.mxu0 0.0
        %2282 = vmatpush1.msra.mxu0 %v2264
        %2283 = vmatprep.subr.mxu0 0.0
        %2284 = vmatpush1.msra.mxu0 %v2265
        %2285 = vmatprep.subr.mxu0 0.0
        %2286 = vmatpush1.msra.mxu0 %v2266
        %2287 = vmatprep.subr.mxu0 0.0
        %2288 = vmatpush1.msra.mxu0 %v2267
        %2289 = vmatprep.subr.mxu0 0.0
        %2290 = vmatpush1.msra.mxu0 0.0
        %2291 = vmatprep.subr.mxu0 0.0
        %2292 = vmatpush1.msra.mxu0 0.0
        %2293 = vmatprep.subr.mxu0 0.0
        %2294 = vmatpush1.msra.mxu0 0.0
        %2295 = vmatprep.subr.mxu0 0.0
        %2296 = vmatpush1.msra.mxu0 0.0
        %2297 = vmatprep.subr.mxu0 0.0
        %2298 = vmatpush1.msra.mxu0 0.0
        %2299 = vmatprep.subr.mxu0 0.0
        %2300 = vmatpush1.msra.mxu0 0.0
        %2301 = vmatprep.subr.mxu0 0.0
        %2302 = vmatpush1.msra.mxu0 0.0
        %2303 = vmatprep.subr.mxu0 0.0
        %2304 = vmatpush1.msra.mxu0 0.0
        %2305 = vmatprep.subr.mxu0 0.0
        %2306 = vmatpush1.msra.mxu0 0.0
        %2307 = vmatprep.subr.mxu0 0.0
        %2308 = vmatpush1.msra.mxu0 0.0
        %2309 = vmatprep.subr.mxu0 0.0
        %2310 = vmatpush1.msra.mxu0 0.0
        %2311 = vmatprep.subr.mxu0 0.0
        %2312 = vmatpush1.msra.mxu0 0.0
        %2313 = vmatprep.subr.mxu0 0.0
        %2314 = vmatpush1.msra.mxu0 0.0
        %2315 = vmatprep.subr.mxu0 0.0
        %2316 = vmatpush1.msra.mxu0 0.0
        %2317 = vmatprep.subr.mxu0 0.0
        %2318 = vmatpush1.msra.mxu0 0.0
        %2319 = vmatprep.subr.mxu0 0.0
        %2320 = vmatpush1.msra.mxu0 0.0
        %2321 = vmatprep.subr.mxu0 0.0
        %2322 = vmatpush1.msra.mxu0 0.0
        %2323 = vmatprep.subr.mxu0 0.0
        %2324 = vmatpush1.msra.mxu0 0.0
        %2325 = vmatprep.subr.mxu0 0.0
        %2326 = vmatpush1.msra.mxu0 0.0
        %2327 = vmatprep.subr.mxu0 0.0
        %2328 = vmatpush1.msra.mxu0 0.0
        %2329 = vmatprep.subr.mxu0 0.0
        %2330 = vmatpush1.msra.mxu0 0.0
        %2331 = vmatprep.subr.mxu0 0.0
        %2332 = vmatpush1.msra.mxu0 0.0
        %2333 = vmatprep.subr.mxu0 0.0
        %2334 = vmatpush1.msra.mxu0 0.0
        %2335 = vmatprep.subr.mxu0 0.0
        %2336 = vmatpush1.msra.mxu0 0.0
        %2337 = vmatprep.subr.mxu0 0.0
        %2338 = vmatpush1.msra.mxu0 0.0
        %2339 = vmatprep.subr.mxu0 0.0
        %2340 = vmatpush1.msra.mxu0 0.0
        %2341 = vmatprep.subr.mxu0 0.0
        %2342 = vmatpush1.msra.mxu0 0.0
        %2343 = vmatprep.subr.mxu0 0.0
        %2344 = vmatpush1.msra.mxu0 0.0
        %2345 = vmatprep.mubr.f32.mxu0 0.0
        %2346 = vmatmul.mubr.f32.gmra.mrb[0].mxu0 %v2276
        %v2347 = vpop.f32.mrb[0].mxu0
        %v2348 = vadd.f32 %v2273, %v2347
        %v2349 = vpop.f32.mrb[0].mxu0
        %2350 = vmatprep.mubr.f32.mxu0 0.0
        %2351 = vmatmul.mubr.f32.gmra.mrb[0].mxu0 %v2279
        %v2352 = vpop.f32.mrb[0].mxu0
        %v2353 = vadd.f32 %v2273, %v2352
        %v2354 = vpop.f32.mrb[0].mxu0
        %2355 = vdwg.mxu0
        %v2356 = vld [vmem:[%s37] sm:$0xff]
        %v2357 = vld [vmem:[%s37 + $0x8] sm:$0xff]
        %v2358 = vld [vmem:[%s37 + $0x10] sm:$0xff]
        %v2359 = vld [vmem:[%s37 + $0x18] sm:$0xff]
        %2362 = vrot.lane.b32.xlu0 %v2348, 96
        %v2363 = vpop.permute.xlu0 %2362
        %2364 = vrot.lane.b32.xlu0 %v2353, 96
        %v2365 = vpop.permute.xlu0 %2364
        %v2366 = vsel %vm2133, %v2348, 0
        %v2368 = vsel %vm2133, %v2353, 0
        %v2370 = vsel %vm2133, %v2363, 0
        %v2372 = vsel %vm2133, %v2365, 0
        %2374 = vmatprep.subr.mxu0 0.0
        %2375 = vmatpush1.xpose.msra.mxu0 %v2370
        %2376 = vmatprep.subr.mxu0 0.0
        %2377 = vmatpush1.xpose.msra.mxu0 %v2372
        %2378 = vmatprep.subr.mxu0 0.0
        %2379 = vmatpush1.xpose.msra.mxu0 0.0
        %2380 = vmatprep.subr.mxu0 0.0
        %2381 = vmatpush1.xpose.msra.mxu0 0.0
        %2382 = vmatprep.subr.mxu0 0.0
        %2383 = vmatpush1.xpose.msra.mxu0 0.0
        %2384 = vmatprep.subr.mxu0 0.0
        %2385 = vmatpush1.xpose.msra.mxu0 0.0
        %2386 = vmatprep.subr.mxu0 0.0
        %2387 = vmatpush1.xpose.msra.mxu0 0.0
        %2388 = vmatprep.subr.mxu0 0.0
        %2389 = vmatpush1.xpose.msra.mxu0 0.0
        %2390 = vmatprep.subr.mxu0 0.0
        %2391 = vmatpush1.xpose.msra.mxu0 0.0
        %2392 = vmatprep.subr.mxu0 0.0
        %2393 = vmatpush1.xpose.msra.mxu0 0.0
        %2394 = vmatprep.subr.mxu0 0.0
        %2395 = vmatpush1.xpose.msra.mxu0 0.0
        %2396 = vmatprep.subr.mxu0 0.0
        %2397 = vmatpush1.xpose.msra.mxu0 0.0
        %2398 = vmatprep.subr.mxu0 0.0
        %2399 = vmatpush1.xpose.msra.mxu0 0.0
        %2400 = vmatprep.subr.mxu0 0.0
        %2401 = vmatpush1.xpose.msra.mxu0 0.0
        %2402 = vmatprep.subr.mxu0 0.0
        %2403 = vmatpush1.xpose.msra.mxu0 0.0
        %2404 = vmatprep.subr.mxu0 0.0
        %2405 = vmatpush1.xpose.msra.mxu0 0.0
        %2406 = vmatprep.subr.mxu0 0.0
        %2407 = vmatpush1.xpose.msra.mxu0 0.0
        %2408 = vmatprep.subr.mxu0 0.0
        %2409 = vmatpush1.xpose.msra.mxu0 0.0
        %2410 = vmatprep.subr.mxu0 0.0
        %2411 = vmatpush1.xpose.msra.mxu0 0.0
        %2412 = vmatprep.subr.mxu0 0.0
        %2413 = vmatpush1.xpose.msra.mxu0 0.0
        %2414 = vmatprep.subr.mxu0 0.0
        %2415 = vmatpush1.xpose.msra.mxu0 0.0
        %2416 = vmatprep.subr.mxu0 0.0
        %2417 = vmatpush1.xpose.msra.mxu0 0.0
        %2418 = vmatprep.subr.mxu0 0.0
        %2419 = vmatpush1.xpose.msra.mxu0 0.0
        %2420 = vmatprep.subr.mxu0 0.0
        %2421 = vmatpush1.xpose.msra.mxu0 0.0
        %2422 = vmatprep.subr.mxu0 0.0
        %2423 = vmatpush1.xpose.msra.mxu0 0.0
        %2424 = vmatprep.subr.mxu0 0.0
        %2425 = vmatpush1.xpose.msra.mxu0 0.0
        %2426 = vmatprep.subr.mxu0 0.0
        %2427 = vmatpush1.xpose.msra.mxu0 0.0
        %2428 = vmatprep.subr.mxu0 0.0
        %2429 = vmatpush1.xpose.msra.mxu0 0.0
        %2430 = vmatprep.subr.mxu0 0.0
        %2431 = vmatpush1.xpose.msra.mxu0 0.0
        %2432 = vmatprep.subr.mxu0 0.0
        %2433 = vmatpush1.xpose.msra.mxu0 0.0
        %2434 = vmatprep.subr.mxu0 0.0
        %2435 = vmatpush1.xpose.msra.mxu0 0.0
        %2436 = vmatprep.subr.mxu0 0.0
        %2437 = vmatpush1.xpose.msra.mxu0 0.0
        %2438 = vmatprep.mubr.f32.mxu0 0.0
        %2439 = vmatmul.mubr.f32.gmra.mrb[0].mxu0 %v2366
        %v2440 = vpop.f32.mrb[0].mxu0
        %v2441 = vadd.f32 0.0, %v2440
        %v2442 = vpop.f32.mrb[0].mxu0
        %2443 = vmatprep.mubr.f32.mxu0 0.0
        %2444 = vmatmul.mubr.f32.gmra.mrb[0].mxu0 %v2368
        %v2445 = vpop.f32.mrb[0].mxu0
        %v2446 = vadd.f32 0.0, %v2445
        %v2447 = vpop.f32.mrb[0].mxu0
        %2448 = vdwg.mxu0
        %v2449 = vmul.f32 %v2441, 0.35355338
        %v2450 = vmul.f32 %v2446, 0.35355338
        %v2451 = vadd.f32 %v2449, %v2262
        %v2452 = vadd.f32 %v2450, %v2263
        %v2453 = vsel %vm1433, %v2451, -inf
        %2454 = vmax.xlane.f32.xlu0 %v2453
        %v2455 = vpop.xlane.xlu0 %2454
        %v2456 = vsel %vm1433, %v2452, -inf
        %2457 = vmax.xlane.f32.xlu0 %v2456
        %v2458 = vpop.xlane.xlu0 %2457
        %v2459 = vsub.f32 %v2451, %v2455
        %v2460 = vsub.f32 %v2452, %v2458
        %v2461 = vmul.f32 %v2459, 1.442695
        %v2462 = vpow.pop %v2461
        %v2463 = vmul.f32 %v2460, 1.442695
        %v2464 = vpow.pop %v2463
        %v2465 = vsel %vm1433, %v2462, 0.0
        %2466 = vadd.xlane.f32.xlu0 %v2465
        %v2467 = vpop.xlane.xlu0 %2466
        %v2468 = vsel %vm1433, %v2464, 0.0
        %2469 = vadd.xlane.f32.xlu0 %v2468
        %v2470 = vpop.xlane.xlu0 %2469
        %v2471 = vrcp.pop %v2467
        %v2472 = vmul.f32 %v2462, %v2471
        %v2473 = vrcp.pop %v2470
        %v2474 = vmul.f32 %v2464, %v2473
        %2475 = vrot.lane.b32.xlu0 %v2348, 64
        %v2476 = vpop.permute.xlu0 %2475
        %2477 = vrot.lane.b32.xlu0 %v2353, 64
        %v2478 = vpop.permute.xlu0 %2477
        %v2482 = vsel %vm1433, %v2472, 0
        %v2485 = vsel %vm1433, %v2474, 0
        %2487 = vmatprep.subr.mxu0 0.0
        %2488 = vmatpush1.msra.mxu0 %v2476
        %2489 = vmatprep.subr.mxu0 0.0
        %2490 = vmatpush1.msra.mxu0 %v2478
        %2491 = vmatprep.subr.mxu0 0.0
        %2492 = vmatpush1.msra.mxu0 0.0
        %2493 = vmatprep.subr.mxu0 0.0
        %2494 = vmatpush1.msra.mxu0 0.0
        %2495 = vmatprep.subr.mxu0 0.0
        %2496 = vmatpush1.msra.mxu0 0.0
        %2497 = vmatprep.subr.mxu0 0.0
        %2498 = vmatpush1.msra.mxu0 0.0
        %2499 = vmatprep.subr.mxu0 0.0
        %2500 = vmatpush1.msra.mxu0 0.0
        %2501 = vmatprep.subr.mxu0 0.0
        %2502 = vmatpush1.msra.mxu0 0.0
        %2503 = vmatprep.subr.mxu0 0.0
        %2504 = vmatpush1.msra.mxu0 0.0
        %2505 = vmatprep.subr.mxu0 0.0
        %2506 = vmatpush1.msra.mxu0 0.0
        %2507 = vmatprep.subr.mxu0 0.0
        %2508 = vmatpush1.msra.mxu0 0.0
        %2509 = vmatprep.subr.mxu0 0.0
        %2510 = vmatpush1.msra.mxu0 0.0
        %2511 = vmatprep.subr.mxu0 0.0
        %2512 = vmatpush1.msra.mxu0 0.0
        %2513 = vmatprep.subr.mxu0 0.0
        %2514 = vmatpush1.msra.mxu0 0.0
        %2515 = vmatprep.subr.mxu0 0.0
        %2516 = vmatpush1.msra.mxu0 0.0
        %2517 = vmatprep.subr.mxu0 0.0
        %2518 = vmatpush1.msra.mxu0 0.0
        %2519 = vmatprep.subr.mxu0 0.0
        %2520 = vmatpush1.msra.mxu0 0.0
        %2521 = vmatprep.subr.mxu0 0.0
        %2522 = vmatpush1.msra.mxu0 0.0
        %2523 = vmatprep.subr.mxu0 0.0
        %2524 = vmatpush1.msra.mxu0 0.0
        %2525 = vmatprep.subr.mxu0 0.0
        %2526 = vmatpush1.msra.mxu0 0.0
        %2527 = vmatprep.subr.mxu0 0.0
        %2528 = vmatpush1.msra.mxu0 0.0
        %2529 = vmatprep.subr.mxu0 0.0
        %2530 = vmatpush1.msra.mxu0 0.0
        %2531 = vmatprep.subr.mxu0 0.0
        %2532 = vmatpush1.msra.mxu0 0.0
        %2533 = vmatprep.subr.mxu0 0.0
        %2534 = vmatpush1.msra.mxu0 0.0
        %2535 = vmatprep.subr.mxu0 0.0
        %2536 = vmatpush1.msra.mxu0 0.0
        %2537 = vmatprep.subr.mxu0 0.0
        %2538 = vmatpush1.msra.mxu0 0.0
        %2539 = vmatprep.subr.mxu0 0.0
        %2540 = vmatpush1.msra.mxu0 0.0
        %2541 = vmatprep.subr.mxu0 0.0
        %2542 = vmatpush1.msra.mxu0 0.0
        %2543 = vmatprep.subr.mxu0 0.0
        %2544 = vmatpush1.msra.mxu0 0.0
        %2545 = vmatprep.subr.mxu0 0.0
        %2546 = vmatpush1.msra.mxu0 0.0
        %2547 = vmatprep.subr.mxu0 0.0
        %2548 = vmatpush1.msra.mxu0 0.0
        %2549 = vmatprep.subr.mxu0 0.0
        %2550 = vmatpush1.msra.mxu0 0.0
        %2551 = vmatprep.mubr.f32.mxu0 0.0
        %2552 = vmatmul.mubr.f32.gmra.mrb[0].mxu0 %v2482
        %v2553 = vpop.f32.mrb[0].mxu0
        %v2554 = vadd.f32 0.0, %v2553
        %v2555 = vpop.f32.mrb[0].mxu0
        %2556 = vmatprep.mubr.f32.mxu0 0.0
        %2557 = vmatmul.mubr.f32.gmra.mrb[0].mxu0 %v2485
        %v2558 = vpop.f32.mrb[0].mxu0
        %v2559 = vadd.f32 0.0, %v2558
        %v2560 = vpop.f32.mrb[0].mxu0
        %2561 = vdwg.mxu0
        %2562 = vrot.lane.b32.xlu0 %v2348, 120
        %v2563 = vpop.permute.xlu0 %2562
        %2564 = vrot.lane.b32.xlu0 %v2353, 120
        %v2565 = vpop.permute.xlu0 %2564
        %2566 = vrot.lane.b32.xlu0 %v2348, 88
        %v2567 = vpop.permute.xlu0 %2566
        %2568 = vrot.lane.b32.xlu0 %v2353, 88
        %v2569 = vpop.permute.xlu0 %2568
        %v2570 = vsel %vm2133, %v2563, 0
        %v2572 = vsel %vm2133, %v2565, 0
        %v2574 = vsel %vm2133, %v2567, 0
        %v2576 = vsel %vm2133, %v2569, 0
        %2578 = vmatprep.subr.mxu0 0.0
        %2579 = vmatpush1.xpose.msra.mxu0 %v2574
        %2580 = vmatprep.subr.mxu0 0.0
        %2581 = vmatpush1.xpose.msra.mxu0 %v2576
        %2582 = vmatprep.subr.mxu0 0.0
        %2583 = vmatpush1.xpose.msra.mxu0 0.0
        %2584 = vmatprep.subr.mxu0 0.0
        %2585 = vmatpush1.xpose.msra.mxu0 0.0
        %2586 = vmatprep.subr.mxu0 0.0
        %2587 = vmatpush1.xpose.msra.mxu0 0.0
        %2588 = vmatprep.subr.mxu0 0.0
        %2589 = vmatpush1.xpose.msra.mxu0 0.0
        %2590 = vmatprep.subr.mxu0 0.0
        %2591 = vmatpush1.xpose.msra.mxu0 0.0
        %2592 = vmatprep.subr.mxu0 0.0
        %2593 = vmatpush1.xpose.msra.mxu0 0.0
        %2594 = vmatprep.subr.mxu0 0.0
        %2595 = vmatpush1.xpose.msra.mxu0 0.0
        %2596 = vmatprep.subr.mxu0 0.0
        %2597 = vmatpush1.xpose.msra.mxu0 0.0
        %2598 = vmatprep.subr.mxu0 0.0
        %2599 = vmatpush1.xpose.msra.mxu0 0.0
        %2600 = vmatprep.subr.mxu0 0.0
        %2601 = vmatpush1.xpose.msra.mxu0 0.0
        %2602 = vmatprep.subr.mxu0 0.0
        %2603 = vmatpush1.xpose.msra.mxu0 0.0
        %2604 = vmatprep.subr.mxu0 0.0
        %2605 = vmatpush1.xpose.msra.mxu0 0.0
        %2606 = vmatprep.subr.mxu0 0.0
        %2607 = vmatpush1.xpose.msra.mxu0 0.0
        %2608 = vmatprep.subr.mxu0 0.0
        %2609 = vmatpush1.xpose.msra.mxu0 0.0
        %2610 = vmatprep.subr.mxu0 0.0
        %2611 = vmatpush1.xpose.msra.mxu0 0.0
        %2612 = vmatprep.subr.mxu0 0.0
        %2613 = vmatpush1.xpose.msra.mxu0 0.0
        %2614 = vmatprep.subr.mxu0 0.0
        %2615 = vmatpush1.xpose.msra.mxu0 0.0
        %2616 = vmatprep.subr.mxu0 0.0
        %2617 = vmatpush1.xpose.msra.mxu0 0.0
        %2618 = vmatprep.subr.mxu0 0.0
        %2619 = vmatpush1.xpose.msra.mxu0 0.0
        %2620 = vmatprep.subr.mxu0 0.0
        %2621 = vmatpush1.xpose.msra.mxu0 0.0
        %2622 = vmatprep.subr.mxu0 0.0
        %2623 = vmatpush1.xpose.msra.mxu0 0.0
        %2624 = vmatprep.subr.mxu0 0.0
        %2625 = vmatpush1.xpose.msra.mxu0 0.0
        %2626 = vmatprep.subr.mxu0 0.0
        %2627 = vmatpush1.xpose.msra.mxu0 0.0
        %2628 = vmatprep.subr.mxu0 0.0
        %2629 = vmatpush1.xpose.msra.mxu0 0.0
        %2630 = vmatprep.subr.mxu0 0.0
        %2631 = vmatpush1.xpose.msra.mxu0 0.0
        %2632 = vmatprep.subr.mxu0 0.0
        %2633 = vmatpush1.xpose.msra.mxu0 0.0
        %2634 = vmatprep.subr.mxu0 0.0
        %2635 = vmatpush1.xpose.msra.mxu0 0.0
        %2636 = vmatprep.subr.mxu0 0.0
        %2637 = vmatpush1.xpose.msra.mxu0 0.0
        %2638 = vmatprep.subr.mxu0 0.0
        %2639 = vmatpush1.xpose.msra.mxu0 0.0
        %2640 = vmatprep.subr.mxu0 0.0
        %2641 = vmatpush1.xpose.msra.mxu0 0.0
        %2642 = vmatprep.mubr.f32.mxu0 0.0
        %2643 = vmatmul.mubr.f32.gmra.mrb[0].mxu0 %v2570
        %v2644 = vpop.f32.mrb[0].mxu0
        %v2645 = vadd.f32 0.0, %v2644
        %v2646 = vpop.f32.mrb[0].mxu0
        %2647 = vmatprep.mubr.f32.mxu0 0.0
        %2648 = vmatmul.mubr.f32.gmra.mrb[0].mxu0 %v2572
        %v2649 = vpop.f32.mrb[0].mxu0
        %v2650 = vadd.f32 0.0, %v2649
        %v2651 = vpop.f32.mrb[0].mxu0
        %2652 = vdwg.mxu0
        %v2653 = vmul.f32 %v2645, 0.35355338
        %v2654 = vmul.f32 %v2650, 0.35355338
        %v2655 = vadd.f32 %v2653, %v2262
        %v2656 = vadd.f32 %v2654, %v2263
        %v2657 = vsel %vm1433, %v2655, -inf
        %2658 = vmax.xlane.f32.xlu0 %v2657
        %v2659 = vpop.xlane.xlu0 %2658
        %v2660 = vsel %vm1433, %v2656, -inf
        %2661 = vmax.xlane.f32.xlu0 %v2660
        %v2662 = vpop.xlane.xlu0 %2661
        %v2663 = vsub.f32 %v2655, %v2659
        %v2664 = vsub.f32 %v2656, %v2662
        %v2665 = vmul.f32 %v2663, 1.442695
        %v2666 = vpow.pop %v2665
        %v2667 = vmul.f32 %v2664, 1.442695
        %v2668 = vpow.pop %v2667
        %v2669 = vsel %vm1433, %v2666, 0.0
        %2670 = vadd.xlane.f32.xlu0 %v2669
        %v2671 = vpop.xlane.xlu0 %2670
        %v2672 = vsel %vm1433, %v2668, 0.0
        %2673 = vadd.xlane.f32.xlu0 %v2672
        %v2674 = vpop.xlane.xlu0 %2673
        %v2675 = vrcp.pop %v2671
        %v2676 = vmul.f32 %v2666, %v2675
        %v2677 = vrcp.pop %v2674
        %v2678 = vmul.f32 %v2668, %v2677
        %2679 = vrot.lane.b32.xlu0 %v2348, 56
        %v2680 = vpop.permute.xlu0 %2679
        %2681 = vrot.lane.b32.xlu0 %v2353, 56
        %v2682 = vpop.permute.xlu0 %2681
        %v2686 = vsel %vm1433, %v2676, 0
        %v2689 = vsel %vm1433, %v2678, 0
        %2691 = vmatprep.subr.mxu0 0.0
        %2692 = vmatpush1.msra.mxu0 %v2680
        %2693 = vmatprep.subr.mxu0 0.0
        %2694 = vmatpush1.msra.mxu0 %v2682
        %2695 = vmatprep.subr.mxu0 0.0
        %2696 = vmatpush1.msra.mxu0 0.0
        %2697 = vmatprep.subr.mxu0 0.0
        %2698 = vmatpush1.msra.mxu0 0.0
        %2699 = vmatprep.subr.mxu0 0.0
        %2700 = vmatpush1.msra.mxu0 0.0
        %2701 = vmatprep.subr.mxu0 0.0
        %2702 = vmatpush1.msra.mxu0 0.0
        %2703 = vmatprep.subr.mxu0 0.0
        %2704 = vmatpush1.msra.mxu0 0.0
        %2705 = vmatprep.subr.mxu0 0.0
        %2706 = vmatpush1.msra.mxu0 0.0
        %2707 = vmatprep.subr.mxu0 0.0
        %2708 = vmatpush1.msra.mxu0 0.0
        %2709 = vmatprep.subr.mxu0 0.0
        %2710 = vmatpush1.msra.mxu0 0.0
        %2711 = vmatprep.subr.mxu0 0.0
        %2712 = vmatpush1.msra.mxu0 0.0
        %2713 = vmatprep.subr.mxu0 0.0
        %2714 = vmatpush1.msra.mxu0 0.0
        %2715 = vmatprep.subr.mxu0 0.0
        %2716 = vmatpush1.msra.mxu0 0.0
        %2717 = vmatprep.subr.mxu0 0.0
        %2718 = vmatpush1.msra.mxu0 0.0
        %2719 = vmatprep.subr.mxu0 0.0
        %2720 = vmatpush1.msra.mxu0 0.0
        %2721 = vmatprep.subr.mxu0 0.0
        %2722 = vmatpush1.msra.mxu0 0.0
        %2723 = vmatprep.subr.mxu0 0.0
        %2724 = vmatpush1.msra.mxu0 0.0
        %2725 = vmatprep.subr.mxu0 0.0
        %2726 = vmatpush1.msra.mxu0 0.0
        %2727 = vmatprep.subr.mxu0 0.0
        %2728 = vmatpush1.msra.mxu0 0.0
        %2729 = vmatprep.subr.mxu0 0.0
        %2730 = vmatpush1.msra.mxu0 0.0
        %2731 = vmatprep.subr.mxu0 0.0
        %2732 = vmatpush1.msra.mxu0 0.0
        %2733 = vmatprep.subr.mxu0 0.0
        %2734 = vmatpush1.msra.mxu0 0.0
        %2735 = vmatprep.subr.mxu0 0.0
        %2736 = vmatpush1.msra.mxu0 0.0
        %2737 = vmatprep.subr.mxu0 0.0
        %2738 = vmatpush1.msra.mxu0 0.0
        %2739 = vmatprep.subr.mxu0 0.0
        %2740 = vmatpush1.msra.mxu0 0.0
        %2741 = vmatprep.subr.mxu0 0.0
        %2742 = vmatpush1.msra.mxu0 0.0
        %2743 = vmatprep.subr.mxu0 0.0
        %2744 = vmatpush1.msra.mxu0 0.0
        %2745 = vmatprep.subr.mxu0 0.0
        %2746 = vmatpush1.msra.mxu0 0.0
        %2747 = vmatprep.subr.mxu0 0.0
        %2748 = vmatpush1.msra.mxu0 0.0
        %2749 = vmatprep.subr.mxu0 0.0
        %2750 = vmatpush1.msra.mxu0 0.0
        %2751 = vmatprep.subr.mxu0 0.0
        %2752 = vmatpush1.msra.mxu0 0.0
        %2753 = vmatprep.subr.mxu0 0.0
        %2754 = vmatpush1.msra.mxu0 0.0
        %2755 = vmatprep.mubr.f32.mxu0 0.0
        %2756 = vmatmul.mubr.f32.gmra.mrb[0].mxu0 %v2686
        %v2757 = vpop.f32.mrb[0].mxu0
        %v2758 = vadd.f32 0.0, %v2757
        %v2759 = vpop.f32.mrb[0].mxu0
        %2760 = vmatprep.mubr.f32.mxu0 0.0
        %2761 = vmatmul.mubr.f32.gmra.mrb[0].mxu0 %v2689
        %v2762 = vpop.f32.mrb[0].mxu0
        %v2763 = vadd.f32 0.0, %v2762
        %v2764 = vpop.f32.mrb[0].mxu0
        %2765 = vdwg.mxu0
        %v2767 = vsel %vm2133, %v2758, 0
        %v2770 = vsel %vm2133, %v2763, 0
        %2772 = vmatprep.subr.mxu0 0.0
        %2773 = vmatpush1.msra.mxu0 %v2357
        %2774 = vmatprep.subr.mxu0 0.0
        %2775 = vmatpush1.msra.mxu0 0.0
        %2776 = vmatprep.subr.mxu0 0.0
        %2777 = vmatpush1.msra.mxu0 0.0
        %2778 = vmatprep.subr.mxu0 0.0
        %2779 = vmatpush1.msra.mxu0 0.0
        %2780 = vmatprep.subr.mxu0 0.0
        %2781 = vmatpush1.msra.mxu0 0.0
        %2782 = vmatprep.subr.mxu0 0.0
        %2783 = vmatpush1.msra.mxu0 0.0
        %2784 = vmatprep.subr.mxu0 0.0
        %2785 = vmatpush1.msra.mxu0 0.0
        %2786 = vmatprep.subr.mxu0 0.0
        %2787 = vmatpush1.msra.mxu0 0.0
        %2788 = vmatprep.subr.mxu0 0.0
        %2789 = vmatpush1.msra.mxu0 0.0
        %2790 = vmatprep.subr.mxu0 0.0
        %2791 = vmatpush1.msra.mxu0 0.0
        %2792 = vmatprep.subr.mxu0 0.0
        %2793 = vmatpush1.msra.mxu0 0.0
        %2794 = vmatprep.subr.mxu0 0.0
        %2795 = vmatpush1.msra.mxu0 0.0
        %2796 = vmatprep.subr.mxu0 0.0
        %2797 = vmatpush1.msra.mxu0 0.0
        %2798 = vmatprep.subr.mxu0 0.0
        %2799 = vmatpush1.msra.mxu0 0.0
        %2800 = vmatprep.subr.mxu0 0.0
        %2801 = vmatpush1.msra.mxu0 0.0
        %2802 = vmatprep.subr.mxu0 0.0
        %2803 = vmatpush1.msra.mxu0 0.0
        %2804 = vmatprep.subr.mxu0 0.0
        %2805 = vmatpush1.msra.mxu0 0.0
        %2806 = vmatprep.subr.mxu0 0.0
        %2807 = vmatpush1.msra.mxu0 0.0
        %2808 = vmatprep.subr.mxu0 0.0
        %2809 = vmatpush1.msra.mxu0 0.0
        %2810 = vmatprep.subr.mxu0 0.0
        %2811 = vmatpush1.msra.mxu0 0.0
        %2812 = vmatprep.subr.mxu0 0.0
        %2813 = vmatpush1.msra.mxu0 0.0
        %2814 = vmatprep.subr.mxu0 0.0
        %2815 = vmatpush1.msra.mxu0 0.0
        %2816 = vmatprep.subr.mxu0 0.0
        %2817 = vmatpush1.msra.mxu0 0.0
        %2818 = vmatprep.subr.mxu0 0.0
        %2819 = vmatpush1.msra.mxu0 0.0
        %2820 = vmatprep.subr.mxu0 0.0
        %2821 = vmatpush1.msra.mxu0 0.0
        %2822 = vmatprep.subr.mxu0 0.0
        %2823 = vmatpush1.msra.mxu0 0.0
        %2824 = vmatprep.subr.mxu0 0.0
        %2825 = vmatpush1.msra.mxu0 0.0
        %2826 = vmatprep.subr.mxu0 0.0
        %2827 = vmatpush1.msra.mxu0 0.0
        %2828 = vmatprep.subr.mxu0 0.0
        %2829 = vmatpush1.msra.mxu0 0.0
        %2830 = vmatprep.subr.mxu0 0.0
        %2831 = vmatpush1.msra.mxu0 0.0
        %2832 = vmatprep.subr.mxu0 0.0
        %2833 = vmatpush1.msra.mxu0 0.0
        %2834 = vmatprep.subr.mxu0 0.0
        %2835 = vmatpush1.msra.mxu0 0.0
        %2836 = vmatprep.mubr.f32.mxu0 0.0
        %2837 = vmatmul.mubr.f32.gmra.mrb[0].mxu0 %v2767
        %v2838 = vpop.f32.mrb[0].mxu0
        %v2839 = vadd.f32 0.0, %v2838
        %v2840 = vpop.f32.mrb[0].mxu0
        %2841 = vmatprep.mubr.f32.mxu0 0.0
        %2842 = vmatmul.mubr.f32.gmra.mrb[0].mxu0 %v2770
        %v2843 = vpop.f32.mrb[0].mxu0
        %v2844 = vadd.f32 0.0, %v2843
        %v2845 = vpop.f32.mrb[0].mxu0
        %2846 = vdwg.mxu0
        %v2848 = vsel %vm2133, %v2554, 0
        %v2851 = vsel %vm2133, %v2559, 0
        %2853 = vmatprep.subr.mxu0 0.0
        %2854 = vmatpush1.msra.mxu0 %v2356
        %2855 = vmatprep.subr.mxu0 0.0
        %2856 = vmatpush1.msra.mxu0 0.0
        %2857 = vmatprep.subr.mxu0 0.0
        %2858 = vmatpush1.msra.mxu0 0.0
        %2859 = vmatprep.subr.mxu0 0.0
        %2860 = vmatpush1.msra.mxu0 0.0
        %2861 = vmatprep.subr.mxu0 0.0
        %2862 = vmatpush1.msra.mxu0 0.0
        %2863 = vmatprep.subr.mxu0 0.0
        %2864 = vmatpush1.msra.mxu0 0.0
        %2865 = vmatprep.subr.mxu0 0.0
        %2866 = vmatpush1.msra.mxu0 0.0
        %2867 = vmatprep.subr.mxu0 0.0
        %2868 = vmatpush1.msra.mxu0 0.0
        %2869 = vmatprep.subr.mxu0 0.0
        %2870 = vmatpush1.msra.mxu0 0.0
        %2871 = vmatprep.subr.mxu0 0.0
        %2872 = vmatpush1.msra.mxu0 0.0
        %2873 = vmatprep.subr.mxu0 0.0
        %2874 = vmatpush1.msra.mxu0 0.0
        %2875 = vmatprep.subr.mxu0 0.0
        %2876 = vmatpush1.msra.mxu0 0.0
        %2877 = vmatprep.subr.mxu0 0.0
        %2878 = vmatpush1.msra.mxu0 0.0
        %2879 = vmatprep.subr.mxu0 0.0
        %2880 = vmatpush1.msra.mxu0 0.0
        %2881 = vmatprep.subr.mxu0 0.0
        %2882 = vmatpush1.msra.mxu0 0.0
        %2883 = vmatprep.subr.mxu0 0.0
        %2884 = vmatpush1.msra.mxu0 0.0
        %2885 = vmatprep.subr.mxu0 0.0
        %2886 = vmatpush1.msra.mxu0 0.0
        %2887 = vmatprep.subr.mxu0 0.0
        %2888 = vmatpush1.msra.mxu0 0.0
        %2889 = vmatprep.subr.mxu0 0.0
        %2890 = vmatpush1.msra.mxu0 0.0
        %2891 = vmatprep.subr.mxu0 0.0
        %2892 = vmatpush1.msra.mxu0 0.0
        %2893 = vmatprep.subr.mxu0 0.0
        %2894 = vmatpush1.msra.mxu0 0.0
        %2895 = vmatprep.subr.mxu0 0.0
        %2896 = vmatpush1.msra.mxu0 0.0
        %2897 = vmatprep.subr.mxu0 0.0
        %2898 = vmatpush1.msra.mxu0 0.0
        %2899 = vmatprep.subr.mxu0 0.0
        %2900 = vmatpush1.msra.mxu0 0.0
        %2901 = vmatprep.subr.mxu0 0.0
        %2902 = vmatpush1.msra.mxu0 0.0
        %2903 = vmatprep.subr.mxu0 0.0
        %2904 = vmatpush1.msra.mxu0 0.0
        %2905 = vmatprep.subr.mxu0 0.0
        %2906 = vmatpush1.msra.mxu0 0.0
        %2907 = vmatprep.subr.mxu0 0.0
        %2908 = vmatpush1.msra.mxu0 0.0
        %2909 = vmatprep.subr.mxu0 0.0
        %2910 = vmatpush1.msra.mxu0 0.0
        %2911 = vmatprep.subr.mxu0 0.0
        %2912 = vmatpush1.msra.mxu0 0.0
        %2913 = vmatprep.subr.mxu0 0.0
        %2914 = vmatpush1.msra.mxu0 0.0
        %2915 = vmatprep.subr.mxu0 0.0
        %2916 = vmatpush1.msra.mxu0 0.0
        %2917 = vmatprep.mubr.f32.mxu0 0.0
        %2918 = vmatmul.mubr.f32.gmra.mrb[0].mxu0 %v2848
        %v2919 = vpop.f32.mrb[0].mxu0
        %v2920 = vadd.f32 %v2839, %v2919
        %v2921 = vpop.f32.mrb[0].mxu0
        %2922 = vmatprep.mubr.f32.mxu0 0.0
        %2923 = vmatmul.mubr.f32.gmra.mrb[0].mxu0 %v2851
        %v2924 = vpop.f32.mrb[0].mxu0
        %v2925 = vadd.f32 %v2844, %v2924
        %v2926 = vpop.f32.mrb[0].mxu0
        %2927 = vdwg.mxu0
        %2928 = vrot.lane.b32.xlu0 %v2348, 112
        %v2929 = vpop.permute.xlu0 %2928
        %2930 = vrot.lane.b32.xlu0 %v2353, 112
        %v2931 = vpop.permute.xlu0 %2930
        %2932 = vrot.lane.b32.xlu0 %v2348, 80
        %v2933 = vpop.permute.xlu0 %2932
        %2934 = vrot.lane.b32.xlu0 %v2353, 80
        %v2935 = vpop.permute.xlu0 %2934
        %v2936 = vsel %vm2133, %v2929, 0
        %v2938 = vsel %vm2133, %v2931, 0
        %v2940 = vsel %vm2133, %v2933, 0
        %v2942 = vsel %vm2133, %v2935, 0
        %2944 = vmatprep.subr.mxu0 0.0
        %2945 = vmatpush1.xpose.msra.mxu0 %v2940
        %2946 = vmatprep.subr.mxu0 0.0
        %2947 = vmatpush1.xpose.msra.mxu0 %v2942
        %2948 = vmatprep.subr.mxu0 0.0
        %2949 = vmatpush1.xpose.msra.mxu0 0.0
        %2950 = vmatprep.subr.mxu0 0.0
        %2951 = vmatpush1.xpose.msra.mxu0 0.0
        %2952 = vmatprep.subr.mxu0 0.0
        %2953 = vmatpush1.xpose.msra.mxu0 0.0
        %2954 = vmatprep.subr.mxu0 0.0
        %2955 = vmatpush1.xpose.msra.mxu0 0.0
        %2956 = vmatprep.subr.mxu0 0.0
        %2957 = vmatpush1.xpose.msra.mxu0 0.0
        %2958 = vmatprep.subr.mxu0 0.0
        %2959 = vmatpush1.xpose.msra.mxu0 0.0
        %2960 = vmatprep.subr.mxu0 0.0
        %2961 = vmatpush1.xpose.msra.mxu0 0.0
        %2962 = vmatprep.subr.mxu0 0.0
        %2963 = vmatpush1.xpose.msra.mxu0 0.0
        %2964 = vmatprep.subr.mxu0 0.0
        %2965 = vmatpush1.xpose.msra.mxu0 0.0
        %2966 = vmatprep.subr.mxu0 0.0
        %2967 = vmatpush1.xpose.msra.mxu0 0.0
        %2968 = vmatprep.subr.mxu0 0.0
        %2969 = vmatpush1.xpose.msra.mxu0 0.0
        %2970 = vmatprep.subr.mxu0 0.0
        %2971 = vmatpush1.xpose.msra.mxu0 0.0
        %2972 = vmatprep.subr.mxu0 0.0
        %2973 = vmatpush1.xpose.msra.mxu0 0.0
        %2974 = vmatprep.subr.mxu0 0.0
        %2975 = vmatpush1.xpose.msra.mxu0 0.0
        %2976 = vmatprep.subr.mxu0 0.0
        %2977 = vmatpush1.xpose.msra.mxu0 0.0
        %2978 = vmatprep.subr.mxu0 0.0
        %2979 = vmatpush1.xpose.msra.mxu0 0.0
        %2980 = vmatprep.subr.mxu0 0.0
        %2981 = vmatpush1.xpose.msra.mxu0 0.0
        %2982 = vmatprep.subr.mxu0 0.0
        %2983 = vmatpush1.xpose.msra.mxu0 0.0
        %2984 = vmatprep.subr.mxu0 0.0
        %2985 = vmatpush1.xpose.msra.mxu0 0.0
        %2986 = vmatprep.subr.mxu0 0.0
        %2987 = vmatpush1.xpose.msra.mxu0 0.0
        %2988 = vmatprep.subr.mxu0 0.0
        %2989 = vmatpush1.xpose.msra.mxu0 0.0
        %2990 = vmatprep.subr.mxu0 0.0
        %2991 = vmatpush1.xpose.msra.mxu0 0.0
        %2992 = vmatprep.subr.mxu0 0.0
        %2993 = vmatpush1.xpose.msra.mxu0 0.0
        %2994 = vmatprep.subr.mxu0 0.0
        %2995 = vmatpush1.xpose.msra.mxu0 0.0
        %2996 = vmatprep.subr.mxu0 0.0
        %2997 = vmatpush1.xpose.msra.mxu0 0.0
        %2998 = vmatprep.subr.mxu0 0.0
        %2999 = vmatpush1.xpose.msra.mxu0 0.0
        %3000 = vmatprep.subr.mxu0 0.0
        %3001 = vmatpush1.xpose.msra.mxu0 0.0
        %3002 = vmatprep.subr.mxu0 0.0
        %3003 = vmatpush1.xpose.msra.mxu0 0.0
        %3004 = vmatprep.subr.mxu0 0.0
        %3005 = vmatpush1.xpose.msra.mxu0 0.0
        %3006 = vmatprep.subr.mxu0 0.0
        %3007 = vmatpush1.xpose.msra.mxu0 0.0
        %3008 = vmatprep.mubr.f32.mxu0 0.0
        %3009 = vmatmul.mubr.f32.gmra.mrb[0].mxu0 %v2936
        %v3010 = vpop.f32.mrb[0].mxu0
        %v3011 = vadd.f32 0.0, %v3010
        %v3012 = vpop.f32.mrb[0].mxu0
        %3013 = vmatprep.mubr.f32.mxu0 0.0
        %3014 = vmatmul.mubr.f32.gmra.mrb[0].mxu0 %v2938
        %v3015 = vpop.f32.mrb[0].mxu0
        %v3016 = vadd.f32 0.0, %v3015
        %v3017 = vpop.f32.mrb[0].mxu0
        %3018 = vdwg.mxu0
        %v3019 = vmul.f32 %v3011, 0.35355338
        %v3020 = vmul.f32 %v3016, 0.35355338
        %v3021 = vadd.f32 %v3019, %v2262
        %v3022 = vadd.f32 %v3020, %v2263
        %v3023 = vsel %vm1433, %v3021, -inf
        %3024 = vmax.xlane.f32.xlu0 %v3023
        %v3025 = vpop.xlane.xlu0 %3024
        %v3026 = vsel %vm1433, %v3022, -inf
        %3027 = vmax.xlane.f32.xlu0 %v3026
        %v3028 = vpop.xlane.xlu0 %3027
        %v3029 = vsub.f32 %v3021, %v3025
        %v3030 = vsub.f32 %v3022, %v3028
        %v3031 = vmul.f32 %v3029, 1.442695
        %v3032 = vpow.pop %v3031
        %v3033 = vmul.f32 %v3030, 1.442695
        %v3034 = vpow.pop %v3033
        %v3035 = vsel %vm1433, %v3032, 0.0
        %3036 = vadd.xlane.f32.xlu0 %v3035
        %v3037 = vpop.xlane.xlu0 %3036
        %v3038 = vsel %vm1433, %v3034, 0.0
        %3039 = vadd.xlane.f32.xlu0 %v3038
        %v3040 = vpop.xlane.xlu0 %3039
        %v3041 = vrcp.pop %v3037
        %v3042 = vmul.f32 %v3032, %v3041
        %v3043 = vrcp.pop %v3040
        %v3044 = vmul.f32 %v3034, %v3043
        %3045 = vrot.lane.b32.xlu0 %v2348, 48
        %v3046 = vpop.permute.xlu0 %3045
        %3047 = vrot.lane.b32.xlu0 %v2353, 48
        %v3048 = vpop.permute.xlu0 %3047
        %v3052 = vsel %vm1433, %v3042, 0
        %v3055 = vsel %vm1433, %v3044, 0
        %3057 = vmatprep.subr.mxu0 0.0
        %3058 = vmatpush1.msra.mxu0 %v3046
        %3059 = vmatprep.subr.mxu0 0.0
        %3060 = vmatpush1.msra.mxu0 %v3048
        %3061 = vmatprep.subr.mxu0 0.0
        %3062 = vmatpush1.msra.mxu0 0.0
        %3063 = vmatprep.subr.mxu0 0.0
        %3064 = vmatpush1.msra.mxu0 0.0
        %3065 = vmatprep.subr.mxu0 0.0
        %3066 = vmatpush1.msra.mxu0 0.0
        %3067 = vmatprep.subr.mxu0 0.0
        %3068 = vmatpush1.msra.mxu0 0.0
        %3069 = vmatprep.subr.mxu0 0.0
        %3070 = vmatpush1.msra.mxu0 0.0
        %3071 = vmatprep.subr.mxu0 0.0
        %3072 = vmatpush1.msra.mxu0 0.0
        %3073 = vmatprep.subr.mxu0 0.0
        %3074 = vmatpush1.msra.mxu0 0.0
        %3075 = vmatprep.subr.mxu0 0.0
        %3076 = vmatpush1.msra.mxu0 0.0
        %3077 = vmatprep.subr.mxu0 0.0
        %3078 = vmatpush1.msra.mxu0 0.0
        %3079 = vmatprep.subr.mxu0 0.0
        %3080 = vmatpush1.msra.mxu0 0.0
        %3081 = vmatprep.subr.mxu0 0.0
        %3082 = vmatpush1.msra.mxu0 0.0
        %3083 = vmatprep.subr.mxu0 0.0
        %3084 = vmatpush1.msra.mxu0 0.0
        %3085 = vmatprep.subr.mxu0 0.0
        %3086 = vmatpush1.msra.mxu0 0.0
        %3087 = vmatprep.subr.mxu0 0.0
        %3088 = vmatpush1.msra.mxu0 0.0
        %3089 = vmatprep.subr.mxu0 0.0
        %3090 = vmatpush1.msra.mxu0 0.0
        %3091 = vmatprep.subr.mxu0 0.0
        %3092 = vmatpush1.msra.mxu0 0.0
        %3093 = vmatprep.subr.mxu0 0.0
        %3094 = vmatpush1.msra.mxu0 0.0
        %3095 = vmatprep.subr.mxu0 0.0
        %3096 = vmatpush1.msra.mxu0 0.0
        %3097 = vmatprep.subr.mxu0 0.0
        %3098 = vmatpush1.msra.mxu0 0.0
        %3099 = vmatprep.subr.mxu0 0.0
        %3100 = vmatpush1.msra.mxu0 0.0
        %3101 = vmatprep.subr.mxu0 0.0
        %3102 = vmatpush1.msra.mxu0 0.0
        %3103 = vmatprep.subr.mxu0 0.0
        %3104 = vmatpush1.msra.mxu0 0.0
        %3105 = vmatprep.subr.mxu0 0.0
        %3106 = vmatpush1.msra.mxu0 0.0
        %3107 = vmatprep.subr.mxu0 0.0
        %3108 = vmatpush1.msra.mxu0 0.0
        %3109 = vmatprep.subr.mxu0 0.0
        %3110 = vmatpush1.msra.mxu0 0.0
        %3111 = vmatprep.subr.mxu0 0.0
        %3112 = vmatpush1.msra.mxu0 0.0
        %3113 = vmatprep.subr.mxu0 0.0
        %3114 = vmatpush1.msra.mxu0 0.0
        %3115 = vmatprep.subr.mxu0 0.0
        %3116 = vmatpush1.msra.mxu0 0.0
        %3117 = vmatprep.subr.mxu0 0.0
        %3118 = vmatpush1.msra.mxu0 0.0
        %3119 = vmatprep.subr.mxu0 0.0
        %3120 = vmatpush1.msra.mxu0 0.0
        %3121 = vmatprep.mubr.f32.mxu0 0.0
        %3122 = vmatmul.mubr.f32.gmra.mrb[0].mxu0 %v3052
        %v3123 = vpop.f32.mrb[0].mxu0
        %v3124 = vadd.f32 0.0, %v3123
        %v3125 = vpop.f32.mrb[0].mxu0
        %3126 = vmatprep.mubr.f32.mxu0 0.0
        %3127 = vmatmul.mubr.f32.gmra.mrb[0].mxu0 %v3055
        %v3128 = vpop.f32.mrb[0].mxu0
        %v3129 = vadd.f32 0.0, %v3128
        %v3130 = vpop.f32.mrb[0].mxu0
        %3131 = vdwg.mxu0
        %v3133 = vsel %vm2133, %v3124, 0
        %v3136 = vsel %vm2133, %v3129, 0
        %3138 = vmatprep.subr.mxu0 0.0
        %3139 = vmatpush1.msra.mxu0 %v2358
        %3140 = vmatprep.subr.mxu0 0.0
        %3141 = vmatpush1.msra.mxu0 0.0
        %3142 = vmatprep.subr.mxu0 0.0
        %3143 = vmatpush1.msra.mxu0 0.0
        %3144 = vmatprep.subr.mxu0 0.0
        %3145 = vmatpush1.msra.mxu0 0.0
        %3146 = vmatprep.subr.mxu0 0.0
        %3147 = vmatpush1.msra.mxu0 0.0
        %3148 = vmatprep.subr.mxu0 0.0
        %3149 = vmatpush1.msra.mxu0 0.0
        %3150 = vmatprep.subr.mxu0 0.0
        %3151 = vmatpush1.msra.mxu0 0.0
        %3152 = vmatprep.subr.mxu0 0.0
        %3153 = vmatpush1.msra.mxu0 0.0
        %3154 = vmatprep.subr.mxu0 0.0
        %3155 = vmatpush1.msra.mxu0 0.0
        %3156 = vmatprep.subr.mxu0 0.0
        %3157 = vmatpush1.msra.mxu0 0.0
        %3158 = vmatprep.subr.mxu0 0.0
        %3159 = vmatpush1.msra.mxu0 0.0
        %3160 = vmatprep.subr.mxu0 0.0
        %3161 = vmatpush1.msra.mxu0 0.0
        %3162 = vmatprep.subr.mxu0 0.0
        %3163 = vmatpush1.msra.mxu0 0.0
        %3164 = vmatprep.subr.mxu0 0.0
        %3165 = vmatpush1.msra.mxu0 0.0
        %3166 = vmatprep.subr.mxu0 0.0
        %3167 = vmatpush1.msra.mxu0 0.0
        %3168 = vmatprep.subr.mxu0 0.0
        %3169 = vmatpush1.msra.mxu0 0.0
        %3170 = vmatprep.subr.mxu0 0.0
        %3171 = vmatpush1.msra.mxu0 0.0
        %3172 = vmatprep.subr.mxu0 0.0
        %3173 = vmatpush1.msra.mxu0 0.0
        %3174 = vmatprep.subr.mxu0 0.0
        %3175 = vmatpush1.msra.mxu0 0.0
        %3176 = vmatprep.subr.mxu0 0.0
        %3177 = vmatpush1.msra.mxu0 0.0
        %3178 = vmatprep.subr.mxu0 0.0
        %3179 = vmatpush1.msra.mxu0 0.0
        %3180 = vmatprep.subr.mxu0 0.0
        %3181 = vmatpush1.msra.mxu0 0.0
        %3182 = vmatprep.subr.mxu0 0.0
        %3183 = vmatpush1.msra.mxu0 0.0
        %3184 = vmatprep.subr.mxu0 0.0
        %3185 = vmatpush1.msra.mxu0 0.0
        %3186 = vmatprep.subr.mxu0 0.0
        %3187 = vmatpush1.msra.mxu0 0.0
        %3188 = vmatprep.subr.mxu0 0.0
        %3189 = vmatpush1.msra.mxu0 0.0
        %3190 = vmatprep.subr.mxu0 0.0
        %3191 = vmatpush1.msra.mxu0 0.0
        %3192 = vmatprep.subr.mxu0 0.0
        %3193 = vmatpush1.msra.mxu0 0.0
        %3194 = vmatprep.subr.mxu0 0.0
        %3195 = vmatpush1.msra.mxu0 0.0
        %3196 = vmatprep.subr.mxu0 0.0
        %3197 = vmatpush1.msra.mxu0 0.0
        %3198 = vmatprep.subr.mxu0 0.0
        %3199 = vmatpush1.msra.mxu0 0.0
        %3200 = vmatprep.subr.mxu0 0.0
        %3201 = vmatpush1.msra.mxu0 0.0
        %3202 = vmatprep.mubr.f32.mxu0 0.0
        %3203 = vmatmul.mubr.f32.gmra.mrb[0].mxu0 %v3133
        %v3204 = vpop.f32.mrb[0].mxu0
        %v3205 = vadd.f32 0.0, %v3204
        %v3206 = vpop.f32.mrb[0].mxu0
        %3207 = vmatprep.mubr.f32.mxu0 0.0
        %3208 = vmatmul.mubr.f32.gmra.mrb[0].mxu0 %v3136
        %v3209 = vpop.f32.mrb[0].mxu0
        %v3210 = vadd.f32 0.0, %v3209
        %v3211 = vpop.f32.mrb[0].mxu0
        %3212 = vdwg.mxu0
        %v3213 = vadd.f32 %v2920, %v3205
        %v3214 = vadd.f32 %v2925, %v3210
        %3215 = vrot.lane.b32.xlu0 %v2348, 104
        %v3216 = vpop.permute.xlu0 %3215
        %3217 = vrot.lane.b32.xlu0 %v2353, 104
        %v3218 = vpop.permute.xlu0 %3217
        %3219 = vrot.lane.b32.xlu0 %v2348, 72
        %v3220 = vpop.permute.xlu0 %3219
        %3221 = vrot.lane.b32.xlu0 %v2353, 72
        %v3222 = vpop.permute.xlu0 %3221
        %v3223 = vsel %vm2133, %v3216, 0
        %v3225 = vsel %vm2133, %v3218, 0
        %v3227 = vsel %vm2133, %v3220, 0
        %v3229 = vsel %vm2133, %v3222, 0
        %3231 = vmatprep.subr.mxu0 0.0
        %3232 = vmatpush1.xpose.msra.mxu0 %v3227
        %3233 = vmatprep.subr.mxu0 0.0
        %3234 = vmatpush1.xpose.msra.mxu0 %v3229
        %3235 = vmatprep.subr.mxu0 0.0
        %3236 = vmatpush1.xpose.msra.mxu0 0.0
        %3237 = vmatprep.subr.mxu0 0.0
        %3238 = vmatpush1.xpose.msra.mxu0 0.0
        %3239 = vmatprep.subr.mxu0 0.0
        %3240 = vmatpush1.xpose.msra.mxu0 0.0
        %3241 = vmatprep.subr.mxu0 0.0
        %3242 = vmatpush1.xpose.msra.mxu0 0.0
        %3243 = vmatprep.subr.mxu0 0.0
        %3244 = vmatpush1.xpose.msra.mxu0 0.0
        %3245 = vmatprep.subr.mxu0 0.0
        %3246 = vmatpush1.xpose.msra.mxu0 0.0
        %3247 = vmatprep.subr.mxu0 0.0
        %3248 = vmatpush1.xpose.msra.mxu0 0.0
        %3249 = vmatprep.subr.mxu0 0.0
        %3250 = vmatpush1.xpose.msra.mxu0 0.0
        %3251 = vmatprep.subr.mxu0 0.0
        %3252 = vmatpush1.xpose.msra.mxu0 0.0
        %3253 = vmatprep.subr.mxu0 0.0
        %3254 = vmatpush1.xpose.msra.mxu0 0.0
        %3255 = vmatprep.subr.mxu0 0.0
        %3256 = vmatpush1.xpose.msra.mxu0 0.0
        %3257 = vmatprep.subr.mxu0 0.0
        %3258 = vmatpush1.xpose.msra.mxu0 0.0
        %3259 = vmatprep.subr.mxu0 0.0
        %3260 = vmatpush1.xpose.msra.mxu0 0.0
        %3261 = vmatprep.subr.mxu0 0.0
        %3262 = vmatpush1.xpose.msra.mxu0 0.0
        %3263 = vmatprep.subr.mxu0 0.0
        %3264 = vmatpush1.xpose.msra.mxu0 0.0
        %3265 = vmatprep.subr.mxu0 0.0
        %3266 = vmatpush1.xpose.msra.mxu0 0.0
        %3267 = vmatprep.subr.mxu0 0.0
        %3268 = vmatpush1.xpose.msra.mxu0 0.0
        %3269 = vmatprep.subr.mxu0 0.0
        %3270 = vmatpush1.xpose.msra.mxu0 0.0
        %3271 = vmatprep.subr.mxu0 0.0
        %3272 = vmatpush1.xpose.msra.mxu0 0.0
        %3273 = vmatprep.subr.mxu0 0.0
        %3274 = vmatpush1.xpose.msra.mxu0 0.0
        %3275 = vmatprep.subr.mxu0 0.0
        %3276 = vmatpush1.xpose.msra.mxu0 0.0
        %3277 = vmatprep.subr.mxu0 0.0
        %3278 = vmatpush1.xpose.msra.mxu0 0.0
        %3279 = vmatprep.subr.mxu0 0.0
        %3280 = vmatpush1.xpose.msra.mxu0 0.0
        %3281 = vmatprep.subr.mxu0 0.0
        %3282 = vmatpush1.xpose.msra.mxu0 0.0
        %3283 = vmatprep.subr.mxu0 0.0
        %3284 = vmatpush1.xpose.msra.mxu0 0.0
        %3285 = vmatprep.subr.mxu0 0.0
        %3286 = vmatpush1.xpose.msra.mxu0 0.0
        %3287 = vmatprep.subr.mxu0 0.0
        %3288 = vmatpush1.xpose.msra.mxu0 0.0
        %3289 = vmatprep.subr.mxu0 0.0
        %3290 = vmatpush1.xpose.msra.mxu0 0.0
        %3291 = vmatprep.subr.mxu0 0.0
        %3292 = vmatpush1.xpose.msra.mxu0 0.0
        %3293 = vmatprep.subr.mxu0 0.0
        %3294 = vmatpush1.xpose.msra.mxu0 0.0
        %3295 = vmatprep.mubr.f32.mxu0 0.0
        %3296 = vmatmul.mubr.f32.gmra.mrb[0].mxu0 %v3223
        %v3297 = vpop.f32.mrb[0].mxu0
        %v3298 = vadd.f32 0.0, %v3297
        %v3299 = vpop.f32.mrb[0].mxu0
        %3300 = vmatprep.mubr.f32.mxu0 0.0
        %3301 = vmatmul.mubr.f32.gmra.mrb[0].mxu0 %v3225
        %v3302 = vpop.f32.mrb[0].mxu0
        %v3303 = vadd.f32 0.0, %v3302
        %v3304 = vpop.f32.mrb[0].mxu0
        %3305 = vdwg.mxu0
        %v3306 = vmul.f32 %v3298, 0.35355338
        %v3307 = vmul.f32 %v3303, 0.35355338
        %v3308 = vadd.f32 %v3306, %v2262
        %v3309 = vadd.f32 %v3307, %v2263
        %v3310 = vsel %vm1433, %v3308, -inf
        %3311 = vmax.xlane.f32.xlu0 %v3310
        %v3312 = vpop.xlane.xlu0 %3311
        %v3313 = vsel %vm1433, %v3309, -inf
        %3314 = vmax.xlane.f32.xlu0 %v3313
        %v3315 = vpop.xlane.xlu0 %3314
        %v3316 = vsub.f32 %v3308, %v3312
        %v3317 = vsub.f32 %v3309, %v3315
        %v3318 = vmul.f32 %v3316, 1.442695
        %v3319 = vpow.pop %v3318
        %v3320 = vmul.f32 %v3317, 1.442695
        %v3321 = vpow.pop %v3320
        %v3322 = vsel %vm1433, %v3319, 0.0
        %3323 = vadd.xlane.f32.xlu0 %v3322
        %v3324 = vpop.xlane.xlu0 %3323
        %v3325 = vsel %vm1433, %v3321, 0.0
        %3326 = vadd.xlane.f32.xlu0 %v3325
        %v3327 = vpop.xlane.xlu0 %3326
        %v3328 = vrcp.pop %v3324
        %v3329 = vmul.f32 %v3319, %v3328
        %v3330 = vrcp.pop %v3327
        %v3331 = vmul.f32 %v3321, %v3330
        %3332 = vrot.lane.b32.xlu0 %v2348, 40
        %v3333 = vpop.permute.xlu0 %3332
        %3334 = vrot.lane.b32.xlu0 %v2353, 40
        %v3335 = vpop.permute.xlu0 %3334
        %v3339 = vsel %vm1433, %v3329, 0
        %v3342 = vsel %vm1433, %v3331, 0
        %3344 = vmatprep.subr.mxu0 0.0
        %3345 = vmatpush1.msra.mxu0 %v3333
        %3346 = vmatprep.subr.mxu0 0.0
        %3347 = vmatpush1.msra.mxu0 %v3335
        %3348 = vmatprep.subr.mxu0 0.0
        %3349 = vmatpush1.msra.mxu0 0.0
        %3350 = vmatprep.subr.mxu0 0.0
        %3351 = vmatpush1.msra.mxu0 0.0
        %3352 = vmatprep.subr.mxu0 0.0
        %3353 = vmatpush1.msra.mxu0 0.0
        %3354 = vmatprep.subr.mxu0 0.0
        %3355 = vmatpush1.msra.mxu0 0.0
        %3356 = vmatprep.subr.mxu0 0.0
        %3357 = vmatpush1.msra.mxu0 0.0
        %3358 = vmatprep.subr.mxu0 0.0
        %3359 = vmatpush1.msra.mxu0 0.0
        %3360 = vmatprep.subr.mxu0 0.0
        %3361 = vmatpush1.msra.mxu0 0.0
        %3362 = vmatprep.subr.mxu0 0.0
        %3363 = vmatpush1.msra.mxu0 0.0
        %3364 = vmatprep.subr.mxu0 0.0
        %3365 = vmatpush1.msra.mxu0 0.0
        %3366 = vmatprep.subr.mxu0 0.0
        %3367 = vmatpush1.msra.mxu0 0.0
        %3368 = vmatprep.subr.mxu0 0.0
        %3369 = vmatpush1.msra.mxu0 0.0
        %3370 = vmatprep.subr.mxu0 0.0
        %3371 = vmatpush1.msra.mxu0 0.0
        %3372 = vmatprep.subr.mxu0 0.0
        %3373 = vmatpush1.msra.mxu0 0.0
        %3374 = vmatprep.subr.mxu0 0.0
        %3375 = vmatpush1.msra.mxu0 0.0
        %3376 = vmatprep.subr.mxu0 0.0
        %3377 = vmatpush1.msra.mxu0 0.0
        %3378 = vmatprep.subr.mxu0 0.0
        %3379 = vmatpush1.msra.mxu0 0.0
        %3380 = vmatprep.subr.mxu0 0.0
        %3381 = vmatpush1.msra.mxu0 0.0
        %3382 = vmatprep.subr.mxu0 0.0
        %3383 = vmatpush1.msra.mxu0 0.0
        %3384 = vmatprep.subr.mxu0 0.0
        %3385 = vmatpush1.msra.mxu0 0.0
        %3386 = vmatprep.subr.mxu0 0.0
        %3387 = vmatpush1.msra.mxu0 0.0
        %3388 = vmatprep.subr.mxu0 0.0
        %3389 = vmatpush1.msra.mxu0 0.0
        %3390 = vmatprep.subr.mxu0 0.0
        %3391 = vmatpush1.msra.mxu0 0.0
        %3392 = vmatprep.subr.mxu0 0.0
        %3393 = vmatpush1.msra.mxu0 0.0
        %3394 = vmatprep.subr.mxu0 0.0
        %3395 = vmatpush1.msra.mxu0 0.0
        %3396 = vmatprep.subr.mxu0 0.0
        %3397 = vmatpush1.msra.mxu0 0.0
        %3398 = vmatprep.subr.mxu0 0.0
        %3399 = vmatpush1.msra.mxu0 0.0
        %3400 = vmatprep.subr.mxu0 0.0
        %3401 = vmatpush1.msra.mxu0 0.0
        %3402 = vmatprep.subr.mxu0 0.0
        %3403 = vmatpush1.msra.mxu0 0.0
        %3404 = vmatprep.subr.mxu0 0.0
        %3405 = vmatpush1.msra.mxu0 0.0
        %3406 = vmatprep.subr.mxu0 0.0
        %3407 = vmatpush1.msra.mxu0 0.0
        %3408 = vmatprep.mubr.f32.mxu0 0.0
        %3409 = vmatmul.mubr.f32.gmra.mrb[0].mxu0 %v3339
        %v3410 = vpop.f32.mrb[0].mxu0
        %v3411 = vadd.f32 0.0, %v3410
        %v3412 = vpop.f32.mrb[0].mxu0
        %3413 = vmatprep.mubr.f32.mxu0 0.0
        %3414 = vmatmul.mubr.f32.gmra.mrb[0].mxu0 %v3342
        %v3415 = vpop.f32.mrb[0].mxu0
        %v3416 = vadd.f32 0.0, %v3415
        %v3417 = vpop.f32.mrb[0].mxu0
        %3418 = vdwg.mxu0
        %v3420 = vsel %vm2133, %v3411, 0
        %v3423 = vsel %vm2133, %v3416, 0
        %3425 = vmatprep.subr.mxu0 0.0
        %3426 = vmatpush1.msra.mxu0 %v2359
        %3427 = vmatprep.subr.mxu0 0.0
        %3428 = vmatpush1.msra.mxu0 0.0
        %3429 = vmatprep.subr.mxu0 0.0
        %3430 = vmatpush1.msra.mxu0 0.0
        %3431 = vmatprep.subr.mxu0 0.0
        %3432 = vmatpush1.msra.mxu0 0.0
        %3433 = vmatprep.subr.mxu0 0.0
        %3434 = vmatpush1.msra.mxu0 0.0
        %3435 = vmatprep.subr.mxu0 0.0
        %3436 = vmatpush1.msra.mxu0 0.0
        %3437 = vmatprep.subr.mxu0 0.0
        %3438 = vmatpush1.msra.mxu0 0.0
        %3439 = vmatprep.subr.mxu0 0.0
        %3440 = vmatpush1.msra.mxu0 0.0
        %3441 = vmatprep.subr.mxu0 0.0
        %3442 = vmatpush1.msra.mxu0 0.0
        %3443 = vmatprep.subr.mxu0 0.0
        %3444 = vmatpush1.msra.mxu0 0.0
        %3445 = vmatprep.subr.mxu0 0.0
        %3446 = vmatpush1.msra.mxu0 0.0
        %3447 = vmatprep.subr.mxu0 0.0
        %3448 = vmatpush1.msra.mxu0 0.0
        %3449 = vmatprep.subr.mxu0 0.0
        %3450 = vmatpush1.msra.mxu0 0.0
        %3451 = vmatprep.subr.mxu0 0.0
        %3452 = vmatpush1.msra.mxu0 0.0
        %3453 = vmatprep.subr.mxu0 0.0
        %3454 = vmatpush1.msra.mxu0 0.0
        %3455 = vmatprep.subr.mxu0 0.0
        %3456 = vmatpush1.msra.mxu0 0.0
        %3457 = vmatprep.subr.mxu0 0.0
        %3458 = vmatpush1.msra.mxu0 0.0
        %3459 = vmatprep.subr.mxu0 0.0
        %3460 = vmatpush1.msra.mxu0 0.0
        %3461 = vmatprep.subr.mxu0 0.0
        %3462 = vmatpush1.msra.mxu0 0.0
        %3463 = vmatprep.subr.mxu0 0.0
        %3464 = vmatpush1.msra.mxu0 0.0
        %3465 = vmatprep.subr.mxu0 0.0
        %3466 = vmatpush1.msra.mxu0 0.0
        %3467 = vmatprep.subr.mxu0 0.0
        %3468 = vmatpush1.msra.mxu0 0.0
        %3469 = vmatprep.subr.mxu0 0.0
        %3470 = vmatpush1.msra.mxu0 0.0
        %3471 = vmatprep.subr.mxu0 0.0
        %3472 = vmatpush1.msra.mxu0 0.0
        %3473 = vmatprep.subr.mxu0 0.0
        %3474 = vmatpush1.msra.mxu0 0.0
        %3475 = vmatprep.subr.mxu0 0.0
        %3476 = vmatpush1.msra.mxu0 0.0
        %3477 = vmatprep.subr.mxu0 0.0
        %3478 = vmatpush1.msra.mxu0 0.0
        %3479 = vmatprep.subr.mxu0 0.0
        %3480 = vmatpush1.msra.mxu0 0.0
        %3481 = vmatprep.subr.mxu0 0.0
        %3482 = vmatpush1.msra.mxu0 0.0
        %3483 = vmatprep.subr.mxu0 0.0
        %3484 = vmatpush1.msra.mxu0 0.0
        %3485 = vmatprep.subr.mxu0 0.0
        %3486 = vmatpush1.msra.mxu0 0.0
        %3487 = vmatprep.subr.mxu0 0.0
        %3488 = vmatpush1.msra.mxu0 0.0
        %3489 = vmatprep.mubr.f32.mxu0 0.0
        %3490 = vmatmul.mubr.f32.gmra.mrb[0].mxu0 %v3420
        %v3491 = vpop.f32.mrb[0].mxu0
        %v3492 = vadd.f32 0.0, %v3491
        %v3493 = vpop.f32.mrb[0].mxu0
        %3494 = vmatprep.mubr.f32.mxu0 0.0
        %3495 = vmatmul.mubr.f32.gmra.mrb[0].mxu0 %v3423
        %v3496 = vpop.f32.mrb[0].mxu0
        %v3497 = vadd.f32 0.0, %v3496
        %v3498 = vpop.f32.mrb[0].mxu0
        %3499 = vdwg.mxu0
        %v3500 = vadd.f32 %v3213, %v3492
        %v3501 = vadd.f32 %v3214, %v3497
        %v3502 = vld [vmem:[%s39] sm:$0x1]
        %v3504 = vlaneseq
        %v3505 = vshrl.u32 %v3504, 7
        %v3506 = vsub.s32 0, %v3505
        %v3507 = vrot.slane %v3502, %v3506
        %v3509 = vadd.f32 %v3500, %v3507
        %v3510 = vadd.f32 %v3501, %v3507
        %v3511 = vadd.f32 %v2260, %v3509
        %v3512 = vadd.f32 %v2261, %v3510
        %v3513 = vld [vmem:[%s41] sm:$0x1]
        %v3514 = vld [vmem:[#allocation31] sm:$0x1]
        %v3515 = vsel %vm1309, %v3511, 0.0
        %3516 = vadd.xlane.f32.xlu0 %v3515
        %v3517 = vpop.xlane.xlu0 %3516
        %v3518 = vsel %vm1309, %v3512, 0.0
        %3519 = vadd.xlane.f32.xlu0 %v3518
        %v3520 = vpop.xlane.xlu0 %3519
        %v3521 = vmul.f32 %v3517, %v2225
        %v3522 = vmul.f32 %v3520, %v2225
        %v3523 = vsub.f32 %v3511, %v3521
        %v3524 = vsub.f32 %v3512, %v3522
        %v3525 = vmul.f32 %v3523, %v3523
        %v3526 = vmul.f32 %v3524, %v3524
        %v3527 = vsel %vm1309, %v3525, 0.0
        %3528 = vadd.xlane.f32.xlu0 %v3527
        %v3529 = vpop.xlane.xlu0 %3528
        %v3530 = vsel %vm1309, %v3526, 0.0
        %3531 = vadd.xlane.f32.xlu0 %v3530
        %v3532 = vpop.xlane.xlu0 %3531
        %v3533 = vmul.f32 %v3529, %v2225
        %v3534 = vmul.f32 %v3532, %v2225
        %v3535 = vadd.f32 %v3533, 1e-05
        %v3536 = vadd.f32 %v3534, 1e-05
        %v3537 = vrsqrt.pop %v3535
        %v3538 = vrsqrt.pop %v3536
        %v3539 = vmul.f32 %v3523, %v3537
        %v3540 = vmul.f32 %v3524, %v3538
        %v3542 = vlaneseq
        %v3543 = vshrl.u32 %v3542, 7
        %v3544 = vsub.s32 0, %v3543
        %v3545 = vrot.slane %v3513, %v3544
        %v3547 = vmul.f32 %v3539, %v3545
        %v3548 = vmul.f32 %v3540, %v3545
        %v3550 = vlaneseq
        %v3551 = vshrl.u32 %v3550, 7
        %v3552 = vsub.s32 0, %v3551
        %v3553 = vrot.slane %v3514, %v3552
        %v3555 = vadd.f32 %v3547, %v3553
        %v3556 = vadd.f32 %v3548, %v3553
        %v3557 = vld [vmem:[#allocation32] sm:$0xff]
        %v3558 = vld [vmem:[#allocation32 + $0x8] sm:$0xff]
        %v3559 = vld [vmem:[#allocation32 + $0x10] sm:$0xff]
        %v3560 = vld [vmem:[#allocation32 + $0x18] sm:$0xff]
        %v3561 = vld [vmem:[#allocation34] sm:$0x1]
        %v3563 = vlaneseq
        %v3564 = vshrl.u32 %v3563, 7
        %v3565 = vsub.s32 0, %v3564
        %v3566 = vrot.slane %v3561, %v3565
        %v3569 = vsel %vm1309, %v3555, 0
        %v3572 = vsel %vm1309, %v3556, 0
        %3574 = vmatprep.subr.mxu0 0.0
        %3575 = vmatpush1.msra.mxu0 %v3557
        %3576 = vmatprep.subr.mxu0 0.0
        %3577 = vmatpush1.msra.mxu0 %v3558
        %3578 = vmatprep.subr.mxu0 0.0
        %3579 = vmatpush1.msra.mxu0 %v3559
        %3580 = vmatprep.subr.mxu0 0.0
        %3581 = vmatpush1.msra.mxu0 %v3560
        %3582 = vmatprep.subr.mxu0 0.0
        %3583 = vmatpush1.msra.mxu0 0.0
        %3584 = vmatprep.subr.mxu0 0.0
        %3585 = vmatpush1.msra.mxu0 0.0
        %3586 = vmatprep.subr.mxu0 0.0
        %3587 = vmatpush1.msra.mxu0 0.0
        %3588 = vmatprep.subr.mxu0 0.0
        %3589 = vmatpush1.msra.mxu0 0.0
        %3590 = vmatprep.subr.mxu0 0.0
        %3591 = vmatpush1.msra.mxu0 0.0
        %3592 = vmatprep.subr.mxu0 0.0
        %3593 = vmatpush1.msra.mxu0 0.0
        %3594 = vmatprep.subr.mxu0 0.0
        %3595 = vmatpush1.msra.mxu0 0.0
        %3596 = vmatprep.subr.mxu0 0.0
        %3597 = vmatpush1.msra.mxu0 0.0
        %3598 = vmatprep.subr.mxu0 0.0
        %3599 = vmatpush1.msra.mxu0 0.0
        %3600 = vmatprep.subr.mxu0 0.0
        %3601 = vmatpush1.msra.mxu0 0.0
        %3602 = vmatprep.subr.mxu0 0.0
        %3603 = vmatpush1.msra.mxu0 0.0
        %3604 = vmatprep.subr.mxu0 0.0
        %3605 = vmatpush1.msra.mxu0 0.0
        %3606 = vmatprep.subr.mxu0 0.0
        %3607 = vmatpush1.msra.mxu0 0.0
        %3608 = vmatprep.subr.mxu0 0.0
        %3609 = vmatpush1.msra.mxu0 0.0
        %3610 = vmatprep.subr.mxu0 0.0
        %3611 = vmatpush1.msra.mxu0 0.0
        %3612 = vmatprep.subr.mxu0 0.0
        %3613 = vmatpush1.msra.mxu0 0.0
        %3614 = vmatprep.subr.mxu0 0.0
        %3615 = vmatpush1.msra.mxu0 0.0
        %3616 = vmatprep.subr.mxu0 0.0
        %3617 = vmatpush1.msra.mxu0 0.0
        %3618 = vmatprep.subr.mxu0 0.0
        %3619 = vmatpush1.msra.mxu0 0.0
        %3620 = vmatprep.subr.mxu0 0.0
        %3621 = vmatpush1.msra.mxu0 0.0
        %3622 = vmatprep.subr.mxu0 0.0
        %3623 = vmatpush1.msra.mxu0 0.0
        %3624 = vmatprep.subr.mxu0 0.0
        %3625 = vmatpush1.msra.mxu0 0.0
        %3626 = vmatprep.subr.mxu0 0.0
        %3627 = vmatpush1.msra.mxu0 0.0
        %3628 = vmatprep.subr.mxu0 0.0
        %3629 = vmatpush1.msra.mxu0 0.0
        %3630 = vmatprep.subr.mxu0 0.0
        %3631 = vmatpush1.msra.mxu0 0.0
        %3632 = vmatprep.subr.mxu0 0.0
        %3633 = vmatpush1.msra.mxu0 0.0
        %3634 = vmatprep.subr.mxu0 0.0
        %3635 = vmatpush1.msra.mxu0 0.0
        %3636 = vmatprep.subr.mxu0 0.0
        %3637 = vmatpush1.msra.mxu0 0.0
        %3638 = vmatprep.mubr.f32.mxu0 0.0
        %3639 = vmatmul.mubr.f32.gmra.mrb[0].mxu0 %v3569
        %v3640 = vpop.f32.mrb[0].mxu0
        %v3641 = vadd.f32 %v3566, %v3640
        %v3642 = vpop.f32.mrb[0].mxu0
        %3643 = vmatprep.mubr.f32.mxu0 0.0
        %3644 = vmatmul.mubr.f32.gmra.mrb[0].mxu0 %v3572
        %v3645 = vpop.f32.mrb[0].mxu0
        %v3646 = vadd.f32 %v3566, %v3645
        %v3647 = vpop.f32.mrb[0].mxu0
        %3648 = vdwg.mxu0
        %v3649 = vmul.f32 %v3641, 0.5
        %v3650 = vmul.f32 %v3646, 0.5
        %v3651 = vmul.f32 %v3641, 0.044715
        %v3652 = vmul.f32 %v3646, 0.044715
        %v3653 = vmul.f32 %v3651, %v3641
        %v3654 = vmul.f32 %v3652, %v3646
        %v3655 = vmul.f32 %v3653, %v3641
        %v3656 = vmul.f32 %v3654, %v3646
        %v3657 = vadd.f32 %v3641, %v3655
        %v3658 = vadd.f32 %v3646, %v3656
        %v3659 = vmul.f32 %v3657, 0.7978846
        %v3660 = vmul.f32 %v3658, 0.7978846
        %v3661 = vtanh.pop %v3659
        %v3662 = vtanh.pop %v3660
        %v3663 = vadd.f32 %v3661, 1.0
        %v3664 = vadd.f32 %v3662, 1.0
        %v3665 = vmul.f32 %v3649, %v3663
        %v3666 = vmul.f32 %v3650, %v3664
        %v3667 = vld [vmem:[#allocation35] sm:$0xff]
        %v3668 = vld [vmem:[#allocation35 + $0x8] sm:$0xff]
        %v3669 = vld [vmem:[#allocation35 + $0x10] sm:$0xff]
        %v3670 = vld [vmem:[#allocation35 + $0x18] sm:$0xff]
        %v3671 = vld [vmem:[#allocation37] sm:$0x1]
        %v3673 = vlaneseq
        %v3674 = vshrl.u32 %v3673, 7
        %v3675 = vsub.s32 0, %v3674
        %v3676 = vrot.slane %v3671, %v3675
        %v3679 = vsel %vm1309, %v3665, 0
        %v3682 = vsel %vm1309, %v3666, 0
        %3684 = vmatprep.subr.mxu0 0.0
        %3685 = vmatpush1.msra.mxu0 %v3667
        %3686 = vmatprep.subr.mxu0 0.0
        %3687 = vmatpush1.msra.mxu0 %v3668
        %3688 = vmatprep.subr.mxu0 0.0
        %3689 = vmatpush1.msra.mxu0 %v3669
        %3690 = vmatprep.subr.mxu0 0.0
        %3691 = vmatpush1.msra.mxu0 %v3670
        %3692 = vmatprep.subr.mxu0 0.0
        %3693 = vmatpush1.msra.mxu0 0.0
        %3694 = vmatprep.subr.mxu0 0.0
        %3695 = vmatpush1.msra.mxu0 0.0
        %3696 = vmatprep.subr.mxu0 0.0
        %3697 = vmatpush1.msra.mxu0 0.0
        %3698 = vmatprep.subr.mxu0 0.0
        %3699 = vmatpush1.msra.mxu0 0.0
        %3700 = vmatprep.subr.mxu0 0.0
        %3701 = vmatpush1.msra.mxu0 0.0
        %3702 = vmatprep.subr.mxu0 0.0
        %3703 = vmatpush1.msra.mxu0 0.0
        %3704 = vmatprep.subr.mxu0 0.0
        %3705 = vmatpush1.msra.mxu0 0.0
        %3706 = vmatprep.subr.mxu0 0.0
        %3707 = vmatpush1.msra.mxu0 0.0
        %3708 = vmatprep.subr.mxu0 0.0
        %3709 = vmatpush1.msra.mxu0 0.0
        %3710 = vmatprep.subr.mxu0 0.0
        %3711 = vmatpush1.msra.mxu0 0.0
        %3712 = vmatprep.subr.mxu0 0.0
        %3713 = vmatpush1.msra.mxu0 0.0
        %3714 = vmatprep.subr.mxu0 0.0
        %3715 = vmatpush1.msra.mxu0 0.0
        %3716 = vmatprep.subr.mxu0 0.0
        %3717 = vmatpush1.msra.mxu0 0.0
        %3718 = vmatprep.subr.mxu0 0.0
        %3719 = vmatpush1.msra.mxu0 0.0
        %3720 = vmatprep.subr.mxu0 0.0
        %3721 = vmatpush1.msra.mxu0 0.0
        %3722 = vmatprep.subr.mxu0 0.0
        %3723 = vmatpush1.msra.mxu0 0.0
        %3724 = vmatprep.subr.mxu0 0.0
        %3725 = vmatpush1.msra.mxu0 0.0
        %3726 = vmatprep.subr.mxu0 0.0
        %3727 = vmatpush1.msra.mxu0 0.0
        %3728 = vmatprep.subr.mxu0 0.0
        %3729 = vmatpush1.msra.mxu0 0.0
        %3730 = vmatprep.subr.mxu0 0.0
        %3731 = vmatpush1.msra.mxu0 0.0
        %3732 = vmatprep.subr.mxu0 0.0
        %3733 = vmatpush1.msra.mxu0 0.0
        %3734 = vmatprep.subr.mxu0 0.0
        %3735 = vmatpush1.msra.mxu0 0.0
        %3736 = vmatprep.subr.mxu0 0.0
        %3737 = vmatpush1.msra.mxu0 0.0
        %3738 = vmatprep.subr.mxu0 0.0
        %3739 = vmatpush1.msra.mxu0 0.0
        %3740 = vmatprep.subr.mxu0 0.0
        %3741 = vmatpush1.msra.mxu0 0.0
        %3742 = vmatprep.subr.mxu0 0.0
        %3743 = vmatpush1.msra.mxu0 0.0
        %3744 = vmatprep.subr.mxu0 0.0
        %3745 = vmatpush1.msra.mxu0 0.0
        %3746 = vmatprep.subr.mxu0 0.0
        %3747 = vmatpush1.msra.mxu0 0.0
        %3748 = vmatprep.mubr.f32.mxu0 0.0
        %3749 = vmatmul.mubr.f32.gmra.mrb[0].mxu0 %v3679
        %v3750 = vpop.f32.mrb[0].mxu0
        %v3751 = vadd.f32 %v3676, %v3750
        %v3752 = vpop.f32.mrb[0].mxu0
        %3753 = vmatprep.mubr.f32.mxu0 0.0
        %3754 = vmatmul.mubr.f32.gmra.mrb[0].mxu0 %v3682
        %v3755 = vpop.f32.mrb[0].mxu0
        %v3756 = vadd.f32 %v3676, %v3755
        %v3757 = vpop.f32.mrb[0].mxu0
        %3758 = vdwg.mxu0
        %v3759 = vadd.f32 %v3555, %v3751
        %v3760 = vadd.f32 %v3556, %v3756
        %v3761 = vld [vmem:[#allocation38] sm:$0x1]
        %v3762 = vld [vmem:[%s55] sm:$0x1]
        %v3763 = vsel %vm1309, %v3759, 0.0
        %3764 = vadd.xlane.f32.xlu0 %v3763
        %v3765 = vpop.xlane.xlu0 %3764
        %v3766 = vsel %vm1309, %v3760, 0.0
        %3767 = vadd.xlane.f32.xlu0 %v3766
        %v3768 = vpop.xlane.xlu0 %3767
        %v3769 = vmul.f32 %v3765, %v2225
        %v3770 = vmul.f32 %v3768, %v2225
        %v3771 = vsub.f32 %v3759, %v3769
        %v3772 = vsub.f32 %v3760, %v3770
        %v3773 = vmul.f32 %v3771, %v3771
        %v3774 = vmul.f32 %v3772, %v3772
        %v3775 = vsel %vm1309, %v3773, 0.0
        %3776 = vadd.xlane.f32.xlu0 %v3775
        %v3777 = vpop.xlane.xlu0 %3776
        %v3778 = vsel %vm1309, %v3774, 0.0
        %3779 = vadd.xlane.f32.xlu0 %v3778
        %v3780 = vpop.xlane.xlu0 %3779
        %v3781 = vmul.f32 %v3777, %v2225
        %v3782 = vmul.f32 %v3780, %v2225
        %v3783 = vadd.f32 %v3781, 1e-05
        %v3784 = vadd.f32 %v3782, 1e-05
        %v3785 = vrsqrt.pop %v3783
        %v3786 = vrsqrt.pop %v3784
        %v3787 = vmul.f32 %v3771, %v3785
        %v3788 = vmul.f32 %v3772, %v3786
        %v3790 = vlaneseq
        %v3791 = vshrl.u32 %v3790, 7
        %v3792 = vsub.s32 0, %v3791
        %v3793 = vrot.slane %v3761, %v3792
        %v3795 = vmul.f32 %v3787, %v3793
        %v3796 = vmul.f32 %v3788, %v3793
        %v3798 = vlaneseq
        %v3799 = vshrl.u32 %v3798, 7
        %v3800 = vsub.s32 0, %v3799
        %v3801 = vrot.slane %v3762, %v3800
        %v3803 = vadd.f32 %v3795, %v3801
        %v3804 = vadd.f32 %v3796, %v3801
        %v3805 = vld [vmem:[%s57] sm:$0x1]
        %v3806 = vld [vmem:[%s59] sm:$0x1]
        %v3807 = vsel %vm1309, %v3803, 0.0
        %3808 = vadd.xlane.f32.xlu0 %v3807
        %v3809 = vpop.xlane.xlu0 %3808
        %v3810 = vsel %vm1309, %v3804, 0.0
        %3811 = vadd.xlane.f32.xlu0 %v3810
        %v3812 = vpop.xlane.xlu0 %3811
        %v3813 = vmul.f32 %v3809, %v2225
        %v3814 = vmul.f32 %v3812, %v2225
        %v3815 = vsub.f32 %v3803, %v3813
        %v3816 = vsub.f32 %v3804, %v3814
        %v3817 = vmul.f32 %v3815, %v3815
        %v3818 = vmul.f32 %v3816, %v3816
        %v3819 = vsel %vm1309, %v3817, 0.0
        %3820 = vadd.xlane.f32.xlu0 %v3819
        %v3821 = vpop.xlane.xlu0 %3820
        %v3822 = vsel %vm1309, %v3818, 0.0
        %3823 = vadd.xlane.f32.xlu0 %v3822
        %v3824 = vpop.xlane.xlu0 %3823
        %v3825 = vmul.f32 %v3821, %v2225
        %v3826 = vmul.f32 %v3824, %v2225
        %v3827 = vadd.f32 %v3825, 1e-05
        %v3828 = vadd.f32 %v3826, 1e-05
        %v3829 = vrsqrt.pop %v3827
        %v3830 = vrsqrt.pop %v3828
        %v3831 = vmul.f32 %v3815, %v3829
        %v3832 = vmul.f32 %v3816, %v3830
        %v3834 = vlaneseq
        %v3835 = vshrl.u32 %v3834, 7
        %v3836 = vsub.s32 0, %v3835
        %v3837 = vrot.slane %v3805, %v3836
        %v3839 = vmul.f32 %v3831, %v3837
        %v3840 = vmul.f32 %v3832, %v3837
        %v3842 = vlaneseq
        %v3843 = vshrl.u32 %v3842, 7
        %v3844 = vsub.s32 0, %v3843
        %v3845 = vrot.slane %v3806, %v3844
        %v3847 = vadd.f32 %v3839, %v3845
        %v3848 = vadd.f32 %v3840, %v3845
        %v3849 = vmul.f32 %v3847, 0.5
        %v3850 = vmul.f32 %v3848, 0.5
        %v3851 = vmul.f32 %v3847, 0.044715
        %v3852 = vmul.f32 %v3848, 0.044715
        %v3853 = vmul.f32 %v3851, %v3847
        %v3854 = vmul.f32 %v3852, %v3848
        %v3855 = vmul.f32 %v3853, %v3847
        %v3856 = vmul.f32 %v3854, %v3848
        %v3857 = vadd.f32 %v3847, %v3855
        %v3858 = vadd.f32 %v3848, %v3856
        %v3859 = vmul.f32 %v3857, 0.7978846
        %v3860 = vmul.f32 %v3858, 0.7978846
        %v3861 = vtanh.pop %v3859
        %v3862 = vtanh.pop %v3860
        %v3863 = vadd.f32 %v3861, 1.0
        %v3864 = vadd.f32 %v3862, 1.0
        %v3865 = vmul.f32 %v3849, %v3863
        %v3866 = vmul.f32 %v3850, %v3864
        %s3867 = smul.u32 %s94, 128
        %s3868 = sld [smem:[#allocation3 + %s3867]]
        %v3869 = vstv %s3868
        %v3870 = vmul.f32 %v3865, %v3869
        %v3871 = vmul.f32 %v3866, %v3869
        %v3872 = vadd.f32 %v3870, 0.0
        %v3873 = vadd.f32 %v3871, 0.0
        %v3874 = vld [vmem:[%s19] sm:$0xff]
        %v3875 = vld [vmem:[%s19 + $0x8] sm:$0xff]
        %v3876 = vld [vmem:[%s19 + $0x10] sm:$0xff]
        %v3877 = vld [vmem:[%s19 + $0x18] sm:$0xff]
        %v3878 = vld [vmem:[#allocation19] sm:$0x1]
        %v3880 = vlaneseq
        %v3881 = vshrl.u32 %v3880, 7
        %v3882 = vsub.s32 0, %v3881
        %v3883 = vrot.slane %v3878, %v3882
        %3885 = vmatprep.subr.mxu0 0.0
        %3886 = vmatpush1.msra.mxu0 %v3874
        %3887 = vmatprep.subr.mxu0 0.0
        %3888 = vmatpush1.msra.mxu0 %v3875
        %3889 = vmatprep.subr.mxu0 0.0
        %3890 = vmatpush1.msra.mxu0 %v3876
        %3891 = vmatprep.subr.mxu0 0.0
        %3892 = vmatpush1.msra.mxu0 %v3877
        %3893 = vmatprep.subr.mxu0 0.0
        %3894 = vmatpush1.msra.mxu0 0.0
        %3895 = vmatprep.subr.mxu0 0.0
        %3896 = vmatpush1.msra.mxu0 0.0
        %3897 = vmatprep.subr.mxu0 0.0
        %3898 = vmatpush1.msra.mxu0 0.0
        %3899 = vmatprep.subr.mxu0 0.0
        %3900 = vmatpush1.msra.mxu0 0.0
        %3901 = vmatprep.subr.mxu0 0.0
        %3902 = vmatpush1.msra.mxu0 0.0
        %3903 = vmatprep.subr.mxu0 0.0
        %3904 = vmatpush1.msra.mxu0 0.0
        %3905 = vmatprep.subr.mxu0 0.0
        %3906 = vmatpush1.msra.mxu0 0.0
        %3907 = vmatprep.subr.mxu0 0.0
        %3908 = vmatpush1.msra.mxu0 0.0
        %3909 = vmatprep.subr.mxu0 0.0
        %3910 = vmatpush1.msra.mxu0 0.0
        %3911 = vmatprep.subr.mxu0 0.0
        %3912 = vmatpush1.msra.mxu0 0.0
        %3913 = vmatprep.subr.mxu0 0.0
        %3914 = vmatpush1.msra.mxu0 0.0
        %3915 = vmatprep.subr.mxu0 0.0
        %3916 = vmatpush1.msra.mxu0 0.0
        %3917 = vmatprep.subr.mxu0 0.0
        %3918 = vmatpush1.msra.mxu0 0.0
        %3919 = vmatprep.subr.mxu0 0.0
        %3920 = vmatpush1.msra.mxu0 0.0
        %3921 = vmatprep.subr.mxu0 0.0
        %3922 = vmatpush1.msra.mxu0 0.0
        %3923 = vmatprep.subr.mxu0 0.0
        %3924 = vmatpush1.msra.mxu0 0.0
        %3925 = vmatprep.subr.mxu0 0.0
        %3926 = vmatpush1.msra.mxu0 0.0
        %3927 = vmatprep.subr.mxu0 0.0
        %3928 = vmatpush1.msra.mxu0 0.0
        %3929 = vmatprep.subr.mxu0 0.0
        %3930 = vmatpush1.msra.mxu0 0.0
        %3931 = vmatprep.subr.mxu0 0.0
        %3932 = vmatpush1.msra.mxu0 0.0
        %3933 = vmatprep.subr.mxu0 0.0
        %3934 = vmatpush1.msra.mxu0 0.0
        %3935 = vmatprep.subr.mxu0 0.0
        %3936 = vmatpush1.msra.mxu0 0.0
        %3937 = vmatprep.subr.mxu0 0.0
        %3938 = vmatpush1.msra.mxu0 0.0
        %3939 = vmatprep.subr.mxu0 0.0
        %3940 = vmatpush1.msra.mxu0 0.0
        %3941 = vmatprep.subr.mxu0 0.0
        %3942 = vmatpush1.msra.mxu0 0.0
        %3943 = vmatprep.subr.mxu0 0.0
        %3944 = vmatpush1.msra.mxu0 0.0
        %3945 = vmatprep.subr.mxu0 0.0
        %3946 = vmatpush1.msra.mxu0 0.0
        %3947 = vmatprep.subr.mxu0 0.0
        %3948 = vmatpush1.msra.mxu0 0.0
        %3949 = vmatprep.mubr.f32.mxu0 0.0
        %3950 = vmatmul.mubr.f32.gmra.mrb[0].mxu0 %v2276
        %v3951 = vpop.f32.mrb[0].mxu0
        %v3952 = vadd.f32 %v3883, %v3951
        %v3953 = vpop.f32.mrb[0].mxu0
        %3954 = vmatprep.mubr.f32.mxu0 0.0
        %3955 = vmatmul.mubr.f32.gmra.mrb[0].mxu0 %v2279
        %v3956 = vpop.f32.mrb[0].mxu0
        %v3957 = vadd.f32 %v3883, %v3956
        %v3958 = vpop.f32.mrb[0].mxu0
        %3959 = vdwg.mxu0
        %v3960 = vmul.f32 %v3952, 0.5
        %v3961 = vmul.f32 %v3957, 0.5
        %v3962 = vmul.f32 %v3952, 0.044715
        %v3963 = vmul.f32 %v3957, 0.044715
        %v3964 = vmul.f32 %v3962, %v3952
        %v3965 = vmul.f32 %v3963, %v3957
        %v3966 = vmul.f32 %v3964, %v3952
        %v3967 = vmul.f32 %v3965, %v3957
        %v3968 = vadd.f32 %v3952, %v3966
        %v3969 = vadd.f32 %v3957, %v3967
        %v3970 = vmul.f32 %v3968, 0.7978846
        %v3971 = vmul.f32 %v3969, 0.7978846
        %v3972 = vtanh.pop %v3970
        %v3973 = vtanh.pop %v3971
        %v3974 = vadd.f32 %v3972, 1.0
        %v3975 = vadd.f32 %v3973, 1.0
        %v3976 = vmul.f32 %v3960, %v3974
        %v3977 = vmul.f32 %v3961, %v3975
        %v3978 = vld [vmem:[#allocation20] sm:$0xff]
        %v3979 = vld [vmem:[#allocation20 + $0x8] sm:$0xff]
        %v3980 = vld [vmem:[#allocation20 + $0x10] sm:$0xff]
        %v3981 = vld [vmem:[#allocation20 + $0x18] sm:$0xff]
        %v3982 = vld [vmem:[#allocation20 + $0x20] sm:$0xff]
        %v3983 = vld [vmem:[#allocation20 + $0x28] sm:$0xff]
        %v3984 = vld [vmem:[#allocation20 + $0x30] sm:$0xff]
        %v3985 = vld [vmem:[#allocation20 + $0x38] sm:$0xff]
        %v3986 = vld [vmem:[#allocation20 + $0x40] sm:$0xff]
        %v3987 = vld [vmem:[#allocation20 + $0x48] sm:$0xff]
        %v3988 = vld [vmem:[#allocation20 + $0x50] sm:$0xff]
        %v3989 = vld [vmem:[#allocation20 + $0x58] sm:$0xff]
        %v3990 = vld [vmem:[#allocation20 + $0x60] sm:$0xff]
        %v3991 = vld [vmem:[#allocation20 + $0x68] sm:$0xff]
        %v3992 = vld [vmem:[#allocation20 + $0x70] sm:$0xff]
        %v3993 = vld [vmem:[#allocation20 + $0x78] sm:$0xff]
        %3996 = vrot.lane.b32.xlu0 %v3976, 120
        %v3997 = vpop.permute.xlu0 %3996
        %3998 = vrot.lane.b32.xlu0 %v3977, 120
        %v3999 = vpop.permute.xlu0 %3998
        %v4003 = vsel %vm1433, %v3980, 0
        %v4006 = vsel %vm1433, %v3981, 0
        %4008 = vmatprep.subr.mxu0 0.0
        %4009 = vmatpush1.msra.mxu0 %v3997
        %4010 = vmatprep.subr.mxu0 0.0
        %4011 = vmatpush1.msra.mxu0 %v3999
        %4012 = vmatprep.subr.mxu0 0.0
        %4013 = vmatpush1.msra.mxu0 0.0
        %4014 = vmatprep.subr.mxu0 0.0
        %4015 = vmatpush1.msra.mxu0 0.0
        %4016 = vmatprep.subr.mxu0 0.0
        %4017 = vmatpush1.msra.mxu0 0.0
        %4018 = vmatprep.subr.mxu0 0.0
        %4019 = vmatpush1.msra.mxu0 0.0
        %4020 = vmatprep.subr.mxu0 0.0
        %4021 = vmatpush1.msra.mxu0 0.0
        %4022 = vmatprep.subr.mxu0 0.0
        %4023 = vmatpush1.msra.mxu0 0.0
        %4024 = vmatprep.subr.mxu0 0.0
        %4025 = vmatpush1.msra.mxu0 0.0
        %4026 = vmatprep.subr.mxu0 0.0
        %4027 = vmatpush1.msra.mxu0 0.0
        %4028 = vmatprep.subr.mxu0 0.0
        %4029 = vmatpush1.msra.mxu0 0.0
        %4030 = vmatprep.subr.mxu0 0.0
        %4031 = vmatpush1.msra.mxu0 0.0
        %4032 = vmatprep.subr.mxu0 0.0
        %4033 = vmatpush1.msra.mxu0 0.0
        %4034 = vmatprep.subr.mxu0 0.0
        %4035 = vmatpush1.msra.mxu0 0.0
        %4036 = vmatprep.subr.mxu0 0.0
        %4037 = vmatpush1.msra.mxu0 0.0
        %4038 = vmatprep.subr.mxu0 0.0
        %4039 = vmatpush1.msra.mxu0 0.0
        %4040 = vmatprep.subr.mxu0 0.0
        %4041 = vmatpush1.msra.mxu0 0.0
        %4042 = vmatprep.subr.mxu0 0.0
        %4043 = vmatpush1.msra.mxu0 0.0
        %4044 = vmatprep.subr.mxu0 0.0
        %4045 = vmatpush1.msra.mxu0 0.0
        %4046 = vmatprep.subr.mxu0 0.0
        %4047 = vmatpush1.msra.mxu0 0.0
        %4048 = vmatprep.subr.mxu0 0.0
        %4049 = vmatpush1.msra.mxu0 0.0
        %4050 = vmatprep.subr.mxu0 0.0
        %4051 = vmatpush1.msra.mxu0 0.0
        %4052 = vmatprep.subr.mxu0 0.0
        %4053 = vmatpush1.msra.mxu0 0.0
        %4054 = vmatprep.subr.mxu0 0.0
        %4055 = vmatpush1.msra.mxu0 0.0
        %4056 = vmatprep.subr.mxu0 0.0
        %4057 = vmatpush1.msra.mxu0 0.0
        %4058 = vmatprep.subr.mxu0 0.0
        %4059 = vmatpush1.msra.mxu0 0.0
        %4060 = vmatprep.subr.mxu0 0.0
        %4061 = vmatpush1.msra.mxu0 0.0
        %4062 = vmatprep.subr.mxu0 0.0
        %4063 = vmatpush1.msra.mxu0 0.0
        %4064 = vmatprep.subr.mxu0 0.0
        %4065 = vmatpush1.msra.mxu0 0.0
        %4066 = vmatprep.subr.mxu0 0.0
        %4067 = vmatpush1.msra.mxu0 0.0
        %4068 = vmatprep.subr.mxu0 0.0
        %4069 = vmatpush1.msra.mxu0 0.0
        %4070 = vmatprep.subr.mxu0 0.0
        %4071 = vmatpush1.msra.mxu0 0.0
        %4072 = vmatprep.mubr.f32.mxu0 0.0
        %4073 = vmatmul.mubr.f32.gmra.mrb[0].mxu0 %v4003
        %v4074 = vpop.f32.mrb[0].mxu0
        %v4075 = vadd.f32 0.0, %v4074
        %v4076 = vpop.f32.mrb[0].mxu0
        %4077 = vmatprep.mubr.f32.mxu0 0.0
        %4078 = vmatmul.mubr.f32.gmra.mrb[0].mxu0 %v4006
        %v4079 = vpop.f32.mrb[0].mxu0
        %v4080 = vadd.f32 0.0, %v4079
        %v4081 = vpop.f32.mrb[0].mxu0
        %4082 = vdwg.mxu0
        %v4084 = vsel %vm1433, %v3978, 0
        %v4087 = vsel %vm1433, %v3979, 0
        %4089 = vmatprep.subr.mxu0 0.0
        %4090 = vmatpush1.msra.mxu0 %v3976
        %4091 = vmatprep.subr.mxu0 0.0
        %4092 = vmatpush1.msra.mxu0 %v3977
        %4093 = vmatprep.subr.mxu0 0.0
        %4094 = vmatpush1.msra.mxu0 0.0
        %4095 = vmatprep.subr.mxu0 0.0
        %4096 = vmatpush1.msra.mxu0 0.0
        %4097 = vmatprep.subr.mxu0 0.0
        %4098 = vmatpush1.msra.mxu0 0.0
        %4099 = vmatprep.subr.mxu0 0.0
        %4100 = vmatpush1.msra.mxu0 0.0
        %4101 = vmatprep.subr.mxu0 0.0
        %4102 = vmatpush1.msra.mxu0 0.0
        %4103 = vmatprep.subr.mxu0 0.0
        %4104 = vmatpush1.msra.mxu0 0.0
        %4105 = vmatprep.subr.mxu0 0.0
        %4106 = vmatpush1.msra.mxu0 0.0
        %4107 = vmatprep.subr.mxu0 0.0
        %4108 = vmatpush1.msra.mxu0 0.0
        %4109 = vmatprep.subr.mxu0 0.0
        %4110 = vmatpush1.msra.mxu0 0.0
        %4111 = vmatprep.subr.mxu0 0.0
        %4112 = vmatpush1.msra.mxu0 0.0
        %4113 = vmatprep.subr.mxu0 0.0
        %4114 = vmatpush1.msra.mxu0 0.0
        %4115 = vmatprep.subr.mxu0 0.0
        %4116 = vmatpush1.msra.mxu0 0.0
        %4117 = vmatprep.subr.mxu0 0.0
        %4118 = vmatpush1.msra.mxu0 0.0
        %4119 = vmatprep.subr.mxu0 0.0
        %4120 = vmatpush1.msra.mxu0 0.0
        %4121 = vmatprep.subr.mxu0 0.0
        %4122 = vmatpush1.msra.mxu0 0.0
        %4123 = vmatprep.subr.mxu0 0.0
        %4124 = vmatpush1.msra.mxu0 0.0
        %4125 = vmatprep.subr.mxu0 0.0
        %4126 = vmatpush1.msra.mxu0 0.0
        %4127 = vmatprep.subr.mxu0 0.0
        %4128 = vmatpush1.msra.mxu0 0.0
        %4129 = vmatprep.subr.mxu0 0.0
        %4130 = vmatpush1.msra.mxu0 0.0
        %4131 = vmatprep.subr.mxu0 0.0
        %4132 = vmatpush1.msra.mxu0 0.0
        %4133 = vmatprep.subr.mxu0 0.0
        %4134 = vmatpush1.msra.mxu0 0.0
        %4135 = vmatprep.subr.mxu0 0.0
        %4136 = vmatpush1.msra.mxu0 0.0
        %4137 = vmatprep.subr.mxu0 0.0
        %4138 = vmatpush1.msra.mxu0 0.0
        %4139 = vmatprep.subr.mxu0 0.0
        %4140 = vmatpush1.msra.mxu0 0.0
        %4141 = vmatprep.subr.mxu0 0.0
        %4142 = vmatpush1.msra.mxu0 0.0
        %4143 = vmatprep.subr.mxu0 0.0
        %4144 = vmatpush1.msra.mxu0 0.0
        %4145 = vmatprep.subr.mxu0 0.0
        %4146 = vmatpush1.msra.mxu0 0.0
        %4147 = vmatprep.subr.mxu0 0.0
        %4148 = vmatpush1.msra.mxu0 0.0
        %4149 = vmatprep.subr.mxu0 0.0
        %4150 = vmatpush1.msra.mxu0 0.0
        %4151 = vmatprep.subr.mxu0 0.0
        %4152 = vmatpush1.msra.mxu0 0.0
        %4153 = vmatprep.mubr.f32.mxu0 0.0
        %4154 = vmatmul.mubr.f32.gmra.mrb[0].mxu0 %v4084
        %v4155 = vpop.f32.mrb[0].mxu0
        %v4156 = vadd.f32 %v4075, %v4155
        %v4157 = vpop.f32.mrb[0].mxu0
        %4158 = vmatprep.mubr.f32.mxu0 0.0
        %4159 = vmatmul.mubr.f32.gmra.mrb[0].mxu0 %v4087
        %v4160 = vpop.f32.mrb[0].mxu0
        %v4161 = vadd.f32 %v4080, %v4160
        %v4162 = vpop.f32.mrb[0].mxu0
        %4163 = vdwg.mxu0
        %4164 = vrot.lane.b32.xlu0 %v3976, 112
        %v4165 = vpop.permute.xlu0 %4164
        %4166 = vrot.lane.b32.xlu0 %v3977, 112
        %v4167 = vpop.permute.xlu0 %4166
        %v4171 = vsel %vm1433, %v3982, 0
        %v4174 = vsel %vm1433, %v3983, 0
        %4176 = vmatprep.subr.mxu0 0.0
        %4177 = vmatpush1.msra.mxu0 %v4165
        %4178 = vmatprep.subr.mxu0 0.0
        %4179 = vmatpush1.msra.mxu0 %v4167
        %4180 = vmatprep.subr.mxu0 0.0
        %4181 = vmatpush1.msra.mxu0 0.0
        %4182 = vmatprep.subr.mxu0 0.0
        %4183 = vmatpush1.msra.mxu0 0.0
        %4184 = vmatprep.subr.mxu0 0.0
        %4185 = vmatpush1.msra.mxu0 0.0
        %4186 = vmatprep.subr.mxu0 0.0
        %4187 = vmatpush1.msra.mxu0 0.0
        %4188 = vmatprep.subr.mxu0 0.0
        %4189 = vmatpush1.msra.mxu0 0.0
        %4190 = vmatprep.subr.mxu0 0.0
        %4191 = vmatpush1.msra.mxu0 0.0
        %4192 = vmatprep.subr.mxu0 0.0
        %4193 = vmatpush1.msra.mxu0 0.0
        %4194 = vmatprep.subr.mxu0 0.0
        %4195 = vmatpush1.msra.mxu0 0.0
        %4196 = vmatprep.subr.mxu0 0.0
        %4197 = vmatpush1.msra.mxu0 0.0
        %4198 = vmatprep.subr.mxu0 0.0
        %4199 = vmatpush1.msra.mxu0 0.0
        %4200 = vmatprep.subr.mxu0 0.0
        %4201 = vmatpush1.msra.mxu0 0.0
        %4202 = vmatprep.subr.mxu0 0.0
        %4203 = vmatpush1.msra.mxu0 0.0
        %4204 = vmatprep.subr.mxu0 0.0
        %4205 = vmatpush1.msra.mxu0 0.0
        %4206 = vmatprep.subr.mxu0 0.0
        %4207 = vmatpush1.msra.mxu0 0.0
        %4208 = vmatprep.subr.mxu0 0.0
        %4209 = vmatpush1.msra.mxu0 0.0
        %4210 = vmatprep.subr.mxu0 0.0
        %4211 = vmatpush1.msra.mxu0 0.0
        %4212 = vmatprep.subr.mxu0 0.0
        %4213 = vmatpush1.msra.mxu0 0.0
        %4214 = vmatprep.subr.mxu0 0.0
        %4215 = vmatpush1.msra.mxu0 0.0
        %4216 = vmatprep.subr.mxu0 0.0
        %4217 = vmatpush1.msra.mxu0 0.0
        %4218 = vmatprep.subr.mxu0 0.0
        %4219 = vmatpush1.msra.mxu0 0.0
        %4220 = vmatprep.subr.mxu0 0.0
        %4221 = vmatpush1.msra.mxu0 0.0
        %4222 = vmatprep.subr.mxu0 0.0
        %4223 = vmatpush1.msra.mxu0 0.0
        %4224 = vmatprep.subr.mxu0 0.0
        %4225 = vmatpush1.msra.mxu0 0.0
        %4226 = vmatprep.subr.mxu0 0.0
        %4227 = vmatpush1.msra.mxu0 0.0
        %4228 = vmatprep.subr.mxu0 0.0
        %4229 = vmatpush1.msra.mxu0 0.0
        %4230 = vmatprep.subr.mxu0 0.0
        %4231 = vmatpush1.msra.mxu0 0.0
        %4232 = vmatprep.subr.mxu0 0.0
        %4233 = vmatpush1.msra.mxu0 0.0
        %4234 = vmatprep.subr.mxu0 0.0
        %4235 = vmatpush1.msra.mxu0 0.0
        %4236 = vmatprep.subr.mxu0 0.0
        %4237 = vmatpush1.msra.mxu0 0.0
        %4238 = vmatprep.subr.mxu0 0.0
        %4239 = vmatpush1.msra.mxu0 0.0
        %4240 = vmatprep.mubr.f32.mxu0 0.0
        %4241 = vmatmul.mubr.f32.gmra.mrb[0].mxu0 %v4171
        %v4242 = vpop.f32.mrb[0].mxu0
        %v4243 = vadd.f32 0.0, %v4242
        %v4244 = vpop.f32.mrb[0].mxu0
        %4245 = vmatprep.mubr.f32.mxu0 0.0
        %4246 = vmatmul.mubr.f32.gmra.mrb[0].mxu0 %v4174
        %v4247 = vpop.f32.mrb[0].mxu0
        %v4248 = vadd.f32 0.0, %v4247
        %v4249 = vpop.f32.mrb[0].mxu0
        %4250 = vdwg.mxu0
        %v4251 = vadd.f32 %v4156, %v4243
        %v4252 = vadd.f32 %v4161, %v4248
        %4253 = vrot.lane.b32.xlu0 %v3976, 104
        %v4254 = vpop.permute.xlu0 %4253
        %4255 = vrot.lane.b32.xlu0 %v3977, 104
        %v4256 = vpop.permute.xlu0 %4255
        %v4260 = vsel %vm1433, %v3984, 0
        %v4263 = vsel %vm1433, %v3985, 0
        %4265 = vmatprep.subr.mxu0 0.0
        %4266 = vmatpush1.msra.mxu0 %v4254
        %4267 = vmatprep.subr.mxu0 0.0
        %4268 = vmatpush1.msra.mxu0 %v4256
        %4269 = vmatprep.subr.mxu0 0.0
        %4270 = vmatpush1.msra.mxu0 0.0
        %4271 = vmatprep.subr.mxu0 0.0
        %4272 = vmatpush1.msra.mxu0 0.0
        %4273 = vmatprep.subr.mxu0 0.0
        %4274 = vmatpush1.msra.mxu0 0.0
        %4275 = vmatprep.subr.mxu0 0.0
        %4276 = vmatpush1.msra.mxu0 0.0
        %4277 = vmatprep.subr.mxu0 0.0
        %4278 = vmatpush1.msra.mxu0 0.0
        %4279 = vmatprep.subr.mxu0 0.0
        %4280 = vmatpush1.msra.mxu0 0.0
        %4281 = vmatprep.subr.mxu0 0.0
        %4282 = vmatpush1.msra.mxu0 0.0
        %4283 = vmatprep.subr.mxu0 0.0
        %4284 = vmatpush1.msra.mxu0 0.0
        %4285 = vmatprep.subr.mxu0 0.0
        %4286 = vmatpush1.msra.mxu0 0.0
        %4287 = vmatprep.subr.mxu0 0.0
        %4288 = vmatpush1.msra.mxu0 0.0
        %4289 = vmatprep.subr.mxu0 0.0
        %4290 = vmatpush1.msra.mxu0 0.0
        %4291 = vmatprep.subr.mxu0 0.0
        %4292 = vmatpush1.msra.mxu0 0.0
        %4293 = vmatprep.subr.mxu0 0.0
        %4294 = vmatpush1.msra.mxu0 0.0
        %4295 = vmatprep.subr.mxu0 0.0
        %4296 = vmatpush1.msra.mxu0 0.0
        %4297 = vmatprep.subr.mxu0 0.0
        %4298 = vmatpush1.msra.mxu0 0.0
        %4299 = vmatprep.subr.mxu0 0.0
        %4300 = vmatpush1.msra.mxu0 0.0
        %4301 = vmatprep.subr.mxu0 0.0
        %4302 = vmatpush1.msra.mxu0 0.0
        %4303 = vmatprep.subr.mxu0 0.0
        %4304 = vmatpush1.msra.mxu0 0.0
        %4305 = vmatprep.subr.mxu0 0.0
        %4306 = vmatpush1.msra.mxu0 0.0
        %4307 = vmatprep.subr.mxu0 0.0
        %4308 = vmatpush1.msra.mxu0 0.0
        %4309 = vmatprep.subr.mxu0 0.0
        %4310 = vmatpush1.msra.mxu0 0.0
        %4311 = vmatprep.subr.mxu0 0.0
        %4312 = vmatpush1.msra.mxu0 0.0
        %4313 = vmatprep.subr.mxu0 0.0
        %4314 = vmatpush1.msra.mxu0 0.0
        %4315 = vmatprep.subr.mxu0 0.0
        %4316 = vmatpush1.msra.mxu0 0.0
        %4317 = vmatprep.subr.mxu0 0.0
        %4318 = vmatpush1.msra.mxu0 0.0
        %4319 = vmatprep.subr.mxu0 0.0
        %4320 = vmatpush1.msra.mxu0 0.0
        %4321 = vmatprep.subr.mxu0 0.0
        %4322 = vmatpush1.msra.mxu0 0.0
        %4323 = vmatprep.subr.mxu0 0.0
        %4324 = vmatpush1.msra.mxu0 0.0
        %4325 = vmatprep.subr.mxu0 0.0
        %4326 = vmatpush1.msra.mxu0 0.0
        %4327 = vmatprep.subr.mxu0 0.0
        %4328 = vmatpush1.msra.mxu0 0.0
        %4329 = vmatprep.mubr.f32.mxu0 0.0
        %4330 = vmatmul.mubr.f32.gmra.mrb[0].mxu0 %v4260
        %v4331 = vpop.f32.mrb[0].mxu0
        %v4332 = vadd.f32 0.0, %v4331
        %v4333 = vpop.f32.mrb[0].mxu0
        %4334 = vmatprep.mubr.f32.mxu0 0.0
        %4335 = vmatmul.mubr.f32.gmra.mrb[0].mxu0 %v4263
        %v4336 = vpop.f32.mrb[0].mxu0
        %v4337 = vadd.f32 0.0, %v4336
        %v4338 = vpop.f32.mrb[0].mxu0
        %4339 = vdwg.mxu0
        %v4340 = vadd.f32 %v4251, %v4332
        %v4341 = vadd.f32 %v4252, %v4337
        %4342 = vrot.lane.b32.xlu0 %v3976, 96
        %v4343 = vpop.permute.xlu0 %4342
        %4344 = vrot.lane.b32.xlu0 %v3977, 96
        %v4345 = vpop.permute.xlu0 %4344
        %v4349 = vsel %vm1433, %v3986, 0
        %v4352 = vsel %vm1433, %v3987, 0
        %4354 = vmatprep.subr.mxu0 0.0
        %4355 = vmatpush1.msra.mxu0 %v4343
        %4356 = vmatprep.subr.mxu0 0.0
        %4357 = vmatpush1.msra.mxu0 %v4345
        %4358 = vmatprep.subr.mxu0 0.0
        %4359 = vmatpush1.msra.mxu0 0.0
        %4360 = vmatprep.subr.mxu0 0.0
        %4361 = vmatpush1.msra.mxu0 0.0
        %4362 = vmatprep.subr.mxu0 0.0
        %4363 = vmatpush1.msra.mxu0 0.0
        %4364 = vmatprep.subr.mxu0 0.0
        %4365 = vmatpush1.msra.mxu0 0.0
        %4366 = vmatprep.subr.mxu0 0.0
        %4367 = vmatpush1.msra.mxu0 0.0
        %4368 = vmatprep.subr.mxu0 0.0
        %4369 = vmatpush1.msra.mxu0 0.0
        %4370 = vmatprep.subr.mxu0 0.0
        %4371 = vmatpush1.msra.mxu0 0.0
        %4372 = vmatprep.subr.mxu0 0.0
        %4373 = vmatpush1.msra.mxu0 0.0
        %4374 = vmatprep.subr.mxu0 0.0
        %4375 = vmatpush1.msra.mxu0 0.0
        %4376 = vmatprep.subr.mxu0 0.0
        %4377 = vmatpush1.msra.mxu0 0.0
        %4378 = vmatprep.subr.mxu0 0.0
        %4379 = vmatpush1.msra.mxu0 0.0
        %4380 = vmatprep.subr.mxu0 0.0
        %4381 = vmatpush1.msra.mxu0 0.0
        %4382 = vmatprep.subr.mxu0 0.0
        %4383 = vmatpush1.msra.mxu0 0.0
        %4384 = vmatprep.subr.mxu0 0.0
        %4385 = vmatpush1.msra.mxu0 0.0
        %4386 = vmatprep.subr.mxu0 0.0
        %4387 = vmatpush1.msra.mxu0 0.0
        %4388 = vmatprep.subr.mxu0 0.0
        %4389 = vmatpush1.msra.mxu0 0.0
        %4390 = vmatprep.subr.mxu0 0.0
        %4391 = vmatpush1.msra.mxu0 0.0
        %4392 = vmatprep.subr.mxu0 0.0
        %4393 = vmatpush1.msra.mxu0 0.0
        %4394 = vmatprep.subr.mxu0 0.0
        %4395 = vmatpush1.msra.mxu0 0.0
        %4396 = vmatprep.subr.mxu0 0.0
        %4397 = vmatpush1.msra.mxu0 0.0
        %4398 = vmatprep.subr.mxu0 0.0
        %4399 = vmatpush1.msra.mxu0 0.0
        %4400 = vmatprep.subr.mxu0 0.0
        %4401 = vmatpush1.msra.mxu0 0.0
        %4402 = vmatprep.subr.mxu0 0.0
        %4403 = vmatpush1.msra.mxu0 0.0
        %4404 = vmatprep.subr.mxu0 0.0
        %4405 = vmatpush1.msra.mxu0 0.0
        %4406 = vmatprep.subr.mxu0 0.0
        %4407 = vmatpush1.msra.mxu0 0.0
        %4408 = vmatprep.subr.mxu0 0.0
        %4409 = vmatpush1.msra.mxu0 0.0
        %4410 = vmatprep.subr.mxu0 0.0
        %4411 = vmatpush1.msra.mxu0 0.0
        %4412 = vmatprep.subr.mxu0 0.0
        %4413 = vmatpush1.msra.mxu0 0.0
        %4414 = vmatprep.subr.mxu0 0.0
        %4415 = vmatpush1.msra.mxu0 0.0
        %4416 = vmatprep.subr.mxu0 0.0
        %4417 = vmatpush1.msra.mxu0 0.0
        %4418 = vmatprep.mubr.f32.mxu0 0.0
        %4419 = vmatmul.mubr.f32.gmra.mrb[0].mxu0 %v4349
        %v4420 = vpop.f32.mrb[0].mxu0
        %v4421 = vadd.f32 0.0, %v4420
        %v4422 = vpop.f32.mrb[0].mxu0
        %4423 = vmatprep.mubr.f32.mxu0 0.0
        %4424 = vmatmul.mubr.f32.gmra.mrb[0].mxu0 %v4352
        %v4425 = vpop.f32.mrb[0].mxu0
        %v4426 = vadd.f32 0.0, %v4425
        %v4427 = vpop.f32.mrb[0].mxu0
        %4428 = vdwg.mxu0
        %v4429 = vadd.f32 %v4340, %v4421
        %v4430 = vadd.f32 %v4341, %v4426
        %4431 = vrot.lane.b32.xlu0 %v3976, 88
        %v4432 = vpop.permute.xlu0 %4431
        %4433 = vrot.lane.b32.xlu0 %v3977, 88
        %v4434 = vpop.permute.xlu0 %4433
        %v4438 = vsel %vm1433, %v3988, 0
        %v4441 = vsel %vm1433, %v3989, 0
        %4443 = vmatprep.subr.mxu0 0.0
        %4444 = vmatpush1.msra.mxu0 %v4432
        %4445 = vmatprep.subr.mxu0 0.0
        %4446 = vmatpush1.msra.mxu0 %v4434
        %4447 = vmatprep.subr.mxu0 0.0
        %4448 = vmatpush1.msra.mxu0 0.0
        %4449 = vmatprep.subr.mxu0 0.0
        %4450 = vmatpush1.msra.mxu0 0.0
        %4451 = vmatprep.subr.mxu0 0.0
        %4452 = vmatpush1.msra.mxu0 0.0
        %4453 = vmatprep.subr.mxu0 0.0
        %4454 = vmatpush1.msra.mxu0 0.0
        %4455 = vmatprep.subr.mxu0 0.0
        %4456 = vmatpush1.msra.mxu0 0.0
        %4457 = vmatprep.subr.mxu0 0.0
        %4458 = vmatpush1.msra.mxu0 0.0
        %4459 = vmatprep.subr.mxu0 0.0
        %4460 = vmatpush1.msra.mxu0 0.0
        %4461 = vmatprep.subr.mxu0 0.0
        %4462 = vmatpush1.msra.mxu0 0.0
        %4463 = vmatprep.subr.mxu0 0.0
        %4464 = vmatpush1.msra.mxu0 0.0
        %4465 = vmatprep.subr.mxu0 0.0
        %4466 = vmatpush1.msra.mxu0 0.0
        %4467 = vmatprep.subr.mxu0 0.0
        %4468 = vmatpush1.msra.mxu0 0.0
        %4469 = vmatprep.subr.mxu0 0.0
        %4470 = vmatpush1.msra.mxu0 0.0
        %4471 = vmatprep.subr.mxu0 0.0
        %4472 = vmatpush1.msra.mxu0 0.0
        %4473 = vmatprep.subr.mxu0 0.0
        %4474 = vmatpush1.msra.mxu0 0.0
        %4475 = vmatprep.subr.mxu0 0.0
        %4476 = vmatpush1.msra.mxu0 0.0
        %4477 = vmatprep.subr.mxu0 0.0
        %4478 = vmatpush1.msra.mxu0 0.0
        %4479 = vmatprep.subr.mxu0 0.0
        %4480 = vmatpush1.msra.mxu0 0.0
        %4481 = vmatprep.subr.mxu0 0.0
        %4482 = vmatpush1.msra.mxu0 0.0
        %4483 = vmatprep.subr.mxu0 0.0
        %4484 = vmatpush1.msra.mxu0 0.0
        %4485 = vmatprep.subr.mxu0 0.0
        %4486 = vmatpush1.msra.mxu0 0.0
        %4487 = vmatprep.subr.mxu0 0.0
        %4488 = vmatpush1.msra.mxu0 0.0
        %4489 = vmatprep.subr.mxu0 0.0
        %4490 = vmatpush1.msra.mxu0 0.0
        %4491 = vmatprep.subr.mxu0 0.0
        %4492 = vmatpush1.msra.mxu0 0.0
        %4493 = vmatprep.subr.mxu0 0.0
        %4494 = vmatpush1.msra.mxu0 0.0
        %4495 = vmatprep.subr.mxu0 0.0
        %4496 = vmatpush1.msra.mxu0 0.0
        %4497 = vmatprep.subr.mxu0 0.0
        %4498 = vmatpush1.msra.mxu0 0.0
        %4499 = vmatprep.subr.mxu0 0.0
        %4500 = vmatpush1.msra.mxu0 0.0
        %4501 = vmatprep.subr.mxu0 0.0
        %4502 = vmatpush1.msra.mxu0 0.0
        %4503 = vmatprep.subr.mxu0 0.0
        %4504 = vmatpush1.msra.mxu0 0.0
        %4505 = vmatprep.subr.mxu0 0.0
        %4506 = vmatpush1.msra.mxu0 0.0
        %4507 = vmatprep.mubr.f32.mxu0 0.0
        %4508 = vmatmul.mubr.f32.gmra.mrb[0].mxu0 %v4438
        %v4509 = vpop.f32.mrb[0].mxu0
        %v4510 = vadd.f32 0.0, %v4509
        %v4511 = vpop.f32.mrb[0].mxu0
        %4512 = vmatprep.mubr.f32.mxu0 0.0
        %4513 = vmatmul.mubr.f32.gmra.mrb[0].mxu0 %v4441
        %v4514 = vpop.f32.mrb[0].mxu0
        %v4515 = vadd.f32 0.0, %v4514
        %v4516 = vpop.f32.mrb[0].mxu0
        %4517 = vdwg.mxu0
        %v4518 = vadd.f32 %v4429, %v4510
        %v4519 = vadd.f32 %v4430, %v4515
        %4520 = vrot.lane.b32.xlu0 %v3976, 80
        %v4521 = vpop.permute.xlu0 %4520
        %4522 = vrot.lane.b32.xlu0 %v3977, 80
        %v4523 = vpop.permute.xlu0 %4522
        %v4527 = vsel %vm1433, %v3990, 0
        %v4530 = vsel %vm1433, %v3991, 0
        %4532 = vmatprep.subr.mxu0 0.0
        %4533 = vmatpush1.msra.mxu0 %v4521
        %4534 = vmatprep.subr.mxu0 0.0
        %4535 = vmatpush1.msra.mxu0 %v4523
        %4536 = vmatprep.subr.mxu0 0.0
        %4537 = vmatpush1.msra.mxu0 0.0
        %4538 = vmatprep.subr.mxu0 0.0
        %4539 = vmatpush1.msra.mxu0 0.0
        %4540 = vmatprep.subr.mxu0 0.0
        %4541 = vmatpush1.msra.mxu0 0.0
        %4542 = vmatprep.subr.mxu0 0.0
        %4543 = vmatpush1.msra.mxu0 0.0
        %4544 = vmatprep.subr.mxu0 0.0
        %4545 = vmatpush1.msra.mxu0 0.0
        %4546 = vmatprep.subr.mxu0 0.0
        %4547 = vmatpush1.msra.mxu0 0.0
        %4548 = vmatprep.subr.mxu0 0.0
        %4549 = vmatpush1.msra.mxu0 0.0
        %4550 = vmatprep.subr.mxu0 0.0
        %4551 = vmatpush1.msra.mxu0 0.0
        %4552 = vmatprep.subr.mxu0 0.0
        %4553 = vmatpush1.msra.mxu0 0.0
        %4554 = vmatprep.subr.mxu0 0.0
        %4555 = vmatpush1.msra.mxu0 0.0
        %4556 = vmatprep.subr.mxu0 0.0
        %4557 = vmatpush1.msra.mxu0 0.0
        %4558 = vmatprep.subr.mxu0 0.0
        %4559 = vmatpush1.msra.mxu0 0.0
        %4560 = vmatprep.subr.mxu0 0.0
        %4561 = vmatpush1.msra.mxu0 0.0
        %4562 = vmatprep.subr.mxu0 0.0
        %4563 = vmatpush1.msra.mxu0 0.0
        %4564 = vmatprep.subr.mxu0 0.0
        %4565 = vmatpush1.msra.mxu0 0.0
        %4566 = vmatprep.subr.mxu0 0.0
        %4567 = vmatpush1.msra.mxu0 0.0
        %4568 = vmatprep.subr.mxu0 0.0
        %4569 = vmatpush1.msra.mxu0 0.0
        %4570 = vmatprep.subr.mxu0 0.0
        %4571 = vmatpush1.msra.mxu0 0.0
        %4572 = vmatprep.subr.mxu0 0.0
        %4573 = vmatpush1.msra.mxu0 0.0
        %4574 = vmatprep.subr.mxu0 0.0
        %4575 = vmatpush1.msra.mxu0 0.0
        %4576 = vmatprep.subr.mxu0 0.0
        %4577 = vmatpush1.msra.mxu0 0.0
        %4578 = vmatprep.subr.mxu0 0.0
        %4579 = vmatpush1.msra.mxu0 0.0
        %4580 = vmatprep.subr.mxu0 0.0
        %4581 = vmatpush1.msra.mxu0 0.0
        %4582 = vmatprep.subr.mxu0 0.0
        %4583 = vmatpush1.msra.mxu0 0.0
        %4584 = vmatprep.subr.mxu0 0.0
        %4585 = vmatpush1.msra.mxu0 0.0
        %4586 = vmatprep.subr.mxu0 0.0
        %4587 = vmatpush1.msra.mxu0 0.0
        %4588 = vmatprep.subr.mxu0 0.0
        %4589 = vmatpush1.msra.mxu0 0.0
        %4590 = vmatprep.subr.mxu0 0.0
        %4591 = vmatpush1.msra.mxu0 0.0
        %4592 = vmatprep.subr.mxu0 0.0
        %4593 = vmatpush1.msra.mxu0 0.0
        %4594 = vmatprep.subr.mxu0 0.0
        %4595 = vmatpush1.msra.mxu0 0.0
        %4596 = vmatprep.mubr.f32.mxu0 0.0
        %4597 = vmatmul.mubr.f32.gmra.mrb[0].mxu0 %v4527
        %v4598 = vpop.f32.mrb[0].mxu0
        %v4599 = vadd.f32 0.0, %v4598
        %v4600 = vpop.f32.mrb[0].mxu0
        %4601 = vmatprep.mubr.f32.mxu0 0.0
        %4602 = vmatmul.mubr.f32.gmra.mrb[0].mxu0 %v4530
        %v4603 = vpop.f32.mrb[0].mxu0
        %v4604 = vadd.f32 0.0, %v4603
        %v4605 = vpop.f32.mrb[0].mxu0
        %4606 = vdwg.mxu0
        %v4607 = vadd.f32 %v4518, %v4599
        %v4608 = vadd.f32 %v4519, %v4604
        %4609 = vrot.lane.b32.xlu0 %v3976, 72
        %v4610 = vpop.permute.xlu0 %4609
        %4611 = vrot.lane.b32.xlu0 %v3977, 72
        %v4612 = vpop.permute.xlu0 %4611
        %v4616 = vsel %vm1433, %v3992, 0
        %v4619 = vsel %vm1433, %v3993, 0
        %4621 = vmatprep.subr.mxu0 0.0
        %4622 = vmatpush1.msra.mxu0 %v4610
        %4623 = vmatprep.subr.mxu0 0.0
        %4624 = vmatpush1.msra.mxu0 %v4612
        %4625 = vmatprep.subr.mxu0 0.0
        %4626 = vmatpush1.msra.mxu0 0.0
        %4627 = vmatprep.subr.mxu0 0.0
        %4628 = vmatpush1.msra.mxu0 0.0
        %4629 = vmatprep.subr.mxu0 0.0
        %4630 = vmatpush1.msra.mxu0 0.0
        %4631 = vmatprep.subr.mxu0 0.0
        %4632 = vmatpush1.msra.mxu0 0.0
        %4633 = vmatprep.subr.mxu0 0.0
        %4634 = vmatpush1.msra.mxu0 0.0
        %4635 = vmatprep.subr.mxu0 0.0
        %4636 = vmatpush1.msra.mxu0 0.0
        %4637 = vmatprep.subr.mxu0 0.0
        %4638 = vmatpush1.msra.mxu0 0.0
        %4639 = vmatprep.subr.mxu0 0.0
        %4640 = vmatpush1.msra.mxu0 0.0
        %4641 = vmatprep.subr.mxu0 0.0
        %4642 = vmatpush1.msra.mxu0 0.0
        %4643 = vmatprep.subr.mxu0 0.0
        %4644 = vmatpush1.msra.mxu0 0.0
        %4645 = vmatprep.subr.mxu0 0.0
        %4646 = vmatpush1.msra.mxu0 0.0
        %4647 = vmatprep.subr.mxu0 0.0
        %4648 = vmatpush1.msra.mxu0 0.0
        %4649 = vmatprep.subr.mxu0 0.0
        %4650 = vmatpush1.msra.mxu0 0.0
        %4651 = vmatprep.subr.mxu0 0.0
        %4652 = vmatpush1.msra.mxu0 0.0
        %4653 = vmatprep.subr.mxu0 0.0
        %4654 = vmatpush1.msra.mxu0 0.0
        %4655 = vmatprep.subr.mxu0 0.0
        %4656 = vmatpush1.msra.mxu0 0.0
        %4657 = vmatprep.subr.mxu0 0.0
        %4658 = vmatpush1.msra.mxu0 0.0
        %4659 = vmatprep.subr.mxu0 0.0
        %4660 = vmatpush1.msra.mxu0 0.0
        %4661 = vmatprep.subr.mxu0 0.0
        %4662 = vmatpush1.msra.mxu0 0.0
        %4663 = vmatprep.subr.mxu0 0.0
        %4664 = vmatpush1.msra.mxu0 0.0
        %4665 = vmatprep.subr.mxu0 0.0
        %4666 = vmatpush1.msra.mxu0 0.0
        %4667 = vmatprep.subr.mxu0 0.0
        %4668 = vmatpush1.msra.mxu0 0.0
        %4669 = vmatprep.subr.mxu0 0.0
        %4670 = vmatpush1.msra.mxu0 0.0
        %4671 = vmatprep.subr.mxu0 0.0
        %4672 = vmatpush1.msra.mxu0 0.0
        %4673 = vmatprep.subr.mxu0 0.0
        %4674 = vmatpush1.msra.mxu0 0.0
        %4675 = vmatprep.subr.mxu0 0.0
        %4676 = vmatpush1.msra.mxu0 0.0
        %4677 = vmatprep.subr.mxu0 0.0
        %4678 = vmatpush1.msra.mxu0 0.0
        %4679 = vmatprep.subr.mxu0 0.0
        %4680 = vmatpush1.msra.mxu0 0.0
        %4681 = vmatprep.subr.mxu0 0.0
        %4682 = vmatpush1.msra.mxu0 0.0
        %4683 = vmatprep.subr.mxu0 0.0
        %4684 = vmatpush1.msra.mxu0 0.0
        %4685 = vmatprep.mubr.f32.mxu0 0.0
        %4686 = vmatmul.mubr.f32.gmra.mrb[0].mxu0 %v4616
        %v4687 = vpop.f32.mrb[0].mxu0
        %v4688 = vadd.f32 0.0, %v4687
        %v4689 = vpop.f32.mrb[0].mxu0
        %4690 = vmatprep.mubr.f32.mxu0 0.0
        %4691 = vmatmul.mubr.f32.gmra.mrb[0].mxu0 %v4619
        %v4692 = vpop.f32.mrb[0].mxu0
        %v4693 = vadd.f32 0.0, %v4692
        %v4694 = vpop.f32.mrb[0].mxu0
        %4695 = vdwg.mxu0
        %v4696 = vadd.f32 %v4607, %v4688
        %v4697 = vadd.f32 %v4608, %v4693
        %v4698 = vld [vmem:[#allocation22] sm:$0xff]
        %v4699 = vld [vmem:[#allocation23] sm:$0xff]
        %v4700 = vld [vmem:[#allocation23 + $0x8] sm:$0xff]
        %v4702 = vsel %vm2133, %v4696, 0
        %v4705 = vsel %vm2133, %v4697, 0
        %4707 = vmatprep.subr.mxu0 0.0
        %4708 = vmatpush1.msra.mxu0 %v4698
        %4709 = vmatprep.subr.mxu0 0.0
        %4710 = vmatpush1.msra.mxu0 0.0
        %4711 = vmatprep.subr.mxu0 0.0
        %4712 = vmatpush1.msra.mxu0 0.0
        %4713 = vmatprep.subr.mxu0 0.0
        %4714 = vmatpush1.msra.mxu0 0.0
        %4715 = vmatprep.subr.mxu0 0.0
        %4716 = vmatpush1.msra.mxu0 0.0
        %4717 = vmatprep.subr.mxu0 0.0
        %4718 = vmatpush1.msra.mxu0 0.0
        %4719 = vmatprep.subr.mxu0 0.0
        %4720 = vmatpush1.msra.mxu0 0.0
        %4721 = vmatprep.subr.mxu0 0.0
        %4722 = vmatpush1.msra.mxu0 0.0
        %4723 = vmatprep.subr.mxu0 0.0
        %4724 = vmatpush1.msra.mxu0 0.0
        %4725 = vmatprep.subr.mxu0 0.0
        %4726 = vmatpush1.msra.mxu0 0.0
        %4727 = vmatprep.subr.mxu0 0.0
        %4728 = vmatpush1.msra.mxu0 0.0
        %4729 = vmatprep.subr.mxu0 0.0
        %4730 = vmatpush1.msra.mxu0 0.0
        %4731 = vmatprep.subr.mxu0 0.0
        %4732 = vmatpush1.msra.mxu0 0.0
        %4733 = vmatprep.subr.mxu0 0.0
        %4734 = vmatpush1.msra.mxu0 0.0
        %4735 = vmatprep.subr.mxu0 0.0
        %4736 = vmatpush1.msra.mxu0 0.0
        %4737 = vmatprep.subr.mxu0 0.0
        %4738 = vmatpush1.msra.mxu0 0.0
        %4739 = vmatprep.subr.mxu0 0.0
        %4740 = vmatpush1.msra.mxu0 0.0
        %4741 = vmatprep.subr.mxu0 0.0
        %4742 = vmatpush1.msra.mxu0 0.0
        %4743 = vmatprep.subr.mxu0 0.0
        %4744 = vmatpush1.msra.mxu0 0.0
        %4745 = vmatprep.subr.mxu0 0.0
        %4746 = vmatpush1.msra.mxu0 0.0
        %4747 = vmatprep.subr.mxu0 0.0
        %4748 = vmatpush1.msra.mxu0 0.0
        %4749 = vmatprep.subr.mxu0 0.0
        %4750 = vmatpush1.msra.mxu0 0.0
        %4751 = vmatprep.subr.mxu0 0.0
        %4752 = vmatpush1.msra.mxu0 0.0
        %4753 = vmatprep.subr.mxu0 0.0
        %4754 = vmatpush1.msra.mxu0 0.0
        %4755 = vmatprep.subr.mxu0 0.0
        %4756 = vmatpush1.msra.mxu0 0.0
        %4757 = vmatprep.subr.mxu0 0.0
        %4758 = vmatpush1.msra.mxu0 0.0
        %4759 = vmatprep.subr.mxu0 0.0
        %4760 = vmatpush1.msra.mxu0 0.0
        %4761 = vmatprep.subr.mxu0 0.0
        %4762 = vmatpush1.msra.mxu0 0.0
        %4763 = vmatprep.subr.mxu0 0.0
        %4764 = vmatpush1.msra.mxu0 0.0
        %4765 = vmatprep.subr.mxu0 0.0
        %4766 = vmatpush1.msra.mxu0 0.0
        %4767 = vmatprep.subr.mxu0 0.0
        %4768 = vmatpush1.msra.mxu0 0.0
        %4769 = vmatprep.subr.mxu0 0.0
        %4770 = vmatpush1.msra.mxu0 0.0
        %4771 = vmatprep.mubr.f32.mxu0 0.0
        %4772 = vmatmul.mubr.f32.gmra.mrb[0].mxu0 %v4702
        %v4773 = vpop.f32.mrb[0].mxu0
        %v4774 = vadd.f32 %v4699, %v4773
        %v4775 = vpop.f32.mrb[0].mxu0
        %4776 = vmatprep.mubr.f32.mxu0 0.0
        %4777 = vmatmul.mubr.f32.gmra.mrb[0].mxu0 %v4705
        %v4778 = vpop.f32.mrb[0].mxu0
        %v4779 = vadd.f32 %v4700, %v4778
        %v4780 = vpop.f32.mrb[0].mxu0
        %4781 = vdwg.mxu0
        %v4782 = vadd.f32 %v2260, %v4774
        %v4783 = vadd.f32 %v2261, %v4779
        %v4784 = vld [vmem:[#allocation25] sm:$0x1]
        %v4785 = vld [vmem:[#allocation26] sm:$0x1]
        %v4786 = vsel %vm1309, %v4782, 0.0
        %4787 = vadd.xlane.f32.xlu0 %v4786
        %v4788 = vpop.xlane.xlu0 %4787
        %v4789 = vsel %vm1309, %v4783, 0.0
        %4790 = vadd.xlane.f32.xlu0 %v4789
        %v4791 = vpop.xlane.xlu0 %4790
        %v4792 = vmul.f32 %v4788, %v2225
        %v4793 = vmul.f32 %v4791, %v2225
        %v4794 = vsub.f32 %v4782, %v4792
        %v4795 = vsub.f32 %v4783, %v4793
        %v4796 = vmul.f32 %v4794, %v4794
        %v4797 = vmul.f32 %v4795, %v4795
        %v4798 = vsel %vm1309, %v4796, 0.0
        %4799 = vadd.xlane.f32.xlu0 %v4798
        %v4800 = vpop.xlane.xlu0 %4799
        %v4801 = vsel %vm1309, %v4797, 0.0
        %4802 = vadd.xlane.f32.xlu0 %v4801
        %v4803 = vpop.xlane.xlu0 %4802
        %v4804 = vmul.f32 %v4800, %v2225
        %v4805 = vmul.f32 %v4803, %v2225
        %v4806 = vadd.f32 %v4804, 1e-05
        %v4807 = vadd.f32 %v4805, 1e-05
        %v4808 = vrsqrt.pop %v4806
        %v4809 = vrsqrt.pop %v4807
        %v4810 = vmul.f32 %v4794, %v4808
        %v4811 = vmul.f32 %v4795, %v4809
        %v4813 = vlaneseq
        %v4814 = vshrl.u32 %v4813, 7
        %v4815 = vsub.s32 0, %v4814
        %v4816 = vrot.slane %v4784, %v4815
        %v4818 = vmul.f32 %v4810, %v4816
        %v4819 = vmul.f32 %v4811, %v4816
        %v4821 = vlaneseq
        %v4822 = vshrl.u32 %v4821, 7
        %v4823 = vsub.s32 0, %v4822
        %v4824 = vrot.slane %v4785, %v4823
        %v4826 = vadd.f32 %v4818, %v4824
        %v4827 = vadd.f32 %v4819, %v4824
        %v4828 = vld [vmem:[%s63] sm:$0xff]
        %v4829 = vld [vmem:[%s63 + $0x8] sm:$0xff]
        %v4831 = vsel %vm1309, %v4826, 0
        %v4834 = vsel %vm1309, %v4827, 0
        %4836 = vmatprep.subr.mxu0 0.0
        %4837 = vmatpush1.msra.mxu0 %v2264
        %4838 = vmatprep.subr.mxu0 0.0
        %4839 = vmatpush1.msra.mxu0 %v2265
        %4840 = vmatprep.subr.mxu0 0.0
        %4841 = vmatpush1.msra.mxu0 %v2266
        %4842 = vmatprep.subr.mxu0 0.0
        %4843 = vmatpush1.msra.mxu0 %v2267
        %4844 = vmatprep.subr.mxu0 0.0
        %4845 = vmatpush1.msra.mxu0 0.0
        %4846 = vmatprep.subr.mxu0 0.0
        %4847 = vmatpush1.msra.mxu0 0.0
        %4848 = vmatprep.subr.mxu0 0.0
        %4849 = vmatpush1.msra.mxu0 0.0
        %4850 = vmatprep.subr.mxu0 0.0
        %4851 = vmatpush1.msra.mxu0 0.0
        %4852 = vmatprep.subr.mxu0 0.0
        %4853 = vmatpush1.msra.mxu0 0.0
        %4854 = vmatprep.subr.mxu0 0.0
        %4855 = vmatpush1.msra.mxu0 0.0
        %4856 = vmatprep.subr.mxu0 0.0
        %4857 = vmatpush1.msra.mxu0 0.0
        %4858 = vmatprep.subr.mxu0 0.0
        %4859 = vmatpush1.msra.mxu0 0.0
        %4860 = vmatprep.subr.mxu0 0.0
        %4861 = vmatpush1.msra.mxu0 0.0
        %4862 = vmatprep.subr.mxu0 0.0
        %4863 = vmatpush1.msra.mxu0 0.0
        %4864 = vmatprep.subr.mxu0 0.0
        %4865 = vmatpush1.msra.mxu0 0.0
        %4866 = vmatprep.subr.mxu0 0.0
        %4867 = vmatpush1.msra.mxu0 0.0
        %4868 = vmatprep.subr.mxu0 0.0
        %4869 = vmatpush1.msra.mxu0 0.0
        %4870 = vmatprep.subr.mxu0 0.0
        %4871 = vmatpush1.msra.mxu0 0.0
        %4872 = vmatprep.subr.mxu0 0.0
        %4873 = vmatpush1.msra.mxu0 0.0
        %4874 = vmatprep.subr.mxu0 0.0
        %4875 = vmatpush1.msra.mxu0 0.0
        %4876 = vmatprep.subr.mxu0 0.0
        %4877 = vmatpush1.msra.mxu0 0.0
        %4878 = vmatprep.subr.mxu0 0.0
        %4879 = vmatpush1.msra.mxu0 0.0
        %4880 = vmatprep.subr.mxu0 0.0
        %4881 = vmatpush1.msra.mxu0 0.0
        %4882 = vmatprep.subr.mxu0 0.0
        %4883 = vmatpush1.msra.mxu0 0.0
        %4884 = vmatprep.subr.mxu0 0.0
        %4885 = vmatpush1.msra.mxu0 0.0
        %4886 = vmatprep.subr.mxu0 0.0
        %4887 = vmatpush1.msra.mxu0 0.0
        %4888 = vmatprep.subr.mxu0 0.0
        %4889 = vmatpush1.msra.mxu0 0.0
        %4890 = vmatprep.subr.mxu0 0.0
        %4891 = vmatpush1.msra.mxu0 0.0
        %4892 = vmatprep.subr.mxu0 0.0
        %4893 = vmatpush1.msra.mxu0 0.0
        %4894 = vmatprep.subr.mxu0 0.0
        %4895 = vmatpush1.msra.mxu0 0.0
        %4896 = vmatprep.subr.mxu0 0.0
        %4897 = vmatpush1.msra.mxu0 0.0
        %4898 = vmatprep.subr.mxu0 0.0
        %4899 = vmatpush1.msra.mxu0 0.0
        %4900 = vmatprep.mubr.f32.mxu0 0.0
        %4901 = vmatmul.mubr.f32.gmra.mrb[0].mxu0 %v4831
        %v4902 = vpop.f32.mrb[0].mxu0
        %v4903 = vadd.f32 %v2273, %v4902
        %v4904 = vpop.f32.mrb[0].mxu0
        %4905 = vmatprep.mubr.f32.mxu0 0.0
        %4906 = vmatmul.mubr.f32.gmra.mrb[0].mxu0 %v4834
        %v4907 = vpop.f32.mrb[0].mxu0
        %v4908 = vadd.f32 %v2273, %v4907
        %v4909 = vpop.f32.mrb[0].mxu0
        %4910 = vdwg.mxu0
        %4913 = vrot.lane.b32.xlu0 %v4903, 96
        %v4914 = vpop.permute.xlu0 %4913
        %4915 = vrot.lane.b32.xlu0 %v4908, 96
        %v4916 = vpop.permute.xlu0 %4915
        %v4917 = vsel %vm2133, %v4903, 0
        %v4919 = vsel %vm2133, %v4908, 0
        %v4921 = vsel %vm2133, %v4914, 0
        %v4923 = vsel %vm2133, %v4916, 0
        %4925 = vmatprep.subr.mxu0 0.0
        %4926 = vmatpush1.xpose.msra.mxu0 %v4921
        %4927 = vmatprep.subr.mxu0 0.0
        %4928 = vmatpush1.xpose.msra.mxu0 %v4923
        %4929 = vmatprep.subr.mxu0 0.0
        %4930 = vmatpush1.xpose.msra.mxu0 0.0
        %4931 = vmatprep.subr.mxu0 0.0
        %4932 = vmatpush1.xpose.msra.mxu0 0.0
        %4933 = vmatprep.subr.mxu0 0.0
        %4934 = vmatpush1.xpose.msra.mxu0 0.0
        %4935 = vmatprep.subr.mxu0 0.0
        %4936 = vmatpush1.xpose.msra.mxu0 0.0
        %4937 = vmatprep.subr.mxu0 0.0
        %4938 = vmatpush1.xpose.msra.mxu0 0.0
        %4939 = vmatprep.subr.mxu0 0.0
        %4940 = vmatpush1.xpose.msra.mxu0 0.0
        %4941 = vmatprep.subr.mxu0 0.0
        %4942 = vmatpush1.xpose.msra.mxu0 0.0
        %4943 = vmatprep.subr.mxu0 0.0
        %4944 = vmatpush1.xpose.msra.mxu0 0.0
        %4945 = vmatprep.subr.mxu0 0.0
        %4946 = vmatpush1.xpose.msra.mxu0 0.0
        %4947 = vmatprep.subr.mxu0 0.0
        %4948 = vmatpush1.xpose.msra.mxu0 0.0
        %4949 = vmatprep.subr.mxu0 0.0
        %4950 = vmatpush1.xpose.msra.mxu0 0.0
        %4951 = vmatprep.subr.mxu0 0.0
        %4952 = vmatpush1.xpose.msra.mxu0 0.0
        %4953 = vmatprep.subr.mxu0 0.0
        %4954 = vmatpush1.xpose.msra.mxu0 0.0
        %4955 = vmatprep.subr.mxu0 0.0
        %4956 = vmatpush1.xpose.msra.mxu0 0.0
        %4957 = vmatprep.subr.mxu0 0.0
        %4958 = vmatpush1.xpose.msra.mxu0 0.0
        %4959 = vmatprep.subr.mxu0 0.0
        %4960 = vmatpush1.xpose.msra.mxu0 0.0
        %4961 = vmatprep.subr.mxu0 0.0
        %4962 = vmatpush1.xpose.msra.mxu0 0.0
        %4963 = vmatprep.subr.mxu0 0.0
        %4964 = vmatpush1.xpose.msra.mxu0 0.0
        %4965 = vmatprep.subr.mxu0 0.0
        %4966 = vmatpush1.xpose.msra.mxu0 0.0
        %4967 = vmatprep.subr.mxu0 0.0
        %4968 = vmatpush1.xpose.msra.mxu0 0.0
        %4969 = vmatprep.subr.mxu0 0.0
        %4970 = vmatpush1.xpose.msra.mxu0 0.0
        %4971 = vmatprep.subr.mxu0 0.0
        %4972 = vmatpush1.xpose.msra.mxu0 0.0
        %4973 = vmatprep.subr.mxu0 0.0
        %4974 = vmatpush1.xpose.msra.mxu0 0.0
        %4975 = vmatprep.subr.mxu0 0.0
        %4976 = vmatpush1.xpose.msra.mxu0 0.0
        %4977 = vmatprep.subr.mxu0 0.0
        %4978 = vmatpush1.xpose.msra.mxu0 0.0
        %4979 = vmatprep.subr.mxu0 0.0
        %4980 = vmatpush1.xpose.msra.mxu0 0.0
        %4981 = vmatprep.subr.mxu0 0.0
        %4982 = vmatpush1.xpose.msra.mxu0 0.0
        %4983 = vmatprep.subr.mxu0 0.0
        %4984 = vmatpush1.xpose.msra.mxu0 0.0
        %4985 = vmatprep.subr.mxu0 0.0
        %4986 = vmatpush1.xpose.msra.mxu0 0.0
        %4987 = vmatprep.subr.mxu0 0.0
        %4988 = vmatpush1.xpose.msra.mxu0 0.0
        %4989 = vmatprep.mubr.f32.mxu0 0.0
        %4990 = vmatmul.mubr.f32.gmra.mrb[0].mxu0 %v4917
        %v4991 = vpop.f32.mrb[0].mxu0
        %v4992 = vadd.f32 0.0, %v4991
        %v4993 = vpop.f32.mrb[0].mxu0
        %4994 = vmatprep.mubr.f32.mxu0 0.0
        %4995 = vmatmul.mubr.f32.gmra.mrb[0].mxu0 %v4919
        %v4996 = vpop.f32.mrb[0].mxu0
        %v4997 = vadd.f32 0.0, %v4996
        %v4998 = vpop.f32.mrb[0].mxu0
        %4999 = vdwg.mxu0
        %v5000 = vmul.f32 %v4992, 0.35355338
        %v5001 = vmul.f32 %v4997, 0.35355338
        %v5002 = vadd.f32 %v5000, %v4828
        %v5003 = vadd.f32 %v5001, %v4829
        %v5004 = vsel %vm1433, %v5002, -inf
        %5005 = vmax.xlane.f32.xlu0 %v5004
        %v5006 = vpop.xlane.xlu0 %5005
        %v5007 = vsel %vm1433, %v5003, -inf
        %5008 = vmax.xlane.f32.xlu0 %v5007
        %v5009 = vpop.xlane.xlu0 %5008
        %v5010 = vsub.f32 %v5002, %v5006
        %v5011 = vsub.f32 %v5003, %v5009
        %v5012 = vmul.f32 %v5010, 1.442695
        %v5013 = vpow.pop %v5012
        %v5014 = vmul.f32 %v5011, 1.442695
        %v5015 = vpow.pop %v5014
        %v5016 = vsel %vm1433, %v5013, 0.0
        %5017 = vadd.xlane.f32.xlu0 %v5016
        %v5018 = vpop.xlane.xlu0 %5017
        %v5019 = vsel %vm1433, %v5015, 0.0
        %5020 = vadd.xlane.f32.xlu0 %v5019
        %v5021 = vpop.xlane.xlu0 %5020
        %v5022 = vrcp.pop %v5018
        %v5023 = vmul.f32 %v5013, %v5022
        %v5024 = vrcp.pop %v5021
        %v5025 = vmul.f32 %v5015, %v5024
        %5026 = vrot.lane.b32.xlu0 %v4903, 64
        %v5027 = vpop.permute.xlu0 %5026
        %5028 = vrot.lane.b32.xlu0 %v4908, 64
        %v5029 = vpop.permute.xlu0 %5028
        %v5033 = vsel %vm1433, %v5023, 0
        %v5036 = vsel %vm1433, %v5025, 0
        %5038 = vmatprep.subr.mxu0 0.0
        %5039 = vmatpush1.msra.mxu0 %v5027
        %5040 = vmatprep.subr.mxu0 0.0
        %5041 = vmatpush1.msra.mxu0 %v5029
        %5042 = vmatprep.subr.mxu0 0.0
        %5043 = vmatpush1.msra.mxu0 0.0
        %5044 = vmatprep.subr.mxu0 0.0
        %5045 = vmatpush1.msra.mxu0 0.0
        %5046 = vmatprep.subr.mxu0 0.0
        %5047 = vmatpush1.msra.mxu0 0.0
        %5048 = vmatprep.subr.mxu0 0.0
        %5049 = vmatpush1.msra.mxu0 0.0
        %5050 = vmatprep.subr.mxu0 0.0
        %5051 = vmatpush1.msra.mxu0 0.0
        %5052 = vmatprep.subr.mxu0 0.0
        %5053 = vmatpush1.msra.mxu0 0.0
        %5054 = vmatprep.subr.mxu0 0.0
        %5055 = vmatpush1.msra.mxu0 0.0
        %5056 = vmatprep.subr.mxu0 0.0
        %5057 = vmatpush1.msra.mxu0 0.0
        %5058 = vmatprep.subr.mxu0 0.0
        %5059 = vmatpush1.msra.mxu0 0.0
        %5060 = vmatprep.subr.mxu0 0.0
        %5061 = vmatpush1.msra.mxu0 0.0
        %5062 = vmatprep.subr.mxu0 0.0
        %5063 = vmatpush1.msra.mxu0 0.0
        %5064 = vmatprep.subr.mxu0 0.0
        %5065 = vmatpush1.msra.mxu0 0.0
        %5066 = vmatprep.subr.mxu0 0.0
        %5067 = vmatpush1.msra.mxu0 0.0
        %5068 = vmatprep.subr.mxu0 0.0
        %5069 = vmatpush1.msra.mxu0 0.0
        %5070 = vmatprep.subr.mxu0 0.0
        %5071 = vmatpush1.msra.mxu0 0.0
        %5072 = vmatprep.subr.mxu0 0.0
        %5073 = vmatpush1.msra.mxu0 0.0
        %5074 = vmatprep.subr.mxu0 0.0
        %5075 = vmatpush1.msra.mxu0 0.0
        %5076 = vmatprep.subr.mxu0 0.0
        %5077 = vmatpush1.msra.mxu0 0.0
        %5078 = vmatprep.subr.mxu0 0.0
        %5079 = vmatpush1.msra.mxu0 0.0
        %5080 = vmatprep.subr.mxu0 0.0
        %5081 = vmatpush1.msra.mxu0 0.0
        %5082 = vmatprep.subr.mxu0 0.0
        %5083 = vmatpush1.msra.mxu0 0.0
        %5084 = vmatprep.subr.mxu0 0.0
        %5085 = vmatpush1.msra.mxu0 0.0
        %5086 = vmatprep.subr.mxu0 0.0
        %5087 = vmatpush1.msra.mxu0 0.0
        %5088 = vmatprep.subr.mxu0 0.0
        %5089 = vmatpush1.msra.mxu0 0.0
        %5090 = vmatprep.subr.mxu0 0.0
        %5091 = vmatpush1.msra.mxu0 0.0
        %5092 = vmatprep.subr.mxu0 0.0
        %5093 = vmatpush1.msra.mxu0 0.0
        %5094 = vmatprep.subr.mxu0 0.0
        %5095 = vmatpush1.msra.mxu0 0.0
        %5096 = vmatprep.subr.mxu0 0.0
        %5097 = vmatpush1.msra.mxu0 0.0
        %5098 = vmatprep.subr.mxu0 0.0
        %5099 = vmatpush1.msra.mxu0 0.0
        %5100 = vmatprep.subr.mxu0 0.0
        %5101 = vmatpush1.msra.mxu0 0.0
        %5102 = vmatprep.mubr.f32.mxu0 0.0
        %5103 = vmatmul.mubr.f32.gmra.mrb[0].mxu0 %v5033
        %v5104 = vpop.f32.mrb[0].mxu0
        %v5105 = vadd.f32 0.0, %v5104
        %v5106 = vpop.f32.mrb[0].mxu0
        %5107 = vmatprep.mubr.f32.mxu0 0.0
        %5108 = vmatmul.mubr.f32.gmra.mrb[0].mxu0 %v5036
        %v5109 = vpop.f32.mrb[0].mxu0
        %v5110 = vadd.f32 0.0, %v5109
        %v5111 = vpop.f32.mrb[0].mxu0
        %5112 = vdwg.mxu0
        %5113 = vrot.lane.b32.xlu0 %v4903, 120
        %v5114 = vpop.permute.xlu0 %5113
        %5115 = vrot.lane.b32.xlu0 %v4908, 120
        %v5116 = vpop.permute.xlu0 %5115
        %5117 = vrot.lane.b32.xlu0 %v4903, 88
        %v5118 = vpop.permute.xlu0 %5117
        %5119 = vrot.lane.b32.xlu0 %v4908, 88
        %v5120 = vpop.permute.xlu0 %5119
        %v5121 = vsel %vm2133, %v5114, 0
        %v5123 = vsel %vm2133, %v5116, 0
        %v5125 = vsel %vm2133, %v5118, 0
        %v5127 = vsel %vm2133, %v5120, 0
        %5129 = vmatprep.subr.mxu0 0.0
        %5130 = vmatpush1.xpose.msra.mxu0 %v5125
        %5131 = vmatprep.subr.mxu0 0.0
        %5132 = vmatpush1.xpose.msra.mxu0 %v5127
        %5133 = vmatprep.subr.mxu0 0.0
        %5134 = vmatpush1.xpose.msra.mxu0 0.0
        %5135 = vmatprep.subr.mxu0 0.0
        %5136 = vmatpush1.xpose.msra.mxu0 0.0
        %5137 = vmatprep.subr.mxu0 0.0
        %5138 = vmatpush1.xpose.msra.mxu0 0.0
        %5139 = vmatprep.subr.mxu0 0.0
        %5140 = vmatpush1.xpose.msra.mxu0 0.0
        %5141 = vmatprep.subr.mxu0 0.0
        %5142 = vmatpush1.xpose.msra.mxu0 0.0
        %5143 = vmatprep.subr.mxu0 0.0
        %5144 = vmatpush1.xpose.msra.mxu0 0.0
        %5145 = vmatprep.subr.mxu0 0.0
        %5146 = vmatpush1.xpose.msra.mxu0 0.0
        %5147 = vmatprep.subr.mxu0 0.0
        %5148 = vmatpush1.xpose.msra.mxu0 0.0
        %5149 = vmatprep.subr.mxu0 0.0
        %5150 = vmatpush1.xpose.msra.mxu0 0.0
        %5151 = vmatprep.subr.mxu0 0.0
        %5152 = vmatpush1.xpose.msra.mxu0 0.0
        %5153 = vmatprep.subr.mxu0 0.0
        %5154 = vmatpush1.xpose.msra.mxu0 0.0
        %5155 = vmatprep.subr.mxu0 0.0
        %5156 = vmatpush1.xpose.msra.mxu0 0.0
        %5157 = vmatprep.subr.mxu0 0.0
        %5158 = vmatpush1.xpose.msra.mxu0 0.0
        %5159 = vmatprep.subr.mxu0 0.0
        %5160 = vmatpush1.xpose.msra.mxu0 0.0
        %5161 = vmatprep.subr.mxu0 0.0
        %5162 = vmatpush1.xpose.msra.mxu0 0.0
        %5163 = vmatprep.subr.mxu0 0.0
        %5164 = vmatpush1.xpose.msra.mxu0 0.0
        %5165 = vmatprep.subr.mxu0 0.0
        %5166 = vmatpush1.xpose.msra.mxu0 0.0
        %5167 = vmatprep.subr.mxu0 0.0
        %5168 = vmatpush1.xpose.msra.mxu0 0.0
        %5169 = vmatprep.subr.mxu0 0.0
        %5170 = vmatpush1.xpose.msra.mxu0 0.0
        %5171 = vmatprep.subr.mxu0 0.0
        %5172 = vmatpush1.xpose.msra.mxu0 0.0
        %5173 = vmatprep.subr.mxu0 0.0
        %5174 = vmatpush1.xpose.msra.mxu0 0.0
        %5175 = vmatprep.subr.mxu0 0.0
        %5176 = vmatpush1.xpose.msra.mxu0 0.0
        %5177 = vmatprep.subr.mxu0 0.0
        %5178 = vmatpush1.xpose.msra.mxu0 0.0
        %5179 = vmatprep.subr.mxu0 0.0
        %5180 = vmatpush1.xpose.msra.mxu0 0.0
        %5181 = vmatprep.subr.mxu0 0.0
        %5182 = vmatpush1.xpose.msra.mxu0 0.0
        %5183 = vmatprep.subr.mxu0 0.0
        %5184 = vmatpush1.xpose.msra.mxu0 0.0
        %5185 = vmatprep.subr.mxu0 0.0
        %5186 = vmatpush1.xpose.msra.mxu0 0.0
        %5187 = vmatprep.subr.mxu0 0.0
        %5188 = vmatpush1.xpose.msra.mxu0 0.0
        %5189 = vmatprep.subr.mxu0 0.0
        %5190 = vmatpush1.xpose.msra.mxu0 0.0
        %5191 = vmatprep.subr.mxu0 0.0
        %5192 = vmatpush1.xpose.msra.mxu0 0.0
        %5193 = vmatprep.mubr.f32.mxu0 0.0
        %5194 = vmatmul.mubr.f32.gmra.mrb[0].mxu0 %v5121
        %v5195 = vpop.f32.mrb[0].mxu0
        %v5196 = vadd.f32 0.0, %v5195
        %v5197 = vpop.f32.mrb[0].mxu0
        %5198 = vmatprep.mubr.f32.mxu0 0.0
        %5199 = vmatmul.mubr.f32.gmra.mrb[0].mxu0 %v5123
        %v5200 = vpop.f32.mrb[0].mxu0
        %v5201 = vadd.f32 0.0, %v5200
        %v5202 = vpop.f32.mrb[0].mxu0
        %5203 = vdwg.mxu0
        %v5204 = vmul.f32 %v5196, 0.35355338
        %v5205 = vmul.f32 %v5201, 0.35355338
        %v5206 = vadd.f32 %v5204, %v4828
        %v5207 = vadd.f32 %v5205, %v4829
        %v5208 = vsel %vm1433, %v5206, -inf
        %5209 = vmax.xlane.f32.xlu0 %v5208
        %v5210 = vpop.xlane.xlu0 %5209
        %v5211 = vsel %vm1433, %v5207, -inf
        %5212 = vmax.xlane.f32.xlu0 %v5211
        %v5213 = vpop.xlane.xlu0 %5212
        %v5214 = vsub.f32 %v5206, %v5210
        %v5215 = vsub.f32 %v5207, %v5213
        %v5216 = vmul.f32 %v5214, 1.442695
        %v5217 = vpow.pop %v5216
        %v5218 = vmul.f32 %v5215, 1.442695
        %v5219 = vpow.pop %v5218
        %v5220 = vsel %vm1433, %v5217, 0.0
        %5221 = vadd.xlane.f32.xlu0 %v5220
        %v5222 = vpop.xlane.xlu0 %5221
        %v5223 = vsel %vm1433, %v5219, 0.0
        %5224 = vadd.xlane.f32.xlu0 %v5223
        %v5225 = vpop.xlane.xlu0 %5224
        %v5226 = vrcp.pop %v5222
        %v5227 = vmul.f32 %v5217, %v5226
        %v5228 = vrcp.pop %v5225
        %v5229 = vmul.f32 %v5219, %v5228
        %5230 = vrot.lane.b32.xlu0 %v4903, 56
        %v5231 = vpop.permute.xlu0 %5230
        %5232 = vrot.lane.b32.xlu0 %v4908, 56
        %v5233 = vpop.permute.xlu0 %5232
        %v5237 = vsel %vm1433, %v5227, 0
        %v5240 = vsel %vm1433, %v5229, 0
        %5242 = vmatprep.subr.mxu0 0.0
        %5243 = vmatpush1.msra.mxu0 %v5231
        %5244 = vmatprep.subr.mxu0 0.0
        %5245 = vmatpush1.msra.mxu0 %v5233
        %5246 = vmatprep.subr.mxu0 0.0
        %5247 = vmatpush1.msra.mxu0 0.0
        %5248 = vmatprep.subr.mxu0 0.0
        %5249 = vmatpush1.msra.mxu0 0.0
        %5250 = vmatprep.subr.mxu0 0.0
        %5251 = vmatpush1.msra.mxu0 0.0
        %5252 = vmatprep.subr.mxu0 0.0
        %5253 = vmatpush1.msra.mxu0 0.0
        %5254 = vmatprep.subr.mxu0 0.0
        %5255 = vmatpush1.msra.mxu0 0.0
        %5256 = vmatprep.subr.mxu0 0.0
        %5257 = vmatpush1.msra.mxu0 0.0
        %5258 = vmatprep.subr.mxu0 0.0
        %5259 = vmatpush1.msra.mxu0 0.0
        %5260 = vmatprep.subr.mxu0 0.0
        %5261 = vmatpush1.msra.mxu0 0.0
        %5262 = vmatprep.subr.mxu0 0.0
        %5263 = vmatpush1.msra.mxu0 0.0
        %5264 = vmatprep.subr.mxu0 0.0
        %5265 = vmatpush1.msra.mxu0 0.0
        %5266 = vmatprep.subr.mxu0 0.0
        %5267 = vmatpush1.msra.mxu0 0.0
        %5268 = vmatprep.subr.mxu0 0.0
        %5269 = vmatpush1.msra.mxu0 0.0
        %5270 = vmatprep.subr.mxu0 0.0
        %5271 = vmatpush1.msra.mxu0 0.0
        %5272 = vmatprep.subr.mxu0 0.0
        %5273 = vmatpush1.msra.mxu0 0.0
        %5274 = vmatprep.subr.mxu0 0.0
        %5275 = vmatpush1.msra.mxu0 0.0
        %5276 = vmatprep.subr.mxu0 0.0
        %5277 = vmatpush1.msra.mxu0 0.0
        %5278 = vmatprep.subr.mxu0 0.0
        %5279 = vmatpush1.msra.mxu0 0.0
        %5280 = vmatprep.subr.mxu0 0.0
        %5281 = vmatpush1.msra.mxu0 0.0
        %5282 = vmatprep.subr.mxu0 0.0
        %5283 = vmatpush1.msra.mxu0 0.0
        %5284 = vmatprep.subr.mxu0 0.0
        %5285 = vmatpush1.msra.mxu0 0.0
        %5286 = vmatprep.subr.mxu0 0.0
        %5287 = vmatpush1.msra.mxu0 0.0
        %5288 = vmatprep.subr.mxu0 0.0
        %5289 = vmatpush1.msra.mxu0 0.0
        %5290 = vmatprep.subr.mxu0 0.0
        %5291 = vmatpush1.msra.mxu0 0.0
        %5292 = vmatprep.subr.mxu0 0.0
        %5293 = vmatpush1.msra.mxu0 0.0
        %5294 = vmatprep.subr.mxu0 0.0
        %5295 = vmatpush1.msra.mxu0 0.0
        %5296 = vmatprep.subr.mxu0 0.0
        %5297 = vmatpush1.msra.mxu0 0.0
        %5298 = vmatprep.subr.mxu0 0.0
        %5299 = vmatpush1.msra.mxu0 0.0
        %5300 = vmatprep.subr.mxu0 0.0
        %5301 = vmatpush1.msra.mxu0 0.0
        %5302 = vmatprep.subr.mxu0 0.0
        %5303 = vmatpush1.msra.mxu0 0.0
        %5304 = vmatprep.subr.mxu0 0.0
        %5305 = vmatpush1.msra.mxu0 0.0
        %5306 = vmatprep.mubr.f32.mxu0 0.0
        %5307 = vmatmul.mubr.f32.gmra.mrb[0].mxu0 %v5237
        %v5308 = vpop.f32.mrb[0].mxu0
        %v5309 = vadd.f32 0.0, %v5308
        %v5310 = vpop.f32.mrb[0].mxu0
        %5311 = vmatprep.mubr.f32.mxu0 0.0
        %5312 = vmatmul.mubr.f32.gmra.mrb[0].mxu0 %v5240
        %v5313 = vpop.f32.mrb[0].mxu0
        %v5314 = vadd.f32 0.0, %v5313
        %v5315 = vpop.f32.mrb[0].mxu0
        %5316 = vdwg.mxu0
        %v5318 = vsel %vm2133, %v5309, 0
        %v5321 = vsel %vm2133, %v5314, 0
        %5323 = vmatprep.subr.mxu0 0.0
        %5324 = vmatpush1.msra.mxu0 %v2357
        %5325 = vmatprep.subr.mxu0 0.0
        %5326 = vmatpush1.msra.mxu0 0.0
        %5327 = vmatprep.subr.mxu0 0.0
        %5328 = vmatpush1.msra.mxu0 0.0
        %5329 = vmatprep.subr.mxu0 0.0
        %5330 = vmatpush1.msra.mxu0 0.0
        %5331 = vmatprep.subr.mxu0 0.0
        %5332 = vmatpush1.msra.mxu0 0.0
        %5333 = vmatprep.subr.mxu0 0.0
        %5334 = vmatpush1.msra.mxu0 0.0
        %5335 = vmatprep.subr.mxu0 0.0
        %5336 = vmatpush1.msra.mxu0 0.0
        %5337 = vmatprep.subr.mxu0 0.0
        %5338 = vmatpush1.msra.mxu0 0.0
        %5339 = vmatprep.subr.mxu0 0.0
        %5340 = vmatpush1.msra.mxu0 0.0
        %5341 = vmatprep.subr.mxu0 0.0
        %5342 = vmatpush1.msra.mxu0 0.0
        %5343 = vmatprep.subr.mxu0 0.0
        %5344 = vmatpush1.msra.mxu0 0.0
        %5345 = vmatprep.subr.mxu0 0.0
        %5346 = vmatpush1.msra.mxu0 0.0
        %5347 = vmatprep.subr.mxu0 0.0
        %5348 = vmatpush1.msra.mxu0 0.0
        %5349 = vmatprep.subr.mxu0 0.0
        %5350 = vmatpush1.msra.mxu0 0.0
        %5351 = vmatprep.subr.mxu0 0.0
        %5352 = vmatpush1.msra.mxu0 0.0
        %5353 = vmatprep.subr.mxu0 0.0
        %5354 = vmatpush1.msra.mxu0 0.0
        %5355 = vmatprep.subr.mxu0 0.0
        %5356 = vmatpush1.msra.mxu0 0.0
        %5357 = vmatprep.subr.mxu0 0.0
        %5358 = vmatpush1.msra.mxu0 0.0
        %5359 = vmatprep.subr.mxu0 0.0
        %5360 = vmatpush1.msra.mxu0 0.0
        %5361 = vmatprep.subr.mxu0 0.0
        %5362 = vmatpush1.msra.mxu0 0.0
        %5363 = vmatprep.subr.mxu0 0.0
        %5364 = vmatpush1.msra.mxu0 0.0
        %5365 = vmatprep.subr.mxu0 0.0
        %5366 = vmatpush1.msra.mxu0 0.0
        %5367 = vmatprep.subr.mxu0 0.0
        %5368 = vmatpush1.msra.mxu0 0.0
        %5369 = vmatprep.subr.mxu0 0.0
        %5370 = vmatpush1.msra.mxu0 0.0
        %5371 = vmatprep.subr.mxu0 0.0
        %5372 = vmatpush1.msra.mxu0 0.0
        %5373 = vmatprep.subr.mxu0 0.0
        %5374 = vmatpush1.msra.mxu0 0.0
        %5375 = vmatprep.subr.mxu0 0.0
        %5376 = vmatpush1.msra.mxu0 0.0
        %5377 = vmatprep.subr.mxu0 0.0
        %5378 = vmatpush1.msra.mxu0 0.0
        %5379 = vmatprep.subr.mxu0 0.0
        %5380 = vmatpush1.msra.mxu0 0.0
        %5381 = vmatprep.subr.mxu0 0.0
        %5382 = vmatpush1.msra.mxu0 0.0
        %5383 = vmatprep.subr.mxu0 0.0
        %5384 = vmatpush1.msra.mxu0 0.0
        %5385 = vmatprep.subr.mxu0 0.0
        %5386 = vmatpush1.msra.mxu0 0.0
        %5387 = vmatprep.mubr.f32.mxu0 0.0
        %5388 = vmatmul.mubr.f32.gmra.mrb[0].mxu0 %v5318
        %v5389 = vpop.f32.mrb[0].mxu0
        %v5390 = vadd.f32 0.0, %v5389
        %v5391 = vpop.f32.mrb[0].mxu0
        %5392 = vmatprep.mubr.f32.mxu0 0.0
        %5393 = vmatmul.mubr.f32.gmra.mrb[0].mxu0 %v5321
        %v5394 = vpop.f32.mrb[0].mxu0
        %v5395 = vadd.f32 0.0, %v5394
        %v5396 = vpop.f32.mrb[0].mxu0
        %5397 = vdwg.mxu0
        %v5399 = vsel %vm2133, %v5105, 0
        %v5402 = vsel %vm2133, %v5110, 0
        %5404 = vmatprep.subr.mxu0 0.0
        %5405 = vmatpush1.msra.mxu0 %v2356
        %5406 = vmatprep.subr.mxu0 0.0
        %5407 = vmatpush1.msra.mxu0 0.0
        %5408 = vmatprep.subr.mxu0 0.0
        %5409 = vmatpush1.msra.mxu0 0.0
        %5410 = vmatprep.subr.mxu0 0.0
        %5411 = vmatpush1.msra.mxu0 0.0
        %5412 = vmatprep.subr.mxu0 0.0
        %5413 = vmatpush1.msra.mxu0 0.0
        %5414 = vmatprep.subr.mxu0 0.0
        %5415 = vmatpush1.msra.mxu0 0.0
        %5416 = vmatprep.subr.mxu0 0.0
        %5417 = vmatpush1.msra.mxu0 0.0
        %5418 = vmatprep.subr.mxu0 0.0
        %5419 = vmatpush1.msra.mxu0 0.0
        %5420 = vmatprep.subr.mxu0 0.0
        %5421 = vmatpush1.msra.mxu0 0.0
        %5422 = vmatprep.subr.mxu0 0.0
        %5423 = vmatpush1.msra.mxu0 0.0
        %5424 = vmatprep.subr.mxu0 0.0
        %5425 = vmatpush1.msra.mxu0 0.0
        %5426 = vmatprep.subr.mxu0 0.0
        %5427 = vmatpush1.msra.mxu0 0.0
        %5428 = vmatprep.subr.mxu0 0.0
        %5429 = vmatpush1.msra.mxu0 0.0
        %5430 = vmatprep.subr.mxu0 0.0
        %5431 = vmatpush1.msra.mxu0 0.0
        %5432 = vmatprep.subr.mxu0 0.0
        %5433 = vmatpush1.msra.mxu0 0.0
        %5434 = vmatprep.subr.mxu0 0.0
        %5435 = vmatpush1.msra.mxu0 0.0
        %5436 = vmatprep.subr.mxu0 0.0
        %5437 = vmatpush1.msra.mxu0 0.0
        %5438 = vmatprep.subr.mxu0 0.0
        %5439 = vmatpush1.msra.mxu0 0.0
        %5440 = vmatprep.subr.mxu0 0.0
        %5441 = vmatpush1.msra.mxu0 0.0
        %5442 = vmatprep.subr.mxu0 0.0
        %5443 = vmatpush1.msra.mxu0 0.0
        %5444 = vmatprep.subr.mxu0 0.0
        %5445 = vmatpush1.msra.mxu0 0.0
        %5446 = vmatprep.subr.mxu0 0.0
        %5447 = vmatpush1.msra.mxu0 0.0
        %5448 = vmatprep.subr.mxu0 0.0
        %5449 = vmatpush1.msra.mxu0 0.0
        %5450 = vmatprep.subr.mxu0 0.0
        %5451 = vmatpush1.msra.mxu0 0.0
        %5452 = vmatprep.subr.mxu0 0.0
        %5453 = vmatpush1.msra.mxu0 0.0
        %5454 = vmatprep.subr.mxu0 0.0
        %5455 = vmatpush1.msra.mxu0 0.0
        %5456 = vmatprep.subr.mxu0 0.0
        %5457 = vmatpush1.msra.mxu0 0.0
        %5458 = vmatprep.subr.mxu0 0.0
        %5459 = vmatpush1.msra.mxu0 0.0
        %5460 = vmatprep.subr.mxu0 0.0
        %5461 = vmatpush1.msra.mxu0 0.0
        %5462 = vmatprep.subr.mxu0 0.0
        %5463 = vmatpush1.msra.mxu0 0.0
        %5464 = vmatprep.subr.mxu0 0.0
        %5465 = vmatpush1.msra.mxu0 0.0
        %5466 = vmatprep.subr.mxu0 0.0
        %5467 = vmatpush1.msra.mxu0 0.0
        %5468 = vmatprep.mubr.f32.mxu0 0.0
        %5469 = vmatmul.mubr.f32.gmra.mrb[0].mxu0 %v5399
        %v5470 = vpop.f32.mrb[0].mxu0
        %v5471 = vadd.f32 %v5390, %v5470
        %v5472 = vpop.f32.mrb[0].mxu0
        %5473 = vmatprep.mubr.f32.mxu0 0.0
        %5474 = vmatmul.mubr.f32.gmra.mrb[0].mxu0 %v5402
        %v5475 = vpop.f32.mrb[0].mxu0
        %v5476 = vadd.f32 %v5395, %v5475
        %v5477 = vpop.f32.mrb[0].mxu0
        %5478 = vdwg.mxu0
        %5479 = vrot.lane.b32.xlu0 %v4903, 112
        %v5480 = vpop.permute.xlu0 %5479
        %5481 = vrot.lane.b32.xlu0 %v4908, 112
        %v5482 = vpop.permute.xlu0 %5481
        %5483 = vrot.lane.b32.xlu0 %v4903, 80
        %v5484 = vpop.permute.xlu0 %5483
        %5485 = vrot.lane.b32.xlu0 %v4908, 80
        %v5486 = vpop.permute.xlu0 %5485
        %v5487 = vsel %vm2133, %v5480, 0
        %v5489 = vsel %vm2133, %v5482, 0
        %v5491 = vsel %vm2133, %v5484, 0
        %v5493 = vsel %vm2133, %v5486, 0
        %5495 = vmatprep.subr.mxu0 0.0
        %5496 = vmatpush1.xpose.msra.mxu0 %v5491
        %5497 = vmatprep.subr.mxu0 0.0
        %5498 = vmatpush1.xpose.msra.mxu0 %v5493
        %5499 = vmatprep.subr.mxu0 0.0
        %5500 = vmatpush1.xpose.msra.mxu0 0.0
        %5501 = vmatprep.subr.mxu0 0.0
        %5502 = vmatpush1.xpose.msra.mxu0 0.0
        %5503 = vmatprep.subr.mxu0 0.0
        %5504 = vmatpush1.xpose.msra.mxu0 0.0
        %5505 = vmatprep.subr.mxu0 0.0
        %5506 = vmatpush1.xpose.msra.mxu0 0.0
        %5507 = vmatprep.subr.mxu0 0.0
        %5508 = vmatpush1.xpose.msra.mxu0 0.0
        %5509 = vmatprep.subr.mxu0 0.0
        %5510 = vmatpush1.xpose.msra.mxu0 0.0
        %5511 = vmatprep.subr.mxu0 0.0
        %5512 = vmatpush1.xpose.msra.mxu0 0.0
        %5513 = vmatprep.subr.mxu0 0.0
        %5514 = vmatpush1.xpose.msra.mxu0 0.0
        %5515 = vmatprep.subr.mxu0 0.0
        %5516 = vmatpush1.xpose.msra.mxu0 0.0
        %5517 = vmatprep.subr.mxu0 0.0
        %5518 = vmatpush1.xpose.msra.mxu0 0.0
        %5519 = vmatprep.subr.mxu0 0.0
        %5520 = vmatpush1.xpose.msra.mxu0 0.0
        %5521 = vmatprep.subr.mxu0 0.0
        %5522 = vmatpush1.xpose.msra.mxu0 0.0
        %5523 = vmatprep.subr.mxu0 0.0
        %5524 = vmatpush1.xpose.msra.mxu0 0.0
        %5525 = vmatprep.subr.mxu0 0.0
        %5526 = vmatpush1.xpose.msra.mxu0 0.0
        %5527 = vmatprep.subr.mxu0 0.0
        %5528 = vmatpush1.xpose.msra.mxu0 0.0
        %5529 = vmatprep.subr.mxu0 0.0
        %5530 = vmatpush1.xpose.msra.mxu0 0.0
        %5531 = vmatprep.subr.mxu0 0.0
        %5532 = vmatpush1.xpose.msra.mxu0 0.0
        %5533 = vmatprep.subr.mxu0 0.0
        %5534 = vmatpush1.xpose.msra.mxu0 0.0
        %5535 = vmatprep.subr.mxu0 0.0
        %5536 = vmatpush1.xpose.msra.mxu0 0.0
        %5537 = vmatprep.subr.mxu0 0.0
        %5538 = vmatpush1.xpose.msra.mxu0 0.0
        %5539 = vmatprep.subr.mxu0 0.0
        %5540 = vmatpush1.xpose.msra.mxu0 0.0
        %5541 = vmatprep.subr.mxu0 0.0
        %5542 = vmatpush1.xpose.msra.mxu0 0.0
        %5543 = vmatprep.subr.mxu0 0.0
        %5544 = vmatpush1.xpose.msra.mxu0 0.0
        %5545 = vmatprep.subr.mxu0 0.0
        %5546 = vmatpush1.xpose.msra.mxu0 0.0
        %5547 = vmatprep.subr.mxu0 0.0
        %5548 = vmatpush1.xpose.msra.mxu0 0.0
        %5549 = vmatprep.subr.mxu0 0.0
        %5550 = vmatpush1.xpose.msra.mxu0 0.0
        %5551 = vmatprep.subr.mxu0 0.0
        %5552 = vmatpush1.xpose.msra.mxu0 0.0
        %5553 = vmatprep.subr.mxu0 0.0
        %5554 = vmatpush1.xpose.msra.mxu0 0.0
        %5555 = vmatprep.subr.mxu0 0.0
        %5556 = vmatpush1.xpose.msra.mxu0 0.0
        %5557 = vmatprep.subr.mxu0 0.0
        %5558 = vmatpush1.xpose.msra.mxu0 0.0
        %5559 = vmatprep.mubr.f32.mxu0 0.0
        %5560 = vmatmul.mubr.f32.gmra.mrb[0].mxu0 %v5487
        %v5561 = vpop.f32.mrb[0].mxu0
        %v5562 = vadd.f32 0.0, %v5561
        %v5563 = vpop.f32.mrb[0].mxu0
        %5564 = vmatprep.mubr.f32.mxu0 0.0
        %5565 = vmatmul.mubr.f32.gmra.mrb[0].mxu0 %v5489
        %v5566 = vpop.f32.mrb[0].mxu0
        %v5567 = vadd.f32 0.0, %v5566
        %v5568 = vpop.f32.mrb[0].mxu0
        %5569 = vdwg.mxu0
        %v5570 = vmul.f32 %v5562, 0.35355338
        %v5571 = vmul.f32 %v5567, 0.35355338
        %v5572 = vadd.f32 %v5570, %v4828
        %v5573 = vadd.f32 %v5571, %v4829
        %v5574 = vsel %vm1433, %v5572, -inf
        %5575 = vmax.xlane.f32.xlu0 %v5574
        %v5576 = vpop.xlane.xlu0 %5575
        %v5577 = vsel %vm1433, %v5573, -inf
        %5578 = vmax.xlane.f32.xlu0 %v5577
        %v5579 = vpop.xlane.xlu0 %5578
        %v5580 = vsub.f32 %v5572, %v5576
        %v5581 = vsub.f32 %v5573, %v5579
        %v5582 = vmul.f32 %v5580, 1.442695
        %v5583 = vpow.pop %v5582
        %v5584 = vmul.f32 %v5581, 1.442695
        %v5585 = vpow.pop %v5584
        %v5586 = vsel %vm1433, %v5583, 0.0
        %5587 = vadd.xlane.f32.xlu0 %v5586
        %v5588 = vpop.xlane.xlu0 %5587
        %v5589 = vsel %vm1433, %v5585, 0.0
        %5590 = vadd.xlane.f32.xlu0 %v5589
        %v5591 = vpop.xlane.xlu0 %5590
        %v5592 = vrcp.pop %v5588
        %v5593 = vmul.f32 %v5583, %v5592
        %v5594 = vrcp.pop %v5591
        %v5595 = vmul.f32 %v5585, %v5594
        %5596 = vrot.lane.b32.xlu0 %v4903, 48
        %v5597 = vpop.permute.xlu0 %5596
        %5598 = vrot.lane.b32.xlu0 %v4908, 48
        %v5599 = vpop.permute.xlu0 %5598
        %v5603 = vsel %vm1433, %v5593, 0
        %v5606 = vsel %vm1433, %v5595, 0
        %5608 = vmatprep.subr.mxu0 0.0
        %5609 = vmatpush1.msra.mxu0 %v5597
        %5610 = vmatprep.subr.mxu0 0.0
        %5611 = vmatpush1.msra.mxu0 %v5599
        %5612 = vmatprep.subr.mxu0 0.0
        %5613 = vmatpush1.msra.mxu0 0.0
        %5614 = vmatprep.subr.mxu0 0.0
        %5615 = vmatpush1.msra.mxu0 0.0
        %5616 = vmatprep.subr.mxu0 0.0
        %5617 = vmatpush1.msra.mxu0 0.0
        %5618 = vmatprep.subr.mxu0 0.0
        %5619 = vmatpush1.msra.mxu0 0.0
        %5620 = vmatprep.subr.mxu0 0.0
        %5621 = vmatpush1.msra.mxu0 0.0
        %5622 = vmatprep.subr.mxu0 0.0
        %5623 = vmatpush1.msra.mxu0 0.0
        %5624 = vmatprep.subr.mxu0 0.0
        %5625 = vmatpush1.msra.mxu0 0.0
        %5626 = vmatprep.subr.mxu0 0.0
        %5627 = vmatpush1.msra.mxu0 0.0
        %5628 = vmatprep.subr.mxu0 0.0
        %5629 = vmatpush1.msra.mxu0 0.0
        %5630 = vmatprep.subr.mxu0 0.0
        %5631 = vmatpush1.msra.mxu0 0.0
        %5632 = vmatprep.subr.mxu0 0.0
        %5633 = vmatpush1.msra.mxu0 0.0
        %5634 = vmatprep.subr.mxu0 0.0
        %5635 = vmatpush1.msra.mxu0 0.0
        %5636 = vmatprep.subr.mxu0 0.0
        %5637 = vmatpush1.msra.mxu0 0.0
        %5638 = vmatprep.subr.mxu0 0.0
        %5639 = vmatpush1.msra.mxu0 0.0
        %5640 = vmatprep.subr.mxu0 0.0
        %5641 = vmatpush1.msra.mxu0 0.0
        %5642 = vmatprep.subr.mxu0 0.0
        %5643 = vmatpush1.msra.mxu0 0.0
        %5644 = vmatprep.subr.mxu0 0.0
        %5645 = vmatpush1.msra.mxu0 0.0
        %5646 = vmatprep.subr.mxu0 0.0
        %5647 = vmatpush1.msra.mxu0 0.0
        %5648 = vmatprep.subr.mxu0 0.0
        %5649 = vmatpush1.msra.mxu0 0.0
        %5650 = vmatprep.subr.mxu0 0.0
        %5651 = vmatpush1.msra.mxu0 0.0
        %5652 = vmatprep.subr.mxu0 0.0
        %5653 = vmatpush1.msra.mxu0 0.0
        %5654 = vmatprep.subr.mxu0 0.0
        %5655 = vmatpush1.msra.mxu0 0.0
        %5656 = vmatprep.subr.mxu0 0.0
        %5657 = vmatpush1.msra.mxu0 0.0
        %5658 = vmatprep.subr.mxu0 0.0
        %5659 = vmatpush1.msra.mxu0 0.0
        %5660 = vmatprep.subr.mxu0 0.0
        %5661 = vmatpush1.msra.mxu0 0.0
        %5662 = vmatprep.subr.mxu0 0.0
        %5663 = vmatpush1.msra.mxu0 0.0
        %5664 = vmatprep.subr.mxu0 0.0
        %5665 = vmatpush1.msra.mxu0 0.0
        %5666 = vmatprep.subr.mxu0 0.0
        %5667 = vmatpush1.msra.mxu0 0.0
        %5668 = vmatprep.subr.mxu0 0.0
        %5669 = vmatpush1.msra.mxu0 0.0
        %5670 = vmatprep.subr.mxu0 0.0
        %5671 = vmatpush1.msra.mxu0 0.0
        %5672 = vmatprep.mubr.f32.mxu0 0.0
        %5673 = vmatmul.mubr.f32.gmra.mrb[0].mxu0 %v5603
        %v5674 = vpop.f32.mrb[0].mxu0
        %v5675 = vadd.f32 0.0, %v5674
        %v5676 = vpop.f32.mrb[0].mxu0
        %5677 = vmatprep.mubr.f32.mxu0 0.0
        %5678 = vmatmul.mubr.f32.gmra.mrb[0].mxu0 %v5606
        %v5679 = vpop.f32.mrb[0].mxu0
        %v5680 = vadd.f32 0.0, %v5679
        %v5681 = vpop.f32.mrb[0].mxu0
        %5682 = vdwg.mxu0
        %v5684 = vsel %vm2133, %v5675, 0
        %v5687 = vsel %vm2133, %v5680, 0
        %5689 = vmatprep.subr.mxu0 0.0
        %5690 = vmatpush1.msra.mxu0 %v2358
        %5691 = vmatprep.subr.mxu0 0.0
        %5692 = vmatpush1.msra.mxu0 0.0
        %5693 = vmatprep.subr.mxu0 0.0
        %5694 = vmatpush1.msra.mxu0 0.0
        %5695 = vmatprep.subr.mxu0 0.0
        %5696 = vmatpush1.msra.mxu0 0.0
        %5697 = vmatprep.subr.mxu0 0.0
        %5698 = vmatpush1.msra.mxu0 0.0
        %5699 = vmatprep.subr.mxu0 0.0
        %5700 = vmatpush1.msra.mxu0 0.0
        %5701 = vmatprep.subr.mxu0 0.0
        %5702 = vmatpush1.msra.mxu0 0.0
        %5703 = vmatprep.subr.mxu0 0.0
        %5704 = vmatpush1.msra.mxu0 0.0
        %5705 = vmatprep.subr.mxu0 0.0
        %5706 = vmatpush1.msra.mxu0 0.0
        %5707 = vmatprep.subr.mxu0 0.0
        %5708 = vmatpush1.msra.mxu0 0.0
        %5709 = vmatprep.subr.mxu0 0.0
        %5710 = vmatpush1.msra.mxu0 0.0
        %5711 = vmatprep.subr.mxu0 0.0
        %5712 = vmatpush1.msra.mxu0 0.0
        %5713 = vmatprep.subr.mxu0 0.0
        %5714 = vmatpush1.msra.mxu0 0.0
        %5715 = vmatprep.subr.mxu0 0.0
        %5716 = vmatpush1.msra.mxu0 0.0
        %5717 = vmatprep.subr.mxu0 0.0
        %5718 = vmatpush1.msra.mxu0 0.0
        %5719 = vmatprep.subr.mxu0 0.0
        %5720 = vmatpush1.msra.mxu0 0.0
        %5721 = vmatprep.subr.mxu0 0.0
        %5722 = vmatpush1.msra.mxu0 0.0
        %5723 = vmatprep.subr.mxu0 0.0
        %5724 = vmatpush1.msra.mxu0 0.0
        %5725 = vmatprep.subr.mxu0 0.0
        %5726 = vmatpush1.msra.mxu0 0.0
        %5727 = vmatprep.subr.mxu0 0.0
        %5728 = vmatpush1.msra.mxu0 0.0
        %5729 = vmatprep.subr.mxu0 0.0
        %5730 = vmatpush1.msra.mxu0 0.0
        %5731 = vmatprep.subr.mxu0 0.0
        %5732 = vmatpush1.msra.mxu0 0.0
        %5733 = vmatprep.subr.mxu0 0.0
        %5734 = vmatpush1.msra.mxu0 0.0
        %5735 = vmatprep.subr.mxu0 0.0
        %5736 = vmatpush1.msra.mxu0 0.0
        %5737 = vmatprep.subr.mxu0 0.0
        %5738 = vmatpush1.msra.mxu0 0.0
        %5739 = vmatprep.subr.mxu0 0.0
        %5740 = vmatpush1.msra.mxu0 0.0
        %5741 = vmatprep.subr.mxu0 0.0
        %5742 = vmatpush1.msra.mxu0 0.0
        %5743 = vmatprep.subr.mxu0 0.0
        %5744 = vmatpush1.msra.mxu0 0.0
        %5745 = vmatprep.subr.mxu0 0.0
        %5746 = vmatpush1.msra.mxu0 0.0
        %5747 = vmatprep.subr.mxu0 0.0
        %5748 = vmatpush1.msra.mxu0 0.0
        %5749 = vmatprep.subr.mxu0 0.0
        %5750 = vmatpush1.msra.mxu0 0.0
        %5751 = vmatprep.subr.mxu0 0.0
        %5752 = vmatpush1.msra.mxu0 0.0
        %5753 = vmatprep.mubr.f32.mxu0 0.0
        %5754 = vmatmul.mubr.f32.gmra.mrb[0].mxu0 %v5684
        %v5755 = vpop.f32.mrb[0].mxu0
        %v5756 = vadd.f32 0.0, %v5755
        %v5757 = vpop.f32.mrb[0].mxu0
        %5758 = vmatprep.mubr.f32.mxu0 0.0
        %5759 = vmatmul.mubr.f32.gmra.mrb[0].mxu0 %v5687
        %v5760 = vpop.f32.mrb[0].mxu0
        %v5761 = vadd.f32 0.0, %v5760
        %v5762 = vpop.f32.mrb[0].mxu0
        %5763 = vdwg.mxu0
        %v5764 = vadd.f32 %v5471, %v5756
        %v5765 = vadd.f32 %v5476, %v5761
        %5766 = vrot.lane.b32.xlu0 %v4903, 104
        %v5767 = vpop.permute.xlu0 %5766
        %5768 = vrot.lane.b32.xlu0 %v4908, 104
        %v5769 = vpop.permute.xlu0 %5768
        %5770 = vrot.lane.b32.xlu0 %v4903, 72
        %v5771 = vpop.permute.xlu0 %5770
        %5772 = vrot.lane.b32.xlu0 %v4908, 72
        %v5773 = vpop.permute.xlu0 %5772
        %v5774 = vsel %vm2133, %v5767, 0
        %v5776 = vsel %vm2133, %v5769, 0
        %v5778 = vsel %vm2133, %v5771, 0
        %v5780 = vsel %vm2133, %v5773, 0
        %5782 = vmatprep.subr.mxu0 0.0
        %5783 = vmatpush1.xpose.msra.mxu0 %v5778
        %5784 = vmatprep.subr.mxu0 0.0
        %5785 = vmatpush1.xpose.msra.mxu0 %v5780
        %5786 = vmatprep.subr.mxu0 0.0
        %5787 = vmatpush1.xpose.msra.mxu0 0.0
        %5788 = vmatprep.subr.mxu0 0.0
        %5789 = vmatpush1.xpose.msra.mxu0 0.0
        %5790 = vmatprep.subr.mxu0 0.0
        %5791 = vmatpush1.xpose.msra.mxu0 0.0
        %5792 = vmatprep.subr.mxu0 0.0
        %5793 = vmatpush1.xpose.msra.mxu0 0.0
        %5794 = vmatprep.subr.mxu0 0.0
        %5795 = vmatpush1.xpose.msra.mxu0 0.0
        %5796 = vmatprep.subr.mxu0 0.0
        %5797 = vmatpush1.xpose.msra.mxu0 0.0
        %5798 = vmatprep.subr.mxu0 0.0
        %5799 = vmatpush1.xpose.msra.mxu0 0.0
        %5800 = vmatprep.subr.mxu0 0.0
        %5801 = vmatpush1.xpose.msra.mxu0 0.0
        %5802 = vmatprep.subr.mxu0 0.0
        %5803 = vmatpush1.xpose.msra.mxu0 0.0
        %5804 = vmatprep.subr.mxu0 0.0
        %5805 = vmatpush1.xpose.msra.mxu0 0.0
        %5806 = vmatprep.subr.mxu0 0.0
        %5807 = vmatpush1.xpose.msra.mxu0 0.0
        %5808 = vmatprep.subr.mxu0 0.0
        %5809 = vmatpush1.xpose.msra.mxu0 0.0
        %5810 = vmatprep.subr.mxu0 0.0
        %5811 = vmatpush1.xpose.msra.mxu0 0.0
        %5812 = vmatprep.subr.mxu0 0.0
        %5813 = vmatpush1.xpose.msra.mxu0 0.0
        %5814 = vmatprep.subr.mxu0 0.0
        %5815 = vmatpush1.xpose.msra.mxu0 0.0
        %5816 = vmatprep.subr.mxu0 0.0
        %5817 = vmatpush1.xpose.msra.mxu0 0.0
        %5818 = vmatprep.subr.mxu0 0.0
        %5819 = vmatpush1.xpose.msra.mxu0 0.0
        %5820 = vmatprep.subr.mxu0 0.0
        %5821 = vmatpush1.xpose.msra.mxu0 0.0
        %5822 = vmatprep.subr.mxu0 0.0
        %5823 = vmatpush1.xpose.msra.mxu0 0.0
        %5824 = vmatprep.subr.mxu0 0.0
        %5825 = vmatpush1.xpose.msra.mxu0 0.0
        %5826 = vmatprep.subr.mxu0 0.0
        %5827 = vmatpush1.xpose.msra.mxu0 0.0
        %5828 = vmatprep.subr.mxu0 0.0
        %5829 = vmatpush1.xpose.msra.mxu0 0.0
        %5830 = vmatprep.subr.mxu0 0.0
        %5831 = vmatpush1.xpose.msra.mxu0 0.0
        %5832 = vmatprep.subr.mxu0 0.0
        %5833 = vmatpush1.xpose.msra.mxu0 0.0
        %5834 = vmatprep.subr.mxu0 0.0
        %5835 = vmatpush1.xpose.msra.mxu0 0.0
        %5836 = vmatprep.subr.mxu0 0.0
        %5837 = vmatpush1.xpose.msra.mxu0 0.0
        %5838 = vmatprep.subr.mxu0 0.0
        %5839 = vmatpush1.xpose.msra.mxu0 0.0
        %5840 = vmatprep.subr.mxu0 0.0
        %5841 = vmatpush1.xpose.msra.mxu0 0.0
        %5842 = vmatprep.subr.mxu0 0.0
        %5843 = vmatpush1.xpose.msra.mxu0 0.0
        %5844 = vmatprep.subr.mxu0 0.0
        %5845 = vmatpush1.xpose.msra.mxu0 0.0
        %5846 = vmatprep.mubr.f32.mxu0 0.0
        %5847 = vmatmul.mubr.f32.gmra.mrb[0].mxu0 %v5774
        %v5848 = vpop.f32.mrb[0].mxu0
        %v5849 = vadd.f32 0.0, %v5848
        %v5850 = vpop.f32.mrb[0].mxu0
        %5851 = vmatprep.mubr.f32.mxu0 0.0
        %5852 = vmatmul.mubr.f32.gmra.mrb[0].mxu0 %v5776
        %v5853 = vpop.f32.mrb[0].mxu0
        %v5854 = vadd.f32 0.0, %v5853
        %v5855 = vpop.f32.mrb[0].mxu0
        %5856 = vdwg.mxu0
        %v5857 = vmul.f32 %v5849, 0.35355338
        %v5858 = vmul.f32 %v5854, 0.35355338
        %v5859 = vadd.f32 %v5857, %v4828
        %v5860 = vadd.f32 %v5858, %v4829
        %v5861 = vsel %vm1433, %v5859, -inf
        %5862 = vmax.xlane.f32.xlu0 %v5861
        %v5863 = vpop.xlane.xlu0 %5862
        %v5864 = vsel %vm1433, %v5860, -inf
        %5865 = vmax.xlane.f32.xlu0 %v5864
        %v5866 = vpop.xlane.xlu0 %5865
        %v5867 = vsub.f32 %v5859, %v5863
        %v5868 = vsub.f32 %v5860, %v5866
        %v5869 = vmul.f32 %v5867, 1.442695
        %v5870 = vpow.pop %v5869
        %v5871 = vmul.f32 %v5868, 1.442695
        %v5872 = vpow.pop %v5871
        %v5873 = vsel %vm1433, %v5870, 0.0
        %5874 = vadd.xlane.f32.xlu0 %v5873
        %v5875 = vpop.xlane.xlu0 %5874
        %v5876 = vsel %vm1433, %v5872, 0.0
        %5877 = vadd.xlane.f32.xlu0 %v5876
        %v5878 = vpop.xlane.xlu0 %5877
        %v5879 = vrcp.pop %v5875
        %v5880 = vmul.f32 %v5870, %v5879
        %v5881 = vrcp.pop %v5878
        %v5882 = vmul.f32 %v5872, %v5881
        %5883 = vrot.lane.b32.xlu0 %v4903, 40
        %v5884 = vpop.permute.xlu0 %5883
        %5885 = vrot.lane.b32.xlu0 %v4908, 40
        %v5886 = vpop.permute.xlu0 %5885
        %v5890 = vsel %vm1433, %v5880, 0
        %v5893 = vsel %vm1433, %v5882, 0
        %5895 = vmatprep.subr.mxu0 0.0
        %5896 = vmatpush1.msra.mxu0 %v5884
        %5897 = vmatprep.subr.mxu0 0.0
        %5898 = vmatpush1.msra.mxu0 %v5886
        %5899 = vmatprep.subr.mxu0 0.0
        %5900 = vmatpush1.msra.mxu0 0.0
        %5901 = vmatprep.subr.mxu0 0.0
        %5902 = vmatpush1.msra.mxu0 0.0
        %5903 = vmatprep.subr.mxu0 0.0
        %5904 = vmatpush1.msra.mxu0 0.0
        %5905 = vmatprep.subr.mxu0 0.0
        %5906 = vmatpush1.msra.mxu0 0.0
        %5907 = vmatprep.subr.mxu0 0.0
        %5908 = vmatpush1.msra.mxu0 0.0
        %5909 = vmatprep.subr.mxu0 0.0
        %5910 = vmatpush1.msra.mxu0 0.0
        %5911 = vmatprep.subr.mxu0 0.0
        %5912 = vmatpush1.msra.mxu0 0.0
        %5913 = vmatprep.subr.mxu0 0.0
        %5914 = vmatpush1.msra.mxu0 0.0
        %5915 = vmatprep.subr.mxu0 0.0
        %5916 = vmatpush1.msra.mxu0 0.0
        %5917 = vmatprep.subr.mxu0 0.0
        %5918 = vmatpush1.msra.mxu0 0.0
        %5919 = vmatprep.subr.mxu0 0.0
        %5920 = vmatpush1.msra.mxu0 0.0
        %5921 = vmatprep.subr.mxu0 0.0
        %5922 = vmatpush1.msra.mxu0 0.0
        %5923 = vmatprep.subr.mxu0 0.0
        %5924 = vmatpush1.msra.mxu0 0.0
        %5925 = vmatprep.subr.mxu0 0.0
        %5926 = vmatpush1.msra.mxu0 0.0
        %5927 = vmatprep.subr.mxu0 0.0
        %5928 = vmatpush1.msra.mxu0 0.0
        %5929 = vmatprep.subr.mxu0 0.0
        %5930 = vmatpush1.msra.mxu0 0.0
        %5931 = vmatprep.subr.mxu0 0.0
        %5932 = vmatpush1.msra.mxu0 0.0
        %5933 = vmatprep.subr.mxu0 0.0
        %5934 = vmatpush1.msra.mxu0 0.0
        %5935 = vmatprep.subr.mxu0 0.0
        %5936 = vmatpush1.msra.mxu0 0.0
        %5937 = vmatprep.subr.mxu0 0.0
        %5938 = vmatpush1.msra.mxu0 0.0
        %5939 = vmatprep.subr.mxu0 0.0
        %5940 = vmatpush1.msra.mxu0 0.0
        %5941 = vmatprep.subr.mxu0 0.0
        %5942 = vmatpush1.msra.mxu0 0.0
        %5943 = vmatprep.subr.mxu0 0.0
        %5944 = vmatpush1.msra.mxu0 0.0
        %5945 = vmatprep.subr.mxu0 0.0
        %5946 = vmatpush1.msra.mxu0 0.0
        %5947 = vmatprep.subr.mxu0 0.0
        %5948 = vmatpush1.msra.mxu0 0.0
        %5949 = vmatprep.subr.mxu0 0.0
        %5950 = vmatpush1.msra.mxu0 0.0
        %5951 = vmatprep.subr.mxu0 0.0
        %5952 = vmatpush1.msra.mxu0 0.0
        %5953 = vmatprep.subr.mxu0 0.0
        %5954 = vmatpush1.msra.mxu0 0.0
        %5955 = vmatprep.subr.mxu0 0.0
        %5956 = vmatpush1.msra.mxu0 0.0
        %5957 = vmatprep.subr.mxu0 0.0
        %5958 = vmatpush1.msra.mxu0 0.0
        %5959 = vmatprep.mubr.f32.mxu0 0.0
        %5960 = vmatmul.mubr.f32.gmra.mrb[0].mxu0 %v5890
        %v5961 = vpop.f32.mrb[0].mxu0
        %v5962 = vadd.f32 0.0, %v5961
        %v5963 = vpop.f32.mrb[0].mxu0
        %5964 = vmatprep.mubr.f32.mxu0 0.0
        %5965 = vmatmul.mubr.f32.gmra.mrb[0].mxu0 %v5893
        %v5966 = vpop.f32.mrb[0].mxu0
        %v5967 = vadd.f32 0.0, %v5966
        %v5968 = vpop.f32.mrb[0].mxu0
        %5969 = vdwg.mxu0
        %v5971 = vsel %vm2133, %v5962, 0
        %v5974 = vsel %vm2133, %v5967, 0
        %5976 = vmatprep.subr.mxu0 0.0
        %5977 = vmatpush1.msra.mxu0 %v2359
        %5978 = vmatprep.subr.mxu0 0.0
        %5979 = vmatpush1.msra.mxu0 0.0
        %5980 = vmatprep.subr.mxu0 0.0
        %5981 = vmatpush1.msra.mxu0 0.0
        %5982 = vmatprep.subr.mxu0 0.0
        %5983 = vmatpush1.msra.mxu0 0.0
        %5984 = vmatprep.subr.mxu0 0.0
        %5985 = vmatpush1.msra.mxu0 0.0
        %5986 = vmatprep.subr.mxu0 0.0
        %5987 = vmatpush1.msra.mxu0 0.0
        %5988 = vmatprep.subr.mxu0 0.0
        %5989 = vmatpush1.msra.mxu0 0.0
        %5990 = vmatprep.subr.mxu0 0.0
        %5991 = vmatpush1.msra.mxu0 0.0
        %5992 = vmatprep.subr.mxu0 0.0
        %5993 = vmatpush1.msra.mxu0 0.0
        %5994 = vmatprep.subr.mxu0 0.0
        %5995 = vmatpush1.msra.mxu0 0.0
        %5996 = vmatprep.subr.mxu0 0.0
        %5997 = vmatpush1.msra.mxu0 0.0
        %5998 = vmatprep.subr.mxu0 0.0
        %5999 = vmatpush1.msra.mxu0 0.0
        %6000 = vmatprep.subr.mxu0 0.0
        %6001 = vmatpush1.msra.mxu0 0.0
        %6002 = vmatprep.subr.mxu0 0.0
        %6003 = vmatpush1.msra.mxu0 0.0
        %6004 = vmatprep.subr.mxu0 0.0
        %6005 = vmatpush1.msra.mxu0 0.0
        %6006 = vmatprep.subr.mxu0 0.0
        %6007 = vmatpush1.msra.mxu0 0.0
        %6008 = vmatprep.subr.mxu0 0.0
        %6009 = vmatpush1.msra.mxu0 0.0
        %6010 = vmatprep.subr.mxu0 0.0
        %6011 = vmatpush1.msra.mxu0 0.0
        %6012 = vmatprep.subr.mxu0 0.0
        %6013 = vmatpush1.msra.mxu0 0.0
        %6014 = vmatprep.subr.mxu0 0.0
        %6015 = vmatpush1.msra.mxu0 0.0
        %6016 = vmatprep.subr.mxu0 0.0
        %6017 = vmatpush1.msra.mxu0 0.0
        %6018 = vmatprep.subr.mxu0 0.0
        %6019 = vmatpush1.msra.mxu0 0.0
        %6020 = vmatprep.subr.mxu0 0.0
        %6021 = vmatpush1.msra.mxu0 0.0
        %6022 = vmatprep.subr.mxu0 0.0
        %6023 = vmatpush1.msra.mxu0 0.0
        %6024 = vmatprep.subr.mxu0 0.0
        %6025 = vmatpush1.msra.mxu0 0.0
        %6026 = vmatprep.subr.mxu0 0.0
        %6027 = vmatpush1.msra.mxu0 0.0
        %6028 = vmatprep.subr.mxu0 0.0
        %6029 = vmatpush1.msra.mxu0 0.0
        %6030 = vmatprep.subr.mxu0 0.0
        %6031 = vmatpush1.msra.mxu0 0.0
        %6032 = vmatprep.subr.mxu0 0.0
        %6033 = vmatpush1.msra.mxu0 0.0
        %6034 = vmatprep.subr.mxu0 0.0
        %6035 = vmatpush1.msra.mxu0 0.0
        %6036 = vmatprep.subr.mxu0 0.0
        %6037 = vmatpush1.msra.mxu0 0.0
        %6038 = vmatprep.subr.mxu0 0.0
        %6039 = vmatpush1.msra.mxu0 0.0
        %6040 = vmatprep.mubr.f32.mxu0 0.0
        %6041 = vmatmul.mubr.f32.gmra.mrb[0].mxu0 %v5971
        %v6042 = vpop.f32.mrb[0].mxu0
        %v6043 = vadd.f32 0.0, %v6042
        %v6044 = vpop.f32.mrb[0].mxu0
        %6045 = vmatprep.mubr.f32.mxu0 0.0
        %6046 = vmatmul.mubr.f32.gmra.mrb[0].mxu0 %v5974
        %v6047 = vpop.f32.mrb[0].mxu0
        %v6048 = vadd.f32 0.0, %v6047
        %v6049 = vpop.f32.mrb[0].mxu0
        %6050 = vdwg.mxu0
        %v6051 = vadd.f32 %v5764, %v6043
        %v6052 = vadd.f32 %v5765, %v6048
        %v6053 = vadd.f32 %v6051, %v3507
        %v6054 = vadd.f32 %v6052, %v3507
        %v6055 = vadd.f32 %v4826, %v6053
        %v6056 = vadd.f32 %v4827, %v6054
        %v6057 = vsel %vm1309, %v6055, 0.0
        %6058 = vadd.xlane.f32.xlu0 %v6057
        %v6059 = vpop.xlane.xlu0 %6058
        %v6060 = vsel %vm1309, %v6056, 0.0
        %6061 = vadd.xlane.f32.xlu0 %v6060
        %v6062 = vpop.xlane.xlu0 %6061
        %v6063 = vmul.f32 %v6059, %v2225
        %v6064 = vmul.f32 %v6062, %v2225
        %v6065 = vsub.f32 %v6055, %v6063
        %v6066 = vsub.f32 %v6056, %v6064
        %v6067 = vmul.f32 %v6065, %v6065
        %v6068 = vmul.f32 %v6066, %v6066
        %v6069 = vsel %vm1309, %v6067, 0.0
        %6070 = vadd.xlane.f32.xlu0 %v6069
        %v6071 = vpop.xlane.xlu0 %6070
        %v6072 = vsel %vm1309, %v6068, 0.0
        %6073 = vadd.xlane.f32.xlu0 %v6072
        %v6074 = vpop.xlane.xlu0 %6073
        %v6075 = vmul.f32 %v6071, %v2225
        %v6076 = vmul.f32 %v6074, %v2225
        %v6077 = vadd.f32 %v6075, 1e-05
        %v6078 = vadd.f32 %v6076, 1e-05
        %v6079 = vrsqrt.pop %v6077
        %v6080 = vrsqrt.pop %v6078
        %v6081 = vmul.f32 %v6065, %v6079
        %v6082 = vmul.f32 %v6066, %v6080
        %v6083 = vmul.f32 %v6081, %v3545
        %v6084 = vmul.f32 %v6082, %v3545
        %v6085 = vadd.f32 %v6083, %v3553
        %v6086 = vadd.f32 %v6084, %v3553
        %v6088 = vsel %vm1309, %v6085, 0
        %v6091 = vsel %vm1309, %v6086, 0
        %6093 = vmatprep.subr.mxu0 0.0
        %6094 = vmatpush1.msra.mxu0 %v3557
        %6095 = vmatprep.subr.mxu0 0.0
        %6096 = vmatpush1.msra.mxu0 %v3558
        %6097 = vmatprep.subr.mxu0 0.0
        %6098 = vmatpush1.msra.mxu0 %v3559
        %6099 = vmatprep.subr.mxu0 0.0
        %6100 = vmatpush1.msra.mxu0 %v3560
        %6101 = vmatprep.subr.mxu0 0.0
        %6102 = vmatpush1.msra.mxu0 0.0
        %6103 = vmatprep.subr.mxu0 0.0
        %6104 = vmatpush1.msra.mxu0 0.0
        %6105 = vmatprep.subr.mxu0 0.0
        %6106 = vmatpush1.msra.mxu0 0.0
        %6107 = vmatprep.subr.mxu0 0.0
        %6108 = vmatpush1.msra.mxu0 0.0
        %6109 = vmatprep.subr.mxu0 0.0
        %6110 = vmatpush1.msra.mxu0 0.0
        %6111 = vmatprep.subr.mxu0 0.0
        %6112 = vmatpush1.msra.mxu0 0.0
        %6113 = vmatprep.subr.mxu0 0.0
        %6114 = vmatpush1.msra.mxu0 0.0
        %6115 = vmatprep.subr.mxu0 0.0
        %6116 = vmatpush1.msra.mxu0 0.0
        %6117 = vmatprep.subr.mxu0 0.0
        %6118 = vmatpush1.msra.mxu0 0.0
        %6119 = vmatprep.subr.mxu0 0.0
        %6120 = vmatpush1.msra.mxu0 0.0
        %6121 = vmatprep.subr.mxu0 0.0
        %6122 = vmatpush1.msra.mxu0 0.0
        %6123 = vmatprep.subr.mxu0 0.0
        %6124 = vmatpush1.msra.mxu0 0.0
        %6125 = vmatprep.subr.mxu0 0.0
        %6126 = vmatpush1.msra.mxu0 0.0
        %6127 = vmatprep.subr.mxu0 0.0
        %6128 = vmatpush1.msra.mxu0 0.0
        %6129 = vmatprep.subr.mxu0 0.0
        %6130 = vmatpush1.msra.mxu0 0.0
        %6131 = vmatprep.subr.mxu0 0.0
        %6132 = vmatpush1.msra.mxu0 0.0
        %6133 = vmatprep.subr.mxu0 0.0
        %6134 = vmatpush1.msra.mxu0 0.0
        %6135 = vmatprep.subr.mxu0 0.0
        %6136 = vmatpush1.msra.mxu0 0.0
        %6137 = vmatprep.subr.mxu0 0.0
        %6138 = vmatpush1.msra.mxu0 0.0
        %6139 = vmatprep.subr.mxu0 0.0
        %6140 = vmatpush1.msra.mxu0 0.0
        %6141 = vmatprep.subr.mxu0 0.0
        %6142 = vmatpush1.msra.mxu0 0.0
        %6143 = vmatprep.subr.mxu0 0.0
        %6144 = vmatpush1.msra.mxu0 0.0
        %6145 = vmatprep.subr.mxu0 0.0
        %6146 = vmatpush1.msra.mxu0 0.0
        %6147 = vmatprep.subr.mxu0 0.0
        %6148 = vmatpush1.msra.mxu0 0.0
        %6149 = vmatprep.subr.mxu0 0.0
        %6150 = vmatpush1.msra.mxu0 0.0
        %6151 = vmatprep.subr.mxu0 0.0
        %6152 = vmatpush1.msra.mxu0 0.0
        %6153 = vmatprep.subr.mxu0 0.0
        %6154 = vmatpush1.msra.mxu0 0.0
        %6155 = vmatprep.subr.mxu0 0.0
        %6156 = vmatpush1.msra.mxu0 0.0
        %6157 = vmatprep.mubr.f32.mxu0 0.0
        %6158 = vmatmul.mubr.f32.gmra.mrb[0].mxu0 %v6088
        %v6159 = vpop.f32.mrb[0].mxu0
        %v6160 = vadd.f32 %v3566, %v6159
        %v6161 = vpop.f32.mrb[0].mxu0
        %6162 = vmatprep.mubr.f32.mxu0 0.0
        %6163 = vmatmul.mubr.f32.gmra.mrb[0].mxu0 %v6091
        %v6164 = vpop.f32.mrb[0].mxu0
        %v6165 = vadd.f32 %v3566, %v6164
        %v6166 = vpop.f32.mrb[0].mxu0
        %6167 = vdwg.mxu0
        %v6168 = vmul.f32 %v6160, 0.5
        %v6169 = vmul.f32 %v6165, 0.5
        %v6170 = vmul.f32 %v6160, 0.044715
        %v6171 = vmul.f32 %v6165, 0.044715
        %v6172 = vmul.f32 %v6170, %v6160
        %v6173 = vmul.f32 %v6171, %v6165
        %v6174 = vmul.f32 %v6172, %v6160
        %v6175 = vmul.f32 %v6173, %v6165
        %v6176 = vadd.f32 %v6160, %v6174
        %v6177 = vadd.f32 %v6165, %v6175
        %v6178 = vmul.f32 %v6176, 0.7978846
        %v6179 = vmul.f32 %v6177, 0.7978846
        %v6180 = vtanh.pop %v6178
        %v6181 = vtanh.pop %v6179
        %v6182 = vadd.f32 %v6180, 1.0
        %v6183 = vadd.f32 %v6181, 1.0
        %v6184 = vmul.f32 %v6168, %v6182
        %v6185 = vmul.f32 %v6169, %v6183
        %v6187 = vsel %vm1309, %v6184, 0
        %v6190 = vsel %vm1309, %v6185, 0
        %6192 = vmatprep.subr.mxu0 0.0
        %6193 = vmatpush1.msra.mxu0 %v3667
        %6194 = vmatprep.subr.mxu0 0.0
        %6195 = vmatpush1.msra.mxu0 %v3668
        %6196 = vmatprep.subr.mxu0 0.0
        %6197 = vmatpush1.msra.mxu0 %v3669
        %6198 = vmatprep.subr.mxu0 0.0
        %6199 = vmatpush1.msra.mxu0 %v3670
        %6200 = vmatprep.subr.mxu0 0.0
        %6201 = vmatpush1.msra.mxu0 0.0
        %6202 = vmatprep.subr.mxu0 0.0
        %6203 = vmatpush1.msra.mxu0 0.0
        %6204 = vmatprep.subr.mxu0 0.0
        %6205 = vmatpush1.msra.mxu0 0.0
        %6206 = vmatprep.subr.mxu0 0.0
        %6207 = vmatpush1.msra.mxu0 0.0
        %6208 = vmatprep.subr.mxu0 0.0
        %6209 = vmatpush1.msra.mxu0 0.0
        %6210 = vmatprep.subr.mxu0 0.0
        %6211 = vmatpush1.msra.mxu0 0.0
        %6212 = vmatprep.subr.mxu0 0.0
        %6213 = vmatpush1.msra.mxu0 0.0
        %6214 = vmatprep.subr.mxu0 0.0
        %6215 = vmatpush1.msra.mxu0 0.0
        %6216 = vmatprep.subr.mxu0 0.0
        %6217 = vmatpush1.msra.mxu0 0.0
        %6218 = vmatprep.subr.mxu0 0.0
        %6219 = vmatpush1.msra.mxu0 0.0
        %6220 = vmatprep.subr.mxu0 0.0
        %6221 = vmatpush1.msra.mxu0 0.0
        %6222 = vmatprep.subr.mxu0 0.0
        %6223 = vmatpush1.msra.mxu0 0.0
        %6224 = vmatprep.subr.mxu0 0.0
        %6225 = vmatpush1.msra.mxu0 0.0
        %6226 = vmatprep.subr.mxu0 0.0
        %6227 = vmatpush1.msra.mxu0 0.0
        %6228 = vmatprep.subr.mxu0 0.0
        %6229 = vmatpush1.msra.mxu0 0.0
        %6230 = vmatprep.subr.mxu0 0.0
        %6231 = vmatpush1.msra.mxu0 0.0
        %6232 = vmatprep.subr.mxu0 0.0
        %6233 = vmatpush1.msra.mxu0 0.0
        %6234 = vmatprep.subr.mxu0 0.0
        %6235 = vmatpush1.msra.mxu0 0.0
        %6236 = vmatprep.subr.mxu0 0.0
        %6237 = vmatpush1.msra.mxu0 0.0
        %6238 = vmatprep.subr.mxu0 0.0
        %6239 = vmatpush1.msra.mxu0 0.0
        %6240 = vmatprep.subr.mxu0 0.0
        %6241 = vmatpush1.msra.mxu0 0.0
        %6242 = vmatprep.subr.mxu0 0.0
        %6243 = vmatpush1.msra.mxu0 0.0
        %6244 = vmatprep.subr.mxu0 0.0
        %6245 = vmatpush1.msra.mxu0 0.0
        %6246 = vmatprep.subr.mxu0 0.0
        %6247 = vmatpush1.msra.mxu0 0.0
        %6248 = vmatprep.subr.mxu0 0.0
        %6249 = vmatpush1.msra.mxu0 0.0
        %6250 = vmatprep.subr.mxu0 0.0
        %6251 = vmatpush1.msra.mxu0 0.0
        %6252 = vmatprep.subr.mxu0 0.0
        %6253 = vmatpush1.msra.mxu0 0.0
        %6254 = vmatprep.subr.mxu0 0.0
        %6255 = vmatpush1.msra.mxu0 0.0
        %6256 = vmatprep.mubr.f32.mxu0 0.0
        %6257 = vmatmul.mubr.f32.gmra.mrb[0].mxu0 %v6187
        %v6258 = vpop.f32.mrb[0].mxu0
        %v6259 = vadd.f32 %v3676, %v6258
        %v6260 = vpop.f32.mrb[0].mxu0
        %6261 = vmatprep.mubr.f32.mxu0 0.0
        %6262 = vmatmul.mubr.f32.gmra.mrb[0].mxu0 %v6190
        %v6263 = vpop.f32.mrb[0].mxu0
        %v6264 = vadd.f32 %v3676, %v6263
        %v6265 = vpop.f32.mrb[0].mxu0
        %6266 = vdwg.mxu0
        %v6267 = vadd.f32 %v6085, %v6259
        %v6268 = vadd.f32 %v6086, %v6264
        %v6269 = vsel %vm1309, %v6267, 0.0
        %6270 = vadd.xlane.f32.xlu0 %v6269
        %v6271 = vpop.xlane.xlu0 %6270
        %v6272 = vsel %vm1309, %v6268, 0.0
        %6273 = vadd.xlane.f32.xlu0 %v6272
        %v6274 = vpop.xlane.xlu0 %6273
        %v6275 = vmul.f32 %v6271, %v2225
        %v6276 = vmul.f32 %v6274, %v2225
        %v6277 = vsub.f32 %v6267, %v6275
        %v6278 = vsub.f32 %v6268, %v6276
        %v6279 = vmul.f32 %v6277, %v6277
        %v6280 = vmul.f32 %v6278, %v6278
        %v6281 = vsel %vm1309, %v6279, 0.0
        %6282 = vadd.xlane.f32.xlu0 %v6281
        %v6283 = vpop.xlane.xlu0 %6282
        %v6284 = vsel %vm1309, %v6280, 0.0
        %6285 = vadd.xlane.f32.xlu0 %v6284
        %v6286 = vpop.xlane.xlu0 %6285
        %v6287 = vmul.f32 %v6283, %v2225
        %v6288 = vmul.f32 %v6286, %v2225
        %v6289 = vadd.f32 %v6287, 1e-05
        %v6290 = vadd.f32 %v6288, 1e-05
        %v6291 = vrsqrt.pop %v6289
        %v6292 = vrsqrt.pop %v6290
        %v6293 = vmul.f32 %v6277, %v6291
        %v6294 = vmul.f32 %v6278, %v6292
        %v6295 = vmul.f32 %v6293, %v3793
        %v6296 = vmul.f32 %v6294, %v3793
        %v6297 = vadd.f32 %v6295, %v3801
        %v6298 = vadd.f32 %v6296, %v3801
        %v6299 = vsel %vm1309, %v6297, 0.0
        %6300 = vadd.xlane.f32.xlu0 %v6299
        %v6301 = vpop.xlane.xlu0 %6300
        %v6302 = vsel %vm1309, %v6298, 0.0
        %6303 = vadd.xlane.f32.xlu0 %v6302
        %v6304 = vpop.xlane.xlu0 %6303
        %v6305 = vmul.f32 %v6301, %v2225
        %v6306 = vmul.f32 %v6304, %v2225
        %v6307 = vsub.f32 %v6297, %v6305
        %v6308 = vsub.f32 %v6298, %v6306
        %v6309 = vmul.f32 %v6307, %v6307
        %v6310 = vmul.f32 %v6308, %v6308
        %v6311 = vsel %vm1309, %v6309, 0.0
        %6312 = vadd.xlane.f32.xlu0 %v6311
        %v6313 = vpop.xlane.xlu0 %6312
        %v6314 = vsel %vm1309, %v6310, 0.0
        %6315 = vadd.xlane.f32.xlu0 %v6314
        %v6316 = vpop.xlane.xlu0 %6315
        %v6317 = vmul.f32 %v6313, %v2225
        %v6318 = vmul.f32 %v6316, %v2225
        %v6319 = vadd.f32 %v6317, 1e-05
        %v6320 = vadd.f32 %v6318, 1e-05
        %v6321 = vrsqrt.pop %v6319
        %v6322 = vrsqrt.pop %v6320
        %v6323 = vmul.f32 %v6307, %v6321
        %v6324 = vmul.f32 %v6308, %v6322
        %v6325 = vmul.f32 %v6323, %v3837
        %v6326 = vmul.f32 %v6324, %v3837
        %v6327 = vadd.f32 %v6325, %v3845
        %v6328 = vadd.f32 %v6326, %v3845
        %v6329 = vmul.f32 %v6327, 0.5
        %v6330 = vmul.f32 %v6328, 0.5
        %v6331 = vmul.f32 %v6327, 0.044715
        %v6332 = vmul.f32 %v6328, 0.044715
        %v6333 = vmul.f32 %v6331, %v6327
        %v6334 = vmul.f32 %v6332, %v6328
        %v6335 = vmul.f32 %v6333, %v6327
        %v6336 = vmul.f32 %v6334, %v6328
        %v6337 = vadd.f32 %v6327, %v6335
        %v6338 = vadd.f32 %v6328, %v6336
        %v6339 = vmul.f32 %v6337, 0.7978846
        %v6340 = vmul.f32 %v6338, 0.7978846
        %v6341 = vtanh.pop %v6339
        %v6342 = vtanh.pop %v6340
        %v6343 = vadd.f32 %v6341, 1.0
        %v6344 = vadd.f32 %v6342, 1.0
        %v6345 = vmul.f32 %v6329, %v6343
        %v6346 = vmul.f32 %v6330, %v6344
        %s6347 = sadd.s32 %s3867, 1
        %s6348 = sld [smem:[#allocation3 + %s6347]]
        %v6349 = vstv %s6348
        %v6350 = vmul.f32 %v6345, %v6349
        %v6351 = vmul.f32 %v6346, %v6349
        %v6352 = vadd.f32 %v3872, %v6350
        %v6353 = vadd.f32 %v3873, %v6351
        %v6354 = vadd.f32 %v6352, %v4826
        %v6355 = vadd.f32 %v6353, %v4827
        %6356 = vst.msk [vmem:[%s1295] sm:$0xff] %vm1309, %v6354
        %6357 = vst.msk [vmem:[%s1295 + $0x8] sm:$0xff] %vm1309, %v6355
        %s6358 = sand.u32 %s779, 1
        %s6359 = scalar_lea.sflag [#allocation5], %s6358
        %s6360 = sand.u32 %s779, 1
        %s6361 = smul.addr %s6360, 16
        %s6362 = scalar_lea.vmem [#allocation40], %s6361
        // Predicated region
        $region241: #{tpu_custom_call.1} parent=147 // pred_check
          %p6363 = pneg %p789
        $region242: #{tpu_custom_call.1} parent=147 // pred_check_branch
          %6365 = sbr.rel (%p6363) target = $region244
        $region243: #{tpu_custom_call.1} parent=147 // pred_region
          %s6367 = ssub.s32 256, 256
          %6368 = vsyncadd %s6359, %s6367
          %s6369 = smul.addr %s94, 2
          %s6370 = smul.addr %s6369, 128
          %s6371 = scalar_lea.hbm %s65, %s6370
          %s6372 = sshll.u32 %s6362, 4
          %s6373 = int_to_ptr.vmem [resolvable:$true] %s6372
          %6378 = dma.vmem_to_hbm [thread:$0]  %s6373, 256, %s6371, %s6359, 128, 128, 8
        $region244: #{tpu_custom_call.1} parent=147 // pred_fallthru
          _
      $region148: #{tpu_custom_call.1} parent=5 // pred_fallthru
        _
      %p6379 = scmp.le.s32.totalorder 2, %s89
      // Predicated region
      $region245: #{tpu_custom_call.1} parent=5 // pred_check
        %p6380 = pneg %p6379
      $region246: #{tpu_custom_call.1} parent=5 // pred_check_branch
        %6382 = sbr.rel (%p6380) target = $region248
      $region247: #{tpu_custom_call.1} parent=5 // pred_region
        %s6383 = ssub.s32 %s89, 2
        // Predicated region
        $region249: #{tpu_custom_call.1} parent=247 // pred_check
          %p6384 = pneg %p795
        $region250: #{tpu_custom_call.1} parent=247 // pred_check_branch
          %6386 = sbr.rel (%p6384) target = $region252
        $region251: #{tpu_custom_call.1} parent=247 // pred_region
          %s6387 = sand.u32 %s780, 1
          %s6388 = scalar_lea.sflag [#allocation5], %s6387
          %s6389 = sand.u32 %s780, 1
          %s6390 = smul.addr %s6389, 16
          %s6391 = scalar_lea.vmem [#allocation40], %s6390
          %6392 = dma.done %s6388, 256
        $region252: #{tpu_custom_call.1} parent=247 // pred_fallthru
          _
      $region248: #{tpu_custom_call.1} parent=5 // pred_fallthru
        _
    $region6: #{tpu_custom_call.1} parent=1 // loop_footer
      %s93 = sadd.s32 1, %s89
    $region7: #{tpu_custom_call.1} parent=1 // loop_footer_branch
      %88 = sbr.rel target = $region3
    $region8: #{tpu_custom_call.1} parent=1 // loop_exit
      _
    %6393 = vsyncpa [#allocation4], 1
    %s6394 = scalar_lea.sflag [#allocation4], 1
    %6395 = vsyncpa %s6394, 1
    %6396 = vsyncpa [#allocation9], 1
    %6397 = vsyncpa [#allocation12], 1
    %6398 = vsyncpa [#allocation15], 1
    %6399 = vsyncpa [#allocation18], 1
    %6400 = vsyncpa [#allocation21], 1
    %6401 = vsyncpa [#allocation24], 1
    %6402 = vsyncpa [#allocation27], 1
    %6403 = vsyncpa [#allocation30], 1
    %6404 = vsyncpa [#allocation33], 1
    %6405 = vsyncpa [#allocation36], 1
    %6406 = vsyncpa [#allocation39], 1
    %6407 = vsyncpa [#allocation5], 1
    %s6408 = scalar_lea.sflag [#allocation5], 1
    %6409 = vsyncpa %s6408, 1
    %6410 = vsyncpa [#allocation6], 1
    %s6411 = scalar_lea.sflag [#allocation6], 1
    %6412 = vsyncpa %s6411, 1

</llo_original>
